<compile_context>
chip_gen: v7x
topology: tpu7x:2x2x1
jax: 0.10.0
libtpu: 0.0.40
codegen_flags: <defaults>
</compile_context>

<pallas_src>
import jax
import jax.numpy as jnp
from jax import lax
from jax.experimental import pallas as pl
from jax.experimental.pallas import tpu as pltpu

EPS = 1e-5
CP = 128   # padded channel width (one lane group)
K1 = 128   # padded im2col contraction width for conv1 (9*Cin real)


def _residual_block_kernel(x1_ref, w1s_ref, w2_ref,
                           g1_ref, b1_ref, g2_ref, b2_ref, gs_ref, bs_ref,
                           o_ref, sc_ref, y1pad_ref, col_ref):
    N, H, W, C = o_ref.shape
    M = N * H * W
    Hp, Wp = H + 2, W + 2
    inv_m = 1.0 / M

    # ---- conv1 (3x3, wrapper-side im2col) + shortcut 1x1 conv:
    #      ONE (M, K1) x (K1, 2C) bf16 MXU matmul, fp32 accumulation ----------
    acc = jnp.dot(x1_ref[...], w1s_ref[...],
                  preferred_element_type=jnp.float32)           # (M, 2C) fp32
    sc_ref[...] = acc[:, C:]        # stash raw shortcut conv output across conv2
    a1 = acc[:, :C]

    # ---- BN1 (training-mode batch stats, single pass) folded to FMA, + ReLU --
    s1 = jnp.sum(a1, axis=0, keepdims=True)
    q1 = jnp.sum(a1 * a1, axis=0, keepdims=True)
    m1 = s1 * inv_m
    v1 = q1 * inv_m - m1 * m1
    scale1 = g1_ref[...] * lax.rsqrt(v1 + EPS)
    bias1 = b1_ref[...] - m1 * scale1
    y1 = jnp.maximum(a1 * scale1 + bias1, 0.0)                  # (M, C) fp32

    # ---- spatially padded intermediate: zero only the 1-px halo frame -------
    zrow = jnp.zeros((N, 1, Wp, C), jnp.float32)
    zcol = jnp.zeros((N, Hp, 1, C), jnp.float32)
    y1pad_ref[:, 0:1, :, :] = zrow
    y1pad_ref[:, Hp - 1:Hp, :, :] = zrow
    y1pad_ref[:, :, 0:1, :] = zcol
    y1pad_ref[:, :, Wp - 1:Wp, :] = zcol
    y1pad_ref[:, 1:1 + H, 1:1 + W, :] = y1.reshape(N, H, W, C)

    # ---- conv2 (3x3): build im2col once (9 lane-aligned 128-wide blocks),
    #      then ONE (M, 9C) x (9C, C) bf16 matmul -----------------------------
    for t in range(9):
        dy, dx = t // 3, t % 3
        patch = y1pad_ref[:, dy:dy + H, dx:dx + W, :]           # (N, H, W, C)
        col_ref[:, t * C:(t + 1) * C] = patch.reshape(M, C).astype(jnp.bfloat16)
    a2 = jnp.dot(col_ref[...], w2_ref[...],
                 preferred_element_type=jnp.float32)            # (M, C) fp32

    # ---- BN2 folded to FMA ---------------------------------------------------
    s2 = jnp.sum(a2, axis=0, keepdims=True)
    q2 = jnp.sum(a2 * a2, axis=0, keepdims=True)
    m2 = s2 * inv_m
    v2 = q2 * inv_m - m2 * m2
    scale2 = g2_ref[...] * lax.rsqrt(v2 + EPS)
    bias2 = b2_ref[...] - m2 * scale2
    y2 = a2 * scale2 + bias2

    # ---- shortcut BN folded to FMA -------------------------------------------
    sc = sc_ref[...]
    ss = jnp.sum(sc, axis=0, keepdims=True)
    qs = jnp.sum(sc * sc, axis=0, keepdims=True)
    ms = ss * inv_m
    vs = qs * inv_m - ms * ms
    scale_s = gs_ref[...] * lax.rsqrt(vs + EPS)
    bias_s = bs_ref[...] - ms * scale_s
    ysc = sc * scale_s + bias_s

    # ---- residual add + final ReLU -------------------------------------------
    o_ref[...] = jnp.maximum(y2 + ysc, 0.0).reshape(N, H, W, C)


def _pad_lanes_row(v):
    """(c,) -> (1, CP) float32, ZERO-padded (padded channels must stay 0)."""
    return jnp.pad(v.astype(jnp.float32), (0, CP - v.shape[0]))[None, :]


def residual_block_forward(x_nchw, params):
    """x_nchw: (N, Cin, H, W) float32.  Returns (N, Cout, H, W) float32."""
    w1, g1, b1, w2, g2, b2, ws, gs, bs = params
    N, Cin, H, W = x_nchw.shape
    Cout = w1.shape[-1]
    M = N * H * W
    assert 9 * Cin <= K1 and Cout <= CP

    # --- glue: NCHW -> NHWC fp32, spatial pad, wrapper-side im2col for conv1 --
    x = jnp.transpose(x_nchw, (0, 2, 3, 1)).astype(jnp.float32)     # (N,H,W,Cin)
    xp = jnp.pad(x, ((0, 0), (1, 1), (1, 1), (0, 0)))
    taps = [xp[:, dy:dy + H, dx:dx + W, :] for dy in range(3) for dx in range(3)]
    x1 = jnp.concatenate(taps, axis=-1).reshape(M, 9 * Cin)         # K = 9*Cin
    x1 = jnp.pad(x1, ((0, 0), (0, K1 - 9 * Cin))).astype(jnp.bfloat16)

    # --- conv1 weights (HWIO) -> (9*Cin, Cout), padded to (K1, CP); shortcut
    #     1x1-conv weights packed into the next CP output lanes at the
    #     center-tap (dy=1, dx=1) K rows --------------------------------------
    w1m = w1.astype(jnp.float32).reshape(9 * Cin, Cout)
    w1p = jnp.zeros((K1, CP), jnp.float32).at[:9 * Cin, :Cout].set(w1m)
    ctr = (1 * 3 + 1) * Cin
    wsp = jnp.zeros((K1, CP), jnp.float32).at[ctr:ctr + Cin, :Cout].set(
        ws.astype(jnp.float32))
    w1s = jnp.concatenate([w1p, wsp], axis=1).astype(jnp.bfloat16)  # (K1, 2*CP)

    # --- conv2 weights -> block-im2col layout (9*CP, CP), tap t in rows
    #     [t*CP, t*CP+Cout) ----------------------------------------------------
    w2m = jnp.zeros((9 * CP, CP), jnp.float32)
    w2f = w2.astype(jnp.float32)
    for t in range(9):
        dy, dx = t // 3, t % 3
        w2m = w2m.at[t * CP:t * CP + Cout, :Cout].set(w2f[dy, dx])
    w2m = w2m.astype(jnp.bfloat16)

    out = pl.pallas_call(
        _residual_block_kernel,
        out_shape=jax.ShapeDtypeStruct((N, H, W, CP), jnp.float32),
        in_specs=[pl.BlockSpec(memory_space=pltpu.MemorySpace.VMEM)] * 9,
        out_specs=pl.BlockSpec(memory_space=pltpu.MemorySpace.VMEM),
        scratch_shapes=[
            pltpu.VMEM((M, CP), jnp.float32),                 # raw shortcut out
            pltpu.VMEM((N, H + 2, W + 2, CP), jnp.float32),   # padded interm.
            pltpu.VMEM((M, 9 * CP), jnp.bfloat16),            # conv2 im2col
        ],
    )(x1, w1s, w2m,
      _pad_lanes_row(g1), _pad_lanes_row(b1),
      _pad_lanes_row(g2), _pad_lanes_row(b2),
      _pad_lanes_row(gs), _pad_lanes_row(bs))

    out = out[..., :Cout]                        # drop channel padding
    return jnp.transpose(out, (0, 3, 1, 2))      # back to NCHW


if __name__ == "__main__":
    N, Cin, Cout, H, W = 2, 4, 8, 16, 16         # ResidualBlock(4, 8, stride=1)
    key = jax.random.PRNGKey(0)
    ks = jax.random.split(key, 10)

    x = jax.random.normal(ks[0], (N, Cin, H, W), jnp.float32)
    # conv weights kept in HWIO layout (deterministic synthetic init)
    w1 = 0.2 * jax.random.normal(ks[1], (3, 3, Cin, Cout), jnp.float32)
    g1 = 1.0 + 0.1 * jax.random.normal(ks[2], (Cout,), jnp.float32)
    b1 = 0.1 * jax.random.normal(ks[3], (Cout,), jnp.float32)
    w2 = 0.2 * jax.random.normal(ks[4], (3, 3, Cout, Cout), jnp.float32)
    g2 = 1.0 + 0.1 * jax.random.normal(ks[5], (Cout,), jnp.float32)
    b2 = 0.1 * jax.random.normal(ks[6], (Cout,), jnp.float32)
    ws = 0.2 * jax.random.normal(ks[7], (Cin, Cout), jnp.float32)   # 1x1 shortcut
    gs = 1.0 + 0.1 * jax.random.normal(ks[8], (Cout,), jnp.float32)
    bs = 0.1 * jax.random.normal(ks[9], (Cout,), jnp.float32)
    params = (w1, g1, b1, w2, g2, b2, ws, gs, bs)

    out = jax.block_until_ready(residual_block_forward(x, params))

    # Pure-JAX reference.  Conv operands are cast to bf16 exactly like the
    # kernel (MXU-native operands); accumulation and BN stay fp32.  The
    # tolerance below therefore documents the bf16-operand precision choice.
    def bf(a):
        return a.astype(jnp.bfloat16).astype(jnp.float32)

    def conv(xh, w, pad):
        return lax.conv_general_dilated(
            bf(xh), bf(w), (1, 1), [(pad, pad), (pad, pad)],
            dimension_numbers=("NHWC", "HWIO", "NHWC"),
            precision=lax.Precision.HIGHEST)

    def bn(xh, g, b):
        m = jnp.mean(xh, axis=(0, 1, 2), keepdims=True)
        v = jnp.mean((xh - m) ** 2, axis=(0, 1, 2), keepdims=True)
        return (xh - m) * lax.rsqrt(v + EPS) * g + b

    xh = jnp.transpose(x, (0, 2, 3, 1))
    left = jnp.maximum(bn(conv(xh, w1, 1), g1, b1), 0.0)
    left = bn(conv(left, w2, 1), g2, b2)
    short = bn(conv(xh, ws[None, None], 0), gs, bs)
    ref = jnp.transpose(jnp.maximum(left + short, 0.0), (0, 3, 1, 2))

    assert out.shape == (N, Cout, H, W)
    err = float(jnp.max(jnp.abs(out - ref)))
    assert jnp.allclose(out, ref, atol=5e-3, rtol=5e-3), f"max abs err {err}"
    print("KERNEL_OK")
</pallas_src>

<mosaic_0001>
module attributes {stable_mosaic.version = 11 : i64} {
  func.func @_residual_block_kernel(%arg0: memref<512x128xbf16, #tpu.memory_space<vmem>>, %arg1: memref<128x256xbf16, #tpu.memory_space<vmem>>, %arg2: memref<1152x128xbf16, #tpu.memory_space<vmem>>, %arg3: memref<1x128xf32, #tpu.memory_space<vmem>>, %arg4: memref<1x128xf32, #tpu.memory_space<vmem>>, %arg5: memref<1x128xf32, #tpu.memory_space<vmem>>, %arg6: memref<1x128xf32, #tpu.memory_space<vmem>>, %arg7: memref<1x128xf32, #tpu.memory_space<vmem>>, %arg8: memref<1x128xf32, #tpu.memory_space<vmem>>, %arg9: memref<2x16x16x128xf32, #tpu.memory_space<vmem>>, %arg10: memref<512x128xf32, #tpu.memory_space<vmem>>, %arg11: memref<2x18x18x128xf32, #tpu.memory_space<vmem>>, %arg12: memref<512x1152xbf16, #tpu.memory_space<vmem>>) attributes {dimension_semantics = [], scalar_prefetch = 0 : i64, scratch_operands = 3 : i64, tpu.core_type = #tpu.core_type<tc>} {
    %c0 = arith.constant 0 : index
    %c0_0 = arith.constant 0 : index
    %0 = vector.load %arg0[%c0, %c0_0] : memref<512x128xbf16, #tpu.memory_space<vmem>>, vector<512x128xbf16>
    %c0_1 = arith.constant 0 : index
    %c0_2 = arith.constant 0 : index
    %1 = vector.load %arg1[%c0_1, %c0_2] : memref<128x256xbf16, #tpu.memory_space<vmem>>, vector<128x256xbf16>
    %cst = arith.constant dense<0.000000e+00> : vector<512x256xf32>
    %2 = tpu.matmul %0, %1, %cst {dimension_numbers = #tpu.dot_dimension_numbers<[1], [0], [0], [1], [0, 0, 1, 1], [], []>} : vector<512x128xbf16>, vector<128x256xbf16>, vector<512x256xf32> -> vector<512x256xf32>
    %3 = vector.extract_strided_slice %2 {offsets = [0, 128], sizes = [512, 128], strides = [1, 1]} : vector<512x256xf32> to vector<512x128xf32>
    %c0_3 = arith.constant 0 : index
    %c0_4 = arith.constant 0 : index
    %4 = vector.load %arg10[%c0_3, %c0_4] : memref<512x128xf32, #tpu.memory_space<vmem>>, vector<512x128xf32>
    tpu.vector_store %arg10[%c0_3, %c0_4], %3 {strides = array<i32>} : memref<512x128xf32, #tpu.memory_space<vmem>>, vector<512x128xf32>,
    %5 = vector.extract_strided_slice %2 {offsets = [0, 0], sizes = [512, 128], strides = [1, 1]} : vector<512x256xf32> to vector<512x128xf32>
    %cst_5 = arith.constant dense<0.000000e+00> : vector<128xf32>
    %6 = vector.multi_reduction <add>, %5, %cst_5 [0] : vector<512x128xf32> to vector<128xf32>
    %7 = vector.shape_cast %6 : vector<128xf32> to vector<1x128xf32>
    %8 = arith.mulf %5, %5 : vector<512x128xf32>
    %cst_6 = arith.constant dense<0.000000e+00> : vector<128xf32>
    %9 = vector.multi_reduction <add>, %8, %cst_6 [0] : vector<512x128xf32> to vector<128xf32>
    %10 = vector.shape_cast %9 : vector<128xf32> to vector<1x128xf32>
    %cst_7 = arith.constant 0.001953125 : f32
    %11 = vector.broadcast %cst_7 : f32 to vector<1x128xf32>
    %12 = arith.mulf %7, %11 : vector<1x128xf32>
    %cst_8 = arith.constant 0.001953125 : f32
    %13 = vector.broadcast %cst_8 : f32 to vector<1x128xf32>
    %14 = arith.mulf %10, %13 : vector<1x128xf32>
    %15 = arith.mulf %12, %12 : vector<1x128xf32>
    %16 = arith.subf %14, %15 : vector<1x128xf32>
    %c0_9 = arith.constant 0 : index
    %c0_10 = arith.constant 0 : index
    %17 = vector.load %arg3[%c0_9, %c0_10] : memref<1x128xf32, #tpu.memory_space<vmem>>, vector<1x128xf32>
    %cst_11 = arith.constant 9.99999974E-6 : f32
    %18 = vector.broadcast %cst_11 : f32 to vector<1x128xf32>
    %19 = arith.addf %16, %18 : vector<1x128xf32>
    %20 = math.rsqrt %19 : vector<1x128xf32>
    %21 = arith.mulf %17, %20 : vector<1x128xf32>
    %c0_12 = arith.constant 0 : index
    %c0_13 = arith.constant 0 : index
    %22 = vector.load %arg4[%c0_12, %c0_13] : memref<1x128xf32, #tpu.memory_space<vmem>>, vector<1x128xf32>
    %23 = arith.mulf %12, %21 : vector<1x128xf32>
    %24 = arith.subf %22, %23 : vector<1x128xf32>
    %25 = vector.broadcast %21 : vector<1x128xf32> to vector<512x128xf32>
    %26 = arith.mulf %5, %25 : vector<512x128xf32>
    %27 = vector.broadcast %24 : vector<1x128xf32> to vector<512x128xf32>
    %28 = arith.addf %26, %27 : vector<512x128xf32>
    %cst_14 = arith.constant 0.000000e+00 : f32
    %29 = vector.broadcast %cst_14 : f32 to vector<512x128xf32>
    %30 = arith.maximumf %28, %29 : vector<512x128xf32>
    %cst_15 = arith.constant 0.000000e+00 : f32
    %31 = vector.broadcast %cst_15 : f32 to vector<2x1x18x128xf32>
    %cst_16 = arith.constant 0.000000e+00 : f32
    %32 = vector.broadcast %cst_16 : f32 to vector<2x18x1x128xf32>
    %c0_17 = arith.constant 0 : index
    %c0_18 = arith.constant 0 : index
    %c0_19 = arith.constant 0 : index
    %c0_20 = arith.constant 0 : index
    %33 = vector.load %arg11[%c0_17, %c0_18, %c0_19, %c0_20] : memref<2x18x18x128xf32, #tpu.memory_space<vmem>>, vector<2x1x18x128xf32>
    tpu.vector_store %arg11[%c0_17, %c0_18, %c0_19, %c0_20], %31 {strides = array<i32>} : memref<2x18x18x128xf32, #tpu.memory_space<vmem>>, vector<2x1x18x128xf32>,
    %c0_21 = arith.constant 0 : index
    %c17 = arith.constant 17 : index
    %c0_22 = arith.constant 0 : index
    %c0_23 = arith.constant 0 : index
    %34 = vector.load %arg11[%c0_21, %c17, %c0_22, %c0_23] : memref<2x18x18x128xf32, #tpu.memory_space<vmem>>, vector<2x1x18x128xf32>
    tpu.vector_store %arg11[%c0_21, %c17, %c0_22, %c0_23], %31 {strides = array<i32>} : memref<2x18x18x128xf32, #tpu.memory_space<vmem>>, vector<2x1x18x128xf32>,
    %c0_24 = arith.constant 0 : index
    %c0_25 = arith.constant 0 : index
    %c0_26 = arith.constant 0 : index
    %c0_27 = arith.constant 0 : index
    %35 = vector.load %arg11[%c0_24, %c0_25, %c0_26, %c0_27] : memref<2x18x18x128xf32, #tpu.memory_space<vmem>>, vector<2x18x1x128xf32>
    tpu.vector_store %arg11[%c0_24, %c0_25, %c0_26, %c0_27], %32 {strides = array<i32>} : memref<2x18x18x128xf32, #tpu.memory_space<vmem>>, vector<2x18x1x128xf32>,
    %c0_28 = arith.constant 0 : index
    %c0_29 = arith.constant 0 : index
    %c17_30 = arith.constant 17 : index
    %c0_31 = arith.constant 0 : index
    %36 = vector.load %arg11[%c0_28, %c0_29, %c17_30, %c0_31] : memref<2x18x18x128xf32, #tpu.memory_space<vmem>>, vector<2x18x1x128xf32>
    tpu.vector_store %arg11[%c0_28, %c0_29, %c17_30, %c0_31], %32 {strides = array<i32>} : memref<2x18x18x128xf32, #tpu.memory_space<vmem>>, vector<2x18x1x128xf32>,
    %37 = vector.shape_cast %30 : vector<512x128xf32> to vector<2x16x16x128xf32>
    %c0_32 = arith.constant 0 : index
    %c1 = arith.constant 1 : index
    %c1_33 = arith.constant 1 : index
    %c0_34 = arith.constant 0 : index
    %38 = vector.load %arg11[%c0_32, %c1, %c1_33, %c0_34] : memref<2x18x18x128xf32, #tpu.memory_space<vmem>>, vector<2x16x16x128xf32>
    tpu.vector_store %arg11[%c0_32, %c1, %c1_33, %c0_34], %37 {strides = array<i32>} : memref<2x18x18x128xf32, #tpu.memory_space<vmem>>, vector<2x16x16x128xf32>,
    %c0_35 = arith.constant 0 : index
    %c0_36 = arith.constant 0 : index
    %c0_37 = arith.constant 0 : index
    %c0_38 = arith.constant 0 : index
    %39 = vector.load %arg11[%c0_35, %c0_36, %c0_37, %c0_38] : memref<2x18x18x128xf32, #tpu.memory_space<vmem>>, vector<2x16x16x128xf32>
    %40 = vector.shape_cast %39 : vector<2x16x16x128xf32> to vector<512x128xf32>
    %41 = arith.truncf %40 : vector<512x128xf32> to vector<512x128xbf16>
    %c0_39 = arith.constant 0 : index
    %c0_40 = arith.constant 0 : index
    %42 = vector.load %arg12[%c0_39, %c0_40] : memref<512x1152xbf16, #tpu.memory_space<vmem>>, vector<512x128xbf16>
    tpu.vector_store %arg12[%c0_39, %c0_40], %41 {strides = array<i32>} : memref<512x1152xbf16, #tpu.memory_space<vmem>>, vector<512x128xbf16>,
    %c0_41 = arith.constant 0 : index
    %c0_42 = arith.constant 0 : index
    %c1_43 = arith.constant 1 : index
    %c0_44 = arith.constant 0 : index
    %43 = vector.load %arg11[%c0_41, %c0_42, %c1_43, %c0_44] : memref<2x18x18x128xf32, #tpu.memory_space<vmem>>, vector<2x16x16x128xf32>
    %44 = vector.shape_cast %43 : vector<2x16x16x128xf32> to vector<512x128xf32>
    %45 = arith.truncf %44 : vector<512x128xf32> to vector<512x128xbf16>
    %c0_45 = arith.constant 0 : index
    %c128 = arith.constant 128 : index
    %46 = vector.load %arg12[%c0_45, %c128] : memref<512x1152xbf16, #tpu.memory_space<vmem>>, vector<512x128xbf16>
    tpu.vector_store %arg12[%c0_45, %c128], %45 {strides = array<i32>} : memref<512x1152xbf16, #tpu.memory_space<vmem>>, vector<512x128xbf16>,
    %c0_46 = arith.constant 0 : index
    %c0_47 = arith.constant 0 : index
    %c2 = arith.constant 2 : index
    %c0_48 = arith.constant 0 : index
    %47 = vector.load %arg11[%c0_46, %c0_47, %c2, %c0_48] : memref<2x18x18x128xf32, #tpu.memory_space<vmem>>, vector<2x16x16x128xf32>
    %48 = vector.shape_cast %47 : vector<2x16x16x128xf32> to vector<512x128xf32>
    %49 = arith.truncf %48 : vector<512x128xf32> to vector<512x128xbf16>
    %c0_49 = arith.constant 0 : index
    %c256 = arith.constant 256 : index
    %50 = vector.load %arg12[%c0_49, %c256] : memref<512x1152xbf16, #tpu.memory_space<vmem>>, vector<512x128xbf16>
    tpu.vector_store %arg12[%c0_49, %c256], %49 {strides = array<i32>} : memref<512x1152xbf16, #tpu.memory_space<vmem>>, vector<512x128xbf16>,
    %c0_50 = arith.constant 0 : index
    %c1_51 = arith.constant 1 : index
    %c0_52 = arith.constant 0 : index
    %c0_53 = arith.constant 0 : index
    %51 = vector.load %arg11[%c0_50, %c1_51, %c0_52, %c0_53] : memref<2x18x18x128xf32, #tpu.memory_space<vmem>>, vector<2x16x16x128xf32>
    %52 = vector.shape_cast %51 : vector<2x16x16x128xf32> to vector<512x128xf32>
    %53 = arith.truncf %52 : vector<512x128xf32> to vector<512x128xbf16>
    %c0_54 = arith.constant 0 : index
    %c384 = arith.constant 384 : index
    %54 = vector.load %arg12[%c0_54, %c384] : memref<512x1152xbf16, #tpu.memory_space<vmem>>, vector<512x128xbf16>
    tpu.vector_store %arg12[%c0_54, %c384], %53 {strides = array<i32>} : memref<512x1152xbf16, #tpu.memory_space<vmem>>, vector<512x128xbf16>,
    %c0_55 = arith.constant 0 : index
    %c1_56 = arith.constant 1 : index
    %c1_57 = arith.constant 1 : index
    %c0_58 = arith.constant 0 : index
    %55 = vector.load %arg11[%c0_55, %c1_56, %c1_57, %c0_58] : memref<2x18x18x128xf32, #tpu.memory_space<vmem>>, vector<2x16x16x128xf32>
    %56 = vector.shape_cast %55 : vector<2x16x16x128xf32> to vector<512x128xf32>
    %57 = arith.truncf %56 : vector<512x128xf32> to vector<512x128xbf16>
    %c0_59 = arith.constant 0 : index
    %c512 = arith.constant 512 : index
    %58 = vector.load %arg12[%c0_59, %c512] : memref<512x1152xbf16, #tpu.memory_space<vmem>>, vector<512x128xbf16>
    tpu.vector_store %arg12[%c0_59, %c512], %57 {strides = array<i32>} : memref<512x1152xbf16, #tpu.memory_space<vmem>>, vector<512x128xbf16>,
    %c0_60 = arith.constant 0 : index
    %c1_61 = arith.constant 1 : index
    %c2_62 = arith.constant 2 : index
    %c0_63 = arith.constant 0 : index
    %59 = vector.load %arg11[%c0_60, %c1_61, %c2_62, %c0_63] : memref<2x18x18x128xf32, #tpu.memory_space<vmem>>, vector<2x16x16x128xf32>
    %60 = vector.shape_cast %59 : vector<2x16x16x128xf32> to vector<512x128xf32>
    %61 = arith.truncf %60 : vector<512x128xf32> to vector<512x128xbf16>
    %c0_64 = arith.constant 0 : index
    %c640 = arith.constant 640 : index
    %62 = vector.load %arg12[%c0_64, %c640] : memref<512x1152xbf16, #tpu.memory_space<vmem>>, vector<512x128xbf16>
    tpu.vector_store %arg12[%c0_64, %c640], %61 {strides = array<i32>} : memref<512x1152xbf16, #tpu.memory_space<vmem>>, vector<512x128xbf16>,
    %c0_65 = arith.constant 0 : index
    %c2_66 = arith.constant 2 : index
    %c0_67 = arith.constant 0 : index
    %c0_68 = arith.constant 0 : index
    %63 = vector.load %arg11[%c0_65, %c2_66, %c0_67, %c0_68] : memref<2x18x18x128xf32, #tpu.memory_space<vmem>>, vector<2x16x16x128xf32>
    %64 = vector.shape_cast %63 : vector<2x16x16x128xf32> to vector<512x128xf32>
    %65 = arith.truncf %64 : vector<512x128xf32> to vector<512x128xbf16>
    %c0_69 = arith.constant 0 : index
    %c768 = arith.constant 768 : index
    %66 = vector.load %arg12[%c0_69, %c768] : memref<512x1152xbf16, #tpu.memory_space<vmem>>, vector<512x128xbf16>
    tpu.vector_store %arg12[%c0_69, %c768], %65 {strides = array<i32>} : memref<512x1152xbf16, #tpu.memory_space<vmem>>, vector<512x128xbf16>,
    %c0_70 = arith.constant 0 : index
    %c2_71 = arith.constant 2 : index
    %c1_72 = arith.constant 1 : index
    %c0_73 = arith.constant 0 : index
    %67 = vector.load %arg11[%c0_70, %c2_71, %c1_72, %c0_73] : memref<2x18x18x128xf32, #tpu.memory_space<vmem>>, vector<2x16x16x128xf32>
    %68 = vector.shape_cast %67 : vector<2x16x16x128xf32> to vector<512x128xf32>
    %69 = arith.truncf %68 : vector<512x128xf32> to vector<512x128xbf16>
    %c0_74 = arith.constant 0 : index
    %c896 = arith.constant 896 : index
    %70 = vector.load %arg12[%c0_74, %c896] : memref<512x1152xbf16, #tpu.memory_space<vmem>>, vector<512x128xbf16>
    tpu.vector_store %arg12[%c0_74, %c896], %69 {strides = array<i32>} : memref<512x1152xbf16, #tpu.memory_space<vmem>>, vector<512x128xbf16>,
    %c0_75 = arith.constant 0 : index
    %c2_76 = arith.constant 2 : index
    %c2_77 = arith.constant 2 : index
    %c0_78 = arith.constant 0 : index
    %71 = vector.load %arg11[%c0_75, %c2_76, %c2_77, %c0_78] : memref<2x18x18x128xf32, #tpu.memory_space<vmem>>, vector<2x16x16x128xf32>
    %72 = vector.shape_cast %71 : vector<2x16x16x128xf32> to vector<512x128xf32>
    %73 = arith.truncf %72 : vector<512x128xf32> to vector<512x128xbf16>
    %c0_79 = arith.constant 0 : index
    %c1024 = arith.constant 1024 : index
    %74 = vector.load %arg12[%c0_79, %c1024] : memref<512x1152xbf16, #tpu.memory_space<vmem>>, vector<512x128xbf16>
    tpu.vector_store %arg12[%c0_79, %c1024], %73 {strides = array<i32>} : memref<512x1152xbf16, #tpu.memory_space<vmem>>, vector<512x128xbf16>,
    %c0_80 = arith.constant 0 : index
    %c0_81 = arith.constant 0 : index
    %75 = vector.load %arg12[%c0_80, %c0_81] : memref<512x1152xbf16, #tpu.memory_space<vmem>>, vector<512x1152xbf16>
    %c0_82 = arith.constant 0 : index
    %c0_83 = arith.constant 0 : index
    %76 = vector.load %arg2[%c0_82, %c0_83] : memref<1152x128xbf16, #tpu.memory_space<vmem>>, vector<1152x128xbf16>
    %cst_84 = arith.constant dense<0.000000e+00> : vector<512x128xf32>
    %77 = tpu.matmul %75, %76, %cst_84 {dimension_numbers = #tpu.dot_dimension_numbers<[1], [0], [0], [1], [0, 0, 1, 1], [], []>} : vector<512x1152xbf16>, vector<1152x128xbf16>, vector<512x128xf32> -> vector<512x128xf32>
    %cst_85 = arith.constant dense<0.000000e+00> : vector<128xf32>
    %78 = vector.multi_reduction <add>, %77, %cst_85 [0] : vector<512x128xf32> to vector<128xf32>
    %79 = vector.shape_cast %78 : vector<128xf32> to vector<1x128xf32>
    %80 = arith.mulf %77, %77 : vector<512x128xf32>
    %cst_86 = arith.constant dense<0.000000e+00> : vector<128xf32>
    %81 = vector.multi_reduction <add>, %80, %cst_86 [0] : vector<512x128xf32> to vector<128xf32>
    %82 = vector.shape_cast %81 : vector<128xf32> to vector<1x128xf32>
    %cst_87 = arith.constant 0.001953125 : f32
    %83 = vector.broadcast %cst_87 : f32 to vector<1x128xf32>
    %84 = arith.mulf %79, %83 : vector<1x128xf32>
    %cst_88 = arith.constant 0.001953125 : f32
    %85 = vector.broadcast %cst_88 : f32 to vector<1x128xf32>
    %86 = arith.mulf %82, %85 : vector<1x128xf32>
    %87 = arith.mulf %84, %84 : vector<1x128xf32>
    %88 = arith.subf %86, %87 : vector<1x128xf32>
    %c0_89 = arith.constant 0 : index
    %c0_90 = arith.constant 0 : index
    %89 = vector.load %arg5[%c0_89, %c0_90] : memref<1x128xf32, #tpu.memory_space<vmem>>, vector<1x128xf32>
    %cst_91 = arith.constant 9.99999974E-6 : f32
    %90 = vector.broadcast %cst_91 : f32 to vector<1x128xf32>
    %91 = arith.addf %88, %90 : vector<1x128xf32>
    %92 = math.rsqrt %91 : vector<1x128xf32>
    %93 = arith.mulf %89, %92 : vector<1x128xf32>
    %c0_92 = arith.constant 0 : index
    %c0_93 = arith.constant 0 : index
    %94 = vector.load %arg6[%c0_92, %c0_93] : memref<1x128xf32, #tpu.memory_space<vmem>>, vector<1x128xf32>
    %95 = arith.mulf %84, %93 : vector<1x128xf32>
    %96 = arith.subf %94, %95 : vector<1x128xf32>
    %97 = vector.broadcast %93 : vector<1x128xf32> to vector<512x128xf32>
    %98 = arith.mulf %77, %97 : vector<512x128xf32>
    %99 = vector.broadcast %96 : vector<1x128xf32> to vector<512x128xf32>
    %100 = arith.addf %98, %99 : vector<512x128xf32>
    %c0_94 = arith.constant 0 : index
    %c0_95 = arith.constant 0 : index
    %101 = vector.load %arg10[%c0_94, %c0_95] : memref<512x128xf32, #tpu.memory_space<vmem>>, vector<512x128xf32>
    %cst_96 = arith.constant dense<0.000000e+00> : vector<128xf32>
    %102 = vector.multi_reduction <add>, %101, %cst_96 [0] : vector<512x128xf32> to vector<128xf32>
    %103 = vector.shape_cast %102 : vector<128xf32> to vector<1x128xf32>
    %104 = arith.mulf %101, %101 : vector<512x128xf32>
    %cst_97 = arith.constant dense<0.000000e+00> : vector<128xf32>
    %105 = vector.multi_reduction <add>, %104, %cst_97 [0] : vector<512x128xf32> to vector<128xf32>
    %106 = vector.shape_cast %105 : vector<128xf32> to vector<1x128xf32>
    %cst_98 = arith.constant 0.001953125 : f32
    %107 = vector.broadcast %cst_98 : f32 to vector<1x128xf32>
    %108 = arith.mulf %103, %107 : vector<1x128xf32>
    %cst_99 = arith.constant 0.001953125 : f32
    %109 = vector.broadcast %cst_99 : f32 to vector<1x128xf32>
    %110 = arith.mulf %106, %109 : vector<1x128xf32>
    %111 = arith.mulf %108, %108 : vector<1x128xf32>
    %112 = arith.subf %110, %111 : vector<1x128xf32>
    %c0_100 = arith.constant 0 : index
    %c0_101 = arith.constant 0 : index
    %113 = vector.load %arg7[%c0_100, %c0_101] : memref<1x128xf32, #tpu.memory_space<vmem>>, vector<1x128xf32>
    %cst_102 = arith.constant 9.99999974E-6 : f32
    %114 = vector.broadcast %cst_102 : f32 to vector<1x128xf32>
    %115 = arith.addf %112, %114 : vector<1x128xf32>
    %116 = math.rsqrt %115 : vector<1x128xf32>
    %117 = arith.mulf %113, %116 : vector<1x128xf32>
    %c0_103 = arith.constant 0 : index
    %c0_104 = arith.constant 0 : index
    %118 = vector.load %arg8[%c0_103, %c0_104] : memref<1x128xf32, #tpu.memory_space<vmem>>, vector<1x128xf32>
    %119 = arith.mulf %108, %117 : vector<1x128xf32>
    %120 = arith.subf %118, %119 : vector<1x128xf32>
    %121 = vector.broadcast %117 : vector<1x128xf32> to vector<512x128xf32>
    %122 = arith.mulf %101, %121 : vector<512x128xf32>
    %123 = vector.broadcast %120 : vector<1x128xf32> to vector<512x128xf32>
    %124 = arith.addf %122, %123 : vector<512x128xf32>
    %125 = arith.addf %100, %124 : vector<512x128xf32>
    %cst_105 = arith.constant 0.000000e+00 : f32
    %126 = vector.broadcast %cst_105 : f32 to vector<512x128xf32>
    %127 = arith.maximumf %125, %126 : vector<512x128xf32>
    %128 = vector.shape_cast %127 : vector<512x128xf32> to vector<2x16x16x128xf32>
    %c0_106 = arith.constant 0 : index
    %c0_107 = arith.constant 0 : index
    %c0_108 = arith.constant 0 : index
    %c0_109 = arith.constant 0 : index
    %129 = vector.load %arg9[%c0_106, %c0_107, %c0_108, %c0_109] : memref<2x16x16x128xf32, #tpu.memory_space<vmem>>, vector<2x16x16x128xf32>
    tpu.vector_store %arg9[%c0_106, %c0_107, %c0_108, %c0_109], %128 {strides = array<i32>} : memref<2x16x16x128xf32, #tpu.memory_space<vmem>>, vector<2x16x16x128xf32>,
    return
  }
}

</mosaic_0001>

<llo_original>
// kernel: tpu_custom_call.1
$region0: #{tpu_custom_call.1}
  #allocation0 [shape = 'u32[]', space=smem, size = 0x4, offset = 0x4, fixed_abs, tag = 'smem constant byte address 0x4 - core index']
  #allocation1 [shape = 'u32[144,128]{1,0:T(1,128)}', space=vmem, size = 0x12000, scoped, tag = 'internal scratch']
  #allocation2 [shape = 'f32[512,128]{1,0:T(8,128)}', space=vmem, size = 0x40000, scoped, tag = 'scratch operand']
  #allocation3 [shape = 'f32[2,18,18,128]{3,2,1,0:T(8,128)}', space=vmem, size = 0x6c000, scoped, tag = 'scratch operand']
  #allocation4 [shape = 'bf16[512,1152]{1,0:T(16,128)(2,1)}', space=vmem, size = 0x120000, scoped, tag = 'scratch operand']
  %s0 = inlined_call_operand.hbm [shape: bf16[512,128], index: 0, kind: input, shape index: {}]
  %s1 = inlined_call_operand.hbm [shape: bf16[128,256], index: 1, kind: input, shape index: {}]
  %s2 = inlined_call_operand.hbm [shape: bf16[1152,128], index: 2, kind: input, shape index: {}]
  %s3 = inlined_call_operand.vmem [shape: f32[1,128], index: 3, kind: input, shape index: {}]
  %s4 = inlined_call_operand.vmem [shape: f32[1,128], index: 4, kind: input, shape index: {}]
  %s5 = inlined_call_operand.vmem [shape: f32[1,128], index: 5, kind: input, shape index: {}]
  %s6 = inlined_call_operand.vmem [shape: f32[1,128], index: 6, kind: input, shape index: {}]
  %s7 = inlined_call_operand.vmem [shape: f32[1,128], index: 7, kind: input, shape index: {}]
  %s8 = inlined_call_operand.vmem [shape: f32[1,128], index: 8, kind: input, shape index: {}]
  %s9 = inlined_call_operand.hbm [shape: f32[2,16,16,128], index: 9, kind: output, shape index: {}]
  %s10 = sld [smem:[#allocation0]]
  $region58: #{tpu_custom_call.1} parent=0
    _
  %s12 = ssub.s32 1, %s10
  %s13 = scalar_select 0, %s12, %s10
  $region1: #{tpu_custom_call.1} parent=0
    #allocation5 [shape = 'u8[131072]{0}', space=vmem, size = 0x20000, scoped, tag = 'input window, operand 0, single buffered']
    #allocation6 [shape = 's32[1]{0}', space=sflag, size = 0x4, scoped, tag = 'scoped memory for tpu_custom_call.1']
    #allocation7 [shape = 's32[1]{0}', space=sflag, size = 0x4, scoped, tag = 'scoped memory for tpu_custom_call.1']
    #allocation8 [shape = 'u8[65536]{0}', space=vmem, size = 0x10000, scoped, tag = 'input window, operand 1, single buffered']
    #allocation9 [shape = 's32[1]{0}', space=sflag, size = 0x4, scoped, tag = 'scoped memory for tpu_custom_call.1']
    #allocation10 [shape = 'u8[294912]{0}', space=vmem, size = 0x48000, scoped, tag = 'input window, operand 2, single buffered']
    #allocation11 [shape = 'u8[262144]{0}', space=vmem, size = 0x40000, scoped, tag = 'output window, operand 0, single buffered']
    %14 = vsyncpa [#allocation6], 0
    %15 = vsyncpa [#allocation9], 0
    %16 = vsyncpa [#allocation7], 0
    // Predicated region
    $region2: #{tpu_custom_call.1} parent=1 // pred_check
      _
    $region3: #{tpu_custom_call.1} parent=1 // pred_check_branch
      %18 = sbr.rel (0) target = $region5
    $region4: #{tpu_custom_call.1} parent=1 // pred_region
      %s20 = ssub.s32 4096, 4096
      %21 = vsyncadd [#allocation6], %s20
      %s22 = sshll.u32 [#allocation5], 4
      %s23 = int_to_ptr.vmem [resolvable:$true] %s22
      %28 = dma.hbm_to_vmem [thread:$0]  %s0, 4096, %s23, [#allocation6], 64, 64, 4
    $region5: #{tpu_custom_call.1} parent=1 // pred_fallthru
      _
    // Predicated region
    $region6: #{tpu_custom_call.1} parent=1 // pred_check
      _
    $region7: #{tpu_custom_call.1} parent=1 // pred_check_branch
      %30 = sbr.rel (0) target = $region9
    $region8: #{tpu_custom_call.1} parent=1 // pred_region
      %s32 = ssub.s32 2048, 2048
      %33 = vsyncadd [#allocation9], %s32
      %s34 = sshll.u32 [#allocation8], 4
      %s35 = int_to_ptr.vmem [resolvable:$true] %s34
      %40 = dma.hbm_to_vmem [thread:$0]  %s1, 2048, %s35, [#allocation9], 128, 128, 8
    $region9: #{tpu_custom_call.1} parent=1 // pred_fallthru
      _
    // Predicated region
    $region10: #{tpu_custom_call.1} parent=1 // pred_check
      _
    $region11: #{tpu_custom_call.1} parent=1 // pred_check_branch
      %42 = sbr.rel (0) target = $region13
    $region12: #{tpu_custom_call.1} parent=1 // pred_region
      %s44 = ssub.s32 9216, 9216
      %45 = vsyncadd [#allocation9], %s44
      %s46 = sshll.u32 [#allocation10], 4
      %s47 = int_to_ptr.vmem [resolvable:$true] %s46
      %52 = dma.hbm_to_vmem [thread:$0]  %s2, 9216, %s47, [#allocation9], 64, 64, 4
    $region13: #{tpu_custom_call.1} parent=1 // pred_fallthru
      _
    // Predicated region
    $region14: #{tpu_custom_call.1} parent=1 // pred_check
      _
    $region15: #{tpu_custom_call.1} parent=1 // pred_check_branch
      %54 = sbr.rel (0) target = $region17
    $region16: #{tpu_custom_call.1} parent=1 // pred_region
      _
    $region17: #{tpu_custom_call.1} parent=1 // pred_fallthru
      _
    // Predicated region
    $region18: #{tpu_custom_call.1} parent=1 // pred_check
      _
    $region19: #{tpu_custom_call.1} parent=1 // pred_check_branch
      %56 = sbr.rel (0) target = $region21
    $region20: #{tpu_custom_call.1} parent=1 // pred_region
      _
    $region21: #{tpu_custom_call.1} parent=1 // pred_fallthru
      _
    // Predicated region
    $region22: #{tpu_custom_call.1} parent=1 // pred_check
      _
    $region23: #{tpu_custom_call.1} parent=1 // pred_check_branch
      %58 = sbr.rel (0) target = $region25
    $region24: #{tpu_custom_call.1} parent=1 // pred_region
      _
    $region25: #{tpu_custom_call.1} parent=1 // pred_fallthru
      _
    // Predicated region
    $region26: #{tpu_custom_call.1} parent=1 // pred_check
      _
    $region27: #{tpu_custom_call.1} parent=1 // pred_check_branch
      %60 = sbr.rel (0) target = $region29
    $region28: #{tpu_custom_call.1} parent=1 // pred_region
      _
    $region29: #{tpu_custom_call.1} parent=1 // pred_fallthru
      _
    // Predicated region
    $region30: #{tpu_custom_call.1} parent=1 // pred_check
      _
    $region31: #{tpu_custom_call.1} parent=1 // pred_check_branch
      %62 = sbr.rel (0) target = $region33
    $region32: #{tpu_custom_call.1} parent=1 // pred_region
      _
    $region33: #{tpu_custom_call.1} parent=1 // pred_fallthru
      _
    // Predicated region
    $region34: #{tpu_custom_call.1} parent=1 // pred_check
      _
    $region35: #{tpu_custom_call.1} parent=1 // pred_check_branch
      %64 = sbr.rel (0) target = $region37
    $region36: #{tpu_custom_call.1} parent=1 // pred_region
      _
    $region37: #{tpu_custom_call.1} parent=1 // pred_fallthru
      _
    // Predicated region
    $region38: #{tpu_custom_call.1} parent=1 // pred_check
      _
    $region39: #{tpu_custom_call.1} parent=1 // pred_check_branch
      %66 = sbr.rel (0) target = $region41
    $region40: #{tpu_custom_call.1} parent=1 // pred_region
      %67 = dma.done [#allocation6], 4096
    $region41: #{tpu_custom_call.1} parent=1 // pred_fallthru
      _
    // Predicated region
    $region42: #{tpu_custom_call.1} parent=1 // pred_check
      _
    $region43: #{tpu_custom_call.1} parent=1 // pred_check_branch
      %69 = sbr.rel (0) target = $region45
    $region44: #{tpu_custom_call.1} parent=1 // pred_region
      %70 = dma.done [#allocation9], 2048
    $region45: #{tpu_custom_call.1} parent=1 // pred_fallthru
      _
    // Predicated region
    $region46: #{tpu_custom_call.1} parent=1 // pred_check
      _
    $region47: #{tpu_custom_call.1} parent=1 // pred_check_branch
      %72 = sbr.rel (0) target = $region49
    $region48: #{tpu_custom_call.1} parent=1 // pred_region
      %73 = dma.done [#allocation9], 9216
    $region49: #{tpu_custom_call.1} parent=1 // pred_fallthru
      _
    %v75 = vld [vmem:[#allocation5] sm:$0xf]
    %v76 = vld [vmem:[#allocation5 + $0x4] sm:$0xf]
    %v77 = vld [vmem:[#allocation5 + $0x8] sm:$0xf]
    %v78 = vld [vmem:[#allocation5 + $0xc] sm:$0xf]
    %v79 = vld [vmem:[#allocation5 + $0x10] sm:$0xf]
    %v80 = vld [vmem:[#allocation5 + $0x14] sm:$0xf]
    %v81 = vld [vmem:[#allocation5 + $0x18] sm:$0xf]
    %v82 = vld [vmem:[#allocation5 + $0x1c] sm:$0xf]
    %v83 = vld [vmem:[#allocation5 + $0x20] sm:$0xf]
    %v84 = vld [vmem:[#allocation5 + $0x24] sm:$0xf]
    %v85 = vld [vmem:[#allocation5 + $0x28] sm:$0xf]
    %v86 = vld [vmem:[#allocation5 + $0x2c] sm:$0xf]
    %v87 = vld [vmem:[#allocation5 + $0x30] sm:$0xf]
    %v88 = vld [vmem:[#allocation5 + $0x34] sm:$0xf]
    %v89 = vld [vmem:[#allocation5 + $0x38] sm:$0xf]
    %v90 = vld [vmem:[#allocation5 + $0x3c] sm:$0xf]
    %v91 = vld [vmem:[#allocation5 + $0x40] sm:$0xf]
    %v92 = vld [vmem:[#allocation5 + $0x44] sm:$0xf]
    %v93 = vld [vmem:[#allocation5 + $0x48] sm:$0xf]
    %v94 = vld [vmem:[#allocation5 + $0x4c] sm:$0xf]
    %v95 = vld [vmem:[#allocation5 + $0x50] sm:$0xf]
    %v96 = vld [vmem:[#allocation5 + $0x54] sm:$0xf]
    %v97 = vld [vmem:[#allocation5 + $0x58] sm:$0xf]
    %v98 = vld [vmem:[#allocation5 + $0x5c] sm:$0xf]
    %v99 = vld [vmem:[#allocation5 + $0x60] sm:$0xf]
    %v100 = vld [vmem:[#allocation5 + $0x64] sm:$0xf]
    %v101 = vld [vmem:[#allocation5 + $0x68] sm:$0xf]
    %v102 = vld [vmem:[#allocation5 + $0x6c] sm:$0xf]
    %v103 = vld [vmem:[#allocation5 + $0x70] sm:$0xf]
    %v104 = vld [vmem:[#allocation5 + $0x74] sm:$0xf]
    %v105 = vld [vmem:[#allocation5 + $0x78] sm:$0xf]
    %v106 = vld [vmem:[#allocation5 + $0x7c] sm:$0xf]
    %v107 = vld [vmem:[#allocation5 + $0x80] sm:$0xf]
    %v108 = vld [vmem:[#allocation5 + $0x84] sm:$0xf]
    %v109 = vld [vmem:[#allocation5 + $0x88] sm:$0xf]
    %v110 = vld [vmem:[#allocation5 + $0x8c] sm:$0xf]
    %v111 = vld [vmem:[#allocation5 + $0x90] sm:$0xf]
    %v112 = vld [vmem:[#allocation5 + $0x94] sm:$0xf]
    %v113 = vld [vmem:[#allocation5 + $0x98] sm:$0xf]
    %v114 = vld [vmem:[#allocation5 + $0x9c] sm:$0xf]
    %v115 = vld [vmem:[#allocation5 + $0xa0] sm:$0xf]
    %v116 = vld [vmem:[#allocation5 + $0xa4] sm:$0xf]
    %v117 = vld [vmem:[#allocation5 + $0xa8] sm:$0xf]
    %v118 = vld [vmem:[#allocation5 + $0xac] sm:$0xf]
    %v119 = vld [vmem:[#allocation5 + $0xb0] sm:$0xf]
    %v120 = vld [vmem:[#allocation5 + $0xb4] sm:$0xf]
    %v121 = vld [vmem:[#allocation5 + $0xb8] sm:$0xf]
    %v122 = vld [vmem:[#allocation5 + $0xbc] sm:$0xf]
    %v123 = vld [vmem:[#allocation5 + $0xc0] sm:$0xf]
    %v124 = vld [vmem:[#allocation5 + $0xc4] sm:$0xf]
    %v125 = vld [vmem:[#allocation5 + $0xc8] sm:$0xf]
    %v126 = vld [vmem:[#allocation5 + $0xcc] sm:$0xf]
    %v127 = vld [vmem:[#allocation5 + $0xd0] sm:$0xf]
    %v128 = vld [vmem:[#allocation5 + $0xd4] sm:$0xf]
    %v129 = vld [vmem:[#allocation5 + $0xd8] sm:$0xf]
    %v130 = vld [vmem:[#allocation5 + $0xdc] sm:$0xf]
    %v131 = vld [vmem:[#allocation5 + $0xe0] sm:$0xf]
    %v132 = vld [vmem:[#allocation5 + $0xe4] sm:$0xf]
    %v133 = vld [vmem:[#allocation5 + $0xe8] sm:$0xf]
    %v134 = vld [vmem:[#allocation5 + $0xec] sm:$0xf]
    %v135 = vld [vmem:[#allocation5 + $0xf0] sm:$0xf]
    %v136 = vld [vmem:[#allocation5 + $0xf4] sm:$0xf]
    %v137 = vld [vmem:[#allocation5 + $0xf8] sm:$0xf]
    %v138 = vld [vmem:[#allocation5 + $0xfc] sm:$0xf]
    %v139 = vld [vmem:[#allocation8] sm:$0xff]
    %v140 = vld [vmem:[#allocation8 + $0x8] sm:$0xff]
    %v141 = vld [vmem:[#allocation8 + $0x10] sm:$0xff]
    %v142 = vld [vmem:[#allocation8 + $0x18] sm:$0xff]
    %v143 = vld [vmem:[#allocation8 + $0x20] sm:$0xff]
    %v144 = vld [vmem:[#allocation8 + $0x28] sm:$0xff]
    %v145 = vld [vmem:[#allocation8 + $0x30] sm:$0xff]
    %v146 = vld [vmem:[#allocation8 + $0x38] sm:$0xff]
    %v147 = vld [vmem:[#allocation8 + $0x40] sm:$0xff]
    %v148 = vld [vmem:[#allocation8 + $0x48] sm:$0xff]
    %v149 = vld [vmem:[#allocation8 + $0x50] sm:$0xff]
    %v150 = vld [vmem:[#allocation8 + $0x58] sm:$0xff]
    %v151 = vld [vmem:[#allocation8 + $0x60] sm:$0xff]
    %v152 = vld [vmem:[#allocation8 + $0x68] sm:$0xff]
    %v153 = vld [vmem:[#allocation8 + $0x70] sm:$0xff]
    %v154 = vld [vmem:[#allocation8 + $0x78] sm:$0xff]
    %v219 = vunpack.c.l.b16 %v75
    %v220 = vunpack.c.l.b16 %v76
    %v221 = vunpack.c.l.b16 %v77
    %v222 = vunpack.c.l.b16 %v78
    %v223 = vunpack.c.l.b16 %v79
    %v224 = vunpack.c.l.b16 %v80
    %v225 = vunpack.c.l.b16 %v81
    %v226 = vunpack.c.l.b16 %v82
    %v227 = vunpack.c.l.b16 %v83
    %v228 = vunpack.c.l.b16 %v84
    %v229 = vunpack.c.l.b16 %v85
    %v230 = vunpack.c.l.b16 %v86
    %v231 = vunpack.c.l.b16 %v87
    %v232 = vunpack.c.l.b16 %v88
    %v233 = vunpack.c.l.b16 %v89
    %v234 = vunpack.c.l.b16 %v90
    %v235 = vunpack.c.l.b16 %v91
    %v236 = vunpack.c.l.b16 %v92
    %v237 = vunpack.c.l.b16 %v93
    %v238 = vunpack.c.l.b16 %v94
    %v239 = vunpack.c.l.b16 %v95
    %v240 = vunpack.c.l.b16 %v96
    %v241 = vunpack.c.l.b16 %v97
    %v242 = vunpack.c.l.b16 %v98
    %v243 = vunpack.c.l.b16 %v99
    %v244 = vunpack.c.l.b16 %v100
    %v245 = vunpack.c.l.b16 %v101
    %v246 = vunpack.c.l.b16 %v102
    %v247 = vunpack.c.l.b16 %v103
    %v248 = vunpack.c.l.b16 %v104
    %v249 = vunpack.c.l.b16 %v105
    %v250 = vunpack.c.l.b16 %v106
    %v251 = vunpack.c.l.b16 %v107
    %v252 = vunpack.c.l.b16 %v108
    %v253 = vunpack.c.l.b16 %v109
    %v254 = vunpack.c.l.b16 %v110
    %v255 = vunpack.c.l.b16 %v111
    %v256 = vunpack.c.l.b16 %v112
    %v257 = vunpack.c.l.b16 %v113
    %v258 = vunpack.c.l.b16 %v114
    %v259 = vunpack.c.l.b16 %v115
    %v260 = vunpack.c.l.b16 %v116
    %v261 = vunpack.c.l.b16 %v117
    %v262 = vunpack.c.l.b16 %v118
    %v263 = vunpack.c.l.b16 %v119
    %v264 = vunpack.c.l.b16 %v120
    %v265 = vunpack.c.l.b16 %v121
    %v266 = vunpack.c.l.b16 %v122
    %v267 = vunpack.c.l.b16 %v123
    %v268 = vunpack.c.l.b16 %v124
    %v269 = vunpack.c.l.b16 %v125
    %v270 = vunpack.c.l.b16 %v126
    %v271 = vunpack.c.l.b16 %v127
    %v272 = vunpack.c.l.b16 %v128
    %v273 = vunpack.c.l.b16 %v129
    %v274 = vunpack.c.l.b16 %v130
    %v275 = vunpack.c.l.b16 %v131
    %v276 = vunpack.c.l.b16 %v132
    %v277 = vunpack.c.l.b16 %v133
    %v278 = vunpack.c.l.b16 %v134
    %v279 = vunpack.c.l.b16 %v135
    %v280 = vunpack.c.l.b16 %v136
    %v281 = vunpack.c.l.b16 %v137
    %v282 = vunpack.c.l.b16 %v138
    %v283 = vpack.c.b16 %v220, %v219
    %v284 = vpack.c.b16 %v222, %v221
    %v285 = vpack.c.b16 %v224, %v223
    %v286 = vpack.c.b16 %v226, %v225
    %v287 = vpack.c.b16 %v228, %v227
    %v288 = vpack.c.b16 %v230, %v229
    %v289 = vpack.c.b16 %v232, %v231
    %v290 = vpack.c.b16 %v234, %v233
    %v291 = vpack.c.b16 %v236, %v235
    %v292 = vpack.c.b16 %v238, %v237
    %v293 = vpack.c.b16 %v240, %v239
    %v294 = vpack.c.b16 %v242, %v241
    %v295 = vpack.c.b16 %v244, %v243
    %v296 = vpack.c.b16 %v246, %v245
    %v297 = vpack.c.b16 %v248, %v247
    %v298 = vpack.c.b16 %v250, %v249
    %v299 = vpack.c.b16 %v252, %v251
    %v300 = vpack.c.b16 %v254, %v253
    %v301 = vpack.c.b16 %v256, %v255
    %v302 = vpack.c.b16 %v258, %v257
    %v303 = vpack.c.b16 %v260, %v259
    %v304 = vpack.c.b16 %v262, %v261
    %v305 = vpack.c.b16 %v264, %v263
    %v306 = vpack.c.b16 %v266, %v265
    %v307 = vpack.c.b16 %v268, %v267
    %v308 = vpack.c.b16 %v270, %v269
    %v309 = vpack.c.b16 %v272, %v271
    %v310 = vpack.c.b16 %v274, %v273
    %v311 = vpack.c.b16 %v276, %v275
    %v312 = vpack.c.b16 %v278, %v277
    %v313 = vpack.c.b16 %v280, %v279
    %v314 = vpack.c.b16 %v282, %v281
    %v363 = vunpack.c.l.b16 %v139
    %v364 = vunpack.c.h.b16 %v139
    %v365 = vunpack.c.l.b16 %v140
    %v366 = vunpack.c.h.b16 %v140
    %v367 = vunpack.c.l.b16 %v141
    %v368 = vunpack.c.h.b16 %v141
    %v369 = vunpack.c.l.b16 %v142
    %v370 = vunpack.c.h.b16 %v142
    %v371 = vunpack.c.l.b16 %v143
    %v372 = vunpack.c.h.b16 %v143
    %v373 = vunpack.c.l.b16 %v144
    %v374 = vunpack.c.h.b16 %v144
    %v375 = vunpack.c.l.b16 %v145
    %v376 = vunpack.c.h.b16 %v145
    %v377 = vunpack.c.l.b16 %v146
    %v378 = vunpack.c.h.b16 %v146
    %v379 = vunpack.c.l.b16 %v147
    %v380 = vunpack.c.h.b16 %v147
    %v381 = vunpack.c.l.b16 %v148
    %v382 = vunpack.c.h.b16 %v148
    %v383 = vunpack.c.l.b16 %v149
    %v384 = vunpack.c.h.b16 %v149
    %v385 = vunpack.c.l.b16 %v150
    %v386 = vunpack.c.h.b16 %v150
    %v387 = vunpack.c.l.b16 %v151
    %v388 = vunpack.c.h.b16 %v151
    %v389 = vunpack.c.l.b16 %v152
    %v390 = vunpack.c.h.b16 %v152
    %v391 = vunpack.c.l.b16 %v153
    %v392 = vunpack.c.h.b16 %v153
    %v393 = vunpack.c.l.b16 %v154
    %v394 = vunpack.c.h.b16 %v154
    %v395 = vpack.c.b16 %v365, %v363
    %v396 = vpack.c.b16 %v366, %v364
    %v397 = vpack.c.b16 %v369, %v367
    %v398 = vpack.c.b16 %v370, %v368
    %v399 = vpack.c.b16 %v373, %v371
    %v400 = vpack.c.b16 %v374, %v372
    %v401 = vpack.c.b16 %v377, %v375
    %v402 = vpack.c.b16 %v378, %v376
    %v403 = vpack.c.b16 %v381, %v379
    %v404 = vpack.c.b16 %v382, %v380
    %v405 = vpack.c.b16 %v385, %v383
    %v406 = vpack.c.b16 %v386, %v384
    %v407 = vpack.c.b16 %v389, %v387
    %v408 = vpack.c.b16 %v390, %v388
    %v409 = vpack.c.b16 %v393, %v391
    %v410 = vpack.c.b16 %v394, %v392
    %427 = vmatprep.subr.bf16.mxu0 %v396
    %428 = vmatpush1.bf16.msra.mxu0 %v395
    %429 = vmatprep.subr.bf16.mxu0 %v398
    %430 = vmatpush1.bf16.msra.mxu0 %v397
    %431 = vmatprep.subr.bf16.mxu0 %v400
    %432 = vmatpush1.bf16.msra.mxu0 %v399
    %433 = vmatprep.subr.bf16.mxu0 %v402
    %434 = vmatpush1.bf16.msra.mxu0 %v401
    %435 = vmatprep.subr.bf16.mxu0 %v404
    %436 = vmatpush1.bf16.msra.mxu0 %v403
    %437 = vmatprep.subr.bf16.mxu0 %v406
    %438 = vmatpush1.bf16.msra.mxu0 %v405
    %439 = vmatprep.subr.bf16.mxu0 %v408
    %440 = vmatpush1.bf16.msra.mxu0 %v407
    %441 = vmatprep.subr.bf16.mxu0 %v410
    %442 = vmatpush1.bf16.msra.mxu0 %v409
    %443 = vmatprep.subr.bf16.mxu0 0
    %444 = vmatpush1.bf16.msra.mxu0 0
    %445 = vmatprep.subr.bf16.mxu0 0
    %446 = vmatpush1.bf16.msra.mxu0 0
    %447 = vmatprep.subr.bf16.mxu0 0
    %448 = vmatpush1.bf16.msra.mxu0 0
    %449 = vmatprep.subr.bf16.mxu0 0
    %450 = vmatpush1.bf16.msra.mxu0 0
    %451 = vmatprep.subr.bf16.mxu0 0
    %452 = vmatpush1.bf16.msra.mxu0 0
    %453 = vmatprep.subr.bf16.mxu0 0
    %454 = vmatpush1.bf16.msra.mxu0 0
    %455 = vmatprep.subr.bf16.mxu0 0
    %456 = vmatpush1.bf16.msra.mxu0 0
    %457 = vmatprep.subr.bf16.mxu0 0
    %458 = vmatpush1.bf16.msra.mxu0 0
    %459 = vmatprep.mubr.bf16.mxu0 0
    %460 = vmatmul.mubr.bf16.gmra.mrb[0].mxu0 %v283
    %v461 = vpop.f32.mrb[0].mxu0
    %v462 = vadd.f32 0.0, %v461
    %v463 = vpop.f32.mrb[0].mxu0
    %v464 = vadd.f32 0.0, %v463
    %v465 = vpop.f32.mrb[0].mxu0
    %v466 = vadd.f32 0.0, %v465
    %v467 = vpop.f32.mrb[0].mxu0
    %v468 = vadd.f32 0.0, %v467
    %469 = vmatprep.mubr.bf16.mxu0 0
    %470 = vmatmul.mubr.bf16.gmra.mrb[0].mxu0 %v284
    %v471 = vpop.f32.mrb[0].mxu0
    %v472 = vadd.f32 0.0, %v471
    %v473 = vpop.f32.mrb[0].mxu0
    %v474 = vadd.f32 0.0, %v473
    %v475 = vpop.f32.mrb[0].mxu0
    %v476 = vadd.f32 0.0, %v475
    %v477 = vpop.f32.mrb[0].mxu0
    %v478 = vadd.f32 0.0, %v477
    %479 = vmatprep.mubr.bf16.mxu0 0
    %480 = vmatmul.mubr.bf16.gmra.mrb[0].mxu0 %v285
    %v481 = vpop.f32.mrb[0].mxu0
    %v482 = vadd.f32 0.0, %v481
    %v483 = vpop.f32.mrb[0].mxu0
    %v484 = vadd.f32 0.0, %v483
    %v485 = vpop.f32.mrb[0].mxu0
    %v486 = vadd.f32 0.0, %v485
    %v487 = vpop.f32.mrb[0].mxu0
    %v488 = vadd.f32 0.0, %v487
    %489 = vmatprep.mubr.bf16.mxu0 0
    %490 = vmatmul.mubr.bf16.gmra.mrb[0].mxu0 %v286
    %v491 = vpop.f32.mrb[0].mxu0
    %v492 = vadd.f32 0.0, %v491
    %v493 = vpop.f32.mrb[0].mxu0
    %v494 = vadd.f32 0.0, %v493
    %v495 = vpop.f32.mrb[0].mxu0
    %v496 = vadd.f32 0.0, %v495
    %v497 = vpop.f32.mrb[0].mxu0
    %v498 = vadd.f32 0.0, %v497
    %499 = vmatprep.mubr.bf16.mxu0 0
    %500 = vmatmul.mubr.bf16.gmra.mrb[0].mxu0 %v287
    %v501 = vpop.f32.mrb[0].mxu0
    %v502 = vadd.f32 0.0, %v501
    %v503 = vpop.f32.mrb[0].mxu0
    %v504 = vadd.f32 0.0, %v503
    %v505 = vpop.f32.mrb[0].mxu0
    %v506 = vadd.f32 0.0, %v505
    %v507 = vpop.f32.mrb[0].mxu0
    %v508 = vadd.f32 0.0, %v507
    %509 = vmatprep.mubr.bf16.mxu0 0
    %510 = vmatmul.mubr.bf16.gmra.mrb[0].mxu0 %v288
    %v511 = vpop.f32.mrb[0].mxu0
    %v512 = vadd.f32 0.0, %v511
    %v513 = vpop.f32.mrb[0].mxu0
    %v514 = vadd.f32 0.0, %v513
    %v515 = vpop.f32.mrb[0].mxu0
    %v516 = vadd.f32 0.0, %v515
    %v517 = vpop.f32.mrb[0].mxu0
    %v518 = vadd.f32 0.0, %v517
    %519 = vmatprep.mubr.bf16.mxu0 0
    %520 = vmatmul.mubr.bf16.gmra.mrb[0].mxu0 %v289
    %v521 = vpop.f32.mrb[0].mxu0
    %v522 = vadd.f32 0.0, %v521
    %v523 = vpop.f32.mrb[0].mxu0
    %v524 = vadd.f32 0.0, %v523
    %v525 = vpop.f32.mrb[0].mxu0
    %v526 = vadd.f32 0.0, %v525
    %v527 = vpop.f32.mrb[0].mxu0
    %v528 = vadd.f32 0.0, %v527
    %529 = vmatprep.mubr.bf16.mxu0 0
    %530 = vmatmul.mubr.bf16.gmra.mrb[0].mxu0 %v290
    %v531 = vpop.f32.mrb[0].mxu0
    %v532 = vadd.f32 0.0, %v531
    %v533 = vpop.f32.mrb[0].mxu0
    %v534 = vadd.f32 0.0, %v533
    %v535 = vpop.f32.mrb[0].mxu0
    %v536 = vadd.f32 0.0, %v535
    %v537 = vpop.f32.mrb[0].mxu0
    %v538 = vadd.f32 0.0, %v537
    %539 = vmatprep.mubr.bf16.mxu0 0
    %540 = vmatmul.mubr.bf16.gmra.mrb[0].mxu0 %v291
    %v541 = vpop.f32.mrb[0].mxu0
    %v542 = vadd.f32 0.0, %v541
    %v543 = vpop.f32.mrb[0].mxu0
    %v544 = vadd.f32 0.0, %v543
    %v545 = vpop.f32.mrb[0].mxu0
    %v546 = vadd.f32 0.0, %v545
    %v547 = vpop.f32.mrb[0].mxu0
    %v548 = vadd.f32 0.0, %v547
    %549 = vmatprep.mubr.bf16.mxu0 0
    %550 = vmatmul.mubr.bf16.gmra.mrb[0].mxu0 %v292
    %v551 = vpop.f32.mrb[0].mxu0
    %v552 = vadd.f32 0.0, %v551
    %v553 = vpop.f32.mrb[0].mxu0
    %v554 = vadd.f32 0.0, %v553
    %v555 = vpop.f32.mrb[0].mxu0
    %v556 = vadd.f32 0.0, %v555
    %v557 = vpop.f32.mrb[0].mxu0
    %v558 = vadd.f32 0.0, %v557
    %559 = vmatprep.mubr.bf16.mxu0 0
    %560 = vmatmul.mubr.bf16.gmra.mrb[0].mxu0 %v293
    %v561 = vpop.f32.mrb[0].mxu0
    %v562 = vadd.f32 0.0, %v561
    %v563 = vpop.f32.mrb[0].mxu0
    %v564 = vadd.f32 0.0, %v563
    %v565 = vpop.f32.mrb[0].mxu0
    %v566 = vadd.f32 0.0, %v565
    %v567 = vpop.f32.mrb[0].mxu0
    %v568 = vadd.f32 0.0, %v567
    %569 = vmatprep.mubr.bf16.mxu0 0
    %570 = vmatmul.mubr.bf16.gmra.mrb[0].mxu0 %v294
    %v571 = vpop.f32.mrb[0].mxu0
    %v572 = vadd.f32 0.0, %v571
    %v573 = vpop.f32.mrb[0].mxu0
    %v574 = vadd.f32 0.0, %v573
    %v575 = vpop.f32.mrb[0].mxu0
    %v576 = vadd.f32 0.0, %v575
    %v577 = vpop.f32.mrb[0].mxu0
    %v578 = vadd.f32 0.0, %v577
    %579 = vmatprep.mubr.bf16.mxu0 0
    %580 = vmatmul.mubr.bf16.gmra.mrb[0].mxu0 %v295
    %v581 = vpop.f32.mrb[0].mxu0
    %v582 = vadd.f32 0.0, %v581
    %v583 = vpop.f32.mrb[0].mxu0
    %v584 = vadd.f32 0.0, %v583
    %v585 = vpop.f32.mrb[0].mxu0
    %v586 = vadd.f32 0.0, %v585
    %v587 = vpop.f32.mrb[0].mxu0
    %v588 = vadd.f32 0.0, %v587
    %589 = vmatprep.mubr.bf16.mxu0 0
    %590 = vmatmul.mubr.bf16.gmra.mrb[0].mxu0 %v296
    %v591 = vpop.f32.mrb[0].mxu0
    %v592 = vadd.f32 0.0, %v591
    %v593 = vpop.f32.mrb[0].mxu0
    %v594 = vadd.f32 0.0, %v593
    %v595 = vpop.f32.mrb[0].mxu0
    %v596 = vadd.f32 0.0, %v595
    %v597 = vpop.f32.mrb[0].mxu0
    %v598 = vadd.f32 0.0, %v597
    %599 = vmatprep.mubr.bf16.mxu0 0
    %600 = vmatmul.mubr.bf16.gmra.mrb[0].mxu0 %v297
    %v601 = vpop.f32.mrb[0].mxu0
    %v602 = vadd.f32 0.0, %v601
    %v603 = vpop.f32.mrb[0].mxu0
    %v604 = vadd.f32 0.0, %v603
    %v605 = vpop.f32.mrb[0].mxu0
    %v606 = vadd.f32 0.0, %v605
    %v607 = vpop.f32.mrb[0].mxu0
    %v608 = vadd.f32 0.0, %v607
    %609 = vmatprep.mubr.bf16.mxu0 0
    %610 = vmatmul.mubr.bf16.gmra.mrb[0].mxu0 %v298
    %v611 = vpop.f32.mrb[0].mxu0
    %v612 = vadd.f32 0.0, %v611
    %v613 = vpop.f32.mrb[0].mxu0
    %v614 = vadd.f32 0.0, %v613
    %v615 = vpop.f32.mrb[0].mxu0
    %v616 = vadd.f32 0.0, %v615
    %v617 = vpop.f32.mrb[0].mxu0
    %v618 = vadd.f32 0.0, %v617
    %619 = vmatprep.mubr.bf16.mxu0 0
    %620 = vmatmul.mubr.bf16.gmra.mrb[0].mxu0 %v299
    %v621 = vpop.f32.mrb[0].mxu0
    %v622 = vadd.f32 0.0, %v621
    %v623 = vpop.f32.mrb[0].mxu0
    %v624 = vadd.f32 0.0, %v623
    %v625 = vpop.f32.mrb[0].mxu0
    %v626 = vadd.f32 0.0, %v625
    %v627 = vpop.f32.mrb[0].mxu0
    %v628 = vadd.f32 0.0, %v627
    %629 = vmatprep.mubr.bf16.mxu0 0
    %630 = vmatmul.mubr.bf16.gmra.mrb[0].mxu0 %v300
    %v631 = vpop.f32.mrb[0].mxu0
    %v632 = vadd.f32 0.0, %v631
    %v633 = vpop.f32.mrb[0].mxu0
    %v634 = vadd.f32 0.0, %v633
    %v635 = vpop.f32.mrb[0].mxu0
    %v636 = vadd.f32 0.0, %v635
    %v637 = vpop.f32.mrb[0].mxu0
    %v638 = vadd.f32 0.0, %v637
    %639 = vmatprep.mubr.bf16.mxu0 0
    %640 = vmatmul.mubr.bf16.gmra.mrb[0].mxu0 %v301
    %v641 = vpop.f32.mrb[0].mxu0
    %v642 = vadd.f32 0.0, %v641
    %v643 = vpop.f32.mrb[0].mxu0
    %v644 = vadd.f32 0.0, %v643
    %v645 = vpop.f32.mrb[0].mxu0
    %v646 = vadd.f32 0.0, %v645
    %v647 = vpop.f32.mrb[0].mxu0
    %v648 = vadd.f32 0.0, %v647
    %649 = vmatprep.mubr.bf16.mxu0 0
    %650 = vmatmul.mubr.bf16.gmra.mrb[0].mxu0 %v302
    %v651 = vpop.f32.mrb[0].mxu0
    %v652 = vadd.f32 0.0, %v651
    %v653 = vpop.f32.mrb[0].mxu0
    %v654 = vadd.f32 0.0, %v653
    %v655 = vpop.f32.mrb[0].mxu0
    %v656 = vadd.f32 0.0, %v655
    %v657 = vpop.f32.mrb[0].mxu0
    %v658 = vadd.f32 0.0, %v657
    %659 = vmatprep.mubr.bf16.mxu0 0
    %660 = vmatmul.mubr.bf16.gmra.mrb[0].mxu0 %v303
    %v661 = vpop.f32.mrb[0].mxu0
    %v662 = vadd.f32 0.0, %v661
    %v663 = vpop.f32.mrb[0].mxu0
    %v664 = vadd.f32 0.0, %v663
    %v665 = vpop.f32.mrb[0].mxu0
    %v666 = vadd.f32 0.0, %v665
    %v667 = vpop.f32.mrb[0].mxu0
    %v668 = vadd.f32 0.0, %v667
    %669 = vmatprep.mubr.bf16.mxu0 0
    %670 = vmatmul.mubr.bf16.gmra.mrb[0].mxu0 %v304
    %v671 = vpop.f32.mrb[0].mxu0
    %v672 = vadd.f32 0.0, %v671
    %v673 = vpop.f32.mrb[0].mxu0
    %v674 = vadd.f32 0.0, %v673
    %v675 = vpop.f32.mrb[0].mxu0
    %v676 = vadd.f32 0.0, %v675
    %v677 = vpop.f32.mrb[0].mxu0
    %v678 = vadd.f32 0.0, %v677
    %679 = vmatprep.mubr.bf16.mxu0 0
    %680 = vmatmul.mubr.bf16.gmra.mrb[0].mxu0 %v305
    %v681 = vpop.f32.mrb[0].mxu0
    %v682 = vadd.f32 0.0, %v681
    %v683 = vpop.f32.mrb[0].mxu0
    %v684 = vadd.f32 0.0, %v683
    %v685 = vpop.f32.mrb[0].mxu0
    %v686 = vadd.f32 0.0, %v685
    %v687 = vpop.f32.mrb[0].mxu0
    %v688 = vadd.f32 0.0, %v687
    %689 = vmatprep.mubr.bf16.mxu0 0
    %690 = vmatmul.mubr.bf16.gmra.mrb[0].mxu0 %v306
    %v691 = vpop.f32.mrb[0].mxu0
    %v692 = vadd.f32 0.0, %v691
    %v693 = vpop.f32.mrb[0].mxu0
    %v694 = vadd.f32 0.0, %v693
    %v695 = vpop.f32.mrb[0].mxu0
    %v696 = vadd.f32 0.0, %v695
    %v697 = vpop.f32.mrb[0].mxu0
    %v698 = vadd.f32 0.0, %v697
    %699 = vmatprep.mubr.bf16.mxu0 0
    %700 = vmatmul.mubr.bf16.gmra.mrb[0].mxu0 %v307
    %v701 = vpop.f32.mrb[0].mxu0
    %v702 = vadd.f32 0.0, %v701
    %v703 = vpop.f32.mrb[0].mxu0
    %v704 = vadd.f32 0.0, %v703
    %v705 = vpop.f32.mrb[0].mxu0
    %v706 = vadd.f32 0.0, %v705
    %v707 = vpop.f32.mrb[0].mxu0
    %v708 = vadd.f32 0.0, %v707
    %709 = vmatprep.mubr.bf16.mxu0 0
    %710 = vmatmul.mubr.bf16.gmra.mrb[0].mxu0 %v308
    %v711 = vpop.f32.mrb[0].mxu0
    %v712 = vadd.f32 0.0, %v711
    %v713 = vpop.f32.mrb[0].mxu0
    %v714 = vadd.f32 0.0, %v713
    %v715 = vpop.f32.mrb[0].mxu0
    %v716 = vadd.f32 0.0, %v715
    %v717 = vpop.f32.mrb[0].mxu0
    %v718 = vadd.f32 0.0, %v717
    %719 = vmatprep.mubr.bf16.mxu0 0
    %720 = vmatmul.mubr.bf16.gmra.mrb[0].mxu0 %v309
    %v721 = vpop.f32.mrb[0].mxu0
    %v722 = vadd.f32 0.0, %v721
    %v723 = vpop.f32.mrb[0].mxu0
    %v724 = vadd.f32 0.0, %v723
    %v725 = vpop.f32.mrb[0].mxu0
    %v726 = vadd.f32 0.0, %v725
    %v727 = vpop.f32.mrb[0].mxu0
    %v728 = vadd.f32 0.0, %v727
    %729 = vmatprep.mubr.bf16.mxu0 0
    %730 = vmatmul.mubr.bf16.gmra.mrb[0].mxu0 %v310
    %v731 = vpop.f32.mrb[0].mxu0
    %v732 = vadd.f32 0.0, %v731
    %v733 = vpop.f32.mrb[0].mxu0
    %v734 = vadd.f32 0.0, %v733
    %v735 = vpop.f32.mrb[0].mxu0
    %v736 = vadd.f32 0.0, %v735
    %v737 = vpop.f32.mrb[0].mxu0
    %v738 = vadd.f32 0.0, %v737
    %739 = vmatprep.mubr.bf16.mxu0 0
    %740 = vmatmul.mubr.bf16.gmra.mrb[0].mxu0 %v311
    %v741 = vpop.f32.mrb[0].mxu0
    %v742 = vadd.f32 0.0, %v741
    %v743 = vpop.f32.mrb[0].mxu0
    %v744 = vadd.f32 0.0, %v743
    %v745 = vpop.f32.mrb[0].mxu0
    %v746 = vadd.f32 0.0, %v745
    %v747 = vpop.f32.mrb[0].mxu0
    %v748 = vadd.f32 0.0, %v747
    %749 = vmatprep.mubr.bf16.mxu0 0
    %750 = vmatmul.mubr.bf16.gmra.mrb[0].mxu0 %v312
    %v751 = vpop.f32.mrb[0].mxu0
    %v752 = vadd.f32 0.0, %v751
    %v753 = vpop.f32.mrb[0].mxu0
    %v754 = vadd.f32 0.0, %v753
    %v755 = vpop.f32.mrb[0].mxu0
    %v756 = vadd.f32 0.0, %v755
    %v757 = vpop.f32.mrb[0].mxu0
    %v758 = vadd.f32 0.0, %v757
    %759 = vmatprep.mubr.bf16.mxu0 0
    %760 = vmatmul.mubr.bf16.gmra.mrb[0].mxu0 %v313
    %v761 = vpop.f32.mrb[0].mxu0
    %v762 = vadd.f32 0.0, %v761
    %v763 = vpop.f32.mrb[0].mxu0
    %v764 = vadd.f32 0.0, %v763
    %v765 = vpop.f32.mrb[0].mxu0
    %v766 = vadd.f32 0.0, %v765
    %v767 = vpop.f32.mrb[0].mxu0
    %v768 = vadd.f32 0.0, %v767
    %769 = vmatprep.mubr.bf16.mxu0 0
    %770 = vmatmul.mubr.bf16.gmra.mrb[0].mxu0 %v314
    %v771 = vpop.f32.mrb[0].mxu0
    %v772 = vadd.f32 0.0, %v771
    %v773 = vpop.f32.mrb[0].mxu0
    %v774 = vadd.f32 0.0, %v773
    %v775 = vpop.f32.mrb[0].mxu0
    %v776 = vadd.f32 0.0, %v775
    %v777 = vpop.f32.mrb[0].mxu0
    %v778 = vadd.f32 0.0, %v777
    %779 = vdwg.mxu0
    %780 = vst [vmem:[#allocation2] sm:$0xff] %v464
    %781 = vst [vmem:[#allocation2 + $0x8] sm:$0xff] %v468
    %782 = vst [vmem:[#allocation2 + $0x10] sm:$0xff] %v474
    %783 = vst [vmem:[#allocation2 + $0x18] sm:$0xff] %v478
    %784 = vst [vmem:[#allocation2 + $0x20] sm:$0xff] %v484
    %785 = vst [vmem:[#allocation2 + $0x28] sm:$0xff] %v488
    %786 = vst [vmem:[#allocation2 + $0x30] sm:$0xff] %v494
    %787 = vst [vmem:[#allocation2 + $0x38] sm:$0xff] %v498
    %788 = vst [vmem:[#allocation2 + $0x40] sm:$0xff] %v504
    %789 = vst [vmem:[#allocation2 + $0x48] sm:$0xff] %v508
    %790 = vst [vmem:[#allocation2 + $0x50] sm:$0xff] %v514
    %791 = vst [vmem:[#allocation2 + $0x58] sm:$0xff] %v518
    %792 = vst [vmem:[#allocation2 + $0x60] sm:$0xff] %v524
    %793 = vst [vmem:[#allocation2 + $0x68] sm:$0xff] %v528
    %794 = vst [vmem:[#allocation2 + $0x70] sm:$0xff] %v534
    %795 = vst [vmem:[#allocation2 + $0x78] sm:$0xff] %v538
    %796 = vst [vmem:[#allocation2 + $0x80] sm:$0xff] %v544
    %797 = vst [vmem:[#allocation2 + $0x88] sm:$0xff] %v548
    %798 = vst [vmem:[#allocation2 + $0x90] sm:$0xff] %v554
    %799 = vst [vmem:[#allocation2 + $0x98] sm:$0xff] %v558
    %800 = vst [vmem:[#allocation2 + $0xa0] sm:$0xff] %v564
    %801 = vst [vmem:[#allocation2 + $0xa8] sm:$0xff] %v568
    %802 = vst [vmem:[#allocation2 + $0xb0] sm:$0xff] %v574
    %803 = vst [vmem:[#allocation2 + $0xb8] sm:$0xff] %v578
    %804 = vst [vmem:[#allocation2 + $0xc0] sm:$0xff] %v584
    %805 = vst [vmem:[#allocation2 + $0xc8] sm:$0xff] %v588
    %806 = vst [vmem:[#allocation2 + $0xd0] sm:$0xff] %v594
    %807 = vst [vmem:[#allocation2 + $0xd8] sm:$0xff] %v598
    %808 = vst [vmem:[#allocation2 + $0xe0] sm:$0xff] %v604
    %809 = vst [vmem:[#allocation2 + $0xe8] sm:$0xff] %v608
    %810 = vst [vmem:[#allocation2 + $0xf0] sm:$0xff] %v614
    %811 = vst [vmem:[#allocation2 + $0xf8] sm:$0xff] %v618
    %812 = vst [vmem:[#allocation2 + $0x100] sm:$0xff] %v624
    %813 = vst [vmem:[#allocation2 + $0x108] sm:$0xff] %v628
    %814 = vst [vmem:[#allocation2 + $0x110] sm:$0xff] %v634
    %815 = vst [vmem:[#allocation2 + $0x118] sm:$0xff] %v638
    %816 = vst [vmem:[#allocation2 + $0x120] sm:$0xff] %v644
    %817 = vst [vmem:[#allocation2 + $0x128] sm:$0xff] %v648
    %818 = vst [vmem:[#allocation2 + $0x130] sm:$0xff] %v654
    %819 = vst [vmem:[#allocation2 + $0x138] sm:$0xff] %v658
    %820 = vst [vmem:[#allocation2 + $0x140] sm:$0xff] %v664
    %821 = vst [vmem:[#allocation2 + $0x148] sm:$0xff] %v668
    %822 = vst [vmem:[#allocation2 + $0x150] sm:$0xff] %v674
    %823 = vst [vmem:[#allocation2 + $0x158] sm:$0xff] %v678
    %824 = vst [vmem:[#allocation2 + $0x160] sm:$0xff] %v684
    %825 = vst [vmem:[#allocation2 + $0x168] sm:$0xff] %v688
    %826 = vst [vmem:[#allocation2 + $0x170] sm:$0xff] %v694
    %827 = vst [vmem:[#allocation2 + $0x178] sm:$0xff] %v698
    %828 = vst [vmem:[#allocation2 + $0x180] sm:$0xff] %v704
    %829 = vst [vmem:[#allocation2 + $0x188] sm:$0xff] %v708
    %830 = vst [vmem:[#allocation2 + $0x190] sm:$0xff] %v714
    %831 = vst [vmem:[#allocation2 + $0x198] sm:$0xff] %v718
    %832 = vst [vmem:[#allocation2 + $0x1a0] sm:$0xff] %v724
    %833 = vst [vmem:[#allocation2 + $0x1a8] sm:$0xff] %v728
    %834 = vst [vmem:[#allocation2 + $0x1b0] sm:$0xff] %v734
    %835 = vst [vmem:[#allocation2 + $0x1b8] sm:$0xff] %v738
    %836 = vst [vmem:[#allocation2 + $0x1c0] sm:$0xff] %v744
    %837 = vst [vmem:[#allocation2 + $0x1c8] sm:$0xff] %v748
    %838 = vst [vmem:[#allocation2 + $0x1d0] sm:$0xff] %v754
    %839 = vst [vmem:[#allocation2 + $0x1d8] sm:$0xff] %v758
    %840 = vst [vmem:[#allocation2 + $0x1e0] sm:$0xff] %v764
    %841 = vst [vmem:[#allocation2 + $0x1e8] sm:$0xff] %v768
    %842 = vst [vmem:[#allocation2 + $0x1f0] sm:$0xff] %v774
    %843 = vst [vmem:[#allocation2 + $0x1f8] sm:$0xff] %v778
    %v844 = vadd.f32 %v462, %v466
    %v845 = vadd.f32 %v844, %v472
    %v846 = vadd.f32 %v845, %v476
    %v847 = vadd.f32 %v846, %v482
    %v848 = vadd.f32 %v847, %v486
    %v849 = vadd.f32 %v848, %v492
    %v850 = vadd.f32 %v849, %v496
    %v851 = vadd.f32 %v850, %v502
    %v852 = vadd.f32 %v851, %v506
    %v853 = vadd.f32 %v852, %v512
    %v854 = vadd.f32 %v853, %v516
    %v855 = vadd.f32 %v854, %v522
    %v856 = vadd.f32 %v855, %v526
    %v857 = vadd.f32 %v856, %v532
    %v858 = vadd.f32 %v857, %v536
    %v859 = vadd.f32 %v858, %v542
    %v860 = vadd.f32 %v859, %v546
    %v861 = vadd.f32 %v860, %v552
    %v862 = vadd.f32 %v861, %v556
    %v863 = vadd.f32 %v862, %v562
    %v864 = vadd.f32 %v863, %v566
    %v865 = vadd.f32 %v864, %v572
    %v866 = vadd.f32 %v865, %v576
    %v867 = vadd.f32 %v866, %v582
    %v868 = vadd.f32 %v867, %v586
    %v869 = vadd.f32 %v868, %v592
    %v870 = vadd.f32 %v869, %v596
    %v871 = vadd.f32 %v870, %v602
    %v872 = vadd.f32 %v871, %v606
    %v873 = vadd.f32 %v872, %v612
    %v874 = vadd.f32 %v873, %v616
    %v875 = vadd.f32 %v874, %v622
    %v876 = vadd.f32 %v875, %v626
    %v877 = vadd.f32 %v876, %v632
    %v878 = vadd.f32 %v877, %v636
    %v879 = vadd.f32 %v878, %v642
    %v880 = vadd.f32 %v879, %v646
    %v881 = vadd.f32 %v880, %v652
    %v882 = vadd.f32 %v881, %v656
    %v883 = vadd.f32 %v882, %v662
    %v884 = vadd.f32 %v883, %v666
    %v885 = vadd.f32 %v884, %v672
    %v886 = vadd.f32 %v885, %v676
    %v887 = vadd.f32 %v886, %v682
    %v888 = vadd.f32 %v887, %v686
    %v889 = vadd.f32 %v888, %v692
    %v890 = vadd.f32 %v889, %v696
    %v891 = vadd.f32 %v890, %v702
    %v892 = vadd.f32 %v891, %v706
    %v893 = vadd.f32 %v892, %v712
    %v894 = vadd.f32 %v893, %v716
    %v895 = vadd.f32 %v894, %v722
    %v896 = vadd.f32 %v895, %v726
    %v897 = vadd.f32 %v896, %v732
    %v898 = vadd.f32 %v897, %v736
    %v899 = vadd.f32 %v898, %v742
    %v900 = vadd.f32 %v899, %v746
    %v901 = vadd.f32 %v900, %v752
    %v902 = vadd.f32 %v901, %v756
    %v903 = vadd.f32 %v902, %v762
    %v904 = vadd.f32 %v903, %v766
    %v905 = vadd.f32 %v904, %v772
    %v906 = vadd.f32 %v905, %v776
    %v907 = vrot.slane %v906, 4
    %v908 = vadd.f32 %v906, %v907
    %v909 = vrot.slane %v908, 2
    %v910 = vadd.f32 %v908, %v909
    %v911 = vrot.slane %v910, 1
    %v912 = vadd.f32 %v910, %v911
    %v913 = vmul.f32 %v462, %v462
    %v914 = vmul.f32 %v466, %v466
    %v915 = vmul.f32 %v472, %v472
    %v916 = vmul.f32 %v476, %v476
    %v917 = vmul.f32 %v482, %v482
    %v918 = vmul.f32 %v486, %v486
    %v919 = vmul.f32 %v492, %v492
    %v920 = vmul.f32 %v496, %v496
    %v921 = vmul.f32 %v502, %v502
    %v922 = vmul.f32 %v506, %v506
    %v923 = vmul.f32 %v512, %v512
    %v924 = vmul.f32 %v516, %v516
    %v925 = vmul.f32 %v522, %v522
    %v926 = vmul.f32 %v526, %v526
    %v927 = vmul.f32 %v532, %v532
    %v928 = vmul.f32 %v536, %v536
    %v929 = vmul.f32 %v542, %v542
    %v930 = vmul.f32 %v546, %v546
    %v931 = vmul.f32 %v552, %v552
    %v932 = vmul.f32 %v556, %v556
    %v933 = vmul.f32 %v562, %v562
    %v934 = vmul.f32 %v566, %v566
    %v935 = vmul.f32 %v572, %v572
    %v936 = vmul.f32 %v576, %v576
    %v937 = vmul.f32 %v582, %v582
    %v938 = vmul.f32 %v586, %v586
    %v939 = vmul.f32 %v592, %v592
    %v940 = vmul.f32 %v596, %v596
    %v941 = vmul.f32 %v602, %v602
    %v942 = vmul.f32 %v606, %v606
    %v943 = vmul.f32 %v612, %v612
    %v944 = vmul.f32 %v616, %v616
    %v945 = vmul.f32 %v622, %v622
    %v946 = vmul.f32 %v626, %v626
    %v947 = vmul.f32 %v632, %v632
    %v948 = vmul.f32 %v636, %v636
    %v949 = vmul.f32 %v642, %v642
    %v950 = vmul.f32 %v646, %v646
    %v951 = vmul.f32 %v652, %v652
    %v952 = vmul.f32 %v656, %v656
    %v953 = vmul.f32 %v662, %v662
    %v954 = vmul.f32 %v666, %v666
    %v955 = vmul.f32 %v672, %v672
    %v956 = vmul.f32 %v676, %v676
    %v957 = vmul.f32 %v682, %v682
    %v958 = vmul.f32 %v686, %v686
    %v959 = vmul.f32 %v692, %v692
    %v960 = vmul.f32 %v696, %v696
    %v961 = vmul.f32 %v702, %v702
    %v962 = vmul.f32 %v706, %v706
    %v963 = vmul.f32 %v712, %v712
    %v964 = vmul.f32 %v716, %v716
    %v965 = vmul.f32 %v722, %v722
    %v966 = vmul.f32 %v726, %v726
    %v967 = vmul.f32 %v732, %v732
    %v968 = vmul.f32 %v736, %v736
    %v969 = vmul.f32 %v742, %v742
    %v970 = vmul.f32 %v746, %v746
    %v971 = vmul.f32 %v752, %v752
    %v972 = vmul.f32 %v756, %v756
    %v973 = vmul.f32 %v762, %v762
    %v974 = vmul.f32 %v766, %v766
    %v975 = vmul.f32 %v772, %v772
    %v976 = vmul.f32 %v776, %v776
    %v977 = vadd.f32 %v913, %v914
    %v978 = vadd.f32 %v977, %v915
    %v979 = vadd.f32 %v978, %v916
    %v980 = vadd.f32 %v979, %v917
    %v981 = vadd.f32 %v980, %v918
    %v982 = vadd.f32 %v981, %v919
    %v983 = vadd.f32 %v982, %v920
    %v984 = vadd.f32 %v983, %v921
    %v985 = vadd.f32 %v984, %v922
    %v986 = vadd.f32 %v985, %v923
    %v987 = vadd.f32 %v986, %v924
    %v988 = vadd.f32 %v987, %v925
    %v989 = vadd.f32 %v988, %v926
    %v990 = vadd.f32 %v989, %v927
    %v991 = vadd.f32 %v990, %v928
    %v992 = vadd.f32 %v991, %v929
    %v993 = vadd.f32 %v992, %v930
    %v994 = vadd.f32 %v993, %v931
    %v995 = vadd.f32 %v994, %v932
    %v996 = vadd.f32 %v995, %v933
    %v997 = vadd.f32 %v996, %v934
    %v998 = vadd.f32 %v997, %v935
    %v999 = vadd.f32 %v998, %v936
    %v1000 = vadd.f32 %v999, %v937
    %v1001 = vadd.f32 %v1000, %v938
    %v1002 = vadd.f32 %v1001, %v939
    %v1003 = vadd.f32 %v1002, %v940
    %v1004 = vadd.f32 %v1003, %v941
    %v1005 = vadd.f32 %v1004, %v942
    %v1006 = vadd.f32 %v1005, %v943
    %v1007 = vadd.f32 %v1006, %v944
    %v1008 = vadd.f32 %v1007, %v945
    %v1009 = vadd.f32 %v1008, %v946
    %v1010 = vadd.f32 %v1009, %v947
    %v1011 = vadd.f32 %v1010, %v948
    %v1012 = vadd.f32 %v1011, %v949
    %v1013 = vadd.f32 %v1012, %v950
    %v1014 = vadd.f32 %v1013, %v951
    %v1015 = vadd.f32 %v1014, %v952
    %v1016 = vadd.f32 %v1015, %v953
    %v1017 = vadd.f32 %v1016, %v954
    %v1018 = vadd.f32 %v1017, %v955
    %v1019 = vadd.f32 %v1018, %v956
    %v1020 = vadd.f32 %v1019, %v957
    %v1021 = vadd.f32 %v1020, %v958
    %v1022 = vadd.f32 %v1021, %v959
    %v1023 = vadd.f32 %v1022, %v960
    %v1024 = vadd.f32 %v1023, %v961
    %v1025 = vadd.f32 %v1024, %v962
    %v1026 = vadd.f32 %v1025, %v963
    %v1027 = vadd.f32 %v1026, %v964
    %v1028 = vadd.f32 %v1027, %v965
    %v1029 = vadd.f32 %v1028, %v966
    %v1030 = vadd.f32 %v1029, %v967
    %v1031 = vadd.f32 %v1030, %v968
    %v1032 = vadd.f32 %v1031, %v969
    %v1033 = vadd.f32 %v1032, %v970
    %v1034 = vadd.f32 %v1033, %v971
    %v1035 = vadd.f32 %v1034, %v972
    %v1036 = vadd.f32 %v1035, %v973
    %v1037 = vadd.f32 %v1036, %v974
    %v1038 = vadd.f32 %v1037, %v975
    %v1039 = vadd.f32 %v1038, %v976
    %v1040 = vrot.slane %v1039, 4
    %v1041 = vadd.f32 %v1039, %v1040
    %v1042 = vrot.slane %v1041, 2
    %v1043 = vadd.f32 %v1041, %v1042
    %v1044 = vrot.slane %v1043, 1
    %v1045 = vadd.f32 %v1043, %v1044
    %v1046 = vmul.f32 %v912, 0.001953125
    %v1047 = vmul.f32 %v1045, 0.001953125
    %v1048 = vmul.f32 %v1046, %v1046
    %v1049 = vsub.f32 %v1047, %v1048
    %v1050 = vld [vmem:[%s3] sm:$0x1]
    %v1051 = vadd.f32 %v1049, 1e-05
    %v1052 = vrsqrt.pop %v1051
    %v1053 = vmul.f32 %v1050, %v1052
    %v1054 = vld [vmem:[%s4] sm:$0x1]
    %v1055 = vmul.f32 %v1046, %v1053
    %v1056 = vsub.f32 %v1054, %v1055
    %v1058 = vlaneseq
    %v1059 = vshrl.u32 %v1058, 7
    %v1060 = vsub.s32 0, %v1059
    %v1061 = vrot.slane %v1053, %v1060
    %v1063 = vmul.f32 %v462, %v1061
    %v1064 = vmul.f32 %v466, %v1061
    %v1065 = vmul.f32 %v472, %v1061
    %v1066 = vmul.f32 %v476, %v1061
    %v1067 = vmul.f32 %v482, %v1061
    %v1068 = vmul.f32 %v486, %v1061
    %v1069 = vmul.f32 %v492, %v1061
    %v1070 = vmul.f32 %v496, %v1061
    %v1071 = vmul.f32 %v502, %v1061
    %v1072 = vmul.f32 %v506, %v1061
    %v1073 = vmul.f32 %v512, %v1061
    %v1074 = vmul.f32 %v516, %v1061
    %v1075 = vmul.f32 %v522, %v1061
    %v1076 = vmul.f32 %v526, %v1061
    %v1077 = vmul.f32 %v532, %v1061
    %v1078 = vmul.f32 %v536, %v1061
    %v1079 = vmul.f32 %v542, %v1061
    %v1080 = vmul.f32 %v546, %v1061
    %v1081 = vmul.f32 %v552, %v1061
    %v1082 = vmul.f32 %v556, %v1061
    %v1083 = vmul.f32 %v562, %v1061
    %v1084 = vmul.f32 %v566, %v1061
    %v1085 = vmul.f32 %v572, %v1061
    %v1086 = vmul.f32 %v576, %v1061
    %v1087 = vmul.f32 %v582, %v1061
    %v1088 = vmul.f32 %v586, %v1061
    %v1089 = vmul.f32 %v592, %v1061
    %v1090 = vmul.f32 %v596, %v1061
    %v1091 = vmul.f32 %v602, %v1061
    %v1092 = vmul.f32 %v606, %v1061
    %v1093 = vmul.f32 %v612, %v1061
    %v1094 = vmul.f32 %v616, %v1061
    %v1095 = vmul.f32 %v622, %v1061
    %v1096 = vmul.f32 %v626, %v1061
    %v1097 = vmul.f32 %v632, %v1061
    %v1098 = vmul.f32 %v636, %v1061
    %v1099 = vmul.f32 %v642, %v1061
    %v1100 = vmul.f32 %v646, %v1061
    %v1101 = vmul.f32 %v652, %v1061
    %v1102 = vmul.f32 %v656, %v1061
    %v1103 = vmul.f32 %v662, %v1061
    %v1104 = vmul.f32 %v666, %v1061
    %v1105 = vmul.f32 %v672, %v1061
    %v1106 = vmul.f32 %v676, %v1061
    %v1107 = vmul.f32 %v682, %v1061
    %v1108 = vmul.f32 %v686, %v1061
    %v1109 = vmul.f32 %v692, %v1061
    %v1110 = vmul.f32 %v696, %v1061
    %v1111 = vmul.f32 %v702, %v1061
    %v1112 = vmul.f32 %v706, %v1061
    %v1113 = vmul.f32 %v712, %v1061
    %v1114 = vmul.f32 %v716, %v1061
    %v1115 = vmul.f32 %v722, %v1061
    %v1116 = vmul.f32 %v726, %v1061
    %v1117 = vmul.f32 %v732, %v1061
    %v1118 = vmul.f32 %v736, %v1061
    %v1119 = vmul.f32 %v742, %v1061
    %v1120 = vmul.f32 %v746, %v1061
    %v1121 = vmul.f32 %v752, %v1061
    %v1122 = vmul.f32 %v756, %v1061
    %v1123 = vmul.f32 %v762, %v1061
    %v1124 = vmul.f32 %v766, %v1061
    %v1125 = vmul.f32 %v772, %v1061
    %v1126 = vmul.f32 %v776, %v1061
    %v1128 = vlaneseq
    %v1129 = vshrl.u32 %v1128, 7
    %v1130 = vsub.s32 0, %v1129
    %v1131 = vrot.slane %v1056, %v1130
    %v1133 = vadd.f32 %v1063, %v1131
    %v1134 = vadd.f32 %v1064, %v1131
    %v1135 = vadd.f32 %v1065, %v1131
    %v1136 = vadd.f32 %v1066, %v1131
    %v1137 = vadd.f32 %v1067, %v1131
    %v1138 = vadd.f32 %v1068, %v1131
    %v1139 = vadd.f32 %v1069, %v1131
    %v1140 = vadd.f32 %v1070, %v1131
    %v1141 = vadd.f32 %v1071, %v1131
    %v1142 = vadd.f32 %v1072, %v1131
    %v1143 = vadd.f32 %v1073, %v1131
    %v1144 = vadd.f32 %v1074, %v1131
    %v1145 = vadd.f32 %v1075, %v1131
    %v1146 = vadd.f32 %v1076, %v1131
    %v1147 = vadd.f32 %v1077, %v1131
    %v1148 = vadd.f32 %v1078, %v1131
    %v1149 = vadd.f32 %v1079, %v1131
    %v1150 = vadd.f32 %v1080, %v1131
    %v1151 = vadd.f32 %v1081, %v1131
    %v1152 = vadd.f32 %v1082, %v1131
    %v1153 = vadd.f32 %v1083, %v1131
    %v1154 = vadd.f32 %v1084, %v1131
    %v1155 = vadd.f32 %v1085, %v1131
    %v1156 = vadd.f32 %v1086, %v1131
    %v1157 = vadd.f32 %v1087, %v1131
    %v1158 = vadd.f32 %v1088, %v1131
    %v1159 = vadd.f32 %v1089, %v1131
    %v1160 = vadd.f32 %v1090, %v1131
    %v1161 = vadd.f32 %v1091, %v1131
    %v1162 = vadd.f32 %v1092, %v1131
    %v1163 = vadd.f32 %v1093, %v1131
    %v1164 = vadd.f32 %v1094, %v1131
    %v1165 = vadd.f32 %v1095, %v1131
    %v1166 = vadd.f32 %v1096, %v1131
    %v1167 = vadd.f32 %v1097, %v1131
    %v1168 = vadd.f32 %v1098, %v1131
    %v1169 = vadd.f32 %v1099, %v1131
    %v1170 = vadd.f32 %v1100, %v1131
    %v1171 = vadd.f32 %v1101, %v1131
    %v1172 = vadd.f32 %v1102, %v1131
    %v1173 = vadd.f32 %v1103, %v1131
    %v1174 = vadd.f32 %v1104, %v1131
    %v1175 = vadd.f32 %v1105, %v1131
    %v1176 = vadd.f32 %v1106, %v1131
    %v1177 = vadd.f32 %v1107, %v1131
    %v1178 = vadd.f32 %v1108, %v1131
    %v1179 = vadd.f32 %v1109, %v1131
    %v1180 = vadd.f32 %v1110, %v1131
    %v1181 = vadd.f32 %v1111, %v1131
    %v1182 = vadd.f32 %v1112, %v1131
    %v1183 = vadd.f32 %v1113, %v1131
    %v1184 = vadd.f32 %v1114, %v1131
    %v1185 = vadd.f32 %v1115, %v1131
    %v1186 = vadd.f32 %v1116, %v1131
    %v1187 = vadd.f32 %v1117, %v1131
    %v1188 = vadd.f32 %v1118, %v1131
    %v1189 = vadd.f32 %v1119, %v1131
    %v1190 = vadd.f32 %v1120, %v1131
    %v1191 = vadd.f32 %v1121, %v1131
    %v1192 = vadd.f32 %v1122, %v1131
    %v1193 = vadd.f32 %v1123, %v1131
    %v1194 = vadd.f32 %v1124, %v1131
    %v1195 = vadd.f32 %v1125, %v1131
    %v1196 = vadd.f32 %v1126, %v1131
    %v1197 = vmax.f32 %v1133, 0.0
    %v1198 = vmax.f32 %v1134, 0.0
    %v1199 = vmax.f32 %v1135, 0.0
    %v1200 = vmax.f32 %v1136, 0.0
    %v1201 = vmax.f32 %v1137, 0.0
    %v1202 = vmax.f32 %v1138, 0.0
    %v1203 = vmax.f32 %v1139, 0.0
    %v1204 = vmax.f32 %v1140, 0.0
    %v1205 = vmax.f32 %v1141, 0.0
    %v1206 = vmax.f32 %v1142, 0.0
    %v1207 = vmax.f32 %v1143, 0.0
    %v1208 = vmax.f32 %v1144, 0.0
    %v1209 = vmax.f32 %v1145, 0.0
    %v1210 = vmax.f32 %v1146, 0.0
    %v1211 = vmax.f32 %v1147, 0.0
    %v1212 = vmax.f32 %v1148, 0.0
    %v1213 = vmax.f32 %v1149, 0.0
    %v1214 = vmax.f32 %v1150, 0.0
    %v1215 = vmax.f32 %v1151, 0.0
    %v1216 = vmax.f32 %v1152, 0.0
    %v1217 = vmax.f32 %v1153, 0.0
    %v1218 = vmax.f32 %v1154, 0.0
    %v1219 = vmax.f32 %v1155, 0.0
    %v1220 = vmax.f32 %v1156, 0.0
    %v1221 = vmax.f32 %v1157, 0.0
    %v1222 = vmax.f32 %v1158, 0.0
    %v1223 = vmax.f32 %v1159, 0.0
    %v1224 = vmax.f32 %v1160, 0.0
    %v1225 = vmax.f32 %v1161, 0.0
    %v1226 = vmax.f32 %v1162, 0.0
    %v1227 = vmax.f32 %v1163, 0.0
    %v1228 = vmax.f32 %v1164, 0.0
    %v1229 = vmax.f32 %v1165, 0.0
    %v1230 = vmax.f32 %v1166, 0.0
    %v1231 = vmax.f32 %v1167, 0.0
    %v1232 = vmax.f32 %v1168, 0.0
    %v1233 = vmax.f32 %v1169, 0.0
    %v1234 = vmax.f32 %v1170, 0.0
    %v1235 = vmax.f32 %v1171, 0.0
    %v1236 = vmax.f32 %v1172, 0.0
    %v1237 = vmax.f32 %v1173, 0.0
    %v1238 = vmax.f32 %v1174, 0.0
    %v1239 = vmax.f32 %v1175, 0.0
    %v1240 = vmax.f32 %v1176, 0.0
    %v1241 = vmax.f32 %v1177, 0.0
    %v1242 = vmax.f32 %v1178, 0.0
    %v1243 = vmax.f32 %v1179, 0.0
    %v1244 = vmax.f32 %v1180, 0.0
    %v1245 = vmax.f32 %v1181, 0.0
    %v1246 = vmax.f32 %v1182, 0.0
    %v1247 = vmax.f32 %v1183, 0.0
    %v1248 = vmax.f32 %v1184, 0.0
    %v1249 = vmax.f32 %v1185, 0.0
    %v1250 = vmax.f32 %v1186, 0.0
    %v1251 = vmax.f32 %v1187, 0.0
    %v1252 = vmax.f32 %v1188, 0.0
    %v1253 = vmax.f32 %v1189, 0.0
    %v1254 = vmax.f32 %v1190, 0.0
    %v1255 = vmax.f32 %v1191, 0.0
    %v1256 = vmax.f32 %v1192, 0.0
    %v1257 = vmax.f32 %v1193, 0.0
    %v1258 = vmax.f32 %v1194, 0.0
    %v1259 = vmax.f32 %v1195, 0.0
    %v1260 = vmax.f32 %v1196, 0.0
    %1261 = vst [vmem:[#allocation3] sm:$0xff] 0.0
    %1262 = vst [vmem:[#allocation3 + $0x8] sm:$0xff] 0.0
    %1263 = vst [vmem:[#allocation3 + $0x10] sm:$0x3] 0.0
    %1264 = vst [vmem:[#allocation3 + $0x1b0] sm:$0xff] 0.0
    %1265 = vst [vmem:[#allocation3 + $0x1b8] sm:$0xff] 0.0
    %1266 = vst [vmem:[#allocation3 + $0x1c0] sm:$0x3] 0.0
    %s1267 = scalar_lea.vmem [#allocation3], 408
    %1268 = vst [vmem:[%s1267] sm:$0xff] 0.0
    %1269 = vst [vmem:[%s1267 + $0x8] sm:$0xff] 0.0
    %1270 = vst [vmem:[%s1267 + $0x10] sm:$0x3] 0.0
    %1271 = vst [vmem:[%s1267 + $0x1b0] sm:$0xff] 0.0
    %1272 = vst [vmem:[%s1267 + $0x1b8] sm:$0xff] 0.0
    %1273 = vst [vmem:[%s1267 + $0x1c0] sm:$0x3] 0.0
    %1274 = vst [vmem:[#allocation3] sm:$0x1] 0.0
    %1275 = vst [vmem:[#allocation3 + $0x18] sm:$0x1] 0.0
    %1276 = vst [vmem:[#allocation3 + $0x30] sm:$0x1] 0.0
    %1277 = vst [vmem:[#allocation3 + $0x48] sm:$0x1] 0.0
    %1278 = vst [vmem:[#allocation3 + $0x60] sm:$0x1] 0.0
    %1279 = vst [vmem:[#allocation3 + $0x78] sm:$0x1] 0.0
    %1280 = vst [vmem:[#allocation3 + $0x90] sm:$0x1] 0.0
    %1281 = vst [vmem:[#allocation3 + $0xa8] sm:$0x1] 0.0
    %1282 = vst [vmem:[#allocation3 + $0xc0] sm:$0x1] 0.0
    %1283 = vst [vmem:[#allocation3 + $0xd8] sm:$0x1] 0.0
    %1284 = vst [vmem:[#allocation3 + $0xf0] sm:$0x1] 0.0
    %1285 = vst [vmem:[#allocation3 + $0x108] sm:$0x1] 0.0
    %1286 = vst [vmem:[#allocation3 + $0x120] sm:$0x1] 0.0
    %1287 = vst [vmem:[#allocation3 + $0x138] sm:$0x1] 0.0
    %1288 = vst [vmem:[#allocation3 + $0x150] sm:$0x1] 0.0
    %1289 = vst [vmem:[#allocation3 + $0x168] sm:$0x1] 0.0
    %1290 = vst [vmem:[#allocation3 + $0x180] sm:$0x1] 0.0
    %1291 = vst [vmem:[#allocation3 + $0x198] sm:$0x1] 0.0
    %1292 = vst [vmem:[#allocation3 + $0x1b0] sm:$0x1] 0.0
    %1293 = vst [vmem:[#allocation3 + $0x1c8] sm:$0x1] 0.0
    %1294 = vst [vmem:[#allocation3 + $0x1e0] sm:$0x1] 0.0
    %1295 = vst [vmem:[#allocation3 + $0x1f8] sm:$0x1] 0.0
    %1296 = vst [vmem:[#allocation3 + $0x210] sm:$0x1] 0.0
    %1297 = vst [vmem:[#allocation3 + $0x228] sm:$0x1] 0.0
    %1298 = vst [vmem:[#allocation3 + $0x240] sm:$0x1] 0.0
    %1299 = vst [vmem:[#allocation3 + $0x258] sm:$0x1] 0.0
    %1300 = vst [vmem:[#allocation3 + $0x270] sm:$0x1] 0.0
    %1301 = vst [vmem:[#allocation3 + $0x288] sm:$0x1] 0.0
    %1302 = vst [vmem:[#allocation3 + $0x2a0] sm:$0x1] 0.0
    %1303 = vst [vmem:[#allocation3 + $0x2b8] sm:$0x1] 0.0
    %1304 = vst [vmem:[#allocation3 + $0x2d0] sm:$0x1] 0.0
    %1305 = vst [vmem:[#allocation3 + $0x2e8] sm:$0x1] 0.0
    %1306 = vst [vmem:[#allocation3 + $0x300] sm:$0x1] 0.0
    %1307 = vst [vmem:[#allocation3 + $0x318] sm:$0x1] 0.0
    %1308 = vst [vmem:[#allocation3 + $0x330] sm:$0x1] 0.0
    %1309 = vst [vmem:[#allocation3 + $0x348] sm:$0x1] 0.0
    %1310 = vst [vmem:[#allocation3 + $0x11] sm:$0x1] 0.0
    %1311 = vst [vmem:[#allocation3 + $0x29] sm:$0x1] 0.0
    %1312 = vst [vmem:[#allocation3 + $0x41] sm:$0x1] 0.0
    %1313 = vst [vmem:[#allocation3 + $0x59] sm:$0x1] 0.0
    %1314 = vst [vmem:[#allocation3 + $0x71] sm:$0x1] 0.0
    %1315 = vst [vmem:[#allocation3 + $0x89] sm:$0x1] 0.0
    %1316 = vst [vmem:[#allocation3 + $0xa1] sm:$0x1] 0.0
    %1317 = vst [vmem:[#allocation3 + $0xb9] sm:$0x1] 0.0
    %1318 = vst [vmem:[#allocation3 + $0xd1] sm:$0x1] 0.0
    %1319 = vst [vmem:[#allocation3 + $0xe9] sm:$0x1] 0.0
    %1320 = vst [vmem:[#allocation3 + $0x101] sm:$0x1] 0.0
    %1321 = vst [vmem:[#allocation3 + $0x119] sm:$0x1] 0.0
    %1322 = vst [vmem:[#allocation3 + $0x131] sm:$0x1] 0.0
    %1323 = vst [vmem:[#allocation3 + $0x149] sm:$0x1] 0.0
    %1324 = vst [vmem:[#allocation3 + $0x161] sm:$0x1] 0.0
    %1325 = vst [vmem:[#allocation3 + $0x179] sm:$0x1] 0.0
    %1326 = vst [vmem:[#allocation3 + $0x191] sm:$0x1] 0.0
    %1327 = vst [vmem:[#allocation3 + $0x1a9] sm:$0x1] 0.0
    %1328 = vst [vmem:[#allocation3 + $0x1c1] sm:$0x1] 0.0
    %1329 = vst [vmem:[#allocation3 + $0x1d9] sm:$0x1] 0.0
    %1330 = vst [vmem:[#allocation3 + $0x1f1] sm:$0x1] 0.0
    %1331 = vst [vmem:[#allocation3 + $0x209] sm:$0x1] 0.0
    %1332 = vst [vmem:[#allocation3 + $0x221] sm:$0x1] 0.0
    %1333 = vst [vmem:[#allocation3 + $0x239] sm:$0x1] 0.0
    %1334 = vst [vmem:[#allocation3 + $0x251] sm:$0x1] 0.0
    %1335 = vst [vmem:[#allocation3 + $0x269] sm:$0x1] 0.0
    %1336 = vst [vmem:[#allocation3 + $0x281] sm:$0x1] 0.0
    %1337 = vst [vmem:[#allocation3 + $0x299] sm:$0x1] 0.0
    %1338 = vst [vmem:[#allocation3 + $0x2b1] sm:$0x1] 0.0
    %1339 = vst [vmem:[#allocation3 + $0x2c9] sm:$0x1] 0.0
    %1340 = vst [vmem:[#allocation3 + $0x2e1] sm:$0x1] 0.0
    %1341 = vst [vmem:[#allocation3 + $0x2f9] sm:$0x1] 0.0
    %1342 = vst [vmem:[#allocation3 + $0x311] sm:$0x1] 0.0
    %1343 = vst [vmem:[#allocation3 + $0x329] sm:$0x1] 0.0
    %1344 = vst [vmem:[#allocation3 + $0x341] sm:$0x1] 0.0
    %1345 = vst [vmem:[#allocation3 + $0x359] sm:$0x1] 0.0
    %s1346 = scalar_lea.vmem [#allocation3], 24
    %1347 = vst [vmem:[%s1346 + $0x1] sm:$0xff] %v1197
    %1348 = vst [vmem:[%s1346 + $0x9] sm:$0xff] %v1198
    %1349 = vst [vmem:[%s1346 + $0x19] sm:$0xff] %v1199
    %1350 = vst [vmem:[%s1346 + $0x21] sm:$0xff] %v1200
    %1351 = vst [vmem:[%s1346 + $0x31] sm:$0xff] %v1201
    %1352 = vst [vmem:[%s1346 + $0x39] sm:$0xff] %v1202
    %1353 = vst [vmem:[%s1346 + $0x49] sm:$0xff] %v1203
    %1354 = vst [vmem:[%s1346 + $0x51] sm:$0xff] %v1204
    %1355 = vst [vmem:[%s1346 + $0x61] sm:$0xff] %v1205
    %1356 = vst [vmem:[%s1346 + $0x69] sm:$0xff] %v1206
    %1357 = vst [vmem:[%s1346 + $0x79] sm:$0xff] %v1207
    %1358 = vst [vmem:[%s1346 + $0x81] sm:$0xff] %v1208
    %1359 = vst [vmem:[%s1346 + $0x91] sm:$0xff] %v1209
    %1360 = vst [vmem:[%s1346 + $0x99] sm:$0xff] %v1210
    %1361 = vst [vmem:[%s1346 + $0xa9] sm:$0xff] %v1211
    %1362 = vst [vmem:[%s1346 + $0xb1] sm:$0xff] %v1212
    %1363 = vst [vmem:[%s1346 + $0xc1] sm:$0xff] %v1213
    %1364 = vst [vmem:[%s1346 + $0xc9] sm:$0xff] %v1214
    %1365 = vst [vmem:[%s1346 + $0xd9] sm:$0xff] %v1215
    %1366 = vst [vmem:[%s1346 + $0xe1] sm:$0xff] %v1216
    %1367 = vst [vmem:[%s1346 + $0xf1] sm:$0xff] %v1217
    %1368 = vst [vmem:[%s1346 + $0xf9] sm:$0xff] %v1218
    %1369 = vst [vmem:[%s1346 + $0x109] sm:$0xff] %v1219
    %1370 = vst [vmem:[%s1346 + $0x111] sm:$0xff] %v1220
    %1371 = vst [vmem:[%s1346 + $0x121] sm:$0xff] %v1221
    %1372 = vst [vmem:[%s1346 + $0x129] sm:$0xff] %v1222
    %1373 = vst [vmem:[%s1346 + $0x139] sm:$0xff] %v1223
    %1374 = vst [vmem:[%s1346 + $0x141] sm:$0xff] %v1224
    %1375 = vst [vmem:[%s1346 + $0x151] sm:$0xff] %v1225
    %1376 = vst [vmem:[%s1346 + $0x159] sm:$0xff] %v1226
    %1377 = vst [vmem:[%s1346 + $0x169] sm:$0xff] %v1227
    %1378 = vst [vmem:[%s1346 + $0x171] sm:$0xff] %v1228
    %1379 = vst [vmem:[%s1346 + $0x1b1] sm:$0xff] %v1229
    %1380 = vst [vmem:[%s1346 + $0x1b9] sm:$0xff] %v1230
    %1381 = vst [vmem:[%s1346 + $0x1c9] sm:$0xff] %v1231
    %1382 = vst [vmem:[%s1346 + $0x1d1] sm:$0xff] %v1232
    %1383 = vst [vmem:[%s1346 + $0x1e1] sm:$0xff] %v1233
    %1384 = vst [vmem:[%s1346 + $0x1e9] sm:$0xff] %v1234
    %1385 = vst [vmem:[%s1346 + $0x1f9] sm:$0xff] %v1235
    %1386 = vst [vmem:[%s1346 + $0x201] sm:$0xff] %v1236
    %1387 = vst [vmem:[%s1346 + $0x211] sm:$0xff] %v1237
    %1388 = vst [vmem:[%s1346 + $0x219] sm:$0xff] %v1238
    %1389 = vst [vmem:[%s1346 + $0x229] sm:$0xff] %v1239
    %1390 = vst [vmem:[%s1346 + $0x231] sm:$0xff] %v1240
    %1391 = vst [vmem:[%s1346 + $0x241] sm:$0xff] %v1241
    %1392 = vst [vmem:[%s1346 + $0x249] sm:$0xff] %v1242
    %1393 = vst [vmem:[%s1346 + $0x259] sm:$0xff] %v1243
    %1394 = vst [vmem:[%s1346 + $0x261] sm:$0xff] %v1244
    %1395 = vst [vmem:[%s1346 + $0x271] sm:$0xff] %v1245
    %1396 = vst [vmem:[%s1346 + $0x279] sm:$0xff] %v1246
    %1397 = vst [vmem:[%s1346 + $0x289] sm:$0xff] %v1247
    %1398 = vst [vmem:[%s1346 + $0x291] sm:$0xff] %v1248
    %1399 = vst [vmem:[%s1346 + $0x2a1] sm:$0xff] %v1249
    %1400 = vst [vmem:[%s1346 + $0x2a9] sm:$0xff] %v1250
    %1401 = vst [vmem:[%s1346 + $0x2b9] sm:$0xff] %v1251
    %1402 = vst [vmem:[%s1346 + $0x2c1] sm:$0xff] %v1252
    %1403 = vst [vmem:[%s1346 + $0x2d1] sm:$0xff] %v1253
    %1404 = vst [vmem:[%s1346 + $0x2d9] sm:$0xff] %v1254
    %1405 = vst [vmem:[%s1346 + $0x2e9] sm:$0xff] %v1255
    %1406 = vst [vmem:[%s1346 + $0x2f1] sm:$0xff] %v1256
    %1407 = vst [vmem:[%s1346 + $0x301] sm:$0xff] %v1257
    %1408 = vst [vmem:[%s1346 + $0x309] sm:$0xff] %v1258
    %1409 = vst [vmem:[%s1346 + $0x319] sm:$0xff] %v1259
    %1410 = vst [vmem:[%s1346 + $0x321] sm:$0xff] %v1260
    %v1411 = vld [vmem:[#allocation3] sm:$0xff]
    %v1412 = vld [vmem:[#allocation3 + $0x8] sm:$0xff]
    %v1413 = vld [vmem:[#allocation3 + $0x18] sm:$0xff]
    %v1414 = vld [vmem:[#allocation3 + $0x20] sm:$0xff]
    %v1415 = vld [vmem:[#allocation3 + $0x30] sm:$0xff]
    %v1416 = vld [vmem:[#allocation3 + $0x38] sm:$0xff]
    %v1417 = vld [vmem:[#allocation3 + $0x48] sm:$0xff]
    %v1418 = vld [vmem:[#allocation3 + $0x50] sm:$0xff]
    %v1419 = vld [vmem:[#allocation3 + $0x60] sm:$0xff]
    %v1420 = vld [vmem:[#allocation3 + $0x68] sm:$0xff]
    %v1421 = vld [vmem:[#allocation3 + $0x78] sm:$0xff]
    %v1422 = vld [vmem:[#allocation3 + $0x80] sm:$0xff]
    %v1423 = vld [vmem:[#allocation3 + $0x90] sm:$0xff]
    %v1424 = vld [vmem:[#allocation3 + $0x98] sm:$0xff]
    %v1425 = vld [vmem:[#allocation3 + $0xa8] sm:$0xff]
    %v1426 = vld [vmem:[#allocation3 + $0xb0] sm:$0xff]
    %v1427 = vld [vmem:[#allocation3 + $0xc0] sm:$0xff]
    %v1428 = vld [vmem:[#allocation3 + $0xc8] sm:$0xff]
    %v1429 = vld [vmem:[#allocation3 + $0xd8] sm:$0xff]
    %v1430 = vld [vmem:[#allocation3 + $0xe0] sm:$0xff]
    %v1431 = vld [vmem:[#allocation3 + $0xf0] sm:$0xff]
    %v1432 = vld [vmem:[#allocation3 + $0xf8] sm:$0xff]
    %v1433 = vld [vmem:[#allocation3 + $0x108] sm:$0xff]
    %v1434 = vld [vmem:[#allocation3 + $0x110] sm:$0xff]
    %v1435 = vld [vmem:[#allocation3 + $0x120] sm:$0xff]
    %v1436 = vld [vmem:[#allocation3 + $0x128] sm:$0xff]
    %v1437 = vld [vmem:[#allocation3 + $0x138] sm:$0xff]
    %v1438 = vld [vmem:[#allocation3 + $0x140] sm:$0xff]
    %v1439 = vld [vmem:[#allocation3 + $0x150] sm:$0xff]
    %v1440 = vld [vmem:[#allocation3 + $0x158] sm:$0xff]
    %v1441 = vld [vmem:[#allocation3 + $0x168] sm:$0xff]
    %v1442 = vld [vmem:[#allocation3 + $0x170] sm:$0xff]
    %v1443 = vld [vmem:[#allocation3 + $0x1b0] sm:$0xff]
    %v1444 = vld [vmem:[#allocation3 + $0x1b8] sm:$0xff]
    %v1445 = vld [vmem:[#allocation3 + $0x1c8] sm:$0xff]
    %v1446 = vld [vmem:[#allocation3 + $0x1d0] sm:$0xff]
    %v1447 = vld [vmem:[#allocation3 + $0x1e0] sm:$0xff]
    %v1448 = vld [vmem:[#allocation3 + $0x1e8] sm:$0xff]
    %v1449 = vld [vmem:[#allocation3 + $0x1f8] sm:$0xff]
    %v1450 = vld [vmem:[#allocation3 + $0x200] sm:$0xff]
    %v1451 = vld [vmem:[#allocation3 + $0x210] sm:$0xff]
    %v1452 = vld [vmem:[#allocation3 + $0x218] sm:$0xff]
    %v1453 = vld [vmem:[#allocation3 + $0x228] sm:$0xff]
    %v1454 = vld [vmem:[#allocation3 + $0x230] sm:$0xff]
    %v1455 = vld [vmem:[#allocation3 + $0x240] sm:$0xff]
    %v1456 = vld [vmem:[#allocation3 + $0x248] sm:$0xff]
    %v1457 = vld [vmem:[#allocation3 + $0x258] sm:$0xff]
    %v1458 = vld [vmem:[#allocation3 + $0x260] sm:$0xff]
    %v1459 = vld [vmem:[#allocation3 + $0x270] sm:$0xff]
    %v1460 = vld [vmem:[#allocation3 + $0x278] sm:$0xff]
    %v1461 = vld [vmem:[#allocation3 + $0x288] sm:$0xff]
    %v1462 = vld [vmem:[#allocation3 + $0x290] sm:$0xff]
    %v1463 = vld [vmem:[#allocation3 + $0x2a0] sm:$0xff]
    %v1464 = vld [vmem:[#allocation3 + $0x2a8] sm:$0xff]
    %v1465 = vld [vmem:[#allocation3 + $0x2b8] sm:$0xff]
    %v1466 = vld [vmem:[#allocation3 + $0x2c0] sm:$0xff]
    %v1467 = vld [vmem:[#allocation3 + $0x2d0] sm:$0xff]
    %v1468 = vld [vmem:[#allocation3 + $0x2d8] sm:$0xff]
    %v1469 = vld [vmem:[#allocation3 + $0x2e8] sm:$0xff]
    %v1470 = vld [vmem:[#allocation3 + $0x2f0] sm:$0xff]
    %v1471 = vld [vmem:[#allocation3 + $0x300] sm:$0xff]
    %v1472 = vld [vmem:[#allocation3 + $0x308] sm:$0xff]
    %v1473 = vld [vmem:[#allocation3 + $0x318] sm:$0xff]
    %v1474 = vld [vmem:[#allocation3 + $0x320] sm:$0xff]
    %v1475 = vpack.c.bf16 %v1412, %v1411
    %v1476 = vpack.c.bf16 %v1414, %v1413
    %v1477 = vpack.c.bf16 %v1416, %v1415
    %v1478 = vpack.c.bf16 %v1418, %v1417
    %v1479 = vpack.c.bf16 %v1420, %v1419
    %v1480 = vpack.c.bf16 %v1422, %v1421
    %v1481 = vpack.c.bf16 %v1424, %v1423
    %v1482 = vpack.c.bf16 %v1426, %v1425
    %v1483 = vpack.c.bf16 %v1428, %v1427
    %v1484 = vpack.c.bf16 %v1430, %v1429
    %v1485 = vpack.c.bf16 %v1432, %v1431
    %v1486 = vpack.c.bf16 %v1434, %v1433
    %v1487 = vpack.c.bf16 %v1436, %v1435
    %v1488 = vpack.c.bf16 %v1438, %v1437
    %v1489 = vpack.c.bf16 %v1440, %v1439
    %v1490 = vpack.c.bf16 %v1442, %v1441
    %v1491 = vpack.c.bf16 %v1444, %v1443
    %v1492 = vpack.c.bf16 %v1446, %v1445
    %v1493 = vpack.c.bf16 %v1448, %v1447
    %v1494 = vpack.c.bf16 %v1450, %v1449
    %v1495 = vpack.c.bf16 %v1452, %v1451
    %v1496 = vpack.c.bf16 %v1454, %v1453
    %v1497 = vpack.c.bf16 %v1456, %v1455
    %v1498 = vpack.c.bf16 %v1458, %v1457
    %v1499 = vpack.c.bf16 %v1460, %v1459
    %v1500 = vpack.c.bf16 %v1462, %v1461
    %v1501 = vpack.c.bf16 %v1464, %v1463
    %v1502 = vpack.c.bf16 %v1466, %v1465
    %v1503 = vpack.c.bf16 %v1468, %v1467
    %v1504 = vpack.c.bf16 %v1470, %v1469
    %v1505 = vpack.c.bf16 %v1472, %v1471
    %v1506 = vpack.c.bf16 %v1474, %v1473
    %1507 = vst [vmem:[#allocation4] sm:$0xff] %v1475
    %1508 = vst [vmem:[#allocation4 + $0x48] sm:$0xff] %v1476
    %1509 = vst [vmem:[#allocation4 + $0x90] sm:$0xff] %v1477
    %1510 = vst [vmem:[#allocation4 + $0xd8] sm:$0xff] %v1478
    %1511 = vst [vmem:[#allocation4 + $0x120] sm:$0xff] %v1479
    %1512 = vst [vmem:[#allocation4 + $0x168] sm:$0xff] %v1480
    %1513 = vst [vmem:[#allocation4 + $0x1b0] sm:$0xff] %v1481
    %1514 = vst [vmem:[#allocation4 + $0x1f8] sm:$0xff] %v1482
    %1515 = vst [vmem:[#allocation4 + $0x240] sm:$0xff] %v1483
    %1516 = vst [vmem:[#allocation4 + $0x288] sm:$0xff] %v1484
    %1517 = vst [vmem:[#allocation4 + $0x2d0] sm:$0xff] %v1485
    %1518 = vst [vmem:[#allocation4 + $0x318] sm:$0xff] %v1486
    %1519 = vst [vmem:[#allocation4 + $0x360] sm:$0xff] %v1487
    %1520 = vst [vmem:[#allocation4 + $0x3a8] sm:$0xff] %v1488
    %1521 = vst [vmem:[#allocation4 + $0x3f0] sm:$0xff] %v1489
    %1522 = vst [vmem:[#allocation4 + $0x438] sm:$0xff] %v1490
    %1523 = vst [vmem:[#allocation4 + $0x480] sm:$0xff] %v1491
    %1524 = vst [vmem:[#allocation4 + $0x4c8] sm:$0xff] %v1492
    %1525 = vst [vmem:[#allocation4 + $0x510] sm:$0xff] %v1493
    %1526 = vst [vmem:[#allocation4 + $0x558] sm:$0xff] %v1494
    %1527 = vst [vmem:[#allocation4 + $0x5a0] sm:$0xff] %v1495
    %1528 = vst [vmem:[#allocation4 + $0x5e8] sm:$0xff] %v1496
    %1529 = vst [vmem:[#allocation4 + $0x630] sm:$0xff] %v1497
    %1530 = vst [vmem:[#allocation4 + $0x678] sm:$0xff] %v1498
    %1531 = vst [vmem:[#allocation4 + $0x6c0] sm:$0xff] %v1499
    %1532 = vst [vmem:[#allocation4 + $0x708] sm:$0xff] %v1500
    %1533 = vst [vmem:[#allocation4 + $0x750] sm:$0xff] %v1501
    %1534 = vst [vmem:[#allocation4 + $0x798] sm:$0xff] %v1502
    %1535 = vst [vmem:[#allocation4 + $0x7e0] sm:$0xff] %v1503
    %1536 = vst [vmem:[#allocation4 + $0x828] sm:$0xff] %v1504
    %1537 = vst [vmem:[#allocation4 + $0x870] sm:$0xff] %v1505
    %1538 = vst [vmem:[#allocation4 + $0x8b8] sm:$0xff] %v1506
    %v1539 = vld [vmem:[#allocation3 + $0x1] sm:$0xff]
    %v1540 = vld [vmem:[#allocation3 + $0x9] sm:$0xff]
    %v1541 = vld [vmem:[#allocation3 + $0x19] sm:$0xff]
    %v1542 = vld [vmem:[#allocation3 + $0x21] sm:$0xff]
    %v1543 = vld [vmem:[#allocation3 + $0x31] sm:$0xff]
    %v1544 = vld [vmem:[#allocation3 + $0x39] sm:$0xff]
    %v1545 = vld [vmem:[#allocation3 + $0x49] sm:$0xff]
    %v1546 = vld [vmem:[#allocation3 + $0x51] sm:$0xff]
    %v1547 = vld [vmem:[#allocation3 + $0x61] sm:$0xff]
    %v1548 = vld [vmem:[#allocation3 + $0x69] sm:$0xff]
    %v1549 = vld [vmem:[#allocation3 + $0x79] sm:$0xff]
    %v1550 = vld [vmem:[#allocation3 + $0x81] sm:$0xff]
    %v1551 = vld [vmem:[#allocation3 + $0x91] sm:$0xff]
    %v1552 = vld [vmem:[#allocation3 + $0x99] sm:$0xff]
    %v1553 = vld [vmem:[#allocation3 + $0xa9] sm:$0xff]
    %v1554 = vld [vmem:[#allocation3 + $0xb1] sm:$0xff]
    %v1555 = vld [vmem:[#allocation3 + $0xc1] sm:$0xff]
    %v1556 = vld [vmem:[#allocation3 + $0xc9] sm:$0xff]
    %v1557 = vld [vmem:[#allocation3 + $0xd9] sm:$0xff]
    %v1558 = vld [vmem:[#allocation3 + $0xe1] sm:$0xff]
    %v1559 = vld [vmem:[#allocation3 + $0xf1] sm:$0xff]
    %v1560 = vld [vmem:[#allocation3 + $0xf9] sm:$0xff]
    %v1561 = vld [vmem:[#allocation3 + $0x109] sm:$0xff]
    %v1562 = vld [vmem:[#allocation3 + $0x111] sm:$0xff]
    %v1563 = vld [vmem:[#allocation3 + $0x121] sm:$0xff]
    %v1564 = vld [vmem:[#allocation3 + $0x129] sm:$0xff]
    %v1565 = vld [vmem:[#allocation3 + $0x139] sm:$0xff]
    %v1566 = vld [vmem:[#allocation3 + $0x141] sm:$0xff]
    %v1567 = vld [vmem:[#allocation3 + $0x151] sm:$0xff]
    %v1568 = vld [vmem:[#allocation3 + $0x159] sm:$0xff]
    %v1569 = vld [vmem:[#allocation3 + $0x169] sm:$0xff]
    %v1570 = vld [vmem:[#allocation3 + $0x171] sm:$0xff]
    %v1571 = vld [vmem:[#allocation3 + $0x1b1] sm:$0xff]
    %v1572 = vld [vmem:[#allocation3 + $0x1b9] sm:$0xff]
    %v1573 = vld [vmem:[#allocation3 + $0x1c9] sm:$0xff]
    %v1574 = vld [vmem:[#allocation3 + $0x1d1] sm:$0xff]
    %v1575 = vld [vmem:[#allocation3 + $0x1e1] sm:$0xff]
    %v1576 = vld [vmem:[#allocation3 + $0x1e9] sm:$0xff]
    %v1577 = vld [vmem:[#allocation3 + $0x1f9] sm:$0xff]
    %v1578 = vld [vmem:[#allocation3 + $0x201] sm:$0xff]
    %v1579 = vld [vmem:[#allocation3 + $0x211] sm:$0xff]
    %v1580 = vld [vmem:[#allocation3 + $0x219] sm:$0xff]
    %v1581 = vld [vmem:[#allocation3 + $0x229] sm:$0xff]
    %v1582 = vld [vmem:[#allocation3 + $0x231] sm:$0xff]
    %v1583 = vld [vmem:[#allocation3 + $0x241] sm:$0xff]
    %v1584 = vld [vmem:[#allocation3 + $0x249] sm:$0xff]
    %v1585 = vld [vmem:[#allocation3 + $0x259] sm:$0xff]
    %v1586 = vld [vmem:[#allocation3 + $0x261] sm:$0xff]
    %v1587 = vld [vmem:[#allocation3 + $0x271] sm:$0xff]
    %v1588 = vld [vmem:[#allocation3 + $0x279] sm:$0xff]
    %v1589 = vld [vmem:[#allocation3 + $0x289] sm:$0xff]
    %v1590 = vld [vmem:[#allocation3 + $0x291] sm:$0xff]
    %v1591 = vld [vmem:[#allocation3 + $0x2a1] sm:$0xff]
    %v1592 = vld [vmem:[#allocation3 + $0x2a9] sm:$0xff]
    %v1593 = vld [vmem:[#allocation3 + $0x2b9] sm:$0xff]
    %v1594 = vld [vmem:[#allocation3 + $0x2c1] sm:$0xff]
    %v1595 = vld [vmem:[#allocation3 + $0x2d1] sm:$0xff]
    %v1596 = vld [vmem:[#allocation3 + $0x2d9] sm:$0xff]
    %v1597 = vld [vmem:[#allocation3 + $0x2e9] sm:$0xff]
    %v1598 = vld [vmem:[#allocation3 + $0x2f1] sm:$0xff]
    %v1599 = vld [vmem:[#allocation3 + $0x301] sm:$0xff]
    %v1600 = vld [vmem:[#allocation3 + $0x309] sm:$0xff]
    %v1601 = vld [vmem:[#allocation3 + $0x319] sm:$0xff]
    %v1602 = vld [vmem:[#allocation3 + $0x321] sm:$0xff]
    %v1603 = vpack.c.bf16 %v1540, %v1539
    %v1604 = vpack.c.bf16 %v1542, %v1541
    %v1605 = vpack.c.bf16 %v1544, %v1543
    %v1606 = vpack.c.bf16 %v1546, %v1545
    %v1607 = vpack.c.bf16 %v1548, %v1547
    %v1608 = vpack.c.bf16 %v1550, %v1549
    %v1609 = vpack.c.bf16 %v1552, %v1551
    %v1610 = vpack.c.bf16 %v1554, %v1553
    %v1611 = vpack.c.bf16 %v1556, %v1555
    %v1612 = vpack.c.bf16 %v1558, %v1557
    %v1613 = vpack.c.bf16 %v1560, %v1559
    %v1614 = vpack.c.bf16 %v1562, %v1561
    %v1615 = vpack.c.bf16 %v1564, %v1563
    %v1616 = vpack.c.bf16 %v1566, %v1565
    %v1617 = vpack.c.bf16 %v1568, %v1567
    %v1618 = vpack.c.bf16 %v1570, %v1569
    %v1619 = vpack.c.bf16 %v1572, %v1571
    %v1620 = vpack.c.bf16 %v1574, %v1573
    %v1621 = vpack.c.bf16 %v1576, %v1575
    %v1622 = vpack.c.bf16 %v1578, %v1577
    %v1623 = vpack.c.bf16 %v1580, %v1579
    %v1624 = vpack.c.bf16 %v1582, %v1581
    %v1625 = vpack.c.bf16 %v1584, %v1583
    %v1626 = vpack.c.bf16 %v1586, %v1585
    %v1627 = vpack.c.bf16 %v1588, %v1587
    %v1628 = vpack.c.bf16 %v1590, %v1589
    %v1629 = vpack.c.bf16 %v1592, %v1591
    %v1630 = vpack.c.bf16 %v1594, %v1593
    %v1631 = vpack.c.bf16 %v1596, %v1595
    %v1632 = vpack.c.bf16 %v1598, %v1597
    %v1633 = vpack.c.bf16 %v1600, %v1599
    %v1634 = vpack.c.bf16 %v1602, %v1601
    %1635 = vst [vmem:[#allocation4 + $0x8] sm:$0xff] %v1603
    %1636 = vst [vmem:[#allocation4 + $0x50] sm:$0xff] %v1604
    %1637 = vst [vmem:[#allocation4 + $0x98] sm:$0xff] %v1605
    %1638 = vst [vmem:[#allocation4 + $0xe0] sm:$0xff] %v1606
    %1639 = vst [vmem:[#allocation4 + $0x128] sm:$0xff] %v1607
    %1640 = vst [vmem:[#allocation4 + $0x170] sm:$0xff] %v1608
    %1641 = vst [vmem:[#allocation4 + $0x1b8] sm:$0xff] %v1609
    %1642 = vst [vmem:[#allocation4 + $0x200] sm:$0xff] %v1610
    %1643 = vst [vmem:[#allocation4 + $0x248] sm:$0xff] %v1611
    %1644 = vst [vmem:[#allocation4 + $0x290] sm:$0xff] %v1612
    %1645 = vst [vmem:[#allocation4 + $0x2d8] sm:$0xff] %v1613
    %1646 = vst [vmem:[#allocation4 + $0x320] sm:$0xff] %v1614
    %1647 = vst [vmem:[#allocation4 + $0x368] sm:$0xff] %v1615
    %1648 = vst [vmem:[#allocation4 + $0x3b0] sm:$0xff] %v1616
    %1649 = vst [vmem:[#allocation4 + $0x3f8] sm:$0xff] %v1617
    %1650 = vst [vmem:[#allocation4 + $0x440] sm:$0xff] %v1618
    %1651 = vst [vmem:[#allocation4 + $0x488] sm:$0xff] %v1619
    %1652 = vst [vmem:[#allocation4 + $0x4d0] sm:$0xff] %v1620
    %1653 = vst [vmem:[#allocation4 + $0x518] sm:$0xff] %v1621
    %1654 = vst [vmem:[#allocation4 + $0x560] sm:$0xff] %v1622
    %1655 = vst [vmem:[#allocation4 + $0x5a8] sm:$0xff] %v1623
    %1656 = vst [vmem:[#allocation4 + $0x5f0] sm:$0xff] %v1624
    %1657 = vst [vmem:[#allocation4 + $0x638] sm:$0xff] %v1625
    %1658 = vst [vmem:[#allocation4 + $0x680] sm:$0xff] %v1626
    %1659 = vst [vmem:[#allocation4 + $0x6c8] sm:$0xff] %v1627
    %1660 = vst [vmem:[#allocation4 + $0x710] sm:$0xff] %v1628
    %1661 = vst [vmem:[#allocation4 + $0x758] sm:$0xff] %v1629
    %1662 = vst [vmem:[#allocation4 + $0x7a0] sm:$0xff] %v1630
    %1663 = vst [vmem:[#allocation4 + $0x7e8] sm:$0xff] %v1631
    %1664 = vst [vmem:[#allocation4 + $0x830] sm:$0xff] %v1632
    %1665 = vst [vmem:[#allocation4 + $0x878] sm:$0xff] %v1633
    %1666 = vst [vmem:[#allocation4 + $0x8c0] sm:$0xff] %v1634
    %v1667 = vld [vmem:[#allocation3 + $0x2] sm:$0xff]
    %v1668 = vld [vmem:[#allocation3 + $0xa] sm:$0xff]
    %v1669 = vld [vmem:[#allocation3 + $0x1a] sm:$0xff]
    %v1670 = vld [vmem:[#allocation3 + $0x22] sm:$0xff]
    %v1671 = vld [vmem:[#allocation3 + $0x32] sm:$0xff]
    %v1672 = vld [vmem:[#allocation3 + $0x3a] sm:$0xff]
    %v1673 = vld [vmem:[#allocation3 + $0x4a] sm:$0xff]
    %v1674 = vld [vmem:[#allocation3 + $0x52] sm:$0xff]
    %v1675 = vld [vmem:[#allocation3 + $0x62] sm:$0xff]
    %v1676 = vld [vmem:[#allocation3 + $0x6a] sm:$0xff]
    %v1677 = vld [vmem:[#allocation3 + $0x7a] sm:$0xff]
    %v1678 = vld [vmem:[#allocation3 + $0x82] sm:$0xff]
    %v1679 = vld [vmem:[#allocation3 + $0x92] sm:$0xff]
    %v1680 = vld [vmem:[#allocation3 + $0x9a] sm:$0xff]
    %v1681 = vld [vmem:[#allocation3 + $0xaa] sm:$0xff]
    %v1682 = vld [vmem:[#allocation3 + $0xb2] sm:$0xff]
    %v1683 = vld [vmem:[#allocation3 + $0xc2] sm:$0xff]
    %v1684 = vld [vmem:[#allocation3 + $0xca] sm:$0xff]
    %v1685 = vld [vmem:[#allocation3 + $0xda] sm:$0xff]
    %v1686 = vld [vmem:[#allocation3 + $0xe2] sm:$0xff]
    %v1687 = vld [vmem:[#allocation3 + $0xf2] sm:$0xff]
    %v1688 = vld [vmem:[#allocation3 + $0xfa] sm:$0xff]
    %v1689 = vld [vmem:[#allocation3 + $0x10a] sm:$0xff]
    %v1690 = vld [vmem:[#allocation3 + $0x112] sm:$0xff]
    %v1691 = vld [vmem:[#allocation3 + $0x122] sm:$0xff]
    %v1692 = vld [vmem:[#allocation3 + $0x12a] sm:$0xff]
    %v1693 = vld [vmem:[#allocation3 + $0x13a] sm:$0xff]
    %v1694 = vld [vmem:[#allocation3 + $0x142] sm:$0xff]
    %v1695 = vld [vmem:[#allocation3 + $0x152] sm:$0xff]
    %v1696 = vld [vmem:[#allocation3 + $0x15a] sm:$0xff]
    %v1697 = vld [vmem:[#allocation3 + $0x16a] sm:$0xff]
    %v1698 = vld [vmem:[#allocation3 + $0x172] sm:$0xff]
    %v1699 = vld [vmem:[#allocation3 + $0x1b2] sm:$0xff]
    %v1700 = vld [vmem:[#allocation3 + $0x1ba] sm:$0xff]
    %v1701 = vld [vmem:[#allocation3 + $0x1ca] sm:$0xff]
    %v1702 = vld [vmem:[#allocation3 + $0x1d2] sm:$0xff]
    %v1703 = vld [vmem:[#allocation3 + $0x1e2] sm:$0xff]
    %v1704 = vld [vmem:[#allocation3 + $0x1ea] sm:$0xff]
    %v1705 = vld [vmem:[#allocation3 + $0x1fa] sm:$0xff]
    %v1706 = vld [vmem:[#allocation3 + $0x202] sm:$0xff]
    %v1707 = vld [vmem:[#allocation3 + $0x212] sm:$0xff]
    %v1708 = vld [vmem:[#allocation3 + $0x21a] sm:$0xff]
    %v1709 = vld [vmem:[#allocation3 + $0x22a] sm:$0xff]
    %v1710 = vld [vmem:[#allocation3 + $0x232] sm:$0xff]
    %v1711 = vld [vmem:[#allocation3 + $0x242] sm:$0xff]
    %v1712 = vld [vmem:[#allocation3 + $0x24a] sm:$0xff]
    %v1713 = vld [vmem:[#allocation3 + $0x25a] sm:$0xff]
    %v1714 = vld [vmem:[#allocation3 + $0x262] sm:$0xff]
    %v1715 = vld [vmem:[#allocation3 + $0x272] sm:$0xff]
    %v1716 = vld [vmem:[#allocation3 + $0x27a] sm:$0xff]
    %v1717 = vld [vmem:[#allocation3 + $0x28a] sm:$0xff]
    %v1718 = vld [vmem:[#allocation3 + $0x292] sm:$0xff]
    %v1719 = vld [vmem:[#allocation3 + $0x2a2] sm:$0xff]
    %v1720 = vld [vmem:[#allocation3 + $0x2aa] sm:$0xff]
    %v1721 = vld [vmem:[#allocation3 + $0x2ba] sm:$0xff]
    %v1722 = vld [vmem:[#allocation3 + $0x2c2] sm:$0xff]
    %v1723 = vld [vmem:[#allocation3 + $0x2d2] sm:$0xff]
    %v1724 = vld [vmem:[#allocation3 + $0x2da] sm:$0xff]
    %v1725 = vld [vmem:[#allocation3 + $0x2ea] sm:$0xff]
    %v1726 = vld [vmem:[#allocation3 + $0x2f2] sm:$0xff]
    %v1727 = vld [vmem:[#allocation3 + $0x302] sm:$0xff]
    %v1728 = vld [vmem:[#allocation3 + $0x30a] sm:$0xff]
    %v1729 = vld [vmem:[#allocation3 + $0x31a] sm:$0xff]
    %v1730 = vld [vmem:[#allocation3 + $0x322] sm:$0xff]
    %v1731 = vpack.c.bf16 %v1668, %v1667
    %v1732 = vpack.c.bf16 %v1670, %v1669
    %v1733 = vpack.c.bf16 %v1672, %v1671
    %v1734 = vpack.c.bf16 %v1674, %v1673
    %v1735 = vpack.c.bf16 %v1676, %v1675
    %v1736 = vpack.c.bf16 %v1678, %v1677
    %v1737 = vpack.c.bf16 %v1680, %v1679
    %v1738 = vpack.c.bf16 %v1682, %v1681
    %v1739 = vpack.c.bf16 %v1684, %v1683
    %v1740 = vpack.c.bf16 %v1686, %v1685
    %v1741 = vpack.c.bf16 %v1688, %v1687
    %v1742 = vpack.c.bf16 %v1690, %v1689
    %v1743 = vpack.c.bf16 %v1692, %v1691
    %v1744 = vpack.c.bf16 %v1694, %v1693
    %v1745 = vpack.c.bf16 %v1696, %v1695
    %v1746 = vpack.c.bf16 %v1698, %v1697
    %v1747 = vpack.c.bf16 %v1700, %v1699
    %v1748 = vpack.c.bf16 %v1702, %v1701
    %v1749 = vpack.c.bf16 %v1704, %v1703
    %v1750 = vpack.c.bf16 %v1706, %v1705
    %v1751 = vpack.c.bf16 %v1708, %v1707
    %v1752 = vpack.c.bf16 %v1710, %v1709
    %v1753 = vpack.c.bf16 %v1712, %v1711
    %v1754 = vpack.c.bf16 %v1714, %v1713
    %v1755 = vpack.c.bf16 %v1716, %v1715
    %v1756 = vpack.c.bf16 %v1718, %v1717
    %v1757 = vpack.c.bf16 %v1720, %v1719
    %v1758 = vpack.c.bf16 %v1722, %v1721
    %v1759 = vpack.c.bf16 %v1724, %v1723
    %v1760 = vpack.c.bf16 %v1726, %v1725
    %v1761 = vpack.c.bf16 %v1728, %v1727
    %v1762 = vpack.c.bf16 %v1730, %v1729
    %1763 = vst [vmem:[#allocation4 + $0x10] sm:$0xff] %v1731
    %1764 = vst [vmem:[#allocation4 + $0x58] sm:$0xff] %v1732
    %1765 = vst [vmem:[#allocation4 + $0xa0] sm:$0xff] %v1733
    %1766 = vst [vmem:[#allocation4 + $0xe8] sm:$0xff] %v1734
    %1767 = vst [vmem:[#allocation4 + $0x130] sm:$0xff] %v1735
    %1768 = vst [vmem:[#allocation4 + $0x178] sm:$0xff] %v1736
    %1769 = vst [vmem:[#allocation4 + $0x1c0] sm:$0xff] %v1737
    %1770 = vst [vmem:[#allocation4 + $0x208] sm:$0xff] %v1738
    %1771 = vst [vmem:[#allocation4 + $0x250] sm:$0xff] %v1739
    %1772 = vst [vmem:[#allocation4 + $0x298] sm:$0xff] %v1740
    %1773 = vst [vmem:[#allocation4 + $0x2e0] sm:$0xff] %v1741
    %1774 = vst [vmem:[#allocation4 + $0x328] sm:$0xff] %v1742
    %1775 = vst [vmem:[#allocation4 + $0x370] sm:$0xff] %v1743
    %1776 = vst [vmem:[#allocation4 + $0x3b8] sm:$0xff] %v1744
    %1777 = vst [vmem:[#allocation4 + $0x400] sm:$0xff] %v1745
    %1778 = vst [vmem:[#allocation4 + $0x448] sm:$0xff] %v1746
    %1779 = vst [vmem:[#allocation4 + $0x490] sm:$0xff] %v1747
    %1780 = vst [vmem:[#allocation4 + $0x4d8] sm:$0xff] %v1748
    %1781 = vst [vmem:[#allocation4 + $0x520] sm:$0xff] %v1749
    %1782 = vst [vmem:[#allocation4 + $0x568] sm:$0xff] %v1750
    %1783 = vst [vmem:[#allocation4 + $0x5b0] sm:$0xff] %v1751
    %1784 = vst [vmem:[#allocation4 + $0x5f8] sm:$0xff] %v1752
    %1785 = vst [vmem:[#allocation4 + $0x640] sm:$0xff] %v1753
    %1786 = vst [vmem:[#allocation4 + $0x688] sm:$0xff] %v1754
    %1787 = vst [vmem:[#allocation4 + $0x6d0] sm:$0xff] %v1755
    %1788 = vst [vmem:[#allocation4 + $0x718] sm:$0xff] %v1756
    %1789 = vst [vmem:[#allocation4 + $0x760] sm:$0xff] %v1757
    %1790 = vst [vmem:[#allocation4 + $0x7a8] sm:$0xff] %v1758
    %1791 = vst [vmem:[#allocation4 + $0x7f0] sm:$0xff] %v1759
    %1792 = vst [vmem:[#allocation4 + $0x838] sm:$0xff] %v1760
    %1793 = vst [vmem:[#allocation4 + $0x880] sm:$0xff] %v1761
    %1794 = vst [vmem:[#allocation4 + $0x8c8] sm:$0xff] %v1762
    %v1795 = vld [vmem:[%s1346] sm:$0xff]
    %v1796 = vld [vmem:[%s1346 + $0x8] sm:$0xff]
    %v1797 = vld [vmem:[%s1346 + $0x18] sm:$0xff]
    %v1798 = vld [vmem:[%s1346 + $0x20] sm:$0xff]
    %v1799 = vld [vmem:[%s1346 + $0x30] sm:$0xff]
    %v1800 = vld [vmem:[%s1346 + $0x38] sm:$0xff]
    %v1801 = vld [vmem:[%s1346 + $0x48] sm:$0xff]
    %v1802 = vld [vmem:[%s1346 + $0x50] sm:$0xff]
    %v1803 = vld [vmem:[%s1346 + $0x60] sm:$0xff]
    %v1804 = vld [vmem:[%s1346 + $0x68] sm:$0xff]
    %v1805 = vld [vmem:[%s1346 + $0x78] sm:$0xff]
    %v1806 = vld [vmem:[%s1346 + $0x80] sm:$0xff]
    %v1807 = vld [vmem:[%s1346 + $0x90] sm:$0xff]
    %v1808 = vld [vmem:[%s1346 + $0x98] sm:$0xff]
    %v1809 = vld [vmem:[%s1346 + $0xa8] sm:$0xff]
    %v1810 = vld [vmem:[%s1346 + $0xb0] sm:$0xff]
    %v1811 = vld [vmem:[%s1346 + $0xc0] sm:$0xff]
    %v1812 = vld [vmem:[%s1346 + $0xc8] sm:$0xff]
    %v1813 = vld [vmem:[%s1346 + $0xd8] sm:$0xff]
    %v1814 = vld [vmem:[%s1346 + $0xe0] sm:$0xff]
    %v1815 = vld [vmem:[%s1346 + $0xf0] sm:$0xff]
    %v1816 = vld [vmem:[%s1346 + $0xf8] sm:$0xff]
    %v1817 = vld [vmem:[%s1346 + $0x108] sm:$0xff]
    %v1818 = vld [vmem:[%s1346 + $0x110] sm:$0xff]
    %v1819 = vld [vmem:[%s1346 + $0x120] sm:$0xff]
    %v1820 = vld [vmem:[%s1346 + $0x128] sm:$0xff]
    %v1821 = vld [vmem:[%s1346 + $0x138] sm:$0xff]
    %v1822 = vld [vmem:[%s1346 + $0x140] sm:$0xff]
    %v1823 = vld [vmem:[%s1346 + $0x150] sm:$0xff]
    %v1824 = vld [vmem:[%s1346 + $0x158] sm:$0xff]
    %v1825 = vld [vmem:[%s1346 + $0x168] sm:$0xff]
    %v1826 = vld [vmem:[%s1346 + $0x170] sm:$0xff]
    %v1827 = vld [vmem:[%s1346 + $0x1b0] sm:$0xff]
    %v1828 = vld [vmem:[%s1346 + $0x1b8] sm:$0xff]
    %v1829 = vld [vmem:[%s1346 + $0x1c8] sm:$0xff]
    %v1830 = vld [vmem:[%s1346 + $0x1d0] sm:$0xff]
    %v1831 = vld [vmem:[%s1346 + $0x1e0] sm:$0xff]
    %v1832 = vld [vmem:[%s1346 + $0x1e8] sm:$0xff]
    %v1833 = vld [vmem:[%s1346 + $0x1f8] sm:$0xff]
    %v1834 = vld [vmem:[%s1346 + $0x200] sm:$0xff]
    %v1835 = vld [vmem:[%s1346 + $0x210] sm:$0xff]
    %v1836 = vld [vmem:[%s1346 + $0x218] sm:$0xff]
    %v1837 = vld [vmem:[%s1346 + $0x228] sm:$0xff]
    %v1838 = vld [vmem:[%s1346 + $0x230] sm:$0xff]
    %v1839 = vld [vmem:[%s1346 + $0x240] sm:$0xff]
    %v1840 = vld [vmem:[%s1346 + $0x248] sm:$0xff]
    %v1841 = vld [vmem:[%s1346 + $0x258] sm:$0xff]
    %v1842 = vld [vmem:[%s1346 + $0x260] sm:$0xff]
    %v1843 = vld [vmem:[%s1346 + $0x270] sm:$0xff]
    %v1844 = vld [vmem:[%s1346 + $0x278] sm:$0xff]
    %v1845 = vld [vmem:[%s1346 + $0x288] sm:$0xff]
    %v1846 = vld [vmem:[%s1346 + $0x290] sm:$0xff]
    %v1847 = vld [vmem:[%s1346 + $0x2a0] sm:$0xff]
    %v1848 = vld [vmem:[%s1346 + $0x2a8] sm:$0xff]
    %v1849 = vld [vmem:[%s1346 + $0x2b8] sm:$0xff]
    %v1850 = vld [vmem:[%s1346 + $0x2c0] sm:$0xff]
    %v1851 = vld [vmem:[%s1346 + $0x2d0] sm:$0xff]
    %v1852 = vld [vmem:[%s1346 + $0x2d8] sm:$0xff]
    %v1853 = vld [vmem:[%s1346 + $0x2e8] sm:$0xff]
    %v1854 = vld [vmem:[%s1346 + $0x2f0] sm:$0xff]
    %v1855 = vld [vmem:[%s1346 + $0x300] sm:$0xff]
    %v1856 = vld [vmem:[%s1346 + $0x308] sm:$0xff]
    %v1857 = vld [vmem:[%s1346 + $0x318] sm:$0xff]
    %v1858 = vld [vmem:[%s1346 + $0x320] sm:$0xff]
    %v1859 = vpack.c.bf16 %v1796, %v1795
    %v1860 = vpack.c.bf16 %v1798, %v1797
    %v1861 = vpack.c.bf16 %v1800, %v1799
    %v1862 = vpack.c.bf16 %v1802, %v1801
    %v1863 = vpack.c.bf16 %v1804, %v1803
    %v1864 = vpack.c.bf16 %v1806, %v1805
    %v1865 = vpack.c.bf16 %v1808, %v1807
    %v1866 = vpack.c.bf16 %v1810, %v1809
    %v1867 = vpack.c.bf16 %v1812, %v1811
    %v1868 = vpack.c.bf16 %v1814, %v1813
    %v1869 = vpack.c.bf16 %v1816, %v1815
    %v1870 = vpack.c.bf16 %v1818, %v1817
    %v1871 = vpack.c.bf16 %v1820, %v1819
    %v1872 = vpack.c.bf16 %v1822, %v1821
    %v1873 = vpack.c.bf16 %v1824, %v1823
    %v1874 = vpack.c.bf16 %v1826, %v1825
    %v1875 = vpack.c.bf16 %v1828, %v1827
    %v1876 = vpack.c.bf16 %v1830, %v1829
    %v1877 = vpack.c.bf16 %v1832, %v1831
    %v1878 = vpack.c.bf16 %v1834, %v1833
    %v1879 = vpack.c.bf16 %v1836, %v1835
    %v1880 = vpack.c.bf16 %v1838, %v1837
    %v1881 = vpack.c.bf16 %v1840, %v1839
    %v1882 = vpack.c.bf16 %v1842, %v1841
    %v1883 = vpack.c.bf16 %v1844, %v1843
    %v1884 = vpack.c.bf16 %v1846, %v1845
    %v1885 = vpack.c.bf16 %v1848, %v1847
    %v1886 = vpack.c.bf16 %v1850, %v1849
    %v1887 = vpack.c.bf16 %v1852, %v1851
    %v1888 = vpack.c.bf16 %v1854, %v1853
    %v1889 = vpack.c.bf16 %v1856, %v1855
    %v1890 = vpack.c.bf16 %v1858, %v1857
    %1891 = vst [vmem:[#allocation4 + $0x18] sm:$0xff] %v1859
    %1892 = vst [vmem:[#allocation4 + $0x60] sm:$0xff] %v1860
    %1893 = vst [vmem:[#allocation4 + $0xa8] sm:$0xff] %v1861
    %1894 = vst [vmem:[#allocation4 + $0xf0] sm:$0xff] %v1862
    %1895 = vst [vmem:[#allocation4 + $0x138] sm:$0xff] %v1863
    %1896 = vst [vmem:[#allocation4 + $0x180] sm:$0xff] %v1864
    %1897 = vst [vmem:[#allocation4 + $0x1c8] sm:$0xff] %v1865
    %1898 = vst [vmem:[#allocation4 + $0x210] sm:$0xff] %v1866
    %1899 = vst [vmem:[#allocation4 + $0x258] sm:$0xff] %v1867
    %1900 = vst [vmem:[#allocation4 + $0x2a0] sm:$0xff] %v1868
    %1901 = vst [vmem:[#allocation4 + $0x2e8] sm:$0xff] %v1869
    %1902 = vst [vmem:[#allocation4 + $0x330] sm:$0xff] %v1870
    %1903 = vst [vmem:[#allocation4 + $0x378] sm:$0xff] %v1871
    %1904 = vst [vmem:[#allocation4 + $0x3c0] sm:$0xff] %v1872
    %1905 = vst [vmem:[#allocation4 + $0x408] sm:$0xff] %v1873
    %1906 = vst [vmem:[#allocation4 + $0x450] sm:$0xff] %v1874
    %1907 = vst [vmem:[#allocation4 + $0x498] sm:$0xff] %v1875
    %1908 = vst [vmem:[#allocation4 + $0x4e0] sm:$0xff] %v1876
    %1909 = vst [vmem:[#allocation4 + $0x528] sm:$0xff] %v1877
    %1910 = vst [vmem:[#allocation4 + $0x570] sm:$0xff] %v1878
    %1911 = vst [vmem:[#allocation4 + $0x5b8] sm:$0xff] %v1879
    %1912 = vst [vmem:[#allocation4 + $0x600] sm:$0xff] %v1880
    %1913 = vst [vmem:[#allocation4 + $0x648] sm:$0xff] %v1881
    %1914 = vst [vmem:[#allocation4 + $0x690] sm:$0xff] %v1882
    %1915 = vst [vmem:[#allocation4 + $0x6d8] sm:$0xff] %v1883
    %1916 = vst [vmem:[#allocation4 + $0x720] sm:$0xff] %v1884
    %1917 = vst [vmem:[#allocation4 + $0x768] sm:$0xff] %v1885
    %1918 = vst [vmem:[#allocation4 + $0x7b0] sm:$0xff] %v1886
    %1919 = vst [vmem:[#allocation4 + $0x7f8] sm:$0xff] %v1887
    %1920 = vst [vmem:[#allocation4 + $0x840] sm:$0xff] %v1888
    %1921 = vst [vmem:[#allocation4 + $0x888] sm:$0xff] %v1889
    %1922 = vst [vmem:[#allocation4 + $0x8d0] sm:$0xff] %v1890
    %v1923 = vld [vmem:[%s1346 + $0x1] sm:$0xff]
    %v1924 = vld [vmem:[%s1346 + $0x9] sm:$0xff]
    %v1925 = vld [vmem:[%s1346 + $0x19] sm:$0xff]
    %v1926 = vld [vmem:[%s1346 + $0x21] sm:$0xff]
    %v1927 = vld [vmem:[%s1346 + $0x31] sm:$0xff]
    %v1928 = vld [vmem:[%s1346 + $0x39] sm:$0xff]
    %v1929 = vld [vmem:[%s1346 + $0x49] sm:$0xff]
    %v1930 = vld [vmem:[%s1346 + $0x51] sm:$0xff]
    %v1931 = vld [vmem:[%s1346 + $0x61] sm:$0xff]
    %v1932 = vld [vmem:[%s1346 + $0x69] sm:$0xff]
    %v1933 = vld [vmem:[%s1346 + $0x79] sm:$0xff]
    %v1934 = vld [vmem:[%s1346 + $0x81] sm:$0xff]
    %v1935 = vld [vmem:[%s1346 + $0x91] sm:$0xff]
    %v1936 = vld [vmem:[%s1346 + $0x99] sm:$0xff]
    %v1937 = vld [vmem:[%s1346 + $0xa9] sm:$0xff]
    %v1938 = vld [vmem:[%s1346 + $0xb1] sm:$0xff]
    %v1939 = vld [vmem:[%s1346 + $0xc1] sm:$0xff]
    %v1940 = vld [vmem:[%s1346 + $0xc9] sm:$0xff]
    %v1941 = vld [vmem:[%s1346 + $0xd9] sm:$0xff]
    %v1942 = vld [vmem:[%s1346 + $0xe1] sm:$0xff]
    %v1943 = vld [vmem:[%s1346 + $0xf1] sm:$0xff]
    %v1944 = vld [vmem:[%s1346 + $0xf9] sm:$0xff]
    %v1945 = vld [vmem:[%s1346 + $0x109] sm:$0xff]
    %v1946 = vld [vmem:[%s1346 + $0x111] sm:$0xff]
    %v1947 = vld [vmem:[%s1346 + $0x121] sm:$0xff]
    %v1948 = vld [vmem:[%s1346 + $0x129] sm:$0xff]
    %v1949 = vld [vmem:[%s1346 + $0x139] sm:$0xff]
    %v1950 = vld [vmem:[%s1346 + $0x141] sm:$0xff]
    %v1951 = vld [vmem:[%s1346 + $0x151] sm:$0xff]
    %v1952 = vld [vmem:[%s1346 + $0x159] sm:$0xff]
    %v1953 = vld [vmem:[%s1346 + $0x169] sm:$0xff]
    %v1954 = vld [vmem:[%s1346 + $0x171] sm:$0xff]
    %v1955 = vld [vmem:[%s1346 + $0x1b1] sm:$0xff]
    %v1956 = vld [vmem:[%s1346 + $0x1b9] sm:$0xff]
    %v1957 = vld [vmem:[%s1346 + $0x1c9] sm:$0xff]
    %v1958 = vld [vmem:[%s1346 + $0x1d1] sm:$0xff]
    %v1959 = vld [vmem:[%s1346 + $0x1e1] sm:$0xff]
    %v1960 = vld [vmem:[%s1346 + $0x1e9] sm:$0xff]
    %v1961 = vld [vmem:[%s1346 + $0x1f9] sm:$0xff]
    %v1962 = vld [vmem:[%s1346 + $0x201] sm:$0xff]
    %v1963 = vld [vmem:[%s1346 + $0x211] sm:$0xff]
    %v1964 = vld [vmem:[%s1346 + $0x219] sm:$0xff]
    %v1965 = vld [vmem:[%s1346 + $0x229] sm:$0xff]
    %v1966 = vld [vmem:[%s1346 + $0x231] sm:$0xff]
    %v1967 = vld [vmem:[%s1346 + $0x241] sm:$0xff]
    %v1968 = vld [vmem:[%s1346 + $0x249] sm:$0xff]
    %v1969 = vld [vmem:[%s1346 + $0x259] sm:$0xff]
    %v1970 = vld [vmem:[%s1346 + $0x261] sm:$0xff]
    %v1971 = vld [vmem:[%s1346 + $0x271] sm:$0xff]
    %v1972 = vld [vmem:[%s1346 + $0x279] sm:$0xff]
    %v1973 = vld [vmem:[%s1346 + $0x289] sm:$0xff]
    %v1974 = vld [vmem:[%s1346 + $0x291] sm:$0xff]
    %v1975 = vld [vmem:[%s1346 + $0x2a1] sm:$0xff]
    %v1976 = vld [vmem:[%s1346 + $0x2a9] sm:$0xff]
    %v1977 = vld [vmem:[%s1346 + $0x2b9] sm:$0xff]
    %v1978 = vld [vmem:[%s1346 + $0x2c1] sm:$0xff]
    %v1979 = vld [vmem:[%s1346 + $0x2d1] sm:$0xff]
    %v1980 = vld [vmem:[%s1346 + $0x2d9] sm:$0xff]
    %v1981 = vld [vmem:[%s1346 + $0x2e9] sm:$0xff]
    %v1982 = vld [vmem:[%s1346 + $0x2f1] sm:$0xff]
    %v1983 = vld [vmem:[%s1346 + $0x301] sm:$0xff]
    %v1984 = vld [vmem:[%s1346 + $0x309] sm:$0xff]
    %v1985 = vld [vmem:[%s1346 + $0x319] sm:$0xff]
    %v1986 = vld [vmem:[%s1346 + $0x321] sm:$0xff]
    %v1987 = vpack.c.bf16 %v1924, %v1923
    %v1988 = vpack.c.bf16 %v1926, %v1925
    %v1989 = vpack.c.bf16 %v1928, %v1927
    %v1990 = vpack.c.bf16 %v1930, %v1929
    %v1991 = vpack.c.bf16 %v1932, %v1931
    %v1992 = vpack.c.bf16 %v1934, %v1933
    %v1993 = vpack.c.bf16 %v1936, %v1935
    %v1994 = vpack.c.bf16 %v1938, %v1937
    %v1995 = vpack.c.bf16 %v1940, %v1939
    %v1996 = vpack.c.bf16 %v1942, %v1941
    %v1997 = vpack.c.bf16 %v1944, %v1943
    %v1998 = vpack.c.bf16 %v1946, %v1945
    %v1999 = vpack.c.bf16 %v1948, %v1947
    %v2000 = vpack.c.bf16 %v1950, %v1949
    %v2001 = vpack.c.bf16 %v1952, %v1951
    %v2002 = vpack.c.bf16 %v1954, %v1953
    %v2003 = vpack.c.bf16 %v1956, %v1955
    %v2004 = vpack.c.bf16 %v1958, %v1957
    %v2005 = vpack.c.bf16 %v1960, %v1959
    %v2006 = vpack.c.bf16 %v1962, %v1961
    %v2007 = vpack.c.bf16 %v1964, %v1963
    %v2008 = vpack.c.bf16 %v1966, %v1965
    %v2009 = vpack.c.bf16 %v1968, %v1967
    %v2010 = vpack.c.bf16 %v1970, %v1969
    %v2011 = vpack.c.bf16 %v1972, %v1971
    %v2012 = vpack.c.bf16 %v1974, %v1973
    %v2013 = vpack.c.bf16 %v1976, %v1975
    %v2014 = vpack.c.bf16 %v1978, %v1977
    %v2015 = vpack.c.bf16 %v1980, %v1979
    %v2016 = vpack.c.bf16 %v1982, %v1981
    %v2017 = vpack.c.bf16 %v1984, %v1983
    %v2018 = vpack.c.bf16 %v1986, %v1985
    %2019 = vst [vmem:[#allocation4 + $0x20] sm:$0xff] %v1987
    %2020 = vst [vmem:[#allocation4 + $0x68] sm:$0xff] %v1988
    %2021 = vst [vmem:[#allocation4 + $0xb0] sm:$0xff] %v1989
    %2022 = vst [vmem:[#allocation4 + $0xf8] sm:$0xff] %v1990
    %2023 = vst [vmem:[#allocation4 + $0x140] sm:$0xff] %v1991
    %2024 = vst [vmem:[#allocation4 + $0x188] sm:$0xff] %v1992
    %2025 = vst [vmem:[#allocation4 + $0x1d0] sm:$0xff] %v1993
    %2026 = vst [vmem:[#allocation4 + $0x218] sm:$0xff] %v1994
    %2027 = vst [vmem:[#allocation4 + $0x260] sm:$0xff] %v1995
    %2028 = vst [vmem:[#allocation4 + $0x2a8] sm:$0xff] %v1996
    %2029 = vst [vmem:[#allocation4 + $0x2f0] sm:$0xff] %v1997
    %2030 = vst [vmem:[#allocation4 + $0x338] sm:$0xff] %v1998
    %2031 = vst [vmem:[#allocation4 + $0x380] sm:$0xff] %v1999
    %2032 = vst [vmem:[#allocation4 + $0x3c8] sm:$0xff] %v2000
    %2033 = vst [vmem:[#allocation4 + $0x410] sm:$0xff] %v2001
    %2034 = vst [vmem:[#allocation4 + $0x458] sm:$0xff] %v2002
    %2035 = vst [vmem:[#allocation4 + $0x4a0] sm:$0xff] %v2003
    %2036 = vst [vmem:[#allocation4 + $0x4e8] sm:$0xff] %v2004
    %2037 = vst [vmem:[#allocation4 + $0x530] sm:$0xff] %v2005
    %2038 = vst [vmem:[#allocation4 + $0x578] sm:$0xff] %v2006
    %2039 = vst [vmem:[#allocation4 + $0x5c0] sm:$0xff] %v2007
    %2040 = vst [vmem:[#allocation4 + $0x608] sm:$0xff] %v2008
    %2041 = vst [vmem:[#allocation4 + $0x650] sm:$0xff] %v2009
    %2042 = vst [vmem:[#allocation4 + $0x698] sm:$0xff] %v2010
    %2043 = vst [vmem:[#allocation4 + $0x6e0] sm:$0xff] %v2011
    %2044 = vst [vmem:[#allocation4 + $0x728] sm:$0xff] %v2012
    %2045 = vst [vmem:[#allocation4 + $0x770] sm:$0xff] %v2013
    %2046 = vst [vmem:[#allocation4 + $0x7b8] sm:$0xff] %v2014
    %2047 = vst [vmem:[#allocation4 + $0x800] sm:$0xff] %v2015
    %2048 = vst [vmem:[#allocation4 + $0x848] sm:$0xff] %v2016
    %2049 = vst [vmem:[#allocation4 + $0x890] sm:$0xff] %v2017
    %2050 = vst [vmem:[#allocation4 + $0x8d8] sm:$0xff] %v2018
    %v2051 = vld [vmem:[%s1346 + $0x2] sm:$0xff]
    %v2052 = vld [vmem:[%s1346 + $0xa] sm:$0xff]
    %v2053 = vld [vmem:[%s1346 + $0x1a] sm:$0xff]
    %v2054 = vld [vmem:[%s1346 + $0x22] sm:$0xff]
    %v2055 = vld [vmem:[%s1346 + $0x32] sm:$0xff]
    %v2056 = vld [vmem:[%s1346 + $0x3a] sm:$0xff]
    %v2057 = vld [vmem:[%s1346 + $0x4a] sm:$0xff]
    %v2058 = vld [vmem:[%s1346 + $0x52] sm:$0xff]
    %v2059 = vld [vmem:[%s1346 + $0x62] sm:$0xff]
    %v2060 = vld [vmem:[%s1346 + $0x6a] sm:$0xff]
    %v2061 = vld [vmem:[%s1346 + $0x7a] sm:$0xff]
    %v2062 = vld [vmem:[%s1346 + $0x82] sm:$0xff]
    %v2063 = vld [vmem:[%s1346 + $0x92] sm:$0xff]
    %v2064 = vld [vmem:[%s1346 + $0x9a] sm:$0xff]
    %v2065 = vld [vmem:[%s1346 + $0xaa] sm:$0xff]
    %v2066 = vld [vmem:[%s1346 + $0xb2] sm:$0xff]
    %v2067 = vld [vmem:[%s1346 + $0xc2] sm:$0xff]
    %v2068 = vld [vmem:[%s1346 + $0xca] sm:$0xff]
    %v2069 = vld [vmem:[%s1346 + $0xda] sm:$0xff]
    %v2070 = vld [vmem:[%s1346 + $0xe2] sm:$0xff]
    %v2071 = vld [vmem:[%s1346 + $0xf2] sm:$0xff]
    %v2072 = vld [vmem:[%s1346 + $0xfa] sm:$0xff]
    %v2073 = vld [vmem:[%s1346 + $0x10a] sm:$0xff]
    %v2074 = vld [vmem:[%s1346 + $0x112] sm:$0xff]
    %v2075 = vld [vmem:[%s1346 + $0x122] sm:$0xff]
    %v2076 = vld [vmem:[%s1346 + $0x12a] sm:$0xff]
    %v2077 = vld [vmem:[%s1346 + $0x13a] sm:$0xff]
    %v2078 = vld [vmem:[%s1346 + $0x142] sm:$0xff]
    %v2079 = vld [vmem:[%s1346 + $0x152] sm:$0xff]
    %v2080 = vld [vmem:[%s1346 + $0x15a] sm:$0xff]
    %v2081 = vld [vmem:[%s1346 + $0x16a] sm:$0xff]
    %v2082 = vld [vmem:[%s1346 + $0x172] sm:$0xff]
    %v2083 = vld [vmem:[%s1346 + $0x1b2] sm:$0xff]
    %v2084 = vld [vmem:[%s1346 + $0x1ba] sm:$0xff]
    %v2085 = vld [vmem:[%s1346 + $0x1ca] sm:$0xff]
    %v2086 = vld [vmem:[%s1346 + $0x1d2] sm:$0xff]
    %v2087 = vld [vmem:[%s1346 + $0x1e2] sm:$0xff]
    %v2088 = vld [vmem:[%s1346 + $0x1ea] sm:$0xff]
    %v2089 = vld [vmem:[%s1346 + $0x1fa] sm:$0xff]
    %v2090 = vld [vmem:[%s1346 + $0x202] sm:$0xff]
    %v2091 = vld [vmem:[%s1346 + $0x212] sm:$0xff]
    %v2092 = vld [vmem:[%s1346 + $0x21a] sm:$0xff]
    %v2093 = vld [vmem:[%s1346 + $0x22a] sm:$0xff]
    %v2094 = vld [vmem:[%s1346 + $0x232] sm:$0xff]
    %v2095 = vld [vmem:[%s1346 + $0x242] sm:$0xff]
    %v2096 = vld [vmem:[%s1346 + $0x24a] sm:$0xff]
    %v2097 = vld [vmem:[%s1346 + $0x25a] sm:$0xff]
    %v2098 = vld [vmem:[%s1346 + $0x262] sm:$0xff]
    %v2099 = vld [vmem:[%s1346 + $0x272] sm:$0xff]
    %v2100 = vld [vmem:[%s1346 + $0x27a] sm:$0xff]
    %v2101 = vld [vmem:[%s1346 + $0x28a] sm:$0xff]
    %v2102 = vld [vmem:[%s1346 + $0x292] sm:$0xff]
    %v2103 = vld [vmem:[%s1346 + $0x2a2] sm:$0xff]
    %v2104 = vld [vmem:[%s1346 + $0x2aa] sm:$0xff]
    %v2105 = vld [vmem:[%s1346 + $0x2ba] sm:$0xff]
    %v2106 = vld [vmem:[%s1346 + $0x2c2] sm:$0xff]
    %v2107 = vld [vmem:[%s1346 + $0x2d2] sm:$0xff]
    %v2108 = vld [vmem:[%s1346 + $0x2da] sm:$0xff]
    %v2109 = vld [vmem:[%s1346 + $0x2ea] sm:$0xff]
    %v2110 = vld [vmem:[%s1346 + $0x2f2] sm:$0xff]
    %v2111 = vld [vmem:[%s1346 + $0x302] sm:$0xff]
    %v2112 = vld [vmem:[%s1346 + $0x30a] sm:$0xff]
    %v2113 = vld [vmem:[%s1346 + $0x31a] sm:$0xff]
    %v2114 = vld [vmem:[%s1346 + $0x322] sm:$0xff]
    %v2115 = vpack.c.bf16 %v2052, %v2051
    %v2116 = vpack.c.bf16 %v2054, %v2053
    %v2117 = vpack.c.bf16 %v2056, %v2055
    %v2118 = vpack.c.bf16 %v2058, %v2057
    %v2119 = vpack.c.bf16 %v2060, %v2059
    %v2120 = vpack.c.bf16 %v2062, %v2061
    %v2121 = vpack.c.bf16 %v2064, %v2063
    %v2122 = vpack.c.bf16 %v2066, %v2065
    %v2123 = vpack.c.bf16 %v2068, %v2067
    %v2124 = vpack.c.bf16 %v2070, %v2069
    %v2125 = vpack.c.bf16 %v2072, %v2071
    %v2126 = vpack.c.bf16 %v2074, %v2073
    %v2127 = vpack.c.bf16 %v2076, %v2075
    %v2128 = vpack.c.bf16 %v2078, %v2077
    %v2129 = vpack.c.bf16 %v2080, %v2079
    %v2130 = vpack.c.bf16 %v2082, %v2081
    %v2131 = vpack.c.bf16 %v2084, %v2083
    %v2132 = vpack.c.bf16 %v2086, %v2085
    %v2133 = vpack.c.bf16 %v2088, %v2087
    %v2134 = vpack.c.bf16 %v2090, %v2089
    %v2135 = vpack.c.bf16 %v2092, %v2091
    %v2136 = vpack.c.bf16 %v2094, %v2093
    %v2137 = vpack.c.bf16 %v2096, %v2095
    %v2138 = vpack.c.bf16 %v2098, %v2097
    %v2139 = vpack.c.bf16 %v2100, %v2099
    %v2140 = vpack.c.bf16 %v2102, %v2101
    %v2141 = vpack.c.bf16 %v2104, %v2103
    %v2142 = vpack.c.bf16 %v2106, %v2105
    %v2143 = vpack.c.bf16 %v2108, %v2107
    %v2144 = vpack.c.bf16 %v2110, %v2109
    %v2145 = vpack.c.bf16 %v2112, %v2111
    %v2146 = vpack.c.bf16 %v2114, %v2113
    %2147 = vst [vmem:[#allocation4 + $0x28] sm:$0xff] %v2115
    %2148 = vst [vmem:[#allocation4 + $0x70] sm:$0xff] %v2116
    %2149 = vst [vmem:[#allocation4 + $0xb8] sm:$0xff] %v2117
    %2150 = vst [vmem:[#allocation4 + $0x100] sm:$0xff] %v2118
    %2151 = vst [vmem:[#allocation4 + $0x148] sm:$0xff] %v2119
    %2152 = vst [vmem:[#allocation4 + $0x190] sm:$0xff] %v2120
    %2153 = vst [vmem:[#allocation4 + $0x1d8] sm:$0xff] %v2121
    %2154 = vst [vmem:[#allocation4 + $0x220] sm:$0xff] %v2122
    %2155 = vst [vmem:[#allocation4 + $0x268] sm:$0xff] %v2123
    %2156 = vst [vmem:[#allocation4 + $0x2b0] sm:$0xff] %v2124
    %2157 = vst [vmem:[#allocation4 + $0x2f8] sm:$0xff] %v2125
    %2158 = vst [vmem:[#allocation4 + $0x340] sm:$0xff] %v2126
    %2159 = vst [vmem:[#allocation4 + $0x388] sm:$0xff] %v2127
    %2160 = vst [vmem:[#allocation4 + $0x3d0] sm:$0xff] %v2128
    %2161 = vst [vmem:[#allocation4 + $0x418] sm:$0xff] %v2129
    %2162 = vst [vmem:[#allocation4 + $0x460] sm:$0xff] %v2130
    %2163 = vst [vmem:[#allocation4 + $0x4a8] sm:$0xff] %v2131
    %2164 = vst [vmem:[#allocation4 + $0x4f0] sm:$0xff] %v2132
    %2165 = vst [vmem:[#allocation4 + $0x538] sm:$0xff] %v2133
    %2166 = vst [vmem:[#allocation4 + $0x580] sm:$0xff] %v2134
    %2167 = vst [vmem:[#allocation4 + $0x5c8] sm:$0xff] %v2135
    %2168 = vst [vmem:[#allocation4 + $0x610] sm:$0xff] %v2136
    %2169 = vst [vmem:[#allocation4 + $0x658] sm:$0xff] %v2137
    %2170 = vst [vmem:[#allocation4 + $0x6a0] sm:$0xff] %v2138
    %2171 = vst [vmem:[#allocation4 + $0x6e8] sm:$0xff] %v2139
    %2172 = vst [vmem:[#allocation4 + $0x730] sm:$0xff] %v2140
    %2173 = vst [vmem:[#allocation4 + $0x778] sm:$0xff] %v2141
    %2174 = vst [vmem:[#allocation4 + $0x7c0] sm:$0xff] %v2142
    %2175 = vst [vmem:[#allocation4 + $0x808] sm:$0xff] %v2143
    %2176 = vst [vmem:[#allocation4 + $0x850] sm:$0xff] %v2144
    %2177 = vst [vmem:[#allocation4 + $0x898] sm:$0xff] %v2145
    %2178 = vst [vmem:[#allocation4 + $0x8e0] sm:$0xff] %v2146
    %s2179 = scalar_lea.vmem [#allocation3], 48
    %v2180 = vld [vmem:[%s2179] sm:$0xff]
    %v2181 = vld [vmem:[%s2179 + $0x8] sm:$0xff]
    %v2182 = vld [vmem:[%s2179 + $0x18] sm:$0xff]
    %v2183 = vld [vmem:[%s2179 + $0x20] sm:$0xff]
    %v2184 = vld [vmem:[%s2179 + $0x30] sm:$0xff]
    %v2185 = vld [vmem:[%s2179 + $0x38] sm:$0xff]
    %v2186 = vld [vmem:[%s2179 + $0x48] sm:$0xff]
    %v2187 = vld [vmem:[%s2179 + $0x50] sm:$0xff]
    %v2188 = vld [vmem:[%s2179 + $0x60] sm:$0xff]
    %v2189 = vld [vmem:[%s2179 + $0x68] sm:$0xff]
    %v2190 = vld [vmem:[%s2179 + $0x78] sm:$0xff]
    %v2191 = vld [vmem:[%s2179 + $0x80] sm:$0xff]
    %v2192 = vld [vmem:[%s2179 + $0x90] sm:$0xff]
    %v2193 = vld [vmem:[%s2179 + $0x98] sm:$0xff]
    %v2194 = vld [vmem:[%s2179 + $0xa8] sm:$0xff]
    %v2195 = vld [vmem:[%s2179 + $0xb0] sm:$0xff]
    %v2196 = vld [vmem:[%s2179 + $0xc0] sm:$0xff]
    %v2197 = vld [vmem:[%s2179 + $0xc8] sm:$0xff]
    %v2198 = vld [vmem:[%s2179 + $0xd8] sm:$0xff]
    %v2199 = vld [vmem:[%s2179 + $0xe0] sm:$0xff]
    %v2200 = vld [vmem:[%s2179 + $0xf0] sm:$0xff]
    %v2201 = vld [vmem:[%s2179 + $0xf8] sm:$0xff]
    %v2202 = vld [vmem:[%s2179 + $0x108] sm:$0xff]
    %v2203 = vld [vmem:[%s2179 + $0x110] sm:$0xff]
    %v2204 = vld [vmem:[%s2179 + $0x120] sm:$0xff]
    %v2205 = vld [vmem:[%s2179 + $0x128] sm:$0xff]
    %v2206 = vld [vmem:[%s2179 + $0x138] sm:$0xff]
    %v2207 = vld [vmem:[%s2179 + $0x140] sm:$0xff]
    %v2208 = vld [vmem:[%s2179 + $0x150] sm:$0xff]
    %v2209 = vld [vmem:[%s2179 + $0x158] sm:$0xff]
    %v2210 = vld [vmem:[%s2179 + $0x168] sm:$0xff]
    %v2211 = vld [vmem:[%s2179 + $0x170] sm:$0xff]
    %v2212 = vld [vmem:[%s2179 + $0x1b0] sm:$0xff]
    %v2213 = vld [vmem:[%s2179 + $0x1b8] sm:$0xff]
    %v2214 = vld [vmem:[%s2179 + $0x1c8] sm:$0xff]
    %v2215 = vld [vmem:[%s2179 + $0x1d0] sm:$0xff]
    %v2216 = vld [vmem:[%s2179 + $0x1e0] sm:$0xff]
    %v2217 = vld [vmem:[%s2179 + $0x1e8] sm:$0xff]
    %v2218 = vld [vmem:[%s2179 + $0x1f8] sm:$0xff]
    %v2219 = vld [vmem:[%s2179 + $0x200] sm:$0xff]
    %v2220 = vld [vmem:[%s2179 + $0x210] sm:$0xff]
    %v2221 = vld [vmem:[%s2179 + $0x218] sm:$0xff]
    %v2222 = vld [vmem:[%s2179 + $0x228] sm:$0xff]
    %v2223 = vld [vmem:[%s2179 + $0x230] sm:$0xff]
    %v2224 = vld [vmem:[%s2179 + $0x240] sm:$0xff]
    %v2225 = vld [vmem:[%s2179 + $0x248] sm:$0xff]
    %v2226 = vld [vmem:[%s2179 + $0x258] sm:$0xff]
    %v2227 = vld [vmem:[%s2179 + $0x260] sm:$0xff]
    %v2228 = vld [vmem:[%s2179 + $0x270] sm:$0xff]
    %v2229 = vld [vmem:[%s2179 + $0x278] sm:$0xff]
    %v2230 = vld [vmem:[%s2179 + $0x288] sm:$0xff]
    %v2231 = vld [vmem:[%s2179 + $0x290] sm:$0xff]
    %v2232 = vld [vmem:[%s2179 + $0x2a0] sm:$0xff]
    %v2233 = vld [vmem:[%s2179 + $0x2a8] sm:$0xff]
    %v2234 = vld [vmem:[%s2179 + $0x2b8] sm:$0xff]
    %v2235 = vld [vmem:[%s2179 + $0x2c0] sm:$0xff]
    %v2236 = vld [vmem:[%s2179 + $0x2d0] sm:$0xff]
    %v2237 = vld [vmem:[%s2179 + $0x2d8] sm:$0xff]
    %v2238 = vld [vmem:[%s2179 + $0x2e8] sm:$0xff]
    %v2239 = vld [vmem:[%s2179 + $0x2f0] sm:$0xff]
    %v2240 = vld [vmem:[%s2179 + $0x300] sm:$0xff]
    %v2241 = vld [vmem:[%s2179 + $0x308] sm:$0xff]
    %v2242 = vld [vmem:[%s2179 + $0x318] sm:$0xff]
    %v2243 = vld [vmem:[%s2179 + $0x320] sm:$0xff]
    %v2244 = vpack.c.bf16 %v2181, %v2180
    %v2245 = vpack.c.bf16 %v2183, %v2182
    %v2246 = vpack.c.bf16 %v2185, %v2184
    %v2247 = vpack.c.bf16 %v2187, %v2186
    %v2248 = vpack.c.bf16 %v2189, %v2188
    %v2249 = vpack.c.bf16 %v2191, %v2190
    %v2250 = vpack.c.bf16 %v2193, %v2192
    %v2251 = vpack.c.bf16 %v2195, %v2194
    %v2252 = vpack.c.bf16 %v2197, %v2196
    %v2253 = vpack.c.bf16 %v2199, %v2198
    %v2254 = vpack.c.bf16 %v2201, %v2200
    %v2255 = vpack.c.bf16 %v2203, %v2202
    %v2256 = vpack.c.bf16 %v2205, %v2204
    %v2257 = vpack.c.bf16 %v2207, %v2206
    %v2258 = vpack.c.bf16 %v2209, %v2208
    %v2259 = vpack.c.bf16 %v2211, %v2210
    %v2260 = vpack.c.bf16 %v2213, %v2212
    %v2261 = vpack.c.bf16 %v2215, %v2214
    %v2262 = vpack.c.bf16 %v2217, %v2216
    %v2263 = vpack.c.bf16 %v2219, %v2218
    %v2264 = vpack.c.bf16 %v2221, %v2220
    %v2265 = vpack.c.bf16 %v2223, %v2222
    %v2266 = vpack.c.bf16 %v2225, %v2224
    %v2267 = vpack.c.bf16 %v2227, %v2226
    %v2268 = vpack.c.bf16 %v2229, %v2228
    %v2269 = vpack.c.bf16 %v2231, %v2230
    %v2270 = vpack.c.bf16 %v2233, %v2232
    %v2271 = vpack.c.bf16 %v2235, %v2234
    %v2272 = vpack.c.bf16 %v2237, %v2236
    %v2273 = vpack.c.bf16 %v2239, %v2238
    %v2274 = vpack.c.bf16 %v2241, %v2240
    %v2275 = vpack.c.bf16 %v2243, %v2242
    %2276 = vst [vmem:[#allocation4 + $0x30] sm:$0xff] %v2244
    %2277 = vst [vmem:[#allocation4 + $0x78] sm:$0xff] %v2245
    %2278 = vst [vmem:[#allocation4 + $0xc0] sm:$0xff] %v2246
    %2279 = vst [vmem:[#allocation4 + $0x108] sm:$0xff] %v2247
    %2280 = vst [vmem:[#allocation4 + $0x150] sm:$0xff] %v2248
    %2281 = vst [vmem:[#allocation4 + $0x198] sm:$0xff] %v2249
    %2282 = vst [vmem:[#allocation4 + $0x1e0] sm:$0xff] %v2250
    %2283 = vst [vmem:[#allocation4 + $0x228] sm:$0xff] %v2251
    %2284 = vst [vmem:[#allocation4 + $0x270] sm:$0xff] %v2252
    %2285 = vst [vmem:[#allocation4 + $0x2b8] sm:$0xff] %v2253
    %2286 = vst [vmem:[#allocation4 + $0x300] sm:$0xff] %v2254
    %2287 = vst [vmem:[#allocation4 + $0x348] sm:$0xff] %v2255
    %2288 = vst [vmem:[#allocation4 + $0x390] sm:$0xff] %v2256
    %2289 = vst [vmem:[#allocation4 + $0x3d8] sm:$0xff] %v2257
    %2290 = vst [vmem:[#allocation4 + $0x420] sm:$0xff] %v2258
    %2291 = vst [vmem:[#allocation4 + $0x468] sm:$0xff] %v2259
    %2292 = vst [vmem:[#allocation4 + $0x4b0] sm:$0xff] %v2260
    %2293 = vst [vmem:[#allocation4 + $0x4f8] sm:$0xff] %v2261
    %2294 = vst [vmem:[#allocation4 + $0x540] sm:$0xff] %v2262
    %2295 = vst [vmem:[#allocation4 + $0x588] sm:$0xff] %v2263
    %2296 = vst [vmem:[#allocation4 + $0x5d0] sm:$0xff] %v2264
    %2297 = vst [vmem:[#allocation4 + $0x618] sm:$0xff] %v2265
    %2298 = vst [vmem:[#allocation4 + $0x660] sm:$0xff] %v2266
    %2299 = vst [vmem:[#allocation4 + $0x6a8] sm:$0xff] %v2267
    %2300 = vst [vmem:[#allocation4 + $0x6f0] sm:$0xff] %v2268
    %2301 = vst [vmem:[#allocation4 + $0x738] sm:$0xff] %v2269
    %2302 = vst [vmem:[#allocation4 + $0x780] sm:$0xff] %v2270
    %2303 = vst [vmem:[#allocation4 + $0x7c8] sm:$0xff] %v2271
    %2304 = vst [vmem:[#allocation4 + $0x810] sm:$0xff] %v2272
    %2305 = vst [vmem:[#allocation4 + $0x858] sm:$0xff] %v2273
    %2306 = vst [vmem:[#allocation4 + $0x8a0] sm:$0xff] %v2274
    %2307 = vst [vmem:[#allocation4 + $0x8e8] sm:$0xff] %v2275
    %v2308 = vld [vmem:[%s2179 + $0x1] sm:$0xff]
    %v2309 = vld [vmem:[%s2179 + $0x9] sm:$0xff]
    %v2310 = vld [vmem:[%s2179 + $0x19] sm:$0xff]
    %v2311 = vld [vmem:[%s2179 + $0x21] sm:$0xff]
    %v2312 = vld [vmem:[%s2179 + $0x31] sm:$0xff]
    %v2313 = vld [vmem:[%s2179 + $0x39] sm:$0xff]
    %v2314 = vld [vmem:[%s2179 + $0x49] sm:$0xff]
    %v2315 = vld [vmem:[%s2179 + $0x51] sm:$0xff]
    %v2316 = vld [vmem:[%s2179 + $0x61] sm:$0xff]
    %v2317 = vld [vmem:[%s2179 + $0x69] sm:$0xff]
    %v2318 = vld [vmem:[%s2179 + $0x79] sm:$0xff]
    %v2319 = vld [vmem:[%s2179 + $0x81] sm:$0xff]
    %v2320 = vld [vmem:[%s2179 + $0x91] sm:$0xff]
    %v2321 = vld [vmem:[%s2179 + $0x99] sm:$0xff]
    %v2322 = vld [vmem:[%s2179 + $0xa9] sm:$0xff]
    %v2323 = vld [vmem:[%s2179 + $0xb1] sm:$0xff]
    %v2324 = vld [vmem:[%s2179 + $0xc1] sm:$0xff]
    %v2325 = vld [vmem:[%s2179 + $0xc9] sm:$0xff]
    %v2326 = vld [vmem:[%s2179 + $0xd9] sm:$0xff]
    %v2327 = vld [vmem:[%s2179 + $0xe1] sm:$0xff]
    %v2328 = vld [vmem:[%s2179 + $0xf1] sm:$0xff]
    %v2329 = vld [vmem:[%s2179 + $0xf9] sm:$0xff]
    %v2330 = vld [vmem:[%s2179 + $0x109] sm:$0xff]
    %v2331 = vld [vmem:[%s2179 + $0x111] sm:$0xff]
    %v2332 = vld [vmem:[%s2179 + $0x121] sm:$0xff]
    %v2333 = vld [vmem:[%s2179 + $0x129] sm:$0xff]
    %v2334 = vld [vmem:[%s2179 + $0x139] sm:$0xff]
    %v2335 = vld [vmem:[%s2179 + $0x141] sm:$0xff]
    %v2336 = vld [vmem:[%s2179 + $0x151] sm:$0xff]
    %v2337 = vld [vmem:[%s2179 + $0x159] sm:$0xff]
    %v2338 = vld [vmem:[%s2179 + $0x169] sm:$0xff]
    %v2339 = vld [vmem:[%s2179 + $0x171] sm:$0xff]
    %v2340 = vld [vmem:[%s2179 + $0x1b1] sm:$0xff]
    %v2341 = vld [vmem:[%s2179 + $0x1b9] sm:$0xff]
    %v2342 = vld [vmem:[%s2179 + $0x1c9] sm:$0xff]
    %v2343 = vld [vmem:[%s2179 + $0x1d1] sm:$0xff]
    %v2344 = vld [vmem:[%s2179 + $0x1e1] sm:$0xff]
    %v2345 = vld [vmem:[%s2179 + $0x1e9] sm:$0xff]
    %v2346 = vld [vmem:[%s2179 + $0x1f9] sm:$0xff]
    %v2347 = vld [vmem:[%s2179 + $0x201] sm:$0xff]
    %v2348 = vld [vmem:[%s2179 + $0x211] sm:$0xff]
    %v2349 = vld [vmem:[%s2179 + $0x219] sm:$0xff]
    %v2350 = vld [vmem:[%s2179 + $0x229] sm:$0xff]
    %v2351 = vld [vmem:[%s2179 + $0x231] sm:$0xff]
    %v2352 = vld [vmem:[%s2179 + $0x241] sm:$0xff]
    %v2353 = vld [vmem:[%s2179 + $0x249] sm:$0xff]
    %v2354 = vld [vmem:[%s2179 + $0x259] sm:$0xff]
    %v2355 = vld [vmem:[%s2179 + $0x261] sm:$0xff]
    %v2356 = vld [vmem:[%s2179 + $0x271] sm:$0xff]
    %v2357 = vld [vmem:[%s2179 + $0x279] sm:$0xff]
    %v2358 = vld [vmem:[%s2179 + $0x289] sm:$0xff]
    %v2359 = vld [vmem:[%s2179 + $0x291] sm:$0xff]
    %v2360 = vld [vmem:[%s2179 + $0x2a1] sm:$0xff]
    %v2361 = vld [vmem:[%s2179 + $0x2a9] sm:$0xff]
    %v2362 = vld [vmem:[%s2179 + $0x2b9] sm:$0xff]
    %v2363 = vld [vmem:[%s2179 + $0x2c1] sm:$0xff]
    %v2364 = vld [vmem:[%s2179 + $0x2d1] sm:$0xff]
    %v2365 = vld [vmem:[%s2179 + $0x2d9] sm:$0xff]
    %v2366 = vld [vmem:[%s2179 + $0x2e9] sm:$0xff]
    %v2367 = vld [vmem:[%s2179 + $0x2f1] sm:$0xff]
    %v2368 = vld [vmem:[%s2179 + $0x301] sm:$0xff]
    %v2369 = vld [vmem:[%s2179 + $0x309] sm:$0xff]
    %v2370 = vld [vmem:[%s2179 + $0x319] sm:$0xff]
    %v2371 = vld [vmem:[%s2179 + $0x321] sm:$0xff]
    %v2372 = vpack.c.bf16 %v2309, %v2308
    %v2373 = vpack.c.bf16 %v2311, %v2310
    %v2374 = vpack.c.bf16 %v2313, %v2312
    %v2375 = vpack.c.bf16 %v2315, %v2314
    %v2376 = vpack.c.bf16 %v2317, %v2316
    %v2377 = vpack.c.bf16 %v2319, %v2318
    %v2378 = vpack.c.bf16 %v2321, %v2320
    %v2379 = vpack.c.bf16 %v2323, %v2322
    %v2380 = vpack.c.bf16 %v2325, %v2324
    %v2381 = vpack.c.bf16 %v2327, %v2326
    %v2382 = vpack.c.bf16 %v2329, %v2328
    %v2383 = vpack.c.bf16 %v2331, %v2330
    %v2384 = vpack.c.bf16 %v2333, %v2332
    %v2385 = vpack.c.bf16 %v2335, %v2334
    %v2386 = vpack.c.bf16 %v2337, %v2336
    %v2387 = vpack.c.bf16 %v2339, %v2338
    %v2388 = vpack.c.bf16 %v2341, %v2340
    %v2389 = vpack.c.bf16 %v2343, %v2342
    %v2390 = vpack.c.bf16 %v2345, %v2344
    %v2391 = vpack.c.bf16 %v2347, %v2346
    %v2392 = vpack.c.bf16 %v2349, %v2348
    %v2393 = vpack.c.bf16 %v2351, %v2350
    %v2394 = vpack.c.bf16 %v2353, %v2352
    %v2395 = vpack.c.bf16 %v2355, %v2354
    %v2396 = vpack.c.bf16 %v2357, %v2356
    %v2397 = vpack.c.bf16 %v2359, %v2358
    %v2398 = vpack.c.bf16 %v2361, %v2360
    %v2399 = vpack.c.bf16 %v2363, %v2362
    %v2400 = vpack.c.bf16 %v2365, %v2364
    %v2401 = vpack.c.bf16 %v2367, %v2366
    %v2402 = vpack.c.bf16 %v2369, %v2368
    %v2403 = vpack.c.bf16 %v2371, %v2370
    %2404 = vst [vmem:[#allocation4 + $0x38] sm:$0xff] %v2372
    %2405 = vst [vmem:[#allocation4 + $0x80] sm:$0xff] %v2373
    %2406 = vst [vmem:[#allocation4 + $0xc8] sm:$0xff] %v2374
    %2407 = vst [vmem:[#allocation4 + $0x110] sm:$0xff] %v2375
    %2408 = vst [vmem:[#allocation4 + $0x158] sm:$0xff] %v2376
    %2409 = vst [vmem:[#allocation4 + $0x1a0] sm:$0xff] %v2377
    %2410 = vst [vmem:[#allocation4 + $0x1e8] sm:$0xff] %v2378
    %2411 = vst [vmem:[#allocation4 + $0x230] sm:$0xff] %v2379
    %2412 = vst [vmem:[#allocation4 + $0x278] sm:$0xff] %v2380
    %2413 = vst [vmem:[#allocation4 + $0x2c0] sm:$0xff] %v2381
    %2414 = vst [vmem:[#allocation4 + $0x308] sm:$0xff] %v2382
    %2415 = vst [vmem:[#allocation4 + $0x350] sm:$0xff] %v2383
    %2416 = vst [vmem:[#allocation4 + $0x398] sm:$0xff] %v2384
    %2417 = vst [vmem:[#allocation4 + $0x3e0] sm:$0xff] %v2385
    %2418 = vst [vmem:[#allocation4 + $0x428] sm:$0xff] %v2386
    %2419 = vst [vmem:[#allocation4 + $0x470] sm:$0xff] %v2387
    %2420 = vst [vmem:[#allocation4 + $0x4b8] sm:$0xff] %v2388
    %2421 = vst [vmem:[#allocation4 + $0x500] sm:$0xff] %v2389
    %2422 = vst [vmem:[#allocation4 + $0x548] sm:$0xff] %v2390
    %2423 = vst [vmem:[#allocation4 + $0x590] sm:$0xff] %v2391
    %2424 = vst [vmem:[#allocation4 + $0x5d8] sm:$0xff] %v2392
    %2425 = vst [vmem:[#allocation4 + $0x620] sm:$0xff] %v2393
    %2426 = vst [vmem:[#allocation4 + $0x668] sm:$0xff] %v2394
    %2427 = vst [vmem:[#allocation4 + $0x6b0] sm:$0xff] %v2395
    %2428 = vst [vmem:[#allocation4 + $0x6f8] sm:$0xff] %v2396
    %2429 = vst [vmem:[#allocation4 + $0x740] sm:$0xff] %v2397
    %2430 = vst [vmem:[#allocation4 + $0x788] sm:$0xff] %v2398
    %2431 = vst [vmem:[#allocation4 + $0x7d0] sm:$0xff] %v2399
    %2432 = vst [vmem:[#allocation4 + $0x818] sm:$0xff] %v2400
    %2433 = vst [vmem:[#allocation4 + $0x860] sm:$0xff] %v2401
    %2434 = vst [vmem:[#allocation4 + $0x8a8] sm:$0xff] %v2402
    %2435 = vst [vmem:[#allocation4 + $0x8f0] sm:$0xff] %v2403
    %v2436 = vld [vmem:[%s2179 + $0x2] sm:$0xff]
    %v2437 = vld [vmem:[%s2179 + $0xa] sm:$0xff]
    %v2438 = vld [vmem:[%s2179 + $0x1a] sm:$0xff]
    %v2439 = vld [vmem:[%s2179 + $0x22] sm:$0xff]
    %v2440 = vld [vmem:[%s2179 + $0x32] sm:$0xff]
    %v2441 = vld [vmem:[%s2179 + $0x3a] sm:$0xff]
    %v2442 = vld [vmem:[%s2179 + $0x4a] sm:$0xff]
    %v2443 = vld [vmem:[%s2179 + $0x52] sm:$0xff]
    %v2444 = vld [vmem:[%s2179 + $0x62] sm:$0xff]
    %v2445 = vld [vmem:[%s2179 + $0x6a] sm:$0xff]
    %v2446 = vld [vmem:[%s2179 + $0x7a] sm:$0xff]
    %v2447 = vld [vmem:[%s2179 + $0x82] sm:$0xff]
    %v2448 = vld [vmem:[%s2179 + $0x92] sm:$0xff]
    %v2449 = vld [vmem:[%s2179 + $0x9a] sm:$0xff]
    %v2450 = vld [vmem:[%s2179 + $0xaa] sm:$0xff]
    %v2451 = vld [vmem:[%s2179 + $0xb2] sm:$0xff]
    %v2452 = vld [vmem:[%s2179 + $0xc2] sm:$0xff]
    %v2453 = vld [vmem:[%s2179 + $0xca] sm:$0xff]
    %v2454 = vld [vmem:[%s2179 + $0xda] sm:$0xff]
    %v2455 = vld [vmem:[%s2179 + $0xe2] sm:$0xff]
    %v2456 = vld [vmem:[%s2179 + $0xf2] sm:$0xff]
    %v2457 = vld [vmem:[%s2179 + $0xfa] sm:$0xff]
    %v2458 = vld [vmem:[%s2179 + $0x10a] sm:$0xff]
    %v2459 = vld [vmem:[%s2179 + $0x112] sm:$0xff]
    %v2460 = vld [vmem:[%s2179 + $0x122] sm:$0xff]
    %v2461 = vld [vmem:[%s2179 + $0x12a] sm:$0xff]
    %v2462 = vld [vmem:[%s2179 + $0x13a] sm:$0xff]
    %v2463 = vld [vmem:[%s2179 + $0x142] sm:$0xff]
    %v2464 = vld [vmem:[%s2179 + $0x152] sm:$0xff]
    %v2465 = vld [vmem:[%s2179 + $0x15a] sm:$0xff]
    %v2466 = vld [vmem:[%s2179 + $0x16a] sm:$0xff]
    %v2467 = vld [vmem:[%s2179 + $0x172] sm:$0xff]
    %v2468 = vld [vmem:[%s2179 + $0x1b2] sm:$0xff]
    %v2469 = vld [vmem:[%s2179 + $0x1ba] sm:$0xff]
    %v2470 = vld [vmem:[%s2179 + $0x1ca] sm:$0xff]
    %v2471 = vld [vmem:[%s2179 + $0x1d2] sm:$0xff]
    %v2472 = vld [vmem:[%s2179 + $0x1e2] sm:$0xff]
    %v2473 = vld [vmem:[%s2179 + $0x1ea] sm:$0xff]
    %v2474 = vld [vmem:[%s2179 + $0x1fa] sm:$0xff]
    %v2475 = vld [vmem:[%s2179 + $0x202] sm:$0xff]
    %v2476 = vld [vmem:[%s2179 + $0x212] sm:$0xff]
    %v2477 = vld [vmem:[%s2179 + $0x21a] sm:$0xff]
    %v2478 = vld [vmem:[%s2179 + $0x22a] sm:$0xff]
    %v2479 = vld [vmem:[%s2179 + $0x232] sm:$0xff]
    %v2480 = vld [vmem:[%s2179 + $0x242] sm:$0xff]
    %v2481 = vld [vmem:[%s2179 + $0x24a] sm:$0xff]
    %v2482 = vld [vmem:[%s2179 + $0x25a] sm:$0xff]
    %v2483 = vld [vmem:[%s2179 + $0x262] sm:$0xff]
    %v2484 = vld [vmem:[%s2179 + $0x272] sm:$0xff]
    %v2485 = vld [vmem:[%s2179 + $0x27a] sm:$0xff]
    %v2486 = vld [vmem:[%s2179 + $0x28a] sm:$0xff]
    %v2487 = vld [vmem:[%s2179 + $0x292] sm:$0xff]
    %v2488 = vld [vmem:[%s2179 + $0x2a2] sm:$0xff]
    %v2489 = vld [vmem:[%s2179 + $0x2aa] sm:$0xff]
    %v2490 = vld [vmem:[%s2179 + $0x2ba] sm:$0xff]
    %v2491 = vld [vmem:[%s2179 + $0x2c2] sm:$0xff]
    %v2492 = vld [vmem:[%s2179 + $0x2d2] sm:$0xff]
    %v2493 = vld [vmem:[%s2179 + $0x2da] sm:$0xff]
    %v2494 = vld [vmem:[%s2179 + $0x2ea] sm:$0xff]
    %v2495 = vld [vmem:[%s2179 + $0x2f2] sm:$0xff]
    %v2496 = vld [vmem:[%s2179 + $0x302] sm:$0xff]
    %v2497 = vld [vmem:[%s2179 + $0x30a] sm:$0xff]
    %v2498 = vld [vmem:[%s2179 + $0x31a] sm:$0xff]
    %v2499 = vld [vmem:[%s2179 + $0x322] sm:$0xff]
    %v2500 = vpack.c.bf16 %v2437, %v2436
    %v2501 = vpack.c.bf16 %v2439, %v2438
    %v2502 = vpack.c.bf16 %v2441, %v2440
    %v2503 = vpack.c.bf16 %v2443, %v2442
    %v2504 = vpack.c.bf16 %v2445, %v2444
    %v2505 = vpack.c.bf16 %v2447, %v2446
    %v2506 = vpack.c.bf16 %v2449, %v2448
    %v2507 = vpack.c.bf16 %v2451, %v2450
    %v2508 = vpack.c.bf16 %v2453, %v2452
    %v2509 = vpack.c.bf16 %v2455, %v2454
    %v2510 = vpack.c.bf16 %v2457, %v2456
    %v2511 = vpack.c.bf16 %v2459, %v2458
    %v2512 = vpack.c.bf16 %v2461, %v2460
    %v2513 = vpack.c.bf16 %v2463, %v2462
    %v2514 = vpack.c.bf16 %v2465, %v2464
    %v2515 = vpack.c.bf16 %v2467, %v2466
    %v2516 = vpack.c.bf16 %v2469, %v2468
    %v2517 = vpack.c.bf16 %v2471, %v2470
    %v2518 = vpack.c.bf16 %v2473, %v2472
    %v2519 = vpack.c.bf16 %v2475, %v2474
    %v2520 = vpack.c.bf16 %v2477, %v2476
    %v2521 = vpack.c.bf16 %v2479, %v2478
    %v2522 = vpack.c.bf16 %v2481, %v2480
    %v2523 = vpack.c.bf16 %v2483, %v2482
    %v2524 = vpack.c.bf16 %v2485, %v2484
    %v2525 = vpack.c.bf16 %v2487, %v2486
    %v2526 = vpack.c.bf16 %v2489, %v2488
    %v2527 = vpack.c.bf16 %v2491, %v2490
    %v2528 = vpack.c.bf16 %v2493, %v2492
    %v2529 = vpack.c.bf16 %v2495, %v2494
    %v2530 = vpack.c.bf16 %v2497, %v2496
    %v2531 = vpack.c.bf16 %v2499, %v2498
    %2532 = vst [vmem:[#allocation4 + $0x40] sm:$0xff] %v2500
    %2533 = vst [vmem:[#allocation4 + $0x88] sm:$0xff] %v2501
    %2534 = vst [vmem:[#allocation4 + $0xd0] sm:$0xff] %v2502
    %2535 = vst [vmem:[#allocation4 + $0x118] sm:$0xff] %v2503
    %2536 = vst [vmem:[#allocation4 + $0x160] sm:$0xff] %v2504
    %2537 = vst [vmem:[#allocation4 + $0x1a8] sm:$0xff] %v2505
    %2538 = vst [vmem:[#allocation4 + $0x1f0] sm:$0xff] %v2506
    %2539 = vst [vmem:[#allocation4 + $0x238] sm:$0xff] %v2507
    %2540 = vst [vmem:[#allocation4 + $0x280] sm:$0xff] %v2508
    %2541 = vst [vmem:[#allocation4 + $0x2c8] sm:$0xff] %v2509
    %2542 = vst [vmem:[#allocation4 + $0x310] sm:$0xff] %v2510
    %2543 = vst [vmem:[#allocation4 + $0x358] sm:$0xff] %v2511
    %2544 = vst [vmem:[#allocation4 + $0x3a0] sm:$0xff] %v2512
    %2545 = vst [vmem:[#allocation4 + $0x3e8] sm:$0xff] %v2513
    %2546 = vst [vmem:[#allocation4 + $0x430] sm:$0xff] %v2514
    %2547 = vst [vmem:[#allocation4 + $0x478] sm:$0xff] %v2515
    %2548 = vst [vmem:[#allocation4 + $0x4c0] sm:$0xff] %v2516
    %2549 = vst [vmem:[#allocation4 + $0x508] sm:$0xff] %v2517
    %2550 = vst [vmem:[#allocation4 + $0x550] sm:$0xff] %v2518
    %2551 = vst [vmem:[#allocation4 + $0x598] sm:$0xff] %v2519
    %2552 = vst [vmem:[#allocation4 + $0x5e0] sm:$0xff] %v2520
    %2553 = vst [vmem:[#allocation4 + $0x628] sm:$0xff] %v2521
    %2554 = vst [vmem:[#allocation4 + $0x670] sm:$0xff] %v2522
    %2555 = vst [vmem:[#allocation4 + $0x6b8] sm:$0xff] %v2523
    %2556 = vst [vmem:[#allocation4 + $0x700] sm:$0xff] %v2524
    %2557 = vst [vmem:[#allocation4 + $0x748] sm:$0xff] %v2525
    %2558 = vst [vmem:[#allocation4 + $0x790] sm:$0xff] %v2526
    %2559 = vst [vmem:[#allocation4 + $0x7d8] sm:$0xff] %v2527
    %2560 = vst [vmem:[#allocation4 + $0x820] sm:$0xff] %v2528
    %2561 = vst [vmem:[#allocation4 + $0x868] sm:$0xff] %v2529
    %2562 = vst [vmem:[#allocation4 + $0x8b0] sm:$0xff] %v2530
    %2563 = vst [vmem:[#allocation4 + $0x8f8] sm:$0xff] %v2531
    %v2564 = vld [vmem:[#allocation4] sm:$0xff]
    %v2565 = vld [vmem:[#allocation4 + $0x8] sm:$0xff]
    %v2566 = vld [vmem:[#allocation4 + $0x10] sm:$0xff]
    %v2567 = vld [vmem:[#allocation4 + $0x18] sm:$0xff]
    %v2568 = vld [vmem:[#allocation4 + $0x20] sm:$0xff]
    %v2569 = vld [vmem:[#allocation4 + $0x28] sm:$0xff]
    %v2570 = vld [vmem:[#allocation4 + $0x30] sm:$0xff]
    %v2571 = vld [vmem:[#allocation4 + $0x38] sm:$0xff]
    %v2572 = vld [vmem:[#allocation4 + $0x40] sm:$0xff]
    %v2573 = vld [vmem:[#allocation4 + $0x48] sm:$0xff]
    %v2574 = vld [vmem:[#allocation4 + $0x50] sm:$0xff]
    %v2575 = vld [vmem:[#allocation4 + $0x58] sm:$0xff]
    %v2576 = vld [vmem:[#allocation4 + $0x60] sm:$0xff]
    %v2577 = vld [vmem:[#allocation4 + $0x68] sm:$0xff]
    %v2578 = vld [vmem:[#allocation4 + $0x70] sm:$0xff]
    %v2579 = vld [vmem:[#allocation4 + $0x78] sm:$0xff]
    %v2580 = vld [vmem:[#allocation4 + $0x80] sm:$0xff]
    %v2581 = vld [vmem:[#allocation4 + $0x88] sm:$0xff]
    %v2582 = vld [vmem:[#allocation4 + $0x90] sm:$0xff]
    %v2583 = vld [vmem:[#allocation4 + $0x98] sm:$0xff]
    %v2584 = vld [vmem:[#allocation4 + $0xa0] sm:$0xff]
    %v2585 = vld [vmem:[#allocation4 + $0xa8] sm:$0xff]
    %v2586 = vld [vmem:[#allocation4 + $0xb0] sm:$0xff]
    %v2587 = vld [vmem:[#allocation4 + $0xb8] sm:$0xff]
    %v2588 = vld [vmem:[#allocation4 + $0xc0] sm:$0xff]
    %v2589 = vld [vmem:[#allocation4 + $0xc8] sm:$0xff]
    %v2590 = vld [vmem:[#allocation4 + $0xd0] sm:$0xff]
    %v2591 = vld [vmem:[#allocation4 + $0xd8] sm:$0xff]
    %v2592 = vld [vmem:[#allocation4 + $0xe0] sm:$0xff]
    %v2593 = vld [vmem:[#allocation4 + $0xe8] sm:$0xff]
    %v2594 = vld [vmem:[#allocation4 + $0xf0] sm:$0xff]
    %v2595 = vld [vmem:[#allocation4 + $0xf8] sm:$0xff]
    %v2596 = vld [vmem:[#allocation4 + $0x100] sm:$0xff]
    %v2597 = vld [vmem:[#allocation4 + $0x108] sm:$0xff]
    %v2598 = vld [vmem:[#allocation4 + $0x110] sm:$0xff]
    %v2599 = vld [vmem:[#allocation4 + $0x118] sm:$0xff]
    %v2600 = vld [vmem:[#allocation4 + $0x120] sm:$0xff]
    %v2601 = vld [vmem:[#allocation4 + $0x128] sm:$0xff]
    %v2602 = vld [vmem:[#allocation4 + $0x130] sm:$0xff]
    %v2603 = vld [vmem:[#allocation4 + $0x138] sm:$0xff]
    %v2604 = vld [vmem:[#allocation4 + $0x140] sm:$0xff]
    %v2605 = vld [vmem:[#allocation4 + $0x148] sm:$0xff]
    %v2606 = vld [vmem:[#allocation4 + $0x150] sm:$0xff]
    %v2607 = vld [vmem:[#allocation4 + $0x158] sm:$0xff]
    %v2608 = vld [vmem:[#allocation4 + $0x160] sm:$0xff]
    %v2609 = vld [vmem:[#allocation4 + $0x168] sm:$0xff]
    %v2610 = vld [vmem:[#allocation4 + $0x170] sm:$0xff]
    %v2611 = vld [vmem:[#allocation4 + $0x178] sm:$0xff]
    %v2612 = vld [vmem:[#allocation4 + $0x180] sm:$0xff]
    %v2613 = vld [vmem:[#allocation4 + $0x188] sm:$0xff]
    %v2614 = vld [vmem:[#allocation4 + $0x190] sm:$0xff]
    %v2615 = vld [vmem:[#allocation4 + $0x198] sm:$0xff]
    %v2616 = vld [vmem:[#allocation4 + $0x1a0] sm:$0xff]
    %v2617 = vld [vmem:[#allocation4 + $0x1a8] sm:$0xff]
    %v2618 = vld [vmem:[#allocation4 + $0x1b0] sm:$0xff]
    %v2619 = vld [vmem:[#allocation4 + $0x1b8] sm:$0xff]
    %v2620 = vld [vmem:[#allocation4 + $0x1c0] sm:$0xff]
    %v2621 = vld [vmem:[#allocation4 + $0x1c8] sm:$0xff]
    %v2622 = vld [vmem:[#allocation4 + $0x1d0] sm:$0xff]
    %v2623 = vld [vmem:[#allocation4 + $0x1d8] sm:$0xff]
    %v2624 = vld [vmem:[#allocation4 + $0x1e0] sm:$0xff]
    %v2625 = vld [vmem:[#allocation4 + $0x1e8] sm:$0xff]
    %v2626 = vld [vmem:[#allocation4 + $0x1f0] sm:$0xff]
    %v2627 = vld [vmem:[#allocation4 + $0x1f8] sm:$0xff]
    %v2628 = vld [vmem:[#allocation4 + $0x200] sm:$0xff]
    %v2629 = vld [vmem:[#allocation4 + $0x208] sm:$0xff]
    %v2630 = vld [vmem:[#allocation4 + $0x210] sm:$0xff]
    %v2631 = vld [vmem:[#allocation4 + $0x218] sm:$0xff]
    %v2632 = vld [vmem:[#allocation4 + $0x220] sm:$0xff]
    %v2633 = vld [vmem:[#allocation4 + $0x228] sm:$0xff]
    %v2634 = vld [vmem:[#allocation4 + $0x230] sm:$0xff]
    %v2635 = vld [vmem:[#allocation4 + $0x238] sm:$0xff]
    %v2636 = vld [vmem:[#allocation4 + $0x240] sm:$0xff]
    %v2637 = vld [vmem:[#allocation4 + $0x248] sm:$0xff]
    %v2638 = vld [vmem:[#allocation4 + $0x250] sm:$0xff]
    %v2639 = vld [vmem:[#allocation4 + $0x258] sm:$0xff]
    %v2640 = vld [vmem:[#allocation4 + $0x260] sm:$0xff]
    %v2641 = vld [vmem:[#allocation4 + $0x268] sm:$0xff]
    %v2642 = vld [vmem:[#allocation4 + $0x270] sm:$0xff]
    %v2643 = vld [vmem:[#allocation4 + $0x278] sm:$0xff]
    %v2644 = vld [vmem:[#allocation4 + $0x280] sm:$0xff]
    %v2645 = vld [vmem:[#allocation4 + $0x288] sm:$0xff]
    %v2646 = vld [vmem:[#allocation4 + $0x290] sm:$0xff]
    %v2647 = vld [vmem:[#allocation4 + $0x298] sm:$0xff]
    %v2648 = vld [vmem:[#allocation4 + $0x2a0] sm:$0xff]
    %v2649 = vld [vmem:[#allocation4 + $0x2a8] sm:$0xff]
    %v2650 = vld [vmem:[#allocation4 + $0x2b0] sm:$0xff]
    %v2651 = vld [vmem:[#allocation4 + $0x2b8] sm:$0xff]
    %v2652 = vld [vmem:[#allocation4 + $0x2c0] sm:$0xff]
    %v2653 = vld [vmem:[#allocation4 + $0x2c8] sm:$0xff]
    %v2654 = vld [vmem:[#allocation4 + $0x2d0] sm:$0xff]
    %v2655 = vld [vmem:[#allocation4 + $0x2d8] sm:$0xff]
    %v2656 = vld [vmem:[#allocation4 + $0x2e0] sm:$0xff]
    %v2657 = vld [vmem:[#allocation4 + $0x2e8] sm:$0xff]
    %v2658 = vld [vmem:[#allocation4 + $0x2f0] sm:$0xff]
    %v2659 = vld [vmem:[#allocation4 + $0x2f8] sm:$0xff]
    %v2660 = vld [vmem:[#allocation4 + $0x300] sm:$0xff]
    %v2661 = vld [vmem:[#allocation4 + $0x308] sm:$0xff]
    %v2662 = vld [vmem:[#allocation4 + $0x310] sm:$0xff]
    %v2663 = vld [vmem:[#allocation4 + $0x318] sm:$0xff]
    %v2664 = vld [vmem:[#allocation4 + $0x320] sm:$0xff]
    %v2665 = vld [vmem:[#allocation4 + $0x328] sm:$0xff]
    %v2666 = vld [vmem:[#allocation4 + $0x330] sm:$0xff]
    %v2667 = vld [vmem:[#allocation4 + $0x338] sm:$0xff]
    %v2668 = vld [vmem:[#allocation4 + $0x340] sm:$0xff]
    %v2669 = vld [vmem:[#allocation4 + $0x348] sm:$0xff]
    %v2670 = vld [vmem:[#allocation4 + $0x350] sm:$0xff]
    %v2671 = vld [vmem:[#allocation4 + $0x358] sm:$0xff]
    %v2672 = vld [vmem:[#allocation4 + $0x360] sm:$0xff]
    %v2673 = vld [vmem:[#allocation4 + $0x368] sm:$0xff]
    %v2674 = vld [vmem:[#allocation4 + $0x370] sm:$0xff]
    %v2675 = vld [vmem:[#allocation4 + $0x378] sm:$0xff]
    %v2676 = vld [vmem:[#allocation4 + $0x380] sm:$0xff]
    %v2677 = vld [vmem:[#allocation4 + $0x388] sm:$0xff]
    %v2678 = vld [vmem:[#allocation4 + $0x390] sm:$0xff]
    %v2679 = vld [vmem:[#allocation4 + $0x398] sm:$0xff]
    %v2680 = vld [vmem:[#allocation4 + $0x3a0] sm:$0xff]
    %v2681 = vld [vmem:[#allocation4 + $0x3a8] sm:$0xff]
    %v2682 = vld [vmem:[#allocation4 + $0x3b0] sm:$0xff]
    %v2683 = vld [vmem:[#allocation4 + $0x3b8] sm:$0xff]
    %v2684 = vld [vmem:[#allocation4 + $0x3c0] sm:$0xff]
    %v2685 = vld [vmem:[#allocation4 + $0x3c8] sm:$0xff]
    %v2686 = vld [vmem:[#allocation4 + $0x3d0] sm:$0xff]
    %v2687 = vld [vmem:[#allocation4 + $0x3d8] sm:$0xff]
    %v2688 = vld [vmem:[#allocation4 + $0x3e0] sm:$0xff]
    %v2689 = vld [vmem:[#allocation4 + $0x3e8] sm:$0xff]
    %v2690 = vld [vmem:[#allocation4 + $0x3f0] sm:$0xff]
    %v2691 = vld [vmem:[#allocation4 + $0x3f8] sm:$0xff]
    %v2692 = vld [vmem:[#allocation4 + $0x400] sm:$0xff]
    %v2693 = vld [vmem:[#allocation4 + $0x408] sm:$0xff]
    %v2694 = vld [vmem:[#allocation4 + $0x410] sm:$0xff]
    %v2695 = vld [vmem:[#allocation4 + $0x418] sm:$0xff]
    %v2696 = vld [vmem:[#allocation4 + $0x420] sm:$0xff]
    %v2697 = vld [vmem:[#allocation4 + $0x428] sm:$0xff]
    %v2698 = vld [vmem:[#allocation4 + $0x430] sm:$0xff]
    %v2699 = vld [vmem:[#allocation4 + $0x438] sm:$0xff]
    %v2700 = vld [vmem:[#allocation4 + $0x440] sm:$0xff]
    %v2701 = vld [vmem:[#allocation4 + $0x448] sm:$0xff]
    %v2702 = vld [vmem:[#allocation4 + $0x450] sm:$0xff]
    %v2703 = vld [vmem:[#allocation4 + $0x458] sm:$0xff]
    %v2704 = vld [vmem:[#allocation4 + $0x460] sm:$0xff]
    %v2705 = vld [vmem:[#allocation4 + $0x468] sm:$0xff]
    %v2706 = vld [vmem:[#allocation4 + $0x470] sm:$0xff]
    %v2707 = vld [vmem:[#allocation4 + $0x478] sm:$0xff]
    %v2708 = vld [vmem:[#allocation4 + $0x480] sm:$0xff]
    %v2709 = vld [vmem:[#allocation4 + $0x488] sm:$0xff]
    %v2710 = vld [vmem:[#allocation4 + $0x490] sm:$0xff]
    %v2711 = vld [vmem:[#allocation4 + $0x498] sm:$0xff]
    %v2712 = vld [vmem:[#allocation4 + $0x4a0] sm:$0xff]
    %v2713 = vld [vmem:[#allocation4 + $0x4a8] sm:$0xff]
    %v2714 = vld [vmem:[#allocation4 + $0x4b0] sm:$0xff]
    %v2715 = vld [vmem:[#allocation4 + $0x4b8] sm:$0xff]
    %v2716 = vld [vmem:[#allocation4 + $0x4c0] sm:$0xff]
    %v2717 = vld [vmem:[#allocation4 + $0x4c8] sm:$0xff]
    %v2718 = vld [vmem:[#allocation4 + $0x4d0] sm:$0xff]
    %v2719 = vld [vmem:[#allocation4 + $0x4d8] sm:$0xff]
    %v2720 = vld [vmem:[#allocation4 + $0x4e0] sm:$0xff]
    %v2721 = vld [vmem:[#allocation4 + $0x4e8] sm:$0xff]
    %v2722 = vld [vmem:[#allocation4 + $0x4f0] sm:$0xff]
    %v2723 = vld [vmem:[#allocation4 + $0x4f8] sm:$0xff]
    %v2724 = vld [vmem:[#allocation4 + $0x500] sm:$0xff]
    %v2725 = vld [vmem:[#allocation4 + $0x508] sm:$0xff]
    %v2726 = vld [vmem:[#allocation4 + $0x510] sm:$0xff]
    %v2727 = vld [vmem:[#allocation4 + $0x518] sm:$0xff]
    %v2728 = vld [vmem:[#allocation4 + $0x520] sm:$0xff]
    %v2729 = vld [vmem:[#allocation4 + $0x528] sm:$0xff]
    %v2730 = vld [vmem:[#allocation4 + $0x530] sm:$0xff]
    %v2731 = vld [vmem:[#allocation4 + $0x538] sm:$0xff]
    %v2732 = vld [vmem:[#allocation4 + $0x540] sm:$0xff]
    %v2733 = vld [vmem:[#allocation4 + $0x548] sm:$0xff]
    %v2734 = vld [vmem:[#allocation4 + $0x550] sm:$0xff]
    %v2735 = vld [vmem:[#allocation4 + $0x558] sm:$0xff]
    %v2736 = vld [vmem:[#allocation4 + $0x560] sm:$0xff]
    %v2737 = vld [vmem:[#allocation4 + $0x568] sm:$0xff]
    %v2738 = vld [vmem:[#allocation4 + $0x570] sm:$0xff]
    %v2739 = vld [vmem:[#allocation4 + $0x578] sm:$0xff]
    %v2740 = vld [vmem:[#allocation4 + $0x580] sm:$0xff]
    %v2741 = vld [vmem:[#allocation4 + $0x588] sm:$0xff]
    %v2742 = vld [vmem:[#allocation4 + $0x590] sm:$0xff]
    %v2743 = vld [vmem:[#allocation4 + $0x598] sm:$0xff]
    %v2744 = vld [vmem:[#allocation4 + $0x5a0] sm:$0xff]
    %v2745 = vld [vmem:[#allocation4 + $0x5a8] sm:$0xff]
    %v2746 = vld [vmem:[#allocation4 + $0x5b0] sm:$0xff]
    %v2747 = vld [vmem:[#allocation4 + $0x5b8] sm:$0xff]
    %v2748 = vld [vmem:[#allocation4 + $0x5c0] sm:$0xff]
    %v2749 = vld [vmem:[#allocation4 + $0x5c8] sm:$0xff]
    %v2750 = vld [vmem:[#allocation4 + $0x5d0] sm:$0xff]
    %v2751 = vld [vmem:[#allocation4 + $0x5d8] sm:$0xff]
    %v2752 = vld [vmem:[#allocation4 + $0x5e0] sm:$0xff]
    %v2753 = vld [vmem:[#allocation4 + $0x5e8] sm:$0xff]
    %v2754 = vld [vmem:[#allocation4 + $0x5f0] sm:$0xff]
    %v2755 = vld [vmem:[#allocation4 + $0x5f8] sm:$0xff]
    %v2756 = vld [vmem:[#allocation4 + $0x600] sm:$0xff]
    %v2757 = vld [vmem:[#allocation4 + $0x608] sm:$0xff]
    %v2758 = vld [vmem:[#allocation4 + $0x610] sm:$0xff]
    %v2759 = vld [vmem:[#allocation4 + $0x618] sm:$0xff]
    %v2760 = vld [vmem:[#allocation4 + $0x620] sm:$0xff]
    %v2761 = vld [vmem:[#allocation4 + $0x628] sm:$0xff]
    %v2762 = vld [vmem:[#allocation4 + $0x630] sm:$0xff]
    %v2763 = vld [vmem:[#allocation4 + $0x638] sm:$0xff]
    %v2764 = vld [vmem:[#allocation4 + $0x640] sm:$0xff]
    %v2765 = vld [vmem:[#allocation4 + $0x648] sm:$0xff]
    %v2766 = vld [vmem:[#allocation4 + $0x650] sm:$0xff]
    %v2767 = vld [vmem:[#allocation4 + $0x658] sm:$0xff]
    %v2768 = vld [vmem:[#allocation4 + $0x660] sm:$0xff]
    %v2769 = vld [vmem:[#allocation4 + $0x668] sm:$0xff]
    %v2770 = vld [vmem:[#allocation4 + $0x670] sm:$0xff]
    %v2771 = vld [vmem:[#allocation4 + $0x678] sm:$0xff]
    %v2772 = vld [vmem:[#allocation4 + $0x680] sm:$0xff]
    %v2773 = vld [vmem:[#allocation4 + $0x688] sm:$0xff]
    %v2774 = vld [vmem:[#allocation4 + $0x690] sm:$0xff]
    %v2775 = vld [vmem:[#allocation4 + $0x698] sm:$0xff]
    %v2776 = vld [vmem:[#allocation4 + $0x6a0] sm:$0xff]
    %v2777 = vld [vmem:[#allocation4 + $0x6a8] sm:$0xff]
    %v2778 = vld [vmem:[#allocation4 + $0x6b0] sm:$0xff]
    %v2779 = vld [vmem:[#allocation4 + $0x6b8] sm:$0xff]
    %v2780 = vld [vmem:[#allocation4 + $0x6c0] sm:$0xff]
    %v2781 = vld [vmem:[#allocation4 + $0x6c8] sm:$0xff]
    %v2782 = vld [vmem:[#allocation4 + $0x6d0] sm:$0xff]
    %v2783 = vld [vmem:[#allocation4 + $0x6d8] sm:$0xff]
    %v2784 = vld [vmem:[#allocation4 + $0x6e0] sm:$0xff]
    %v2785 = vld [vmem:[#allocation4 + $0x6e8] sm:$0xff]
    %v2786 = vld [vmem:[#allocation4 + $0x6f0] sm:$0xff]
    %v2787 = vld [vmem:[#allocation4 + $0x6f8] sm:$0xff]
    %v2788 = vld [vmem:[#allocation4 + $0x700] sm:$0xff]
    %v2789 = vld [vmem:[#allocation4 + $0x708] sm:$0xff]
    %v2790 = vld [vmem:[#allocation4 + $0x710] sm:$0xff]
    %v2791 = vld [vmem:[#allocation4 + $0x718] sm:$0xff]
    %v2792 = vld [vmem:[#allocation4 + $0x720] sm:$0xff]
    %v2793 = vld [vmem:[#allocation4 + $0x728] sm:$0xff]
    %v2794 = vld [vmem:[#allocation4 + $0x730] sm:$0xff]
    %v2795 = vld [vmem:[#allocation4 + $0x738] sm:$0xff]
    %v2796 = vld [vmem:[#allocation4 + $0x740] sm:$0xff]
    %v2797 = vld [vmem:[#allocation4 + $0x748] sm:$0xff]
    %v2798 = vld [vmem:[#allocation4 + $0x750] sm:$0xff]
    %v2799 = vld [vmem:[#allocation4 + $0x758] sm:$0xff]
    %v2800 = vld [vmem:[#allocation4 + $0x760] sm:$0xff]
    %v2801 = vld [vmem:[#allocation4 + $0x768] sm:$0xff]
    %v2802 = vld [vmem:[#allocation4 + $0x770] sm:$0xff]
    %v2803 = vld [vmem:[#allocation4 + $0x778] sm:$0xff]
    %v2804 = vld [vmem:[#allocation4 + $0x780] sm:$0xff]
    %v2805 = vld [vmem:[#allocation4 + $0x788] sm:$0xff]
    %v2806 = vld [vmem:[#allocation4 + $0x790] sm:$0xff]
    %v2807 = vld [vmem:[#allocation4 + $0x798] sm:$0xff]
    %v2808 = vld [vmem:[#allocation4 + $0x7a0] sm:$0xff]
    %v2809 = vld [vmem:[#allocation4 + $0x7a8] sm:$0xff]
    %v2810 = vld [vmem:[#allocation4 + $0x7b0] sm:$0xff]
    %v2811 = vld [vmem:[#allocation4 + $0x7b8] sm:$0xff]
    %v2812 = vld [vmem:[#allocation4 + $0x7c0] sm:$0xff]
    %v2813 = vld [vmem:[#allocation4 + $0x7c8] sm:$0xff]
    %v2814 = vld [vmem:[#allocation4 + $0x7d0] sm:$0xff]
    %v2815 = vld [vmem:[#allocation4 + $0x7d8] sm:$0xff]
    %v2816 = vld [vmem:[#allocation4 + $0x7e0] sm:$0xff]
    %v2817 = vld [vmem:[#allocation4 + $0x7e8] sm:$0xff]
    %v2818 = vld [vmem:[#allocation4 + $0x7f0] sm:$0xff]
    %v2819 = vld [vmem:[#allocation4 + $0x7f8] sm:$0xff]
    %v2820 = vld [vmem:[#allocation4 + $0x800] sm:$0xff]
    %v2821 = vld [vmem:[#allocation4 + $0x808] sm:$0xff]
    %v2822 = vld [vmem:[#allocation4 + $0x810] sm:$0xff]
    %v2823 = vld [vmem:[#allocation4 + $0x818] sm:$0xff]
    %v2824 = vld [vmem:[#allocation4 + $0x820] sm:$0xff]
    %v2825 = vld [vmem:[#allocation4 + $0x828] sm:$0xff]
    %v2826 = vld [vmem:[#allocation4 + $0x830] sm:$0xff]
    %v2827 = vld [vmem:[#allocation4 + $0x838] sm:$0xff]
    %v2828 = vld [vmem:[#allocation4 + $0x840] sm:$0xff]
    %v2829 = vld [vmem:[#allocation4 + $0x848] sm:$0xff]
    %v2830 = vld [vmem:[#allocation4 + $0x850] sm:$0xff]
    %v2831 = vld [vmem:[#allocation4 + $0x858] sm:$0xff]
    %v2832 = vld [vmem:[#allocation4 + $0x860] sm:$0xff]
    %v2833 = vld [vmem:[#allocation4 + $0x868] sm:$0xff]
    %v2834 = vld [vmem:[#allocation4 + $0x870] sm:$0xff]
    %v2835 = vld [vmem:[#allocation4 + $0x878] sm:$0xff]
    %v2836 = vld [vmem:[#allocation4 + $0x880] sm:$0xff]
    %v2837 = vld [vmem:[#allocation4 + $0x888] sm:$0xff]
    %v2838 = vld [vmem:[#allocation4 + $0x890] sm:$0xff]
    %v2839 = vld [vmem:[#allocation4 + $0x898] sm:$0xff]
    %v2840 = vld [vmem:[#allocation4 + $0x8a0] sm:$0xff]
    %v2841 = vld [vmem:[#allocation4 + $0x8a8] sm:$0xff]
    %v2842 = vld [vmem:[#allocation4 + $0x8b0] sm:$0xff]
    %v2843 = vld [vmem:[#allocation4 + $0x8b8] sm:$0xff]
    %v2844 = vld [vmem:[#allocation4 + $0x8c0] sm:$0xff]
    %v2845 = vld [vmem:[#allocation4 + $0x8c8] sm:$0xff]
    %v2846 = vld [vmem:[#allocation4 + $0x8d0] sm:$0xff]
    %v2847 = vld [vmem:[#allocation4 + $0x8d8] sm:$0xff]
    %v2848 = vld [vmem:[#allocation4 + $0x8e0] sm:$0xff]
    %v2849 = vld [vmem:[#allocation4 + $0x8e8] sm:$0xff]
    %v2850 = vld [vmem:[#allocation4 + $0x8f0] sm:$0xff]
    %v2851 = vld [vmem:[#allocation4 + $0x8f8] sm:$0xff]
    %v2852 = vld [vmem:[#allocation10] sm:$0xf]
    %v2853 = vld [vmem:[#allocation10 + $0x4] sm:$0xf]
    %v2854 = vld [vmem:[#allocation10 + $0x8] sm:$0xf]
    %v2855 = vld [vmem:[#allocation10 + $0xc] sm:$0xf]
    %v2856 = vld [vmem:[#allocation10 + $0x10] sm:$0xf]
    %v2857 = vld [vmem:[#allocation10 + $0x14] sm:$0xf]
    %v2858 = vld [vmem:[#allocation10 + $0x18] sm:$0xf]
    %v2859 = vld [vmem:[#allocation10 + $0x1c] sm:$0xf]
    %v2860 = vld [vmem:[#allocation10 + $0x20] sm:$0xf]
    %v2861 = vld [vmem:[#allocation10 + $0x24] sm:$0xf]
    %v2862 = vld [vmem:[#allocation10 + $0x28] sm:$0xf]
    %v2863 = vld [vmem:[#allocation10 + $0x2c] sm:$0xf]
    %v2864 = vld [vmem:[#allocation10 + $0x30] sm:$0xf]
    %v2865 = vld [vmem:[#allocation10 + $0x34] sm:$0xf]
    %v2866 = vld [vmem:[#allocation10 + $0x38] sm:$0xf]
    %v2867 = vld [vmem:[#allocation10 + $0x3c] sm:$0xf]
    %v2868 = vld [vmem:[#allocation10 + $0x40] sm:$0xf]
    %v2869 = vld [vmem:[#allocation10 + $0x44] sm:$0xf]
    %v2870 = vld [vmem:[#allocation10 + $0x48] sm:$0xf]
    %v2871 = vld [vmem:[#allocation10 + $0x4c] sm:$0xf]
    %v2872 = vld [vmem:[#allocation10 + $0x50] sm:$0xf]
    %v2873 = vld [vmem:[#allocation10 + $0x54] sm:$0xf]
    %v2874 = vld [vmem:[#allocation10 + $0x58] sm:$0xf]
    %v2875 = vld [vmem:[#allocation10 + $0x5c] sm:$0xf]
    %v2876 = vld [vmem:[#allocation10 + $0x60] sm:$0xf]
    %v2877 = vld [vmem:[#allocation10 + $0x64] sm:$0xf]
    %v2878 = vld [vmem:[#allocation10 + $0x68] sm:$0xf]
    %v2879 = vld [vmem:[#allocation10 + $0x6c] sm:$0xf]
    %v2880 = vld [vmem:[#allocation10 + $0x70] sm:$0xf]
    %v2881 = vld [vmem:[#allocation10 + $0x74] sm:$0xf]
    %v2882 = vld [vmem:[#allocation10 + $0x78] sm:$0xf]
    %v2883 = vld [vmem:[#allocation10 + $0x7c] sm:$0xf]
    %v2884 = vld [vmem:[#allocation10 + $0x80] sm:$0xf]
    %v2885 = vld [vmem:[#allocation10 + $0x84] sm:$0xf]
    %v2886 = vld [vmem:[#allocation10 + $0x88] sm:$0xf]
    %v2887 = vld [vmem:[#allocation10 + $0x8c] sm:$0xf]
    %v2888 = vld [vmem:[#allocation10 + $0x90] sm:$0xf]
    %v2889 = vld [vmem:[#allocation10 + $0x94] sm:$0xf]
    %v2890 = vld [vmem:[#allocation10 + $0x98] sm:$0xf]
    %v2891 = vld [vmem:[#allocation10 + $0x9c] sm:$0xf]
    %v2892 = vld [vmem:[#allocation10 + $0xa0] sm:$0xf]
    %v2893 = vld [vmem:[#allocation10 + $0xa4] sm:$0xf]
    %v2894 = vld [vmem:[#allocation10 + $0xa8] sm:$0xf]
    %v2895 = vld [vmem:[#allocation10 + $0xac] sm:$0xf]
    %v2896 = vld [vmem:[#allocation10 + $0xb0] sm:$0xf]
    %v2897 = vld [vmem:[#allocation10 + $0xb4] sm:$0xf]
    %v2898 = vld [vmem:[#allocation10 + $0xb8] sm:$0xf]
    %v2899 = vld [vmem:[#allocation10 + $0xbc] sm:$0xf]
    %v2900 = vld [vmem:[#allocation10 + $0xc0] sm:$0xf]
    %v2901 = vld [vmem:[#allocation10 + $0xc4] sm:$0xf]
    %v2902 = vld [vmem:[#allocation10 + $0xc8] sm:$0xf]
    %v2903 = vld [vmem:[#allocation10 + $0xcc] sm:$0xf]
    %v2904 = vld [vmem:[#allocation10 + $0xd0] sm:$0xf]
    %v2905 = vld [vmem:[#allocation10 + $0xd4] sm:$0xf]
    %v2906 = vld [vmem:[#allocation10 + $0xd8] sm:$0xf]
    %v2907 = vld [vmem:[#allocation10 + $0xdc] sm:$0xf]
    %v2908 = vld [vmem:[#allocation10 + $0xe0] sm:$0xf]
    %v2909 = vld [vmem:[#allocation10 + $0xe4] sm:$0xf]
    %v2910 = vld [vmem:[#allocation10 + $0xe8] sm:$0xf]
    %v2911 = vld [vmem:[#allocation10 + $0xec] sm:$0xf]
    %v2912 = vld [vmem:[#allocation10 + $0xf0] sm:$0xf]
    %v2913 = vld [vmem:[#allocation10 + $0xf4] sm:$0xf]
    %v2914 = vld [vmem:[#allocation10 + $0xf8] sm:$0xf]
    %v2915 = vld [vmem:[#allocation10 + $0xfc] sm:$0xf]
    %v2916 = vld [vmem:[#allocation10 + $0x100] sm:$0xf]
    %v2917 = vld [vmem:[#allocation10 + $0x104] sm:$0xf]
    %v2918 = vld [vmem:[#allocation10 + $0x108] sm:$0xf]
    %v2919 = vld [vmem:[#allocation10 + $0x10c] sm:$0xf]
    %v2920 = vld [vmem:[#allocation10 + $0x110] sm:$0xf]
    %v2921 = vld [vmem:[#allocation10 + $0x114] sm:$0xf]
    %v2922 = vld [vmem:[#allocation10 + $0x118] sm:$0xf]
    %v2923 = vld [vmem:[#allocation10 + $0x11c] sm:$0xf]
    %v2924 = vld [vmem:[#allocation10 + $0x120] sm:$0xf]
    %v2925 = vld [vmem:[#allocation10 + $0x124] sm:$0xf]
    %v2926 = vld [vmem:[#allocation10 + $0x128] sm:$0xf]
    %v2927 = vld [vmem:[#allocation10 + $0x12c] sm:$0xf]
    %v2928 = vld [vmem:[#allocation10 + $0x130] sm:$0xf]
    %v2929 = vld [vmem:[#allocation10 + $0x134] sm:$0xf]
    %v2930 = vld [vmem:[#allocation10 + $0x138] sm:$0xf]
    %v2931 = vld [vmem:[#allocation10 + $0x13c] sm:$0xf]
    %v2932 = vld [vmem:[#allocation10 + $0x140] sm:$0xf]
    %v2933 = vld [vmem:[#allocation10 + $0x144] sm:$0xf]
    %v2934 = vld [vmem:[#allocation10 + $0x148] sm:$0xf]
    %v2935 = vld [vmem:[#allocation10 + $0x14c] sm:$0xf]
    %v2936 = vld [vmem:[#allocation10 + $0x150] sm:$0xf]
    %v2937 = vld [vmem:[#allocation10 + $0x154] sm:$0xf]
    %v2938 = vld [vmem:[#allocation10 + $0x158] sm:$0xf]
    %v2939 = vld [vmem:[#allocation10 + $0x15c] sm:$0xf]
    %v2940 = vld [vmem:[#allocation10 + $0x160] sm:$0xf]
    %v2941 = vld [vmem:[#allocation10 + $0x164] sm:$0xf]
    %v2942 = vld [vmem:[#allocation10 + $0x168] sm:$0xf]
    %v2943 = vld [vmem:[#allocation10 + $0x16c] sm:$0xf]
    %v2944 = vld [vmem:[#allocation10 + $0x170] sm:$0xf]
    %v2945 = vld [vmem:[#allocation10 + $0x174] sm:$0xf]
    %v2946 = vld [vmem:[#allocation10 + $0x178] sm:$0xf]
    %v2947 = vld [vmem:[#allocation10 + $0x17c] sm:$0xf]
    %v2948 = vld [vmem:[#allocation10 + $0x180] sm:$0xf]
    %v2949 = vld [vmem:[#allocation10 + $0x184] sm:$0xf]
    %v2950 = vld [vmem:[#allocation10 + $0x188] sm:$0xf]
    %v2951 = vld [vmem:[#allocation10 + $0x18c] sm:$0xf]
    %v2952 = vld [vmem:[#allocation10 + $0x190] sm:$0xf]
    %v2953 = vld [vmem:[#allocation10 + $0x194] sm:$0xf]
    %v2954 = vld [vmem:[#allocation10 + $0x198] sm:$0xf]
    %v2955 = vld [vmem:[#allocation10 + $0x19c] sm:$0xf]
    %v2956 = vld [vmem:[#allocation10 + $0x1a0] sm:$0xf]
    %v2957 = vld [vmem:[#allocation10 + $0x1a4] sm:$0xf]
    %v2958 = vld [vmem:[#allocation10 + $0x1a8] sm:$0xf]
    %v2959 = vld [vmem:[#allocation10 + $0x1ac] sm:$0xf]
    %v2960 = vld [vmem:[#allocation10 + $0x1b0] sm:$0xf]
    %v2961 = vld [vmem:[#allocation10 + $0x1b4] sm:$0xf]
    %v2962 = vld [vmem:[#allocation10 + $0x1b8] sm:$0xf]
    %v2963 = vld [vmem:[#allocation10 + $0x1bc] sm:$0xf]
    %v2964 = vld [vmem:[#allocation10 + $0x1c0] sm:$0xf]
    %v2965 = vld [vmem:[#allocation10 + $0x1c4] sm:$0xf]
    %v2966 = vld [vmem:[#allocation10 + $0x1c8] sm:$0xf]
    %v2967 = vld [vmem:[#allocation10 + $0x1cc] sm:$0xf]
    %v2968 = vld [vmem:[#allocation10 + $0x1d0] sm:$0xf]
    %v2969 = vld [vmem:[#allocation10 + $0x1d4] sm:$0xf]
    %v2970 = vld [vmem:[#allocation10 + $0x1d8] sm:$0xf]
    %v2971 = vld [vmem:[#allocation10 + $0x1dc] sm:$0xf]
    %v2972 = vld [vmem:[#allocation10 + $0x1e0] sm:$0xf]
    %v2973 = vld [vmem:[#allocation10 + $0x1e4] sm:$0xf]
    %v2974 = vld [vmem:[#allocation10 + $0x1e8] sm:$0xf]
    %v2975 = vld [vmem:[#allocation10 + $0x1ec] sm:$0xf]
    %v2976 = vld [vmem:[#allocation10 + $0x1f0] sm:$0xf]
    %v2977 = vld [vmem:[#allocation10 + $0x1f4] sm:$0xf]
    %v2978 = vld [vmem:[#allocation10 + $0x1f8] sm:$0xf]
    %v2979 = vld [vmem:[#allocation10 + $0x1fc] sm:$0xf]
    %v2980 = vld [vmem:[#allocation10 + $0x200] sm:$0xf]
    %v2981 = vld [vmem:[#allocation10 + $0x204] sm:$0xf]
    %v2982 = vld [vmem:[#allocation10 + $0x208] sm:$0xf]
    %v2983 = vld [vmem:[#allocation10 + $0x20c] sm:$0xf]
    %v2984 = vld [vmem:[#allocation10 + $0x210] sm:$0xf]
    %v2985 = vld [vmem:[#allocation10 + $0x214] sm:$0xf]
    %v2986 = vld [vmem:[#allocation10 + $0x218] sm:$0xf]
    %v2987 = vld [vmem:[#allocation10 + $0x21c] sm:$0xf]
    %v2988 = vld [vmem:[#allocation10 + $0x220] sm:$0xf]
    %v2989 = vld [vmem:[#allocation10 + $0x224] sm:$0xf]
    %v2990 = vld [vmem:[#allocation10 + $0x228] sm:$0xf]
    %v2991 = vld [vmem:[#allocation10 + $0x22c] sm:$0xf]
    %v2992 = vld [vmem:[#allocation10 + $0x230] sm:$0xf]
    %v2993 = vld [vmem:[#allocation10 + $0x234] sm:$0xf]
    %v2994 = vld [vmem:[#allocation10 + $0x238] sm:$0xf]
    %v2995 = vld [vmem:[#allocation10 + $0x23c] sm:$0xf]
    %v3140 = vunpack.c.l.b16 %v2852
    %v3141 = vunpack.c.l.b16 %v2853
    %v3142 = vunpack.c.l.b16 %v2854
    %v3143 = vunpack.c.l.b16 %v2855
    %v3144 = vunpack.c.l.b16 %v2856
    %v3145 = vunpack.c.l.b16 %v2857
    %v3146 = vunpack.c.l.b16 %v2858
    %v3147 = vunpack.c.l.b16 %v2859
    %v3148 = vunpack.c.l.b16 %v2860
    %v3149 = vunpack.c.l.b16 %v2861
    %v3150 = vunpack.c.l.b16 %v2862
    %v3151 = vunpack.c.l.b16 %v2863
    %v3152 = vunpack.c.l.b16 %v2864
    %v3153 = vunpack.c.l.b16 %v2865
    %v3154 = vunpack.c.l.b16 %v2866
    %v3155 = vunpack.c.l.b16 %v2867
    %v3156 = vunpack.c.l.b16 %v2868
    %v3157 = vunpack.c.l.b16 %v2869
    %v3158 = vunpack.c.l.b16 %v2870
    %v3159 = vunpack.c.l.b16 %v2871
    %v3160 = vunpack.c.l.b16 %v2872
    %v3161 = vunpack.c.l.b16 %v2873
    %v3162 = vunpack.c.l.b16 %v2874
    %v3163 = vunpack.c.l.b16 %v2875
    %v3164 = vunpack.c.l.b16 %v2876
    %v3165 = vunpack.c.l.b16 %v2877
    %v3166 = vunpack.c.l.b16 %v2878
    %v3167 = vunpack.c.l.b16 %v2879
    %v3168 = vunpack.c.l.b16 %v2880
    %v3169 = vunpack.c.l.b16 %v2881
    %v3170 = vunpack.c.l.b16 %v2882
    %v3171 = vunpack.c.l.b16 %v2883
    %v3172 = vunpack.c.l.b16 %v2884
    %v3173 = vunpack.c.l.b16 %v2885
    %v3174 = vunpack.c.l.b16 %v2886
    %v3175 = vunpack.c.l.b16 %v2887
    %v3176 = vunpack.c.l.b16 %v2888
    %v3177 = vunpack.c.l.b16 %v2889
    %v3178 = vunpack.c.l.b16 %v2890
    %v3179 = vunpack.c.l.b16 %v2891
    %v3180 = vunpack.c.l.b16 %v2892
    %v3181 = vunpack.c.l.b16 %v2893
    %v3182 = vunpack.c.l.b16 %v2894
    %v3183 = vunpack.c.l.b16 %v2895
    %v3184 = vunpack.c.l.b16 %v2896
    %v3185 = vunpack.c.l.b16 %v2897
    %v3186 = vunpack.c.l.b16 %v2898
    %v3187 = vunpack.c.l.b16 %v2899
    %v3188 = vunpack.c.l.b16 %v2900
    %v3189 = vunpack.c.l.b16 %v2901
    %v3190 = vunpack.c.l.b16 %v2902
    %v3191 = vunpack.c.l.b16 %v2903
    %v3192 = vunpack.c.l.b16 %v2904
    %v3193 = vunpack.c.l.b16 %v2905
    %v3194 = vunpack.c.l.b16 %v2906
    %v3195 = vunpack.c.l.b16 %v2907
    %v3196 = vunpack.c.l.b16 %v2908
    %v3197 = vunpack.c.l.b16 %v2909
    %v3198 = vunpack.c.l.b16 %v2910
    %v3199 = vunpack.c.l.b16 %v2911
    %v3200 = vunpack.c.l.b16 %v2912
    %v3201 = vunpack.c.l.b16 %v2913
    %v3202 = vunpack.c.l.b16 %v2914
    %v3203 = vunpack.c.l.b16 %v2915
    %v3204 = vunpack.c.l.b16 %v2916
    %v3205 = vunpack.c.l.b16 %v2917
    %v3206 = vunpack.c.l.b16 %v2918
    %v3207 = vunpack.c.l.b16 %v2919
    %v3208 = vunpack.c.l.b16 %v2920
    %v3209 = vunpack.c.l.b16 %v2921
    %v3210 = vunpack.c.l.b16 %v2922
    %v3211 = vunpack.c.l.b16 %v2923
    %v3212 = vunpack.c.l.b16 %v2924
    %v3213 = vunpack.c.l.b16 %v2925
    %v3214 = vunpack.c.l.b16 %v2926
    %v3215 = vunpack.c.l.b16 %v2927
    %v3216 = vunpack.c.l.b16 %v2928
    %v3217 = vunpack.c.l.b16 %v2929
    %v3218 = vunpack.c.l.b16 %v2930
    %v3219 = vunpack.c.l.b16 %v2931
    %v3220 = vunpack.c.l.b16 %v2932
    %v3221 = vunpack.c.l.b16 %v2933
    %v3222 = vunpack.c.l.b16 %v2934
    %v3223 = vunpack.c.l.b16 %v2935
    %v3224 = vunpack.c.l.b16 %v2936
    %v3225 = vunpack.c.l.b16 %v2937
    %v3226 = vunpack.c.l.b16 %v2938
    %v3227 = vunpack.c.l.b16 %v2939
    %v3228 = vunpack.c.l.b16 %v2940
    %v3229 = vunpack.c.l.b16 %v2941
    %v3230 = vunpack.c.l.b16 %v2942
    %v3231 = vunpack.c.l.b16 %v2943
    %v3232 = vunpack.c.l.b16 %v2944
    %v3233 = vunpack.c.l.b16 %v2945
    %v3234 = vunpack.c.l.b16 %v2946
    %v3235 = vunpack.c.l.b16 %v2947
    %v3236 = vunpack.c.l.b16 %v2948
    %v3237 = vunpack.c.l.b16 %v2949
    %v3238 = vunpack.c.l.b16 %v2950
    %v3239 = vunpack.c.l.b16 %v2951
    %v3240 = vunpack.c.l.b16 %v2952
    %v3241 = vunpack.c.l.b16 %v2953
    %v3242 = vunpack.c.l.b16 %v2954
    %v3243 = vunpack.c.l.b16 %v2955
    %v3244 = vunpack.c.l.b16 %v2956
    %v3245 = vunpack.c.l.b16 %v2957
    %v3246 = vunpack.c.l.b16 %v2958
    %v3247 = vunpack.c.l.b16 %v2959
    %v3248 = vunpack.c.l.b16 %v2960
    %v3249 = vunpack.c.l.b16 %v2961
    %v3250 = vunpack.c.l.b16 %v2962
    %v3251 = vunpack.c.l.b16 %v2963
    %v3252 = vunpack.c.l.b16 %v2964
    %v3253 = vunpack.c.l.b16 %v2965
    %v3254 = vunpack.c.l.b16 %v2966
    %v3255 = vunpack.c.l.b16 %v2967
    %v3256 = vunpack.c.l.b16 %v2968
    %v3257 = vunpack.c.l.b16 %v2969
    %v3258 = vunpack.c.l.b16 %v2970
    %v3259 = vunpack.c.l.b16 %v2971
    %v3260 = vunpack.c.l.b16 %v2972
    %v3261 = vunpack.c.l.b16 %v2973
    %v3262 = vunpack.c.l.b16 %v2974
    %v3263 = vunpack.c.l.b16 %v2975
    %v3264 = vunpack.c.l.b16 %v2976
    %v3265 = vunpack.c.l.b16 %v2977
    %v3266 = vunpack.c.l.b16 %v2978
    %v3267 = vunpack.c.l.b16 %v2979
    %v3268 = vunpack.c.l.b16 %v2980
    %v3269 = vunpack.c.l.b16 %v2981
    %v3270 = vunpack.c.l.b16 %v2982
    %v3271 = vunpack.c.l.b16 %v2983
    %v3272 = vunpack.c.l.b16 %v2984
    %v3273 = vunpack.c.l.b16 %v2985
    %v3274 = vunpack.c.l.b16 %v2986
    %v3275 = vunpack.c.l.b16 %v2987
    %v3276 = vunpack.c.l.b16 %v2988
    %v3277 = vunpack.c.l.b16 %v2989
    %v3278 = vunpack.c.l.b16 %v2990
    %v3279 = vunpack.c.l.b16 %v2991
    %v3280 = vunpack.c.l.b16 %v2992
    %v3281 = vunpack.c.l.b16 %v2993
    %v3282 = vunpack.c.l.b16 %v2994
    %v3283 = vunpack.c.l.b16 %v2995
    %v3284 = vpack.c.b16 %v3141, %v3140
    %v3285 = vpack.c.b16 %v3143, %v3142
    %v3286 = vpack.c.b16 %v3145, %v3144
    %v3287 = vpack.c.b16 %v3147, %v3146
    %v3288 = vpack.c.b16 %v3149, %v3148
    %v3289 = vpack.c.b16 %v3151, %v3150
    %v3290 = vpack.c.b16 %v3153, %v3152
    %v3291 = vpack.c.b16 %v3155, %v3154
    %v3292 = vpack.c.b16 %v3157, %v3156
    %v3293 = vpack.c.b16 %v3159, %v3158
    %v3294 = vpack.c.b16 %v3161, %v3160
    %v3295 = vpack.c.b16 %v3163, %v3162
    %v3296 = vpack.c.b16 %v3165, %v3164
    %v3297 = vpack.c.b16 %v3167, %v3166
    %v3298 = vpack.c.b16 %v3169, %v3168
    %v3299 = vpack.c.b16 %v3171, %v3170
    %v3300 = vpack.c.b16 %v3173, %v3172
    %v3301 = vpack.c.b16 %v3175, %v3174
    %v3302 = vpack.c.b16 %v3177, %v3176
    %v3303 = vpack.c.b16 %v3179, %v3178
    %v3304 = vpack.c.b16 %v3181, %v3180
    %v3305 = vpack.c.b16 %v3183, %v3182
    %v3306 = vpack.c.b16 %v3185, %v3184
    %v3307 = vpack.c.b16 %v3187, %v3186
    %v3308 = vpack.c.b16 %v3189, %v3188
    %v3309 = vpack.c.b16 %v3191, %v3190
    %v3310 = vpack.c.b16 %v3193, %v3192
    %v3311 = vpack.c.b16 %v3195, %v3194
    %v3312 = vpack.c.b16 %v3197, %v3196
    %v3313 = vpack.c.b16 %v3199, %v3198
    %v3314 = vpack.c.b16 %v3201, %v3200
    %v3315 = vpack.c.b16 %v3203, %v3202
    %v3316 = vpack.c.b16 %v3205, %v3204
    %v3317 = vpack.c.b16 %v3207, %v3206
    %v3318 = vpack.c.b16 %v3209, %v3208
    %v3319 = vpack.c.b16 %v3211, %v3210
    %v3320 = vpack.c.b16 %v3213, %v3212
    %v3321 = vpack.c.b16 %v3215, %v3214
    %v3322 = vpack.c.b16 %v3217, %v3216
    %v3323 = vpack.c.b16 %v3219, %v3218
    %v3324 = vpack.c.b16 %v3221, %v3220
    %v3325 = vpack.c.b16 %v3223, %v3222
    %v3326 = vpack.c.b16 %v3225, %v3224
    %v3327 = vpack.c.b16 %v3227, %v3226
    %v3328 = vpack.c.b16 %v3229, %v3228
    %v3329 = vpack.c.b16 %v3231, %v3230
    %v3330 = vpack.c.b16 %v3233, %v3232
    %v3331 = vpack.c.b16 %v3235, %v3234
    %v3332 = vpack.c.b16 %v3237, %v3236
    %v3333 = vpack.c.b16 %v3239, %v3238
    %v3334 = vpack.c.b16 %v3241, %v3240
    %v3335 = vpack.c.b16 %v3243, %v3242
    %v3336 = vpack.c.b16 %v3245, %v3244
    %v3337 = vpack.c.b16 %v3247, %v3246
    %v3338 = vpack.c.b16 %v3249, %v3248
    %v3339 = vpack.c.b16 %v3251, %v3250
    %v3340 = vpack.c.b16 %v3253, %v3252
    %v3341 = vpack.c.b16 %v3255, %v3254
    %v3342 = vpack.c.b16 %v3257, %v3256
    %v3343 = vpack.c.b16 %v3259, %v3258
    %v3344 = vpack.c.b16 %v3261, %v3260
    %v3345 = vpack.c.b16 %v3263, %v3262
    %v3346 = vpack.c.b16 %v3265, %v3264
    %v3347 = vpack.c.b16 %v3267, %v3266
    %v3348 = vpack.c.b16 %v3269, %v3268
    %v3349 = vpack.c.b16 %v3271, %v3270
    %v3350 = vpack.c.b16 %v3273, %v3272
    %v3351 = vpack.c.b16 %v3275, %v3274
    %v3352 = vpack.c.b16 %v3277, %v3276
    %v3353 = vpack.c.b16 %v3279, %v3278
    %v3354 = vpack.c.b16 %v3281, %v3280
    %v3355 = vpack.c.b16 %v3283, %v3282
    %3428 = vmatprep.subr.bf16.mxu0 0
    %3429 = vmatpush1.bf16.msra.mxu0 %v3284
    %3430 = vmatprep.subr.bf16.mxu0 0
    %3431 = vmatpush1.bf16.msra.mxu0 %v3285
    %3432 = vmatprep.subr.bf16.mxu0 0
    %3433 = vmatpush1.bf16.msra.mxu0 %v3286
    %3434 = vmatprep.subr.bf16.mxu0 0
    %3435 = vmatpush1.bf16.msra.mxu0 %v3287
    %3436 = vmatprep.subr.bf16.mxu0 0
    %3437 = vmatpush1.bf16.msra.mxu0 %v3288
    %3438 = vmatprep.subr.bf16.mxu0 0
    %3439 = vmatpush1.bf16.msra.mxu0 %v3289
    %3440 = vmatprep.subr.bf16.mxu0 0
    %3441 = vmatpush1.bf16.msra.mxu0 %v3290
    %3442 = vmatprep.subr.bf16.mxu0 0
    %3443 = vmatpush1.bf16.msra.mxu0 %v3291
    %3444 = vmatprep.subr.bf16.mxu0 0
    %3445 = vmatpush1.bf16.msra.mxu0 %v3292
    %3446 = vmatprep.subr.bf16.mxu0 0
    %3447 = vmatpush1.bf16.msra.mxu0 %v3293
    %3448 = vmatprep.subr.bf16.mxu0 0
    %3449 = vmatpush1.bf16.msra.mxu0 %v3294
    %3450 = vmatprep.subr.bf16.mxu0 0
    %3451 = vmatpush1.bf16.msra.mxu0 %v3295
    %3452 = vmatprep.subr.bf16.mxu0 0
    %3453 = vmatpush1.bf16.msra.mxu0 %v3296
    %3454 = vmatprep.subr.bf16.mxu0 0
    %3455 = vmatpush1.bf16.msra.mxu0 %v3297
    %3456 = vmatprep.subr.bf16.mxu0 0
    %3457 = vmatpush1.bf16.msra.mxu0 %v3298
    %3458 = vmatprep.subr.bf16.mxu0 0
    %3459 = vmatpush1.bf16.msra.mxu0 %v3299
    %3460 = vmatprep.mubr.bf16.mxu0 %v2565
    %3461 = vmatmul.mubr.bf16.gmra.mrb[0].mxu0 %v2564
    %v3462 = vpop.f32.mrb[0].mxu0
    %v3463 = vadd.f32 0.0, %v3462
    %v3464 = vpop.f32.mrb[0].mxu0
    %v3465 = vpop.f32.mrb[0].mxu0
    %v3466 = vadd.f32 0.0, %v3465
    %v3467 = vpop.f32.mrb[0].mxu0
    %3468 = vmatprep.mubr.bf16.mxu0 %v2574
    %3469 = vmatmul.mubr.bf16.gmra.mrb[0].mxu0 %v2573
    %v3470 = vpop.f32.mrb[0].mxu0
    %v3471 = vadd.f32 0.0, %v3470
    %v3472 = vpop.f32.mrb[0].mxu0
    %v3473 = vpop.f32.mrb[0].mxu0
    %v3474 = vadd.f32 0.0, %v3473
    %v3475 = vpop.f32.mrb[0].mxu0
    %3476 = vmatprep.mubr.bf16.mxu0 %v2583
    %3477 = vmatmul.mubr.bf16.gmra.mrb[0].mxu0 %v2582
    %v3478 = vpop.f32.mrb[0].mxu0
    %v3479 = vadd.f32 0.0, %v3478
    %v3480 = vpop.f32.mrb[0].mxu0
    %v3481 = vpop.f32.mrb[0].mxu0
    %v3482 = vadd.f32 0.0, %v3481
    %v3483 = vpop.f32.mrb[0].mxu0
    %3484 = vmatprep.mubr.bf16.mxu0 %v2592
    %3485 = vmatmul.mubr.bf16.gmra.mrb[0].mxu0 %v2591
    %v3486 = vpop.f32.mrb[0].mxu0
    %v3487 = vadd.f32 0.0, %v3486
    %v3488 = vpop.f32.mrb[0].mxu0
    %v3489 = vpop.f32.mrb[0].mxu0
    %v3490 = vadd.f32 0.0, %v3489
    %v3491 = vpop.f32.mrb[0].mxu0
    %3492 = vmatprep.mubr.bf16.mxu0 %v2601
    %3493 = vmatmul.mubr.bf16.gmra.mrb[0].mxu0 %v2600
    %v3494 = vpop.f32.mrb[0].mxu0
    %v3495 = vadd.f32 0.0, %v3494
    %v3496 = vpop.f32.mrb[0].mxu0
    %v3497 = vpop.f32.mrb[0].mxu0
    %v3498 = vadd.f32 0.0, %v3497
    %v3499 = vpop.f32.mrb[0].mxu0
    %3500 = vmatprep.mubr.bf16.mxu0 %v2610
    %3501 = vmatmul.mubr.bf16.gmra.mrb[0].mxu0 %v2609
    %v3502 = vpop.f32.mrb[0].mxu0
    %v3503 = vadd.f32 0.0, %v3502
    %v3504 = vpop.f32.mrb[0].mxu0
    %v3505 = vpop.f32.mrb[0].mxu0
    %v3506 = vadd.f32 0.0, %v3505
    %v3507 = vpop.f32.mrb[0].mxu0
    %3508 = vmatprep.mubr.bf16.mxu0 %v2619
    %3509 = vmatmul.mubr.bf16.gmra.mrb[0].mxu0 %v2618
    %v3510 = vpop.f32.mrb[0].mxu0
    %v3511 = vadd.f32 0.0, %v3510
    %v3512 = vpop.f32.mrb[0].mxu0
    %v3513 = vpop.f32.mrb[0].mxu0
    %v3514 = vadd.f32 0.0, %v3513
    %v3515 = vpop.f32.mrb[0].mxu0
    %3516 = vmatprep.mubr.bf16.mxu0 %v2628
    %3517 = vmatmul.mubr.bf16.gmra.mrb[0].mxu0 %v2627
    %v3518 = vpop.f32.mrb[0].mxu0
    %v3519 = vadd.f32 0.0, %v3518
    %v3520 = vpop.f32.mrb[0].mxu0
    %v3521 = vpop.f32.mrb[0].mxu0
    %v3522 = vadd.f32 0.0, %v3521
    %v3523 = vpop.f32.mrb[0].mxu0
    %3524 = vmatprep.mubr.bf16.mxu0 %v2637
    %3525 = vmatmul.mubr.bf16.gmra.mrb[0].mxu0 %v2636
    %v3526 = vpop.f32.mrb[0].mxu0
    %v3527 = vadd.f32 0.0, %v3526
    %v3528 = vpop.f32.mrb[0].mxu0
    %v3529 = vpop.f32.mrb[0].mxu0
    %v3530 = vadd.f32 0.0, %v3529
    %v3531 = vpop.f32.mrb[0].mxu0
    %3532 = vmatprep.mubr.bf16.mxu0 %v2646
    %3533 = vmatmul.mubr.bf16.gmra.mrb[0].mxu0 %v2645
    %v3534 = vpop.f32.mrb[0].mxu0
    %v3535 = vadd.f32 0.0, %v3534
    %v3536 = vpop.f32.mrb[0].mxu0
    %v3537 = vpop.f32.mrb[0].mxu0
    %v3538 = vadd.f32 0.0, %v3537
    %v3539 = vpop.f32.mrb[0].mxu0
    %3540 = vmatprep.mubr.bf16.mxu0 %v2655
    %3541 = vmatmul.mubr.bf16.gmra.mrb[0].mxu0 %v2654
    %v3542 = vpop.f32.mrb[0].mxu0
    %v3543 = vadd.f32 0.0, %v3542
    %v3544 = vpop.f32.mrb[0].mxu0
    %v3545 = vpop.f32.mrb[0].mxu0
    %v3546 = vadd.f32 0.0, %v3545
    %v3547 = vpop.f32.mrb[0].mxu0
    %3548 = vmatprep.mubr.bf16.mxu0 %v2664
    %3549 = vmatmul.mubr.bf16.gmra.mrb[0].mxu0 %v2663
    %v3550 = vpop.f32.mrb[0].mxu0
    %v3551 = vadd.f32 0.0, %v3550
    %v3552 = vpop.f32.mrb[0].mxu0
    %v3553 = vpop.f32.mrb[0].mxu0
    %v3554 = vadd.f32 0.0, %v3553
    %v3555 = vpop.f32.mrb[0].mxu0
    %3556 = vmatprep.mubr.bf16.mxu0 %v2673
    %3557 = vmatmul.mubr.bf16.gmra.mrb[0].mxu0 %v2672
    %v3558 = vpop.f32.mrb[0].mxu0
    %v3559 = vadd.f32 0.0, %v3558
    %v3560 = vpop.f32.mrb[0].mxu0
    %v3561 = vpop.f32.mrb[0].mxu0
    %v3562 = vadd.f32 0.0, %v3561
    %v3563 = vpop.f32.mrb[0].mxu0
    %3564 = vmatprep.mubr.bf16.mxu0 %v2682
    %3565 = vmatmul.mubr.bf16.gmra.mrb[0].mxu0 %v2681
    %v3566 = vpop.f32.mrb[0].mxu0
    %v3567 = vadd.f32 0.0, %v3566
    %v3568 = vpop.f32.mrb[0].mxu0
    %v3569 = vpop.f32.mrb[0].mxu0
    %v3570 = vadd.f32 0.0, %v3569
    %v3571 = vpop.f32.mrb[0].mxu0
    %3572 = vmatprep.mubr.bf16.mxu0 %v2691
    %3573 = vmatmul.mubr.bf16.gmra.mrb[0].mxu0 %v2690
    %v3574 = vpop.f32.mrb[0].mxu0
    %v3575 = vadd.f32 0.0, %v3574
    %v3576 = vpop.f32.mrb[0].mxu0
    %v3577 = vpop.f32.mrb[0].mxu0
    %v3578 = vadd.f32 0.0, %v3577
    %v3579 = vpop.f32.mrb[0].mxu0
    %3580 = vmatprep.mubr.bf16.mxu0 %v2700
    %3581 = vmatmul.mubr.bf16.gmra.mrb[0].mxu0 %v2699
    %v3582 = vpop.f32.mrb[0].mxu0
    %v3583 = vadd.f32 0.0, %v3582
    %v3584 = vpop.f32.mrb[0].mxu0
    %v3585 = vpop.f32.mrb[0].mxu0
    %v3586 = vadd.f32 0.0, %v3585
    %v3587 = vpop.f32.mrb[0].mxu0
    %3588 = vmatprep.mubr.bf16.mxu0 %v2709
    %3589 = vmatmul.mubr.bf16.gmra.mrb[0].mxu0 %v2708
    %v3590 = vpop.f32.mrb[0].mxu0
    %v3591 = vadd.f32 0.0, %v3590
    %v3592 = vpop.f32.mrb[0].mxu0
    %v3593 = vpop.f32.mrb[0].mxu0
    %v3594 = vadd.f32 0.0, %v3593
    %v3595 = vpop.f32.mrb[0].mxu0
    %3596 = vmatprep.mubr.bf16.mxu0 %v2718
    %3597 = vmatmul.mubr.bf16.gmra.mrb[0].mxu0 %v2717
    %v3598 = vpop.f32.mrb[0].mxu0
    %v3599 = vadd.f32 0.0, %v3598
    %v3600 = vpop.f32.mrb[0].mxu0
    %v3601 = vpop.f32.mrb[0].mxu0
    %v3602 = vadd.f32 0.0, %v3601
    %v3603 = vpop.f32.mrb[0].mxu0
    %3604 = vmatprep.mubr.bf16.mxu0 %v2727
    %3605 = vmatmul.mubr.bf16.gmra.mrb[0].mxu0 %v2726
    %v3606 = vpop.f32.mrb[0].mxu0
    %v3607 = vadd.f32 0.0, %v3606
    %v3608 = vpop.f32.mrb[0].mxu0
    %v3609 = vpop.f32.mrb[0].mxu0
    %v3610 = vadd.f32 0.0, %v3609
    %v3611 = vpop.f32.mrb[0].mxu0
    %3612 = vmatprep.mubr.bf16.mxu0 %v2736
    %3613 = vmatmul.mubr.bf16.gmra.mrb[0].mxu0 %v2735
    %v3614 = vpop.f32.mrb[0].mxu0
    %v3615 = vadd.f32 0.0, %v3614
    %v3616 = vpop.f32.mrb[0].mxu0
    %v3617 = vpop.f32.mrb[0].mxu0
    %v3618 = vadd.f32 0.0, %v3617
    %v3619 = vpop.f32.mrb[0].mxu0
    %3620 = vmatprep.mubr.bf16.mxu0 %v2745
    %3621 = vmatmul.mubr.bf16.gmra.mrb[0].mxu0 %v2744
    %v3622 = vpop.f32.mrb[0].mxu0
    %v3623 = vadd.f32 0.0, %v3622
    %v3624 = vpop.f32.mrb[0].mxu0
    %v3625 = vpop.f32.mrb[0].mxu0
    %v3626 = vadd.f32 0.0, %v3625
    %v3627 = vpop.f32.mrb[0].mxu0
    %3628 = vmatprep.mubr.bf16.mxu0 %v2754
    %3629 = vmatmul.mubr.bf16.gmra.mrb[0].mxu0 %v2753
    %v3630 = vpop.f32.mrb[0].mxu0
    %v3631 = vadd.f32 0.0, %v3630
    %v3632 = vpop.f32.mrb[0].mxu0
    %v3633 = vpop.f32.mrb[0].mxu0
    %v3634 = vadd.f32 0.0, %v3633
    %v3635 = vpop.f32.mrb[0].mxu0
    %3636 = vmatprep.mubr.bf16.mxu0 %v2763
    %3637 = vmatmul.mubr.bf16.gmra.mrb[0].mxu0 %v2762
    %v3638 = vpop.f32.mrb[0].mxu0
    %v3639 = vadd.f32 0.0, %v3638
    %v3640 = vpop.f32.mrb[0].mxu0
    %v3641 = vpop.f32.mrb[0].mxu0
    %v3642 = vadd.f32 0.0, %v3641
    %v3643 = vpop.f32.mrb[0].mxu0
    %3644 = vmatprep.mubr.bf16.mxu0 %v2772
    %3645 = vmatmul.mubr.bf16.gmra.mrb[0].mxu0 %v2771
    %v3646 = vpop.f32.mrb[0].mxu0
    %v3647 = vadd.f32 0.0, %v3646
    %v3648 = vpop.f32.mrb[0].mxu0
    %v3649 = vpop.f32.mrb[0].mxu0
    %v3650 = vadd.f32 0.0, %v3649
    %v3651 = vpop.f32.mrb[0].mxu0
    %3652 = vmatprep.mubr.bf16.mxu0 %v2781
    %3653 = vmatmul.mubr.bf16.gmra.mrb[0].mxu0 %v2780
    %v3654 = vpop.f32.mrb[0].mxu0
    %v3655 = vadd.f32 0.0, %v3654
    %v3656 = vpop.f32.mrb[0].mxu0
    %v3657 = vpop.f32.mrb[0].mxu0
    %v3658 = vadd.f32 0.0, %v3657
    %v3659 = vpop.f32.mrb[0].mxu0
    %3660 = vmatprep.mubr.bf16.mxu0 %v2790
    %3661 = vmatmul.mubr.bf16.gmra.mrb[0].mxu0 %v2789
    %v3662 = vpop.f32.mrb[0].mxu0
    %v3663 = vadd.f32 0.0, %v3662
    %v3664 = vpop.f32.mrb[0].mxu0
    %v3665 = vpop.f32.mrb[0].mxu0
    %v3666 = vadd.f32 0.0, %v3665
    %v3667 = vpop.f32.mrb[0].mxu0
    %3668 = vmatprep.mubr.bf16.mxu0 %v2799
    %3669 = vmatmul.mubr.bf16.gmra.mrb[0].mxu0 %v2798
    %v3670 = vpop.f32.mrb[0].mxu0
    %v3671 = vadd.f32 0.0, %v3670
    %v3672 = vpop.f32.mrb[0].mxu0
    %v3673 = vpop.f32.mrb[0].mxu0
    %v3674 = vadd.f32 0.0, %v3673
    %v3675 = vpop.f32.mrb[0].mxu0
    %3676 = vmatprep.mubr.bf16.mxu0 %v2808
    %3677 = vmatmul.mubr.bf16.gmra.mrb[0].mxu0 %v2807
    %v3678 = vpop.f32.mrb[0].mxu0
    %v3679 = vadd.f32 0.0, %v3678
    %v3680 = vpop.f32.mrb[0].mxu0
    %v3681 = vpop.f32.mrb[0].mxu0
    %v3682 = vadd.f32 0.0, %v3681
    %v3683 = vpop.f32.mrb[0].mxu0
    %3684 = vmatprep.mubr.bf16.mxu0 %v2817
    %3685 = vmatmul.mubr.bf16.gmra.mrb[0].mxu0 %v2816
    %v3686 = vpop.f32.mrb[0].mxu0
    %v3687 = vadd.f32 0.0, %v3686
    %v3688 = vpop.f32.mrb[0].mxu0
    %v3689 = vpop.f32.mrb[0].mxu0
    %v3690 = vadd.f32 0.0, %v3689
    %v3691 = vpop.f32.mrb[0].mxu0
    %3692 = vmatprep.mubr.bf16.mxu0 %v2826
    %3693 = vmatmul.mubr.bf16.gmra.mrb[0].mxu0 %v2825
    %v3694 = vpop.f32.mrb[0].mxu0
    %v3695 = vadd.f32 0.0, %v3694
    %v3696 = vpop.f32.mrb[0].mxu0
    %v3697 = vpop.f32.mrb[0].mxu0
    %v3698 = vadd.f32 0.0, %v3697
    %v3699 = vpop.f32.mrb[0].mxu0
    %3700 = vmatprep.mubr.bf16.mxu0 %v2835
    %3701 = vmatmul.mubr.bf16.gmra.mrb[0].mxu0 %v2834
    %v3702 = vpop.f32.mrb[0].mxu0
    %v3703 = vadd.f32 0.0, %v3702
    %v3704 = vpop.f32.mrb[0].mxu0
    %v3705 = vpop.f32.mrb[0].mxu0
    %v3706 = vadd.f32 0.0, %v3705
    %v3707 = vpop.f32.mrb[0].mxu0
    %3708 = vmatprep.mubr.bf16.mxu0 %v2844
    %3709 = vmatmul.mubr.bf16.gmra.mrb[0].mxu0 %v2843
    %v3710 = vpop.f32.mrb[0].mxu0
    %v3711 = vadd.f32 0.0, %v3710
    %v3712 = vpop.f32.mrb[0].mxu0
    %v3713 = vpop.f32.mrb[0].mxu0
    %v3714 = vadd.f32 0.0, %v3713
    %v3715 = vpop.f32.mrb[0].mxu0
    %3716 = vdwg.mxu0
    %3717 = vmatprep.subr.bf16.mxu0 0
    %3718 = vmatpush1.bf16.msra.mxu0 %v3300
    %3719 = vmatprep.subr.bf16.mxu0 0
    %3720 = vmatpush1.bf16.msra.mxu0 %v3301
    %3721 = vmatprep.subr.bf16.mxu0 0
    %3722 = vmatpush1.bf16.msra.mxu0 %v3302
    %3723 = vmatprep.subr.bf16.mxu0 0
    %3724 = vmatpush1.bf16.msra.mxu0 %v3303
    %3725 = vmatprep.subr.bf16.mxu0 0
    %3726 = vmatpush1.bf16.msra.mxu0 %v3304
    %3727 = vmatprep.subr.bf16.mxu0 0
    %3728 = vmatpush1.bf16.msra.mxu0 %v3305
    %3729 = vmatprep.subr.bf16.mxu0 0
    %3730 = vmatpush1.bf16.msra.mxu0 %v3306
    %3731 = vmatprep.subr.bf16.mxu0 0
    %3732 = vmatpush1.bf16.msra.mxu0 %v3307
    %3733 = vmatprep.subr.bf16.mxu0 0
    %3734 = vmatpush1.bf16.msra.mxu0 %v3308
    %3735 = vmatprep.subr.bf16.mxu0 0
    %3736 = vmatpush1.bf16.msra.mxu0 %v3309
    %3737 = vmatprep.subr.bf16.mxu0 0
    %3738 = vmatpush1.bf16.msra.mxu0 %v3310
    %3739 = vmatprep.subr.bf16.mxu0 0
    %3740 = vmatpush1.bf16.msra.mxu0 %v3311
    %3741 = vmatprep.subr.bf16.mxu0 0
    %3742 = vmatpush1.bf16.msra.mxu0 %v3312
    %3743 = vmatprep.subr.bf16.mxu0 0
    %3744 = vmatpush1.bf16.msra.mxu0 %v3313
    %3745 = vmatprep.subr.bf16.mxu0 0
    %3746 = vmatpush1.bf16.msra.mxu0 %v3314
    %3747 = vmatprep.subr.bf16.mxu0 0
    %3748 = vmatpush1.bf16.msra.mxu0 %v3315
    %3749 = vmatprep.mubr.bf16.mxu0 %v2567
    %3750 = vmatmul.mubr.bf16.gmra.mrb[0].mxu0 %v2566
    %v3751 = vpop.f32.mrb[0].mxu0
    %v3752 = vadd.f32 %v3463, %v3751
    %v3753 = vpop.f32.mrb[0].mxu0
    %v3754 = vpop.f32.mrb[0].mxu0
    %v3755 = vadd.f32 %v3466, %v3754
    %v3756 = vpop.f32.mrb[0].mxu0
    %3757 = vmatprep.mubr.bf16.mxu0 %v2576
    %3758 = vmatmul.mubr.bf16.gmra.mrb[0].mxu0 %v2575
    %v3759 = vpop.f32.mrb[0].mxu0
    %v3760 = vadd.f32 %v3471, %v3759
    %v3761 = vpop.f32.mrb[0].mxu0
    %v3762 = vpop.f32.mrb[0].mxu0
    %v3763 = vadd.f32 %v3474, %v3762
    %v3764 = vpop.f32.mrb[0].mxu0
    %3765 = vmatprep.mubr.bf16.mxu0 %v2585
    %3766 = vmatmul.mubr.bf16.gmra.mrb[0].mxu0 %v2584
    %v3767 = vpop.f32.mrb[0].mxu0
    %v3768 = vadd.f32 %v3479, %v3767
    %v3769 = vpop.f32.mrb[0].mxu0
    %v3770 = vpop.f32.mrb[0].mxu0
    %v3771 = vadd.f32 %v3482, %v3770
    %v3772 = vpop.f32.mrb[0].mxu0
    %3773 = vmatprep.mubr.bf16.mxu0 %v2594
    %3774 = vmatmul.mubr.bf16.gmra.mrb[0].mxu0 %v2593
    %v3775 = vpop.f32.mrb[0].mxu0
    %v3776 = vadd.f32 %v3487, %v3775
    %v3777 = vpop.f32.mrb[0].mxu0
    %v3778 = vpop.f32.mrb[0].mxu0
    %v3779 = vadd.f32 %v3490, %v3778
    %v3780 = vpop.f32.mrb[0].mxu0
    %3781 = vmatprep.mubr.bf16.mxu0 %v2603
    %3782 = vmatmul.mubr.bf16.gmra.mrb[0].mxu0 %v2602
    %v3783 = vpop.f32.mrb[0].mxu0
    %v3784 = vadd.f32 %v3495, %v3783
    %v3785 = vpop.f32.mrb[0].mxu0
    %v3786 = vpop.f32.mrb[0].mxu0
    %v3787 = vadd.f32 %v3498, %v3786
    %v3788 = vpop.f32.mrb[0].mxu0
    %3789 = vmatprep.mubr.bf16.mxu0 %v2612
    %3790 = vmatmul.mubr.bf16.gmra.mrb[0].mxu0 %v2611
    %v3791 = vpop.f32.mrb[0].mxu0
    %v3792 = vadd.f32 %v3503, %v3791
    %v3793 = vpop.f32.mrb[0].mxu0
    %v3794 = vpop.f32.mrb[0].mxu0
    %v3795 = vadd.f32 %v3506, %v3794
    %v3796 = vpop.f32.mrb[0].mxu0
    %3797 = vmatprep.mubr.bf16.mxu0 %v2621
    %3798 = vmatmul.mubr.bf16.gmra.mrb[0].mxu0 %v2620
    %v3799 = vpop.f32.mrb[0].mxu0
    %v3800 = vadd.f32 %v3511, %v3799
    %v3801 = vpop.f32.mrb[0].mxu0
    %v3802 = vpop.f32.mrb[0].mxu0
    %v3803 = vadd.f32 %v3514, %v3802
    %v3804 = vpop.f32.mrb[0].mxu0
    %3805 = vmatprep.mubr.bf16.mxu0 %v2630
    %3806 = vmatmul.mubr.bf16.gmra.mrb[0].mxu0 %v2629
    %v3807 = vpop.f32.mrb[0].mxu0
    %v3808 = vadd.f32 %v3519, %v3807
    %v3809 = vpop.f32.mrb[0].mxu0
    %v3810 = vpop.f32.mrb[0].mxu0
    %v3811 = vadd.f32 %v3522, %v3810
    %v3812 = vpop.f32.mrb[0].mxu0
    %3813 = vmatprep.mubr.bf16.mxu0 %v2639
    %3814 = vmatmul.mubr.bf16.gmra.mrb[0].mxu0 %v2638
    %v3815 = vpop.f32.mrb[0].mxu0
    %v3816 = vadd.f32 %v3527, %v3815
    %v3817 = vpop.f32.mrb[0].mxu0
    %v3818 = vpop.f32.mrb[0].mxu0
    %v3819 = vadd.f32 %v3530, %v3818
    %v3820 = vpop.f32.mrb[0].mxu0
    %3821 = vmatprep.mubr.bf16.mxu0 %v2648
    %3822 = vmatmul.mubr.bf16.gmra.mrb[0].mxu0 %v2647
    %v3823 = vpop.f32.mrb[0].mxu0
    %v3824 = vadd.f32 %v3535, %v3823
    %v3825 = vpop.f32.mrb[0].mxu0
    %v3826 = vpop.f32.mrb[0].mxu0
    %v3827 = vadd.f32 %v3538, %v3826
    %v3828 = vpop.f32.mrb[0].mxu0
    %3829 = vmatprep.mubr.bf16.mxu0 %v2657
    %3830 = vmatmul.mubr.bf16.gmra.mrb[0].mxu0 %v2656
    %v3831 = vpop.f32.mrb[0].mxu0
    %v3832 = vadd.f32 %v3543, %v3831
    %v3833 = vpop.f32.mrb[0].mxu0
    %v3834 = vpop.f32.mrb[0].mxu0
    %v3835 = vadd.f32 %v3546, %v3834
    %v3836 = vpop.f32.mrb[0].mxu0
    %3837 = vmatprep.mubr.bf16.mxu0 %v2666
    %3838 = vmatmul.mubr.bf16.gmra.mrb[0].mxu0 %v2665
    %v3839 = vpop.f32.mrb[0].mxu0
    %v3840 = vadd.f32 %v3551, %v3839
    %v3841 = vpop.f32.mrb[0].mxu0
    %v3842 = vpop.f32.mrb[0].mxu0
    %v3843 = vadd.f32 %v3554, %v3842
    %v3844 = vpop.f32.mrb[0].mxu0
    %3845 = vmatprep.mubr.bf16.mxu0 %v2675
    %3846 = vmatmul.mubr.bf16.gmra.mrb[0].mxu0 %v2674
    %v3847 = vpop.f32.mrb[0].mxu0
    %v3848 = vadd.f32 %v3559, %v3847
    %v3849 = vpop.f32.mrb[0].mxu0
    %v3850 = vpop.f32.mrb[0].mxu0
    %v3851 = vadd.f32 %v3562, %v3850
    %v3852 = vpop.f32.mrb[0].mxu0
    %3853 = vmatprep.mubr.bf16.mxu0 %v2684
    %3854 = vmatmul.mubr.bf16.gmra.mrb[0].mxu0 %v2683
    %v3855 = vpop.f32.mrb[0].mxu0
    %v3856 = vadd.f32 %v3567, %v3855
    %v3857 = vpop.f32.mrb[0].mxu0
    %v3858 = vpop.f32.mrb[0].mxu0
    %v3859 = vadd.f32 %v3570, %v3858
    %v3860 = vpop.f32.mrb[0].mxu0
    %3861 = vmatprep.mubr.bf16.mxu0 %v2693
    %3862 = vmatmul.mubr.bf16.gmra.mrb[0].mxu0 %v2692
    %v3863 = vpop.f32.mrb[0].mxu0
    %v3864 = vadd.f32 %v3575, %v3863
    %v3865 = vpop.f32.mrb[0].mxu0
    %v3866 = vpop.f32.mrb[0].mxu0
    %v3867 = vadd.f32 %v3578, %v3866
    %v3868 = vpop.f32.mrb[0].mxu0
    %3869 = vmatprep.mubr.bf16.mxu0 %v2702
    %3870 = vmatmul.mubr.bf16.gmra.mrb[0].mxu0 %v2701
    %v3871 = vpop.f32.mrb[0].mxu0
    %v3872 = vadd.f32 %v3583, %v3871
    %v3873 = vpop.f32.mrb[0].mxu0
    %v3874 = vpop.f32.mrb[0].mxu0
    %v3875 = vadd.f32 %v3586, %v3874
    %v3876 = vpop.f32.mrb[0].mxu0
    %3877 = vmatprep.mubr.bf16.mxu0 %v2711
    %3878 = vmatmul.mubr.bf16.gmra.mrb[0].mxu0 %v2710
    %v3879 = vpop.f32.mrb[0].mxu0
    %v3880 = vadd.f32 %v3591, %v3879
    %v3881 = vpop.f32.mrb[0].mxu0
    %v3882 = vpop.f32.mrb[0].mxu0
    %v3883 = vadd.f32 %v3594, %v3882
    %v3884 = vpop.f32.mrb[0].mxu0
    %3885 = vmatprep.mubr.bf16.mxu0 %v2720
    %3886 = vmatmul.mubr.bf16.gmra.mrb[0].mxu0 %v2719
    %v3887 = vpop.f32.mrb[0].mxu0
    %v3888 = vadd.f32 %v3599, %v3887
    %v3889 = vpop.f32.mrb[0].mxu0
    %v3890 = vpop.f32.mrb[0].mxu0
    %v3891 = vadd.f32 %v3602, %v3890
    %v3892 = vpop.f32.mrb[0].mxu0
    %3893 = vmatprep.mubr.bf16.mxu0 %v2729
    %3894 = vmatmul.mubr.bf16.gmra.mrb[0].mxu0 %v2728
    %v3895 = vpop.f32.mrb[0].mxu0
    %v3896 = vadd.f32 %v3607, %v3895
    %v3897 = vpop.f32.mrb[0].mxu0
    %v3898 = vpop.f32.mrb[0].mxu0
    %v3899 = vadd.f32 %v3610, %v3898
    %v3900 = vpop.f32.mrb[0].mxu0
    %3901 = vmatprep.mubr.bf16.mxu0 %v2738
    %3902 = vmatmul.mubr.bf16.gmra.mrb[0].mxu0 %v2737
    %v3903 = vpop.f32.mrb[0].mxu0
    %v3904 = vadd.f32 %v3615, %v3903
    %v3905 = vpop.f32.mrb[0].mxu0
    %v3906 = vpop.f32.mrb[0].mxu0
    %v3907 = vadd.f32 %v3618, %v3906
    %v3908 = vpop.f32.mrb[0].mxu0
    %3909 = vmatprep.mubr.bf16.mxu0 %v2747
    %3910 = vmatmul.mubr.bf16.gmra.mrb[0].mxu0 %v2746
    %v3911 = vpop.f32.mrb[0].mxu0
    %v3912 = vadd.f32 %v3623, %v3911
    %v3913 = vpop.f32.mrb[0].mxu0
    %v3914 = vpop.f32.mrb[0].mxu0
    %v3915 = vadd.f32 %v3626, %v3914
    %v3916 = vpop.f32.mrb[0].mxu0
    %3917 = vmatprep.mubr.bf16.mxu0 %v2756
    %3918 = vmatmul.mubr.bf16.gmra.mrb[0].mxu0 %v2755
    %v3919 = vpop.f32.mrb[0].mxu0
    %v3920 = vadd.f32 %v3631, %v3919
    %v3921 = vpop.f32.mrb[0].mxu0
    %v3922 = vpop.f32.mrb[0].mxu0
    %v3923 = vadd.f32 %v3634, %v3922
    %v3924 = vpop.f32.mrb[0].mxu0
    %3925 = vmatprep.mubr.bf16.mxu0 %v2765
    %3926 = vmatmul.mubr.bf16.gmra.mrb[0].mxu0 %v2764
    %v3927 = vpop.f32.mrb[0].mxu0
    %v3928 = vadd.f32 %v3639, %v3927
    %v3929 = vpop.f32.mrb[0].mxu0
    %v3930 = vpop.f32.mrb[0].mxu0
    %v3931 = vadd.f32 %v3642, %v3930
    %v3932 = vpop.f32.mrb[0].mxu0
    %3933 = vmatprep.mubr.bf16.mxu0 %v2774
    %3934 = vmatmul.mubr.bf16.gmra.mrb[0].mxu0 %v2773
    %v3935 = vpop.f32.mrb[0].mxu0
    %v3936 = vadd.f32 %v3647, %v3935
    %v3937 = vpop.f32.mrb[0].mxu0
    %v3938 = vpop.f32.mrb[0].mxu0
    %v3939 = vadd.f32 %v3650, %v3938
    %v3940 = vpop.f32.mrb[0].mxu0
    %3941 = vmatprep.mubr.bf16.mxu0 %v2783
    %3942 = vmatmul.mubr.bf16.gmra.mrb[0].mxu0 %v2782
    %v3943 = vpop.f32.mrb[0].mxu0
    %v3944 = vadd.f32 %v3655, %v3943
    %v3945 = vpop.f32.mrb[0].mxu0
    %v3946 = vpop.f32.mrb[0].mxu0
    %v3947 = vadd.f32 %v3658, %v3946
    %v3948 = vpop.f32.mrb[0].mxu0
    %3949 = vmatprep.mubr.bf16.mxu0 %v2792
    %3950 = vmatmul.mubr.bf16.gmra.mrb[0].mxu0 %v2791
    %v3951 = vpop.f32.mrb[0].mxu0
    %v3952 = vadd.f32 %v3663, %v3951
    %v3953 = vpop.f32.mrb[0].mxu0
    %v3954 = vpop.f32.mrb[0].mxu0
    %v3955 = vadd.f32 %v3666, %v3954
    %v3956 = vpop.f32.mrb[0].mxu0
    %3957 = vmatprep.mubr.bf16.mxu0 %v2801
    %3958 = vmatmul.mubr.bf16.gmra.mrb[0].mxu0 %v2800
    %v3959 = vpop.f32.mrb[0].mxu0
    %v3960 = vadd.f32 %v3671, %v3959
    %v3961 = vpop.f32.mrb[0].mxu0
    %v3962 = vpop.f32.mrb[0].mxu0
    %v3963 = vadd.f32 %v3674, %v3962
    %v3964 = vpop.f32.mrb[0].mxu0
    %3965 = vmatprep.mubr.bf16.mxu0 %v2810
    %3966 = vmatmul.mubr.bf16.gmra.mrb[0].mxu0 %v2809
    %v3967 = vpop.f32.mrb[0].mxu0
    %v3968 = vadd.f32 %v3679, %v3967
    %v3969 = vpop.f32.mrb[0].mxu0
    %v3970 = vpop.f32.mrb[0].mxu0
    %v3971 = vadd.f32 %v3682, %v3970
    %v3972 = vpop.f32.mrb[0].mxu0
    %3973 = vmatprep.mubr.bf16.mxu0 %v2819
    %3974 = vmatmul.mubr.bf16.gmra.mrb[0].mxu0 %v2818
    %v3975 = vpop.f32.mrb[0].mxu0
    %v3976 = vadd.f32 %v3687, %v3975
    %v3977 = vpop.f32.mrb[0].mxu0
    %v3978 = vpop.f32.mrb[0].mxu0
    %v3979 = vadd.f32 %v3690, %v3978
    %v3980 = vpop.f32.mrb[0].mxu0
    %3981 = vmatprep.mubr.bf16.mxu0 %v2828
    %3982 = vmatmul.mubr.bf16.gmra.mrb[0].mxu0 %v2827
    %v3983 = vpop.f32.mrb[0].mxu0
    %v3984 = vadd.f32 %v3695, %v3983
    %v3985 = vpop.f32.mrb[0].mxu0
    %v3986 = vpop.f32.mrb[0].mxu0
    %v3987 = vadd.f32 %v3698, %v3986
    %v3988 = vpop.f32.mrb[0].mxu0
    %3989 = vmatprep.mubr.bf16.mxu0 %v2837
    %3990 = vmatmul.mubr.bf16.gmra.mrb[0].mxu0 %v2836
    %v3991 = vpop.f32.mrb[0].mxu0
    %v3992 = vadd.f32 %v3703, %v3991
    %v3993 = vpop.f32.mrb[0].mxu0
    %v3994 = vpop.f32.mrb[0].mxu0
    %v3995 = vadd.f32 %v3706, %v3994
    %v3996 = vpop.f32.mrb[0].mxu0
    %3997 = vmatprep.mubr.bf16.mxu0 %v2846
    %3998 = vmatmul.mubr.bf16.gmra.mrb[0].mxu0 %v2845
    %v3999 = vpop.f32.mrb[0].mxu0
    %v4000 = vadd.f32 %v3711, %v3999
    %v4001 = vpop.f32.mrb[0].mxu0
    %v4002 = vpop.f32.mrb[0].mxu0
    %v4003 = vadd.f32 %v3714, %v4002
    %v4004 = vpop.f32.mrb[0].mxu0
    %4005 = vdwg.mxu0
    %4006 = vmatprep.subr.bf16.mxu0 0
    %4007 = vmatpush1.bf16.msra.mxu0 %v3316
    %4008 = vmatprep.subr.bf16.mxu0 0
    %4009 = vmatpush1.bf16.msra.mxu0 %v3317
    %4010 = vmatprep.subr.bf16.mxu0 0
    %4011 = vmatpush1.bf16.msra.mxu0 %v3318
    %4012 = vmatprep.subr.bf16.mxu0 0
    %4013 = vmatpush1.bf16.msra.mxu0 %v3319
    %4014 = vmatprep.subr.bf16.mxu0 0
    %4015 = vmatpush1.bf16.msra.mxu0 %v3320
    %4016 = vmatprep.subr.bf16.mxu0 0
    %4017 = vmatpush1.bf16.msra.mxu0 %v3321
    %4018 = vmatprep.subr.bf16.mxu0 0
    %4019 = vmatpush1.bf16.msra.mxu0 %v3322
    %4020 = vmatprep.subr.bf16.mxu0 0
    %4021 = vmatpush1.bf16.msra.mxu0 %v3323
    %4022 = vmatprep.subr.bf16.mxu0 0
    %4023 = vmatpush1.bf16.msra.mxu0 %v3324
    %4024 = vmatprep.subr.bf16.mxu0 0
    %4025 = vmatpush1.bf16.msra.mxu0 %v3325
    %4026 = vmatprep.subr.bf16.mxu0 0
    %4027 = vmatpush1.bf16.msra.mxu0 %v3326
    %4028 = vmatprep.subr.bf16.mxu0 0
    %4029 = vmatpush1.bf16.msra.mxu0 %v3327
    %4030 = vmatprep.subr.bf16.mxu0 0
    %4031 = vmatpush1.bf16.msra.mxu0 %v3328
    %4032 = vmatprep.subr.bf16.mxu0 0
    %4033 = vmatpush1.bf16.msra.mxu0 %v3329
    %4034 = vmatprep.subr.bf16.mxu0 0
    %4035 = vmatpush1.bf16.msra.mxu0 %v3330
    %4036 = vmatprep.subr.bf16.mxu0 0
    %4037 = vmatpush1.bf16.msra.mxu0 %v3331
    %4038 = vmatprep.mubr.bf16.mxu0 %v2569
    %4039 = vmatmul.mubr.bf16.gmra.mrb[0].mxu0 %v2568
    %v4040 = vpop.f32.mrb[0].mxu0
    %v4041 = vadd.f32 %v3752, %v4040
    %v4042 = vpop.f32.mrb[0].mxu0
    %v4043 = vpop.f32.mrb[0].mxu0
    %v4044 = vadd.f32 %v3755, %v4043
    %v4045 = vpop.f32.mrb[0].mxu0
    %4046 = vmatprep.mubr.bf16.mxu0 %v2578
    %4047 = vmatmul.mubr.bf16.gmra.mrb[0].mxu0 %v2577
    %v4048 = vpop.f32.mrb[0].mxu0
    %v4049 = vadd.f32 %v3760, %v4048
    %v4050 = vpop.f32.mrb[0].mxu0
    %v4051 = vpop.f32.mrb[0].mxu0
    %v4052 = vadd.f32 %v3763, %v4051
    %v4053 = vpop.f32.mrb[0].mxu0
    %4054 = vmatprep.mubr.bf16.mxu0 %v2587
    %4055 = vmatmul.mubr.bf16.gmra.mrb[0].mxu0 %v2586
    %v4056 = vpop.f32.mrb[0].mxu0
    %v4057 = vadd.f32 %v3768, %v4056
    %v4058 = vpop.f32.mrb[0].mxu0
    %v4059 = vpop.f32.mrb[0].mxu0
    %v4060 = vadd.f32 %v3771, %v4059
    %v4061 = vpop.f32.mrb[0].mxu0
    %4062 = vmatprep.mubr.bf16.mxu0 %v2596
    %4063 = vmatmul.mubr.bf16.gmra.mrb[0].mxu0 %v2595
    %v4064 = vpop.f32.mrb[0].mxu0
    %v4065 = vadd.f32 %v3776, %v4064
    %v4066 = vpop.f32.mrb[0].mxu0
    %v4067 = vpop.f32.mrb[0].mxu0
    %v4068 = vadd.f32 %v3779, %v4067
    %v4069 = vpop.f32.mrb[0].mxu0
    %4070 = vmatprep.mubr.bf16.mxu0 %v2605
    %4071 = vmatmul.mubr.bf16.gmra.mrb[0].mxu0 %v2604
    %v4072 = vpop.f32.mrb[0].mxu0
    %v4073 = vadd.f32 %v3784, %v4072
    %v4074 = vpop.f32.mrb[0].mxu0
    %v4075 = vpop.f32.mrb[0].mxu0
    %v4076 = vadd.f32 %v3787, %v4075
    %v4077 = vpop.f32.mrb[0].mxu0
    %4078 = vmatprep.mubr.bf16.mxu0 %v2614
    %4079 = vmatmul.mubr.bf16.gmra.mrb[0].mxu0 %v2613
    %v4080 = vpop.f32.mrb[0].mxu0
    %v4081 = vadd.f32 %v3792, %v4080
    %v4082 = vpop.f32.mrb[0].mxu0
    %v4083 = vpop.f32.mrb[0].mxu0
    %v4084 = vadd.f32 %v3795, %v4083
    %v4085 = vpop.f32.mrb[0].mxu0
    %4086 = vmatprep.mubr.bf16.mxu0 %v2623
    %4087 = vmatmul.mubr.bf16.gmra.mrb[0].mxu0 %v2622
    %v4088 = vpop.f32.mrb[0].mxu0
    %v4089 = vadd.f32 %v3800, %v4088
    %v4090 = vpop.f32.mrb[0].mxu0
    %v4091 = vpop.f32.mrb[0].mxu0
    %v4092 = vadd.f32 %v3803, %v4091
    %v4093 = vpop.f32.mrb[0].mxu0
    %4094 = vmatprep.mubr.bf16.mxu0 %v2632
    %4095 = vmatmul.mubr.bf16.gmra.mrb[0].mxu0 %v2631
    %v4096 = vpop.f32.mrb[0].mxu0
    %v4097 = vadd.f32 %v3808, %v4096
    %v4098 = vpop.f32.mrb[0].mxu0
    %v4099 = vpop.f32.mrb[0].mxu0
    %v4100 = vadd.f32 %v3811, %v4099
    %v4101 = vpop.f32.mrb[0].mxu0
    %4102 = vmatprep.mubr.bf16.mxu0 %v2641
    %4103 = vmatmul.mubr.bf16.gmra.mrb[0].mxu0 %v2640
    %v4104 = vpop.f32.mrb[0].mxu0
    %v4105 = vadd.f32 %v3816, %v4104
    %v4106 = vpop.f32.mrb[0].mxu0
    %v4107 = vpop.f32.mrb[0].mxu0
    %v4108 = vadd.f32 %v3819, %v4107
    %v4109 = vpop.f32.mrb[0].mxu0
    %4110 = vmatprep.mubr.bf16.mxu0 %v2650
    %4111 = vmatmul.mubr.bf16.gmra.mrb[0].mxu0 %v2649
    %v4112 = vpop.f32.mrb[0].mxu0
    %v4113 = vadd.f32 %v3824, %v4112
    %v4114 = vpop.f32.mrb[0].mxu0
    %v4115 = vpop.f32.mrb[0].mxu0
    %v4116 = vadd.f32 %v3827, %v4115
    %v4117 = vpop.f32.mrb[0].mxu0
    %4118 = vmatprep.mubr.bf16.mxu0 %v2659
    %4119 = vmatmul.mubr.bf16.gmra.mrb[0].mxu0 %v2658
    %v4120 = vpop.f32.mrb[0].mxu0
    %v4121 = vadd.f32 %v3832, %v4120
    %v4122 = vpop.f32.mrb[0].mxu0
    %v4123 = vpop.f32.mrb[0].mxu0
    %v4124 = vadd.f32 %v3835, %v4123
    %v4125 = vpop.f32.mrb[0].mxu0
    %4126 = vmatprep.mubr.bf16.mxu0 %v2668
    %4127 = vmatmul.mubr.bf16.gmra.mrb[0].mxu0 %v2667
    %v4128 = vpop.f32.mrb[0].mxu0
    %v4129 = vadd.f32 %v3840, %v4128
    %v4130 = vpop.f32.mrb[0].mxu0
    %v4131 = vpop.f32.mrb[0].mxu0
    %v4132 = vadd.f32 %v3843, %v4131
    %v4133 = vpop.f32.mrb[0].mxu0
    %4134 = vmatprep.mubr.bf16.mxu0 %v2677
    %4135 = vmatmul.mubr.bf16.gmra.mrb[0].mxu0 %v2676
    %v4136 = vpop.f32.mrb[0].mxu0
    %v4137 = vadd.f32 %v3848, %v4136
    %v4138 = vpop.f32.mrb[0].mxu0
    %v4139 = vpop.f32.mrb[0].mxu0
    %v4140 = vadd.f32 %v3851, %v4139
    %v4141 = vpop.f32.mrb[0].mxu0
    %4142 = vmatprep.mubr.bf16.mxu0 %v2686
    %4143 = vmatmul.mubr.bf16.gmra.mrb[0].mxu0 %v2685
    %v4144 = vpop.f32.mrb[0].mxu0
    %v4145 = vadd.f32 %v3856, %v4144
    %v4146 = vpop.f32.mrb[0].mxu0
    %v4147 = vpop.f32.mrb[0].mxu0
    %v4148 = vadd.f32 %v3859, %v4147
    %v4149 = vpop.f32.mrb[0].mxu0
    %4150 = vmatprep.mubr.bf16.mxu0 %v2695
    %4151 = vmatmul.mubr.bf16.gmra.mrb[0].mxu0 %v2694
    %v4152 = vpop.f32.mrb[0].mxu0
    %v4153 = vadd.f32 %v3864, %v4152
    %v4154 = vpop.f32.mrb[0].mxu0
    %v4155 = vpop.f32.mrb[0].mxu0
    %v4156 = vadd.f32 %v3867, %v4155
    %v4157 = vpop.f32.mrb[0].mxu0
    %4158 = vmatprep.mubr.bf16.mxu0 %v2704
    %4159 = vmatmul.mubr.bf16.gmra.mrb[0].mxu0 %v2703
    %v4160 = vpop.f32.mrb[0].mxu0
    %v4161 = vadd.f32 %v3872, %v4160
    %v4162 = vpop.f32.mrb[0].mxu0
    %v4163 = vpop.f32.mrb[0].mxu0
    %v4164 = vadd.f32 %v3875, %v4163
    %v4165 = vpop.f32.mrb[0].mxu0
    %4166 = vmatprep.mubr.bf16.mxu0 %v2713
    %4167 = vmatmul.mubr.bf16.gmra.mrb[0].mxu0 %v2712
    %v4168 = vpop.f32.mrb[0].mxu0
    %v4169 = vadd.f32 %v3880, %v4168
    %v4170 = vpop.f32.mrb[0].mxu0
    %v4171 = vpop.f32.mrb[0].mxu0
    %v4172 = vadd.f32 %v3883, %v4171
    %v4173 = vpop.f32.mrb[0].mxu0
    %4174 = vmatprep.mubr.bf16.mxu0 %v2722
    %4175 = vmatmul.mubr.bf16.gmra.mrb[0].mxu0 %v2721
    %v4176 = vpop.f32.mrb[0].mxu0
    %v4177 = vadd.f32 %v3888, %v4176
    %v4178 = vpop.f32.mrb[0].mxu0
    %v4179 = vpop.f32.mrb[0].mxu0
    %v4180 = vadd.f32 %v3891, %v4179
    %v4181 = vpop.f32.mrb[0].mxu0
    %4182 = vmatprep.mubr.bf16.mxu0 %v2731
    %4183 = vmatmul.mubr.bf16.gmra.mrb[0].mxu0 %v2730
    %v4184 = vpop.f32.mrb[0].mxu0
    %v4185 = vadd.f32 %v3896, %v4184
    %v4186 = vpop.f32.mrb[0].mxu0
    %v4187 = vpop.f32.mrb[0].mxu0
    %v4188 = vadd.f32 %v3899, %v4187
    %v4189 = vpop.f32.mrb[0].mxu0
    %4190 = vmatprep.mubr.bf16.mxu0 %v2740
    %4191 = vmatmul.mubr.bf16.gmra.mrb[0].mxu0 %v2739
    %v4192 = vpop.f32.mrb[0].mxu0
    %v4193 = vadd.f32 %v3904, %v4192
    %v4194 = vpop.f32.mrb[0].mxu0
    %v4195 = vpop.f32.mrb[0].mxu0
    %v4196 = vadd.f32 %v3907, %v4195
    %v4197 = vpop.f32.mrb[0].mxu0
    %4198 = vmatprep.mubr.bf16.mxu0 %v2749
    %4199 = vmatmul.mubr.bf16.gmra.mrb[0].mxu0 %v2748
    %v4200 = vpop.f32.mrb[0].mxu0
    %v4201 = vadd.f32 %v3912, %v4200
    %v4202 = vpop.f32.mrb[0].mxu0
    %v4203 = vpop.f32.mrb[0].mxu0
    %v4204 = vadd.f32 %v3915, %v4203
    %v4205 = vpop.f32.mrb[0].mxu0
    %4206 = vmatprep.mubr.bf16.mxu0 %v2758
    %4207 = vmatmul.mubr.bf16.gmra.mrb[0].mxu0 %v2757
    %v4208 = vpop.f32.mrb[0].mxu0
    %v4209 = vadd.f32 %v3920, %v4208
    %v4210 = vpop.f32.mrb[0].mxu0
    %v4211 = vpop.f32.mrb[0].mxu0
    %v4212 = vadd.f32 %v3923, %v4211
    %v4213 = vpop.f32.mrb[0].mxu0
    %4214 = vmatprep.mubr.bf16.mxu0 %v2767
    %4215 = vmatmul.mubr.bf16.gmra.mrb[0].mxu0 %v2766
    %v4216 = vpop.f32.mrb[0].mxu0
    %v4217 = vadd.f32 %v3928, %v4216
    %v4218 = vpop.f32.mrb[0].mxu0
    %v4219 = vpop.f32.mrb[0].mxu0
    %v4220 = vadd.f32 %v3931, %v4219
    %v4221 = vpop.f32.mrb[0].mxu0
    %4222 = vmatprep.mubr.bf16.mxu0 %v2776
    %4223 = vmatmul.mubr.bf16.gmra.mrb[0].mxu0 %v2775
    %v4224 = vpop.f32.mrb[0].mxu0
    %v4225 = vadd.f32 %v3936, %v4224
    %v4226 = vpop.f32.mrb[0].mxu0
    %v4227 = vpop.f32.mrb[0].mxu0
    %v4228 = vadd.f32 %v3939, %v4227
    %v4229 = vpop.f32.mrb[0].mxu0
    %4230 = vmatprep.mubr.bf16.mxu0 %v2785
    %4231 = vmatmul.mubr.bf16.gmra.mrb[0].mxu0 %v2784
    %v4232 = vpop.f32.mrb[0].mxu0
    %v4233 = vadd.f32 %v3944, %v4232
    %v4234 = vpop.f32.mrb[0].mxu0
    %v4235 = vpop.f32.mrb[0].mxu0
    %v4236 = vadd.f32 %v3947, %v4235
    %v4237 = vpop.f32.mrb[0].mxu0
    %4238 = vmatprep.mubr.bf16.mxu0 %v2794
    %4239 = vmatmul.mubr.bf16.gmra.mrb[0].mxu0 %v2793
    %v4240 = vpop.f32.mrb[0].mxu0
    %v4241 = vadd.f32 %v3952, %v4240
    %v4242 = vpop.f32.mrb[0].mxu0
    %v4243 = vpop.f32.mrb[0].mxu0
    %v4244 = vadd.f32 %v3955, %v4243
    %v4245 = vpop.f32.mrb[0].mxu0
    %4246 = vmatprep.mubr.bf16.mxu0 %v2803
    %4247 = vmatmul.mubr.bf16.gmra.mrb[0].mxu0 %v2802
    %v4248 = vpop.f32.mrb[0].mxu0
    %v4249 = vadd.f32 %v3960, %v4248
    %v4250 = vpop.f32.mrb[0].mxu0
    %v4251 = vpop.f32.mrb[0].mxu0
    %v4252 = vadd.f32 %v3963, %v4251
    %v4253 = vpop.f32.mrb[0].mxu0
    %4254 = vmatprep.mubr.bf16.mxu0 %v2812
    %4255 = vmatmul.mubr.bf16.gmra.mrb[0].mxu0 %v2811
    %v4256 = vpop.f32.mrb[0].mxu0
    %v4257 = vadd.f32 %v3968, %v4256
    %v4258 = vpop.f32.mrb[0].mxu0
    %v4259 = vpop.f32.mrb[0].mxu0
    %v4260 = vadd.f32 %v3971, %v4259
    %v4261 = vpop.f32.mrb[0].mxu0
    %4262 = vmatprep.mubr.bf16.mxu0 %v2821
    %4263 = vmatmul.mubr.bf16.gmra.mrb[0].mxu0 %v2820
    %v4264 = vpop.f32.mrb[0].mxu0
    %v4265 = vadd.f32 %v3976, %v4264
    %v4266 = vpop.f32.mrb[0].mxu0
    %v4267 = vpop.f32.mrb[0].mxu0
    %v4268 = vadd.f32 %v3979, %v4267
    %v4269 = vpop.f32.mrb[0].mxu0
    %4270 = vmatprep.mubr.bf16.mxu0 %v2830
    %4271 = vmatmul.mubr.bf16.gmra.mrb[0].mxu0 %v2829
    %v4272 = vpop.f32.mrb[0].mxu0
    %v4273 = vadd.f32 %v3984, %v4272
    %v4274 = vpop.f32.mrb[0].mxu0
    %v4275 = vpop.f32.mrb[0].mxu0
    %v4276 = vadd.f32 %v3987, %v4275
    %v4277 = vpop.f32.mrb[0].mxu0
    %4278 = vmatprep.mubr.bf16.mxu0 %v2839
    %4279 = vmatmul.mubr.bf16.gmra.mrb[0].mxu0 %v2838
    %v4280 = vpop.f32.mrb[0].mxu0
    %v4281 = vadd.f32 %v3992, %v4280
    %v4282 = vpop.f32.mrb[0].mxu0
    %v4283 = vpop.f32.mrb[0].mxu0
    %v4284 = vadd.f32 %v3995, %v4283
    %v4285 = vpop.f32.mrb[0].mxu0
    %4286 = vmatprep.mubr.bf16.mxu0 %v2848
    %4287 = vmatmul.mubr.bf16.gmra.mrb[0].mxu0 %v2847
    %v4288 = vpop.f32.mrb[0].mxu0
    %v4289 = vadd.f32 %v4000, %v4288
    %v4290 = vpop.f32.mrb[0].mxu0
    %v4291 = vpop.f32.mrb[0].mxu0
    %v4292 = vadd.f32 %v4003, %v4291
    %v4293 = vpop.f32.mrb[0].mxu0
    %4294 = vdwg.mxu0
    %4295 = vmatprep.subr.bf16.mxu0 0
    %4296 = vmatpush1.bf16.msra.mxu0 %v3332
    %4297 = vmatprep.subr.bf16.mxu0 0
    %4298 = vmatpush1.bf16.msra.mxu0 %v3333
    %4299 = vmatprep.subr.bf16.mxu0 0
    %4300 = vmatpush1.bf16.msra.mxu0 %v3334
    %4301 = vmatprep.subr.bf16.mxu0 0
    %4302 = vmatpush1.bf16.msra.mxu0 %v3335
    %4303 = vmatprep.subr.bf16.mxu0 0
    %4304 = vmatpush1.bf16.msra.mxu0 %v3336
    %4305 = vmatprep.subr.bf16.mxu0 0
    %4306 = vmatpush1.bf16.msra.mxu0 %v3337
    %4307 = vmatprep.subr.bf16.mxu0 0
    %4308 = vmatpush1.bf16.msra.mxu0 %v3338
    %4309 = vmatprep.subr.bf16.mxu0 0
    %4310 = vmatpush1.bf16.msra.mxu0 %v3339
    %4311 = vmatprep.subr.bf16.mxu0 0
    %4312 = vmatpush1.bf16.msra.mxu0 %v3340
    %4313 = vmatprep.subr.bf16.mxu0 0
    %4314 = vmatpush1.bf16.msra.mxu0 %v3341
    %4315 = vmatprep.subr.bf16.mxu0 0
    %4316 = vmatpush1.bf16.msra.mxu0 %v3342
    %4317 = vmatprep.subr.bf16.mxu0 0
    %4318 = vmatpush1.bf16.msra.mxu0 %v3343
    %4319 = vmatprep.subr.bf16.mxu0 0
    %4320 = vmatpush1.bf16.msra.mxu0 %v3344
    %4321 = vmatprep.subr.bf16.mxu0 0
    %4322 = vmatpush1.bf16.msra.mxu0 %v3345
    %4323 = vmatprep.subr.bf16.mxu0 0
    %4324 = vmatpush1.bf16.msra.mxu0 %v3346
    %4325 = vmatprep.subr.bf16.mxu0 0
    %4326 = vmatpush1.bf16.msra.mxu0 %v3347
    %4327 = vmatprep.mubr.bf16.mxu0 %v2571
    %4328 = vmatmul.mubr.bf16.gmra.mrb[0].mxu0 %v2570
    %v4329 = vpop.f32.mrb[0].mxu0
    %v4330 = vadd.f32 %v4041, %v4329
    %v4331 = vpop.f32.mrb[0].mxu0
    %v4332 = vpop.f32.mrb[0].mxu0
    %v4333 = vadd.f32 %v4044, %v4332
    %v4334 = vpop.f32.mrb[0].mxu0
    %4335 = vmatprep.mubr.bf16.mxu0 %v2580
    %4336 = vmatmul.mubr.bf16.gmra.mrb[0].mxu0 %v2579
    %v4337 = vpop.f32.mrb[0].mxu0
    %v4338 = vadd.f32 %v4049, %v4337
    %v4339 = vpop.f32.mrb[0].mxu0
    %v4340 = vpop.f32.mrb[0].mxu0
    %v4341 = vadd.f32 %v4052, %v4340
    %v4342 = vpop.f32.mrb[0].mxu0
    %4343 = vmatprep.mubr.bf16.mxu0 %v2589
    %4344 = vmatmul.mubr.bf16.gmra.mrb[0].mxu0 %v2588
    %v4345 = vpop.f32.mrb[0].mxu0
    %v4346 = vadd.f32 %v4057, %v4345
    %v4347 = vpop.f32.mrb[0].mxu0
    %v4348 = vpop.f32.mrb[0].mxu0
    %v4349 = vadd.f32 %v4060, %v4348
    %v4350 = vpop.f32.mrb[0].mxu0
    %4351 = vmatprep.mubr.bf16.mxu0 %v2598
    %4352 = vmatmul.mubr.bf16.gmra.mrb[0].mxu0 %v2597
    %v4353 = vpop.f32.mrb[0].mxu0
    %v4354 = vadd.f32 %v4065, %v4353
    %v4355 = vpop.f32.mrb[0].mxu0
    %v4356 = vpop.f32.mrb[0].mxu0
    %v4357 = vadd.f32 %v4068, %v4356
    %v4358 = vpop.f32.mrb[0].mxu0
    %4359 = vmatprep.mubr.bf16.mxu0 %v2607
    %4360 = vmatmul.mubr.bf16.gmra.mrb[0].mxu0 %v2606
    %v4361 = vpop.f32.mrb[0].mxu0
    %v4362 = vadd.f32 %v4073, %v4361
    %v4363 = vpop.f32.mrb[0].mxu0
    %v4364 = vpop.f32.mrb[0].mxu0
    %v4365 = vadd.f32 %v4076, %v4364
    %v4366 = vpop.f32.mrb[0].mxu0
    %4367 = vmatprep.mubr.bf16.mxu0 %v2616
    %4368 = vmatmul.mubr.bf16.gmra.mrb[0].mxu0 %v2615
    %v4369 = vpop.f32.mrb[0].mxu0
    %v4370 = vadd.f32 %v4081, %v4369
    %v4371 = vpop.f32.mrb[0].mxu0
    %v4372 = vpop.f32.mrb[0].mxu0
    %v4373 = vadd.f32 %v4084, %v4372
    %v4374 = vpop.f32.mrb[0].mxu0
    %4375 = vmatprep.mubr.bf16.mxu0 %v2625
    %4376 = vmatmul.mubr.bf16.gmra.mrb[0].mxu0 %v2624
    %v4377 = vpop.f32.mrb[0].mxu0
    %v4378 = vadd.f32 %v4089, %v4377
    %v4379 = vpop.f32.mrb[0].mxu0
    %v4380 = vpop.f32.mrb[0].mxu0
    %v4381 = vadd.f32 %v4092, %v4380
    %v4382 = vpop.f32.mrb[0].mxu0
    %4383 = vmatprep.mubr.bf16.mxu0 %v2634
    %4384 = vmatmul.mubr.bf16.gmra.mrb[0].mxu0 %v2633
    %v4385 = vpop.f32.mrb[0].mxu0
    %v4386 = vadd.f32 %v4097, %v4385
    %v4387 = vpop.f32.mrb[0].mxu0
    %v4388 = vpop.f32.mrb[0].mxu0
    %v4389 = vadd.f32 %v4100, %v4388
    %v4390 = vpop.f32.mrb[0].mxu0
    %4391 = vmatprep.mubr.bf16.mxu0 %v2643
    %4392 = vmatmul.mubr.bf16.gmra.mrb[0].mxu0 %v2642
    %v4393 = vpop.f32.mrb[0].mxu0
    %v4394 = vadd.f32 %v4105, %v4393
    %v4395 = vpop.f32.mrb[0].mxu0
    %v4396 = vpop.f32.mrb[0].mxu0
    %v4397 = vadd.f32 %v4108, %v4396
    %v4398 = vpop.f32.mrb[0].mxu0
    %4399 = vmatprep.mubr.bf16.mxu0 %v2652
    %4400 = vmatmul.mubr.bf16.gmra.mrb[0].mxu0 %v2651
    %v4401 = vpop.f32.mrb[0].mxu0
    %v4402 = vadd.f32 %v4113, %v4401
    %v4403 = vpop.f32.mrb[0].mxu0
    %v4404 = vpop.f32.mrb[0].mxu0
    %v4405 = vadd.f32 %v4116, %v4404
    %v4406 = vpop.f32.mrb[0].mxu0
    %4407 = vmatprep.mubr.bf16.mxu0 %v2661
    %4408 = vmatmul.mubr.bf16.gmra.mrb[0].mxu0 %v2660
    %v4409 = vpop.f32.mrb[0].mxu0
    %v4410 = vadd.f32 %v4121, %v4409
    %v4411 = vpop.f32.mrb[0].mxu0
    %v4412 = vpop.f32.mrb[0].mxu0
    %v4413 = vadd.f32 %v4124, %v4412
    %v4414 = vpop.f32.mrb[0].mxu0
    %4415 = vmatprep.mubr.bf16.mxu0 %v2670
    %4416 = vmatmul.mubr.bf16.gmra.mrb[0].mxu0 %v2669
    %v4417 = vpop.f32.mrb[0].mxu0
    %v4418 = vadd.f32 %v4129, %v4417
    %v4419 = vpop.f32.mrb[0].mxu0
    %v4420 = vpop.f32.mrb[0].mxu0
    %v4421 = vadd.f32 %v4132, %v4420
    %v4422 = vpop.f32.mrb[0].mxu0
    %4423 = vmatprep.mubr.bf16.mxu0 %v2679
    %4424 = vmatmul.mubr.bf16.gmra.mrb[0].mxu0 %v2678
    %v4425 = vpop.f32.mrb[0].mxu0
    %v4426 = vadd.f32 %v4137, %v4425
    %v4427 = vpop.f32.mrb[0].mxu0
    %v4428 = vpop.f32.mrb[0].mxu0
    %v4429 = vadd.f32 %v4140, %v4428
    %v4430 = vpop.f32.mrb[0].mxu0
    %4431 = vmatprep.mubr.bf16.mxu0 %v2688
    %4432 = vmatmul.mubr.bf16.gmra.mrb[0].mxu0 %v2687
    %v4433 = vpop.f32.mrb[0].mxu0
    %v4434 = vadd.f32 %v4145, %v4433
    %v4435 = vpop.f32.mrb[0].mxu0
    %v4436 = vpop.f32.mrb[0].mxu0
    %v4437 = vadd.f32 %v4148, %v4436
    %v4438 = vpop.f32.mrb[0].mxu0
    %4439 = vmatprep.mubr.bf16.mxu0 %v2697
    %4440 = vmatmul.mubr.bf16.gmra.mrb[0].mxu0 %v2696
    %v4441 = vpop.f32.mrb[0].mxu0
    %v4442 = vadd.f32 %v4153, %v4441
    %v4443 = vpop.f32.mrb[0].mxu0
    %v4444 = vpop.f32.mrb[0].mxu0
    %v4445 = vadd.f32 %v4156, %v4444
    %v4446 = vpop.f32.mrb[0].mxu0
    %4447 = vmatprep.mubr.bf16.mxu0 %v2706
    %4448 = vmatmul.mubr.bf16.gmra.mrb[0].mxu0 %v2705
    %v4449 = vpop.f32.mrb[0].mxu0
    %v4450 = vadd.f32 %v4161, %v4449
    %v4451 = vpop.f32.mrb[0].mxu0
    %v4452 = vpop.f32.mrb[0].mxu0
    %v4453 = vadd.f32 %v4164, %v4452
    %v4454 = vpop.f32.mrb[0].mxu0
    %4455 = vmatprep.mubr.bf16.mxu0 %v2715
    %4456 = vmatmul.mubr.bf16.gmra.mrb[0].mxu0 %v2714
    %v4457 = vpop.f32.mrb[0].mxu0
    %v4458 = vadd.f32 %v4169, %v4457
    %v4459 = vpop.f32.mrb[0].mxu0
    %v4460 = vpop.f32.mrb[0].mxu0
    %v4461 = vadd.f32 %v4172, %v4460
    %v4462 = vpop.f32.mrb[0].mxu0
    %4463 = vmatprep.mubr.bf16.mxu0 %v2724
    %4464 = vmatmul.mubr.bf16.gmra.mrb[0].mxu0 %v2723
    %v4465 = vpop.f32.mrb[0].mxu0
    %v4466 = vadd.f32 %v4177, %v4465
    %v4467 = vpop.f32.mrb[0].mxu0
    %v4468 = vpop.f32.mrb[0].mxu0
    %v4469 = vadd.f32 %v4180, %v4468
    %v4470 = vpop.f32.mrb[0].mxu0
    %4471 = vmatprep.mubr.bf16.mxu0 %v2733
    %4472 = vmatmul.mubr.bf16.gmra.mrb[0].mxu0 %v2732
    %v4473 = vpop.f32.mrb[0].mxu0
    %v4474 = vadd.f32 %v4185, %v4473
    %v4475 = vpop.f32.mrb[0].mxu0
    %v4476 = vpop.f32.mrb[0].mxu0
    %v4477 = vadd.f32 %v4188, %v4476
    %v4478 = vpop.f32.mrb[0].mxu0
    %4479 = vmatprep.mubr.bf16.mxu0 %v2742
    %4480 = vmatmul.mubr.bf16.gmra.mrb[0].mxu0 %v2741
    %v4481 = vpop.f32.mrb[0].mxu0
    %v4482 = vadd.f32 %v4193, %v4481
    %v4483 = vpop.f32.mrb[0].mxu0
    %v4484 = vpop.f32.mrb[0].mxu0
    %v4485 = vadd.f32 %v4196, %v4484
    %v4486 = vpop.f32.mrb[0].mxu0
    %4487 = vmatprep.mubr.bf16.mxu0 %v2751
    %4488 = vmatmul.mubr.bf16.gmra.mrb[0].mxu0 %v2750
    %v4489 = vpop.f32.mrb[0].mxu0
    %v4490 = vadd.f32 %v4201, %v4489
    %v4491 = vpop.f32.mrb[0].mxu0
    %v4492 = vpop.f32.mrb[0].mxu0
    %v4493 = vadd.f32 %v4204, %v4492
    %v4494 = vpop.f32.mrb[0].mxu0
    %4495 = vmatprep.mubr.bf16.mxu0 %v2760
    %4496 = vmatmul.mubr.bf16.gmra.mrb[0].mxu0 %v2759
    %v4497 = vpop.f32.mrb[0].mxu0
    %v4498 = vadd.f32 %v4209, %v4497
    %v4499 = vpop.f32.mrb[0].mxu0
    %v4500 = vpop.f32.mrb[0].mxu0
    %v4501 = vadd.f32 %v4212, %v4500
    %v4502 = vpop.f32.mrb[0].mxu0
    %4503 = vmatprep.mubr.bf16.mxu0 %v2769
    %4504 = vmatmul.mubr.bf16.gmra.mrb[0].mxu0 %v2768
    %v4505 = vpop.f32.mrb[0].mxu0
    %v4506 = vadd.f32 %v4217, %v4505
    %v4507 = vpop.f32.mrb[0].mxu0
    %v4508 = vpop.f32.mrb[0].mxu0
    %v4509 = vadd.f32 %v4220, %v4508
    %v4510 = vpop.f32.mrb[0].mxu0
    %4511 = vmatprep.mubr.bf16.mxu0 %v2778
    %4512 = vmatmul.mubr.bf16.gmra.mrb[0].mxu0 %v2777
    %v4513 = vpop.f32.mrb[0].mxu0
    %v4514 = vadd.f32 %v4225, %v4513
    %v4515 = vpop.f32.mrb[0].mxu0
    %v4516 = vpop.f32.mrb[0].mxu0
    %v4517 = vadd.f32 %v4228, %v4516
    %v4518 = vpop.f32.mrb[0].mxu0
    %4519 = vmatprep.mubr.bf16.mxu0 %v2787
    %4520 = vmatmul.mubr.bf16.gmra.mrb[0].mxu0 %v2786
    %v4521 = vpop.f32.mrb[0].mxu0
    %v4522 = vadd.f32 %v4233, %v4521
    %v4523 = vpop.f32.mrb[0].mxu0
    %v4524 = vpop.f32.mrb[0].mxu0
    %v4525 = vadd.f32 %v4236, %v4524
    %v4526 = vpop.f32.mrb[0].mxu0
    %4527 = vmatprep.mubr.bf16.mxu0 %v2796
    %4528 = vmatmul.mubr.bf16.gmra.mrb[0].mxu0 %v2795
    %v4529 = vpop.f32.mrb[0].mxu0
    %v4530 = vadd.f32 %v4241, %v4529
    %v4531 = vpop.f32.mrb[0].mxu0
    %v4532 = vpop.f32.mrb[0].mxu0
    %v4533 = vadd.f32 %v4244, %v4532
    %v4534 = vpop.f32.mrb[0].mxu0
    %4535 = vmatprep.mubr.bf16.mxu0 %v2805
    %4536 = vmatmul.mubr.bf16.gmra.mrb[0].mxu0 %v2804
    %v4537 = vpop.f32.mrb[0].mxu0
    %v4538 = vadd.f32 %v4249, %v4537
    %v4539 = vpop.f32.mrb[0].mxu0
    %v4540 = vpop.f32.mrb[0].mxu0
    %v4541 = vadd.f32 %v4252, %v4540
    %v4542 = vpop.f32.mrb[0].mxu0
    %4543 = vmatprep.mubr.bf16.mxu0 %v2814
    %4544 = vmatmul.mubr.bf16.gmra.mrb[0].mxu0 %v2813
    %v4545 = vpop.f32.mrb[0].mxu0
    %v4546 = vadd.f32 %v4257, %v4545
    %v4547 = vpop.f32.mrb[0].mxu0
    %v4548 = vpop.f32.mrb[0].mxu0
    %v4549 = vadd.f32 %v4260, %v4548
    %v4550 = vpop.f32.mrb[0].mxu0
    %4551 = vmatprep.mubr.bf16.mxu0 %v2823
    %4552 = vmatmul.mubr.bf16.gmra.mrb[0].mxu0 %v2822
    %v4553 = vpop.f32.mrb[0].mxu0
    %v4554 = vadd.f32 %v4265, %v4553
    %v4555 = vpop.f32.mrb[0].mxu0
    %v4556 = vpop.f32.mrb[0].mxu0
    %v4557 = vadd.f32 %v4268, %v4556
    %v4558 = vpop.f32.mrb[0].mxu0
    %4559 = vmatprep.mubr.bf16.mxu0 %v2832
    %4560 = vmatmul.mubr.bf16.gmra.mrb[0].mxu0 %v2831
    %v4561 = vpop.f32.mrb[0].mxu0
    %v4562 = vadd.f32 %v4273, %v4561
    %v4563 = vpop.f32.mrb[0].mxu0
    %v4564 = vpop.f32.mrb[0].mxu0
    %v4565 = vadd.f32 %v4276, %v4564
    %v4566 = vpop.f32.mrb[0].mxu0
    %4567 = vmatprep.mubr.bf16.mxu0 %v2841
    %4568 = vmatmul.mubr.bf16.gmra.mrb[0].mxu0 %v2840
    %v4569 = vpop.f32.mrb[0].mxu0
    %v4570 = vadd.f32 %v4281, %v4569
    %v4571 = vpop.f32.mrb[0].mxu0
    %v4572 = vpop.f32.mrb[0].mxu0
    %v4573 = vadd.f32 %v4284, %v4572
    %v4574 = vpop.f32.mrb[0].mxu0
    %4575 = vmatprep.mubr.bf16.mxu0 %v2850
    %4576 = vmatmul.mubr.bf16.gmra.mrb[0].mxu0 %v2849
    %v4577 = vpop.f32.mrb[0].mxu0
    %v4578 = vadd.f32 %v4289, %v4577
    %v4579 = vpop.f32.mrb[0].mxu0
    %v4580 = vpop.f32.mrb[0].mxu0
    %v4581 = vadd.f32 %v4292, %v4580
    %v4582 = vpop.f32.mrb[0].mxu0
    %4583 = vdwg.mxu0
    %4584 = vmatprep.subr.bf16.mxu0 0
    %4585 = vmatpush1.bf16.msra.mxu0 %v3348
    %4586 = vmatprep.subr.bf16.mxu0 0
    %4587 = vmatpush1.bf16.msra.mxu0 %v3349
    %4588 = vmatprep.subr.bf16.mxu0 0
    %4589 = vmatpush1.bf16.msra.mxu0 %v3350
    %4590 = vmatprep.subr.bf16.mxu0 0
    %4591 = vmatpush1.bf16.msra.mxu0 %v3351
    %4592 = vmatprep.subr.bf16.mxu0 0
    %4593 = vmatpush1.bf16.msra.mxu0 %v3352
    %4594 = vmatprep.subr.bf16.mxu0 0
    %4595 = vmatpush1.bf16.msra.mxu0 %v3353
    %4596 = vmatprep.subr.bf16.mxu0 0
    %4597 = vmatpush1.bf16.msra.mxu0 %v3354
    %4598 = vmatprep.subr.bf16.mxu0 0
    %4599 = vmatpush1.bf16.msra.mxu0 %v3355
    %4600 = vmatprep.subr.bf16.mxu0 0
    %4601 = vmatpush1.bf16.msra.mxu0 0
    %4602 = vmatprep.subr.bf16.mxu0 0
    %4603 = vmatpush1.bf16.msra.mxu0 0
    %4604 = vmatprep.subr.bf16.mxu0 0
    %4605 = vmatpush1.bf16.msra.mxu0 0
    %4606 = vmatprep.subr.bf16.mxu0 0
    %4607 = vmatpush1.bf16.msra.mxu0 0
    %4608 = vmatprep.subr.bf16.mxu0 0
    %4609 = vmatpush1.bf16.msra.mxu0 0
    %4610 = vmatprep.subr.bf16.mxu0 0
    %4611 = vmatpush1.bf16.msra.mxu0 0
    %4612 = vmatprep.subr.bf16.mxu0 0
    %4613 = vmatpush1.bf16.msra.mxu0 0
    %4614 = vmatprep.subr.bf16.mxu0 0
    %4615 = vmatpush1.bf16.msra.mxu0 0
    %4616 = vmatprep.mubr.bf16.mxu0 0
    %4617 = vmatmul.mubr.bf16.gmra.mrb[0].mxu0 %v2572
    %v4618 = vpop.f32.mrb[0].mxu0
    %v4619 = vadd.f32 %v4330, %v4618
    %v4620 = vpop.f32.mrb[0].mxu0
    %v4621 = vpop.f32.mrb[0].mxu0
    %v4622 = vadd.f32 %v4333, %v4621
    %v4623 = vpop.f32.mrb[0].mxu0
    %4624 = vmatprep.mubr.bf16.mxu0 0
    %4625 = vmatmul.mubr.bf16.gmra.mrb[0].mxu0 %v2581
    %v4626 = vpop.f32.mrb[0].mxu0
    %v4627 = vadd.f32 %v4338, %v4626
    %v4628 = vpop.f32.mrb[0].mxu0
    %v4629 = vpop.f32.mrb[0].mxu0
    %v4630 = vadd.f32 %v4341, %v4629
    %v4631 = vpop.f32.mrb[0].mxu0
    %4632 = vmatprep.mubr.bf16.mxu0 0
    %4633 = vmatmul.mubr.bf16.gmra.mrb[0].mxu0 %v2590
    %v4634 = vpop.f32.mrb[0].mxu0
    %v4635 = vadd.f32 %v4346, %v4634
    %v4636 = vpop.f32.mrb[0].mxu0
    %v4637 = vpop.f32.mrb[0].mxu0
    %v4638 = vadd.f32 %v4349, %v4637
    %v4639 = vpop.f32.mrb[0].mxu0
    %4640 = vmatprep.mubr.bf16.mxu0 0
    %4641 = vmatmul.mubr.bf16.gmra.mrb[0].mxu0 %v2599
    %v4642 = vpop.f32.mrb[0].mxu0
    %v4643 = vadd.f32 %v4354, %v4642
    %v4644 = vpop.f32.mrb[0].mxu0
    %v4645 = vpop.f32.mrb[0].mxu0
    %v4646 = vadd.f32 %v4357, %v4645
    %v4647 = vpop.f32.mrb[0].mxu0
    %4648 = vmatprep.mubr.bf16.mxu0 0
    %4649 = vmatmul.mubr.bf16.gmra.mrb[0].mxu0 %v2608
    %v4650 = vpop.f32.mrb[0].mxu0
    %v4651 = vadd.f32 %v4362, %v4650
    %v4652 = vpop.f32.mrb[0].mxu0
    %v4653 = vpop.f32.mrb[0].mxu0
    %v4654 = vadd.f32 %v4365, %v4653
    %v4655 = vpop.f32.mrb[0].mxu0
    %4656 = vmatprep.mubr.bf16.mxu0 0
    %4657 = vmatmul.mubr.bf16.gmra.mrb[0].mxu0 %v2617
    %v4658 = vpop.f32.mrb[0].mxu0
    %v4659 = vadd.f32 %v4370, %v4658
    %v4660 = vpop.f32.mrb[0].mxu0
    %v4661 = vpop.f32.mrb[0].mxu0
    %v4662 = vadd.f32 %v4373, %v4661
    %v4663 = vpop.f32.mrb[0].mxu0
    %4664 = vmatprep.mubr.bf16.mxu0 0
    %4665 = vmatmul.mubr.bf16.gmra.mrb[0].mxu0 %v2626
    %v4666 = vpop.f32.mrb[0].mxu0
    %v4667 = vadd.f32 %v4378, %v4666
    %v4668 = vpop.f32.mrb[0].mxu0
    %v4669 = vpop.f32.mrb[0].mxu0
    %v4670 = vadd.f32 %v4381, %v4669
    %v4671 = vpop.f32.mrb[0].mxu0
    %4672 = vmatprep.mubr.bf16.mxu0 0
    %4673 = vmatmul.mubr.bf16.gmra.mrb[0].mxu0 %v2635
    %v4674 = vpop.f32.mrb[0].mxu0
    %v4675 = vadd.f32 %v4386, %v4674
    %v4676 = vpop.f32.mrb[0].mxu0
    %v4677 = vpop.f32.mrb[0].mxu0
    %v4678 = vadd.f32 %v4389, %v4677
    %v4679 = vpop.f32.mrb[0].mxu0
    %4680 = vmatprep.mubr.bf16.mxu0 0
    %4681 = vmatmul.mubr.bf16.gmra.mrb[0].mxu0 %v2644
    %v4682 = vpop.f32.mrb[0].mxu0
    %v4683 = vadd.f32 %v4394, %v4682
    %v4684 = vpop.f32.mrb[0].mxu0
    %v4685 = vpop.f32.mrb[0].mxu0
    %v4686 = vadd.f32 %v4397, %v4685
    %v4687 = vpop.f32.mrb[0].mxu0
    %4688 = vmatprep.mubr.bf16.mxu0 0
    %4689 = vmatmul.mubr.bf16.gmra.mrb[0].mxu0 %v2653
    %v4690 = vpop.f32.mrb[0].mxu0
    %v4691 = vadd.f32 %v4402, %v4690
    %v4692 = vpop.f32.mrb[0].mxu0
    %v4693 = vpop.f32.mrb[0].mxu0
    %v4694 = vadd.f32 %v4405, %v4693
    %v4695 = vpop.f32.mrb[0].mxu0
    %4696 = vmatprep.mubr.bf16.mxu0 0
    %4697 = vmatmul.mubr.bf16.gmra.mrb[0].mxu0 %v2662
    %v4698 = vpop.f32.mrb[0].mxu0
    %v4699 = vadd.f32 %v4410, %v4698
    %v4700 = vpop.f32.mrb[0].mxu0
    %v4701 = vpop.f32.mrb[0].mxu0
    %v4702 = vadd.f32 %v4413, %v4701
    %v4703 = vpop.f32.mrb[0].mxu0
    %4704 = vmatprep.mubr.bf16.mxu0 0
    %4705 = vmatmul.mubr.bf16.gmra.mrb[0].mxu0 %v2671
    %v4706 = vpop.f32.mrb[0].mxu0
    %v4707 = vadd.f32 %v4418, %v4706
    %v4708 = vpop.f32.mrb[0].mxu0
    %v4709 = vpop.f32.mrb[0].mxu0
    %v4710 = vadd.f32 %v4421, %v4709
    %v4711 = vpop.f32.mrb[0].mxu0
    %4712 = vmatprep.mubr.bf16.mxu0 0
    %4713 = vmatmul.mubr.bf16.gmra.mrb[0].mxu0 %v2680
    %v4714 = vpop.f32.mrb[0].mxu0
    %v4715 = vadd.f32 %v4426, %v4714
    %v4716 = vpop.f32.mrb[0].mxu0
    %v4717 = vpop.f32.mrb[0].mxu0
    %v4718 = vadd.f32 %v4429, %v4717
    %v4719 = vpop.f32.mrb[0].mxu0
    %4720 = vmatprep.mubr.bf16.mxu0 0
    %4721 = vmatmul.mubr.bf16.gmra.mrb[0].mxu0 %v2689
    %v4722 = vpop.f32.mrb[0].mxu0
    %v4723 = vadd.f32 %v4434, %v4722
    %v4724 = vpop.f32.mrb[0].mxu0
    %v4725 = vpop.f32.mrb[0].mxu0
    %v4726 = vadd.f32 %v4437, %v4725
    %v4727 = vpop.f32.mrb[0].mxu0
    %4728 = vmatprep.mubr.bf16.mxu0 0
    %4729 = vmatmul.mubr.bf16.gmra.mrb[0].mxu0 %v2698
    %v4730 = vpop.f32.mrb[0].mxu0
    %v4731 = vadd.f32 %v4442, %v4730
    %v4732 = vpop.f32.mrb[0].mxu0
    %v4733 = vpop.f32.mrb[0].mxu0
    %v4734 = vadd.f32 %v4445, %v4733
    %v4735 = vpop.f32.mrb[0].mxu0
    %4736 = vmatprep.mubr.bf16.mxu0 0
    %4737 = vmatmul.mubr.bf16.gmra.mrb[0].mxu0 %v2707
    %v4738 = vpop.f32.mrb[0].mxu0
    %v4739 = vadd.f32 %v4450, %v4738
    %v4740 = vpop.f32.mrb[0].mxu0
    %v4741 = vpop.f32.mrb[0].mxu0
    %v4742 = vadd.f32 %v4453, %v4741
    %v4743 = vpop.f32.mrb[0].mxu0
    %4744 = vmatprep.mubr.bf16.mxu0 0
    %4745 = vmatmul.mubr.bf16.gmra.mrb[0].mxu0 %v2716
    %v4746 = vpop.f32.mrb[0].mxu0
    %v4747 = vadd.f32 %v4458, %v4746
    %v4748 = vpop.f32.mrb[0].mxu0
    %v4749 = vpop.f32.mrb[0].mxu0
    %v4750 = vadd.f32 %v4461, %v4749
    %v4751 = vpop.f32.mrb[0].mxu0
    %4752 = vmatprep.mubr.bf16.mxu0 0
    %4753 = vmatmul.mubr.bf16.gmra.mrb[0].mxu0 %v2725
    %v4754 = vpop.f32.mrb[0].mxu0
    %v4755 = vadd.f32 %v4466, %v4754
    %v4756 = vpop.f32.mrb[0].mxu0
    %v4757 = vpop.f32.mrb[0].mxu0
    %v4758 = vadd.f32 %v4469, %v4757
    %v4759 = vpop.f32.mrb[0].mxu0
    %4760 = vmatprep.mubr.bf16.mxu0 0
    %4761 = vmatmul.mubr.bf16.gmra.mrb[0].mxu0 %v2734
    %v4762 = vpop.f32.mrb[0].mxu0
    %v4763 = vadd.f32 %v4474, %v4762
    %v4764 = vpop.f32.mrb[0].mxu0
    %v4765 = vpop.f32.mrb[0].mxu0
    %v4766 = vadd.f32 %v4477, %v4765
    %v4767 = vpop.f32.mrb[0].mxu0
    %4768 = vmatprep.mubr.bf16.mxu0 0
    %4769 = vmatmul.mubr.bf16.gmra.mrb[0].mxu0 %v2743
    %v4770 = vpop.f32.mrb[0].mxu0
    %v4771 = vadd.f32 %v4482, %v4770
    %v4772 = vpop.f32.mrb[0].mxu0
    %v4773 = vpop.f32.mrb[0].mxu0
    %v4774 = vadd.f32 %v4485, %v4773
    %v4775 = vpop.f32.mrb[0].mxu0
    %4776 = vmatprep.mubr.bf16.mxu0 0
    %4777 = vmatmul.mubr.bf16.gmra.mrb[0].mxu0 %v2752
    %v4778 = vpop.f32.mrb[0].mxu0
    %v4779 = vadd.f32 %v4490, %v4778
    %v4780 = vpop.f32.mrb[0].mxu0
    %v4781 = vpop.f32.mrb[0].mxu0
    %v4782 = vadd.f32 %v4493, %v4781
    %v4783 = vpop.f32.mrb[0].mxu0
    %4784 = vmatprep.mubr.bf16.mxu0 0
    %4785 = vmatmul.mubr.bf16.gmra.mrb[0].mxu0 %v2761
    %v4786 = vpop.f32.mrb[0].mxu0
    %v4787 = vadd.f32 %v4498, %v4786
    %v4788 = vpop.f32.mrb[0].mxu0
    %v4789 = vpop.f32.mrb[0].mxu0
    %v4790 = vadd.f32 %v4501, %v4789
    %v4791 = vpop.f32.mrb[0].mxu0
    %4792 = vmatprep.mubr.bf16.mxu0 0
    %4793 = vmatmul.mubr.bf16.gmra.mrb[0].mxu0 %v2770
    %v4794 = vpop.f32.mrb[0].mxu0
    %v4795 = vadd.f32 %v4506, %v4794
    %v4796 = vpop.f32.mrb[0].mxu0
    %v4797 = vpop.f32.mrb[0].mxu0
    %v4798 = vadd.f32 %v4509, %v4797
    %v4799 = vpop.f32.mrb[0].mxu0
    %4800 = vmatprep.mubr.bf16.mxu0 0
    %4801 = vmatmul.mubr.bf16.gmra.mrb[0].mxu0 %v2779
    %v4802 = vpop.f32.mrb[0].mxu0
    %v4803 = vadd.f32 %v4514, %v4802
    %v4804 = vpop.f32.mrb[0].mxu0
    %v4805 = vpop.f32.mrb[0].mxu0
    %v4806 = vadd.f32 %v4517, %v4805
    %v4807 = vpop.f32.mrb[0].mxu0
    %4808 = vmatprep.mubr.bf16.mxu0 0
    %4809 = vmatmul.mubr.bf16.gmra.mrb[0].mxu0 %v2788
    %v4810 = vpop.f32.mrb[0].mxu0
    %v4811 = vadd.f32 %v4522, %v4810
    %v4812 = vpop.f32.mrb[0].mxu0
    %v4813 = vpop.f32.mrb[0].mxu0
    %v4814 = vadd.f32 %v4525, %v4813
    %v4815 = vpop.f32.mrb[0].mxu0
    %4816 = vmatprep.mubr.bf16.mxu0 0
    %4817 = vmatmul.mubr.bf16.gmra.mrb[0].mxu0 %v2797
    %v4818 = vpop.f32.mrb[0].mxu0
    %v4819 = vadd.f32 %v4530, %v4818
    %v4820 = vpop.f32.mrb[0].mxu0
    %v4821 = vpop.f32.mrb[0].mxu0
    %v4822 = vadd.f32 %v4533, %v4821
    %v4823 = vpop.f32.mrb[0].mxu0
    %4824 = vmatprep.mubr.bf16.mxu0 0
    %4825 = vmatmul.mubr.bf16.gmra.mrb[0].mxu0 %v2806
    %v4826 = vpop.f32.mrb[0].mxu0
    %v4827 = vadd.f32 %v4538, %v4826
    %v4828 = vpop.f32.mrb[0].mxu0
    %v4829 = vpop.f32.mrb[0].mxu0
    %v4830 = vadd.f32 %v4541, %v4829
    %v4831 = vpop.f32.mrb[0].mxu0
    %4832 = vmatprep.mubr.bf16.mxu0 0
    %4833 = vmatmul.mubr.bf16.gmra.mrb[0].mxu0 %v2815
    %v4834 = vpop.f32.mrb[0].mxu0
    %v4835 = vadd.f32 %v4546, %v4834
    %v4836 = vpop.f32.mrb[0].mxu0
    %v4837 = vpop.f32.mrb[0].mxu0
    %v4838 = vadd.f32 %v4549, %v4837
    %v4839 = vpop.f32.mrb[0].mxu0
    %4840 = vmatprep.mubr.bf16.mxu0 0
    %4841 = vmatmul.mubr.bf16.gmra.mrb[0].mxu0 %v2824
    %v4842 = vpop.f32.mrb[0].mxu0
    %v4843 = vadd.f32 %v4554, %v4842
    %v4844 = vpop.f32.mrb[0].mxu0
    %v4845 = vpop.f32.mrb[0].mxu0
    %v4846 = vadd.f32 %v4557, %v4845
    %v4847 = vpop.f32.mrb[0].mxu0
    %4848 = vmatprep.mubr.bf16.mxu0 0
    %4849 = vmatmul.mubr.bf16.gmra.mrb[0].mxu0 %v2833
    %v4850 = vpop.f32.mrb[0].mxu0
    %v4851 = vadd.f32 %v4562, %v4850
    %v4852 = vpop.f32.mrb[0].mxu0
    %v4853 = vpop.f32.mrb[0].mxu0
    %v4854 = vadd.f32 %v4565, %v4853
    %v4855 = vpop.f32.mrb[0].mxu0
    %4856 = vmatprep.mubr.bf16.mxu0 0
    %4857 = vmatmul.mubr.bf16.gmra.mrb[0].mxu0 %v2842
    %v4858 = vpop.f32.mrb[0].mxu0
    %v4859 = vadd.f32 %v4570, %v4858
    %v4860 = vpop.f32.mrb[0].mxu0
    %v4861 = vpop.f32.mrb[0].mxu0
    %v4862 = vadd.f32 %v4573, %v4861
    %v4863 = vpop.f32.mrb[0].mxu0
    %4864 = vmatprep.mubr.bf16.mxu0 0
    %4865 = vmatmul.mubr.bf16.gmra.mrb[0].mxu0 %v2851
    %v4866 = vpop.f32.mrb[0].mxu0
    %v4867 = vadd.f32 %v4578, %v4866
    %v4868 = vpop.f32.mrb[0].mxu0
    %v4869 = vpop.f32.mrb[0].mxu0
    %v4870 = vadd.f32 %v4581, %v4869
    %v4871 = vpop.f32.mrb[0].mxu0
    %4872 = vdwg.mxu0
    %v4873 = vadd.f32 %v4619, %v4622
    %v4874 = vadd.f32 %v4873, %v4627
    %v4875 = vadd.f32 %v4874, %v4630
    %v4876 = vadd.f32 %v4875, %v4635
    %v4877 = vadd.f32 %v4876, %v4638
    %v4878 = vadd.f32 %v4877, %v4643
    %v4879 = vadd.f32 %v4878, %v4646
    %v4880 = vadd.f32 %v4879, %v4651
    %v4881 = vadd.f32 %v4880, %v4654
    %v4882 = vadd.f32 %v4881, %v4659
    %v4883 = vadd.f32 %v4882, %v4662
    %v4884 = vadd.f32 %v4883, %v4667
    %v4885 = vadd.f32 %v4884, %v4670
    %v4886 = vadd.f32 %v4885, %v4675
    %v4887 = vadd.f32 %v4886, %v4678
    %v4888 = vadd.f32 %v4887, %v4683
    %v4889 = vadd.f32 %v4888, %v4686
    %v4890 = vadd.f32 %v4889, %v4691
    %v4891 = vadd.f32 %v4890, %v4694
    %v4892 = vadd.f32 %v4891, %v4699
    %v4893 = vadd.f32 %v4892, %v4702
    %v4894 = vadd.f32 %v4893, %v4707
    %v4895 = vadd.f32 %v4894, %v4710
    %v4896 = vadd.f32 %v4895, %v4715
    %v4897 = vadd.f32 %v4896, %v4718
    %v4898 = vadd.f32 %v4897, %v4723
    %v4899 = vadd.f32 %v4898, %v4726
    %v4900 = vadd.f32 %v4899, %v4731
    %v4901 = vadd.f32 %v4900, %v4734
    %v4902 = vadd.f32 %v4901, %v4739
    %v4903 = vadd.f32 %v4902, %v4742
    %v4904 = vadd.f32 %v4903, %v4747
    %v4905 = vadd.f32 %v4904, %v4750
    %v4906 = vadd.f32 %v4905, %v4755
    %v4907 = vadd.f32 %v4906, %v4758
    %v4908 = vadd.f32 %v4907, %v4763
    %v4909 = vadd.f32 %v4908, %v4766
    %v4910 = vadd.f32 %v4909, %v4771
    %v4911 = vadd.f32 %v4910, %v4774
    %v4912 = vadd.f32 %v4911, %v4779
    %v4913 = vadd.f32 %v4912, %v4782
    %v4914 = vadd.f32 %v4913, %v4787
    %v4915 = vadd.f32 %v4914, %v4790
    %v4916 = vadd.f32 %v4915, %v4795
    %v4917 = vadd.f32 %v4916, %v4798
    %v4918 = vadd.f32 %v4917, %v4803
    %v4919 = vadd.f32 %v4918, %v4806
    %v4920 = vadd.f32 %v4919, %v4811
    %v4921 = vadd.f32 %v4920, %v4814
    %v4922 = vadd.f32 %v4921, %v4819
    %v4923 = vadd.f32 %v4922, %v4822
    %v4924 = vadd.f32 %v4923, %v4827
    %v4925 = vadd.f32 %v4924, %v4830
    %v4926 = vadd.f32 %v4925, %v4835
    %v4927 = vadd.f32 %v4926, %v4838
    %v4928 = vadd.f32 %v4927, %v4843
    %v4929 = vadd.f32 %v4928, %v4846
    %v4930 = vadd.f32 %v4929, %v4851
    %v4931 = vadd.f32 %v4930, %v4854
    %v4932 = vadd.f32 %v4931, %v4859
    %v4933 = vadd.f32 %v4932, %v4862
    %v4934 = vadd.f32 %v4933, %v4867
    %v4935 = vadd.f32 %v4934, %v4870
    %v4936 = vrot.slane %v4935, 4
    %v4937 = vadd.f32 %v4935, %v4936
    %v4938 = vrot.slane %v4937, 2
    %v4939 = vadd.f32 %v4937, %v4938
    %v4940 = vrot.slane %v4939, 1
    %v4941 = vadd.f32 %v4939, %v4940
    %v4942 = vmul.f32 %v4619, %v4619
    %v4943 = vmul.f32 %v4622, %v4622
    %v4944 = vmul.f32 %v4627, %v4627
    %v4945 = vmul.f32 %v4630, %v4630
    %v4946 = vmul.f32 %v4635, %v4635
    %v4947 = vmul.f32 %v4638, %v4638
    %v4948 = vmul.f32 %v4643, %v4643
    %v4949 = vmul.f32 %v4646, %v4646
    %v4950 = vmul.f32 %v4651, %v4651
    %v4951 = vmul.f32 %v4654, %v4654
    %v4952 = vmul.f32 %v4659, %v4659
    %v4953 = vmul.f32 %v4662, %v4662
    %v4954 = vmul.f32 %v4667, %v4667
    %v4955 = vmul.f32 %v4670, %v4670
    %v4956 = vmul.f32 %v4675, %v4675
    %v4957 = vmul.f32 %v4678, %v4678
    %v4958 = vmul.f32 %v4683, %v4683
    %v4959 = vmul.f32 %v4686, %v4686
    %v4960 = vmul.f32 %v4691, %v4691
    %v4961 = vmul.f32 %v4694, %v4694
    %v4962 = vmul.f32 %v4699, %v4699
    %v4963 = vmul.f32 %v4702, %v4702
    %v4964 = vmul.f32 %v4707, %v4707
    %v4965 = vmul.f32 %v4710, %v4710
    %v4966 = vmul.f32 %v4715, %v4715
    %v4967 = vmul.f32 %v4718, %v4718
    %v4968 = vmul.f32 %v4723, %v4723
    %v4969 = vmul.f32 %v4726, %v4726
    %v4970 = vmul.f32 %v4731, %v4731
    %v4971 = vmul.f32 %v4734, %v4734
    %v4972 = vmul.f32 %v4739, %v4739
    %v4973 = vmul.f32 %v4742, %v4742
    %v4974 = vmul.f32 %v4747, %v4747
    %v4975 = vmul.f32 %v4750, %v4750
    %v4976 = vmul.f32 %v4755, %v4755
    %v4977 = vmul.f32 %v4758, %v4758
    %v4978 = vmul.f32 %v4763, %v4763
    %v4979 = vmul.f32 %v4766, %v4766
    %v4980 = vmul.f32 %v4771, %v4771
    %v4981 = vmul.f32 %v4774, %v4774
    %v4982 = vmul.f32 %v4779, %v4779
    %v4983 = vmul.f32 %v4782, %v4782
    %v4984 = vmul.f32 %v4787, %v4787
    %v4985 = vmul.f32 %v4790, %v4790
    %v4986 = vmul.f32 %v4795, %v4795
    %v4987 = vmul.f32 %v4798, %v4798
    %v4988 = vmul.f32 %v4803, %v4803
    %v4989 = vmul.f32 %v4806, %v4806
    %v4990 = vmul.f32 %v4811, %v4811
    %v4991 = vmul.f32 %v4814, %v4814
    %v4992 = vmul.f32 %v4819, %v4819
    %v4993 = vmul.f32 %v4822, %v4822
    %v4994 = vmul.f32 %v4827, %v4827
    %v4995 = vmul.f32 %v4830, %v4830
    %v4996 = vmul.f32 %v4835, %v4835
    %v4997 = vmul.f32 %v4838, %v4838
    %v4998 = vmul.f32 %v4843, %v4843
    %v4999 = vmul.f32 %v4846, %v4846
    %v5000 = vmul.f32 %v4851, %v4851
    %v5001 = vmul.f32 %v4854, %v4854
    %v5002 = vmul.f32 %v4859, %v4859
    %v5003 = vmul.f32 %v4862, %v4862
    %v5004 = vmul.f32 %v4867, %v4867
    %v5005 = vmul.f32 %v4870, %v4870
    %v5006 = vadd.f32 %v4942, %v4943
    %v5007 = vadd.f32 %v5006, %v4944
    %v5008 = vadd.f32 %v5007, %v4945
    %v5009 = vadd.f32 %v5008, %v4946
    %v5010 = vadd.f32 %v5009, %v4947
    %v5011 = vadd.f32 %v5010, %v4948
    %v5012 = vadd.f32 %v5011, %v4949
    %v5013 = vadd.f32 %v5012, %v4950
    %v5014 = vadd.f32 %v5013, %v4951
    %v5015 = vadd.f32 %v5014, %v4952
    %v5016 = vadd.f32 %v5015, %v4953
    %v5017 = vadd.f32 %v5016, %v4954
    %v5018 = vadd.f32 %v5017, %v4955
    %v5019 = vadd.f32 %v5018, %v4956
    %v5020 = vadd.f32 %v5019, %v4957
    %v5021 = vadd.f32 %v5020, %v4958
    %v5022 = vadd.f32 %v5021, %v4959
    %v5023 = vadd.f32 %v5022, %v4960
    %v5024 = vadd.f32 %v5023, %v4961
    %v5025 = vadd.f32 %v5024, %v4962
    %v5026 = vadd.f32 %v5025, %v4963
    %v5027 = vadd.f32 %v5026, %v4964
    %v5028 = vadd.f32 %v5027, %v4965
    %v5029 = vadd.f32 %v5028, %v4966
    %v5030 = vadd.f32 %v5029, %v4967
    %v5031 = vadd.f32 %v5030, %v4968
    %v5032 = vadd.f32 %v5031, %v4969
    %v5033 = vadd.f32 %v5032, %v4970
    %v5034 = vadd.f32 %v5033, %v4971
    %v5035 = vadd.f32 %v5034, %v4972
    %v5036 = vadd.f32 %v5035, %v4973
    %v5037 = vadd.f32 %v5036, %v4974
    %v5038 = vadd.f32 %v5037, %v4975
    %v5039 = vadd.f32 %v5038, %v4976
    %v5040 = vadd.f32 %v5039, %v4977
    %v5041 = vadd.f32 %v5040, %v4978
    %v5042 = vadd.f32 %v5041, %v4979
    %v5043 = vadd.f32 %v5042, %v4980
    %v5044 = vadd.f32 %v5043, %v4981
    %v5045 = vadd.f32 %v5044, %v4982
    %v5046 = vadd.f32 %v5045, %v4983
    %v5047 = vadd.f32 %v5046, %v4984
    %v5048 = vadd.f32 %v5047, %v4985
    %v5049 = vadd.f32 %v5048, %v4986
    %v5050 = vadd.f32 %v5049, %v4987
    %v5051 = vadd.f32 %v5050, %v4988
    %v5052 = vadd.f32 %v5051, %v4989
    %v5053 = vadd.f32 %v5052, %v4990
    %v5054 = vadd.f32 %v5053, %v4991
    %v5055 = vadd.f32 %v5054, %v4992
    %v5056 = vadd.f32 %v5055, %v4993
    %v5057 = vadd.f32 %v5056, %v4994
    %v5058 = vadd.f32 %v5057, %v4995
    %v5059 = vadd.f32 %v5058, %v4996
    %v5060 = vadd.f32 %v5059, %v4997
    %v5061 = vadd.f32 %v5060, %v4998
    %v5062 = vadd.f32 %v5061, %v4999
    %v5063 = vadd.f32 %v5062, %v5000
    %v5064 = vadd.f32 %v5063, %v5001
    %v5065 = vadd.f32 %v5064, %v5002
    %v5066 = vadd.f32 %v5065, %v5003
    %v5067 = vadd.f32 %v5066, %v5004
    %v5068 = vadd.f32 %v5067, %v5005
    %v5069 = vrot.slane %v5068, 4
    %v5070 = vadd.f32 %v5068, %v5069
    %v5071 = vrot.slane %v5070, 2
    %v5072 = vadd.f32 %v5070, %v5071
    %v5073 = vrot.slane %v5072, 1
    %v5074 = vadd.f32 %v5072, %v5073
    %v5075 = vmul.f32 %v4941, 0.001953125
    %v5076 = vmul.f32 %v5074, 0.001953125
    %v5077 = vmul.f32 %v5075, %v5075
    %v5078 = vsub.f32 %v5076, %v5077
    %v5079 = vld [vmem:[%s5] sm:$0x1]
    %v5080 = vadd.f32 %v5078, 1e-05
    %v5081 = vrsqrt.pop %v5080
    %v5082 = vmul.f32 %v5079, %v5081
    %v5083 = vld [vmem:[%s6] sm:$0x1]
    %v5084 = vmul.f32 %v5075, %v5082
    %v5085 = vsub.f32 %v5083, %v5084
    %v5087 = vlaneseq
    %v5088 = vshrl.u32 %v5087, 7
    %v5089 = vsub.s32 0, %v5088
    %v5090 = vrot.slane %v5082, %v5089
    %v5092 = vmul.f32 %v4619, %v5090
    %v5093 = vmul.f32 %v4622, %v5090
    %v5094 = vmul.f32 %v4627, %v5090
    %v5095 = vmul.f32 %v4630, %v5090
    %v5096 = vmul.f32 %v4635, %v5090
    %v5097 = vmul.f32 %v4638, %v5090
    %v5098 = vmul.f32 %v4643, %v5090
    %v5099 = vmul.f32 %v4646, %v5090
    %v5100 = vmul.f32 %v4651, %v5090
    %v5101 = vmul.f32 %v4654, %v5090
    %v5102 = vmul.f32 %v4659, %v5090
    %v5103 = vmul.f32 %v4662, %v5090
    %v5104 = vmul.f32 %v4667, %v5090
    %v5105 = vmul.f32 %v4670, %v5090
    %v5106 = vmul.f32 %v4675, %v5090
    %v5107 = vmul.f32 %v4678, %v5090
    %v5108 = vmul.f32 %v4683, %v5090
    %v5109 = vmul.f32 %v4686, %v5090
    %v5110 = vmul.f32 %v4691, %v5090
    %v5111 = vmul.f32 %v4694, %v5090
    %v5112 = vmul.f32 %v4699, %v5090
    %v5113 = vmul.f32 %v4702, %v5090
    %v5114 = vmul.f32 %v4707, %v5090
    %v5115 = vmul.f32 %v4710, %v5090
    %v5116 = vmul.f32 %v4715, %v5090
    %v5117 = vmul.f32 %v4718, %v5090
    %v5118 = vmul.f32 %v4723, %v5090
    %v5119 = vmul.f32 %v4726, %v5090
    %v5120 = vmul.f32 %v4731, %v5090
    %v5121 = vmul.f32 %v4734, %v5090
    %v5122 = vmul.f32 %v4739, %v5090
    %v5123 = vmul.f32 %v4742, %v5090
    %v5124 = vmul.f32 %v4747, %v5090
    %v5125 = vmul.f32 %v4750, %v5090
    %v5126 = vmul.f32 %v4755, %v5090
    %v5127 = vmul.f32 %v4758, %v5090
    %v5128 = vmul.f32 %v4763, %v5090
    %v5129 = vmul.f32 %v4766, %v5090
    %v5130 = vmul.f32 %v4771, %v5090
    %v5131 = vmul.f32 %v4774, %v5090
    %v5132 = vmul.f32 %v4779, %v5090
    %v5133 = vmul.f32 %v4782, %v5090
    %v5134 = vmul.f32 %v4787, %v5090
    %v5135 = vmul.f32 %v4790, %v5090
    %v5136 = vmul.f32 %v4795, %v5090
    %v5137 = vmul.f32 %v4798, %v5090
    %v5138 = vmul.f32 %v4803, %v5090
    %v5139 = vmul.f32 %v4806, %v5090
    %v5140 = vmul.f32 %v4811, %v5090
    %v5141 = vmul.f32 %v4814, %v5090
    %v5142 = vmul.f32 %v4819, %v5090
    %v5143 = vmul.f32 %v4822, %v5090
    %v5144 = vmul.f32 %v4827, %v5090
    %v5145 = vmul.f32 %v4830, %v5090
    %v5146 = vmul.f32 %v4835, %v5090
    %v5147 = vmul.f32 %v4838, %v5090
    %v5148 = vmul.f32 %v4843, %v5090
    %v5149 = vmul.f32 %v4846, %v5090
    %v5150 = vmul.f32 %v4851, %v5090
    %v5151 = vmul.f32 %v4854, %v5090
    %v5152 = vmul.f32 %v4859, %v5090
    %v5153 = vmul.f32 %v4862, %v5090
    %v5154 = vmul.f32 %v4867, %v5090
    %v5155 = vmul.f32 %v4870, %v5090
    %v5157 = vlaneseq
    %v5158 = vshrl.u32 %v5157, 7
    %v5159 = vsub.s32 0, %v5158
    %v5160 = vrot.slane %v5085, %v5159
    %v5162 = vadd.f32 %v5092, %v5160
    %v5163 = vadd.f32 %v5093, %v5160
    %v5164 = vadd.f32 %v5094, %v5160
    %v5165 = vadd.f32 %v5095, %v5160
    %v5166 = vadd.f32 %v5096, %v5160
    %v5167 = vadd.f32 %v5097, %v5160
    %v5168 = vadd.f32 %v5098, %v5160
    %v5169 = vadd.f32 %v5099, %v5160
    %v5170 = vadd.f32 %v5100, %v5160
    %v5171 = vadd.f32 %v5101, %v5160
    %v5172 = vadd.f32 %v5102, %v5160
    %v5173 = vadd.f32 %v5103, %v5160
    %v5174 = vadd.f32 %v5104, %v5160
    %v5175 = vadd.f32 %v5105, %v5160
    %v5176 = vadd.f32 %v5106, %v5160
    %v5177 = vadd.f32 %v5107, %v5160
    %v5178 = vadd.f32 %v5108, %v5160
    %v5179 = vadd.f32 %v5109, %v5160
    %v5180 = vadd.f32 %v5110, %v5160
    %v5181 = vadd.f32 %v5111, %v5160
    %v5182 = vadd.f32 %v5112, %v5160
    %v5183 = vadd.f32 %v5113, %v5160
    %v5184 = vadd.f32 %v5114, %v5160
    %v5185 = vadd.f32 %v5115, %v5160
    %v5186 = vadd.f32 %v5116, %v5160
    %v5187 = vadd.f32 %v5117, %v5160
    %v5188 = vadd.f32 %v5118, %v5160
    %v5189 = vadd.f32 %v5119, %v5160
    %v5190 = vadd.f32 %v5120, %v5160
    %v5191 = vadd.f32 %v5121, %v5160
    %v5192 = vadd.f32 %v5122, %v5160
    %v5193 = vadd.f32 %v5123, %v5160
    %v5194 = vadd.f32 %v5124, %v5160
    %v5195 = vadd.f32 %v5125, %v5160
    %v5196 = vadd.f32 %v5126, %v5160
    %v5197 = vadd.f32 %v5127, %v5160
    %v5198 = vadd.f32 %v5128, %v5160
    %v5199 = vadd.f32 %v5129, %v5160
    %v5200 = vadd.f32 %v5130, %v5160
    %v5201 = vadd.f32 %v5131, %v5160
    %v5202 = vadd.f32 %v5132, %v5160
    %v5203 = vadd.f32 %v5133, %v5160
    %v5204 = vadd.f32 %v5134, %v5160
    %v5205 = vadd.f32 %v5135, %v5160
    %v5206 = vadd.f32 %v5136, %v5160
    %v5207 = vadd.f32 %v5137, %v5160
    %v5208 = vadd.f32 %v5138, %v5160
    %v5209 = vadd.f32 %v5139, %v5160
    %v5210 = vadd.f32 %v5140, %v5160
    %v5211 = vadd.f32 %v5141, %v5160
    %v5212 = vadd.f32 %v5142, %v5160
    %v5213 = vadd.f32 %v5143, %v5160
    %v5214 = vadd.f32 %v5144, %v5160
    %v5215 = vadd.f32 %v5145, %v5160
    %v5216 = vadd.f32 %v5146, %v5160
    %v5217 = vadd.f32 %v5147, %v5160
    %v5218 = vadd.f32 %v5148, %v5160
    %v5219 = vadd.f32 %v5149, %v5160
    %v5220 = vadd.f32 %v5150, %v5160
    %v5221 = vadd.f32 %v5151, %v5160
    %v5222 = vadd.f32 %v5152, %v5160
    %v5223 = vadd.f32 %v5153, %v5160
    %v5224 = vadd.f32 %v5154, %v5160
    %v5225 = vadd.f32 %v5155, %v5160
    %v5226 = vld [vmem:[#allocation2] sm:$0xff]
    %v5227 = vld [vmem:[#allocation2 + $0x8] sm:$0xff]
    %v5228 = vld [vmem:[#allocation2 + $0x10] sm:$0xff]
    %v5229 = vld [vmem:[#allocation2 + $0x18] sm:$0xff]
    %v5230 = vld [vmem:[#allocation2 + $0x20] sm:$0xff]
    %v5231 = vld [vmem:[#allocation2 + $0x28] sm:$0xff]
    %v5232 = vld [vmem:[#allocation2 + $0x30] sm:$0xff]
    %v5233 = vld [vmem:[#allocation2 + $0x38] sm:$0xff]
    %v5234 = vld [vmem:[#allocation2 + $0x40] sm:$0xff]
    %v5235 = vld [vmem:[#allocation2 + $0x48] sm:$0xff]
    %v5236 = vld [vmem:[#allocation2 + $0x50] sm:$0xff]
    %v5237 = vld [vmem:[#allocation2 + $0x58] sm:$0xff]
    %v5238 = vld [vmem:[#allocation2 + $0x60] sm:$0xff]
    %v5239 = vld [vmem:[#allocation2 + $0x68] sm:$0xff]
    %v5240 = vld [vmem:[#allocation2 + $0x70] sm:$0xff]
    %v5241 = vld [vmem:[#allocation2 + $0x78] sm:$0xff]
    %v5242 = vld [vmem:[#allocation2 + $0x80] sm:$0xff]
    %v5243 = vld [vmem:[#allocation2 + $0x88] sm:$0xff]
    %v5244 = vld [vmem:[#allocation2 + $0x90] sm:$0xff]
    %v5245 = vld [vmem:[#allocation2 + $0x98] sm:$0xff]
    %v5246 = vld [vmem:[#allocation2 + $0xa0] sm:$0xff]
    %v5247 = vld [vmem:[#allocation2 + $0xa8] sm:$0xff]
    %v5248 = vld [vmem:[#allocation2 + $0xb0] sm:$0xff]
    %v5249 = vld [vmem:[#allocation2 + $0xb8] sm:$0xff]
    %v5250 = vld [vmem:[#allocation2 + $0xc0] sm:$0xff]
    %v5251 = vld [vmem:[#allocation2 + $0xc8] sm:$0xff]
    %v5252 = vld [vmem:[#allocation2 + $0xd0] sm:$0xff]
    %v5253 = vld [vmem:[#allocation2 + $0xd8] sm:$0xff]
    %v5254 = vld [vmem:[#allocation2 + $0xe0] sm:$0xff]
    %v5255 = vld [vmem:[#allocation2 + $0xe8] sm:$0xff]
    %v5256 = vld [vmem:[#allocation2 + $0xf0] sm:$0xff]
    %v5257 = vld [vmem:[#allocation2 + $0xf8] sm:$0xff]
    %v5258 = vld [vmem:[#allocation2 + $0x100] sm:$0xff]
    %v5259 = vld [vmem:[#allocation2 + $0x108] sm:$0xff]
    %v5260 = vld [vmem:[#allocation2 + $0x110] sm:$0xff]
    %v5261 = vld [vmem:[#allocation2 + $0x118] sm:$0xff]
    %v5262 = vld [vmem:[#allocation2 + $0x120] sm:$0xff]
    %v5263 = vld [vmem:[#allocation2 + $0x128] sm:$0xff]
    %v5264 = vld [vmem:[#allocation2 + $0x130] sm:$0xff]
    %v5265 = vld [vmem:[#allocation2 + $0x138] sm:$0xff]
    %v5266 = vld [vmem:[#allocation2 + $0x140] sm:$0xff]
    %v5267 = vld [vmem:[#allocation2 + $0x148] sm:$0xff]
    %v5268 = vld [vmem:[#allocation2 + $0x150] sm:$0xff]
    %v5269 = vld [vmem:[#allocation2 + $0x158] sm:$0xff]
    %v5270 = vld [vmem:[#allocation2 + $0x160] sm:$0xff]
    %v5271 = vld [vmem:[#allocation2 + $0x168] sm:$0xff]
    %v5272 = vld [vmem:[#allocation2 + $0x170] sm:$0xff]
    %v5273 = vld [vmem:[#allocation2 + $0x178] sm:$0xff]
    %v5274 = vld [vmem:[#allocation2 + $0x180] sm:$0xff]
    %v5275 = vld [vmem:[#allocation2 + $0x188] sm:$0xff]
    %v5276 = vld [vmem:[#allocation2 + $0x190] sm:$0xff]
    %v5277 = vld [vmem:[#allocation2 + $0x198] sm:$0xff]
    %v5278 = vld [vmem:[#allocation2 + $0x1a0] sm:$0xff]
    %v5279 = vld [vmem:[#allocation2 + $0x1a8] sm:$0xff]
    %v5280 = vld [vmem:[#allocation2 + $0x1b0] sm:$0xff]
    %v5281 = vld [vmem:[#allocation2 + $0x1b8] sm:$0xff]
    %v5282 = vld [vmem:[#allocation2 + $0x1c0] sm:$0xff]
    %v5283 = vld [vmem:[#allocation2 + $0x1c8] sm:$0xff]
    %v5284 = vld [vmem:[#allocation2 + $0x1d0] sm:$0xff]
    %v5285 = vld [vmem:[#allocation2 + $0x1d8] sm:$0xff]
    %v5286 = vld [vmem:[#allocation2 + $0x1e0] sm:$0xff]
    %v5287 = vld [vmem:[#allocation2 + $0x1e8] sm:$0xff]
    %v5288 = vld [vmem:[#allocation2 + $0x1f0] sm:$0xff]
    %v5289 = vld [vmem:[#allocation2 + $0x1f8] sm:$0xff]
    %v5290 = vadd.f32 %v5226, %v5227
    %v5291 = vadd.f32 %v5290, %v5228
    %v5292 = vadd.f32 %v5291, %v5229
    %v5293 = vadd.f32 %v5292, %v5230
    %v5294 = vadd.f32 %v5293, %v5231
    %v5295 = vadd.f32 %v5294, %v5232
    %v5296 = vadd.f32 %v5295, %v5233
    %v5297 = vadd.f32 %v5296, %v5234
    %v5298 = vadd.f32 %v5297, %v5235
    %v5299 = vadd.f32 %v5298, %v5236
    %v5300 = vadd.f32 %v5299, %v5237
    %v5301 = vadd.f32 %v5300, %v5238
    %v5302 = vadd.f32 %v5301, %v5239
    %v5303 = vadd.f32 %v5302, %v5240
    %v5304 = vadd.f32 %v5303, %v5241
    %v5305 = vadd.f32 %v5304, %v5242
    %v5306 = vadd.f32 %v5305, %v5243
    %v5307 = vadd.f32 %v5306, %v5244
    %v5308 = vadd.f32 %v5307, %v5245
    %v5309 = vadd.f32 %v5308, %v5246
    %v5310 = vadd.f32 %v5309, %v5247
    %v5311 = vadd.f32 %v5310, %v5248
    %v5312 = vadd.f32 %v5311, %v5249
    %v5313 = vadd.f32 %v5312, %v5250
    %v5314 = vadd.f32 %v5313, %v5251
    %v5315 = vadd.f32 %v5314, %v5252
    %v5316 = vadd.f32 %v5315, %v5253
    %v5317 = vadd.f32 %v5316, %v5254
    %v5318 = vadd.f32 %v5317, %v5255
    %v5319 = vadd.f32 %v5318, %v5256
    %v5320 = vadd.f32 %v5319, %v5257
    %v5321 = vadd.f32 %v5320, %v5258
    %v5322 = vadd.f32 %v5321, %v5259
    %v5323 = vadd.f32 %v5322, %v5260
    %v5324 = vadd.f32 %v5323, %v5261
    %v5325 = vadd.f32 %v5324, %v5262
    %v5326 = vadd.f32 %v5325, %v5263
    %v5327 = vadd.f32 %v5326, %v5264
    %v5328 = vadd.f32 %v5327, %v5265
    %v5329 = vadd.f32 %v5328, %v5266
    %v5330 = vadd.f32 %v5329, %v5267
    %v5331 = vadd.f32 %v5330, %v5268
    %v5332 = vadd.f32 %v5331, %v5269
    %v5333 = vadd.f32 %v5332, %v5270
    %v5334 = vadd.f32 %v5333, %v5271
    %v5335 = vadd.f32 %v5334, %v5272
    %v5336 = vadd.f32 %v5335, %v5273
    %v5337 = vadd.f32 %v5336, %v5274
    %v5338 = vadd.f32 %v5337, %v5275
    %v5339 = vadd.f32 %v5338, %v5276
    %v5340 = vadd.f32 %v5339, %v5277
    %v5341 = vadd.f32 %v5340, %v5278
    %v5342 = vadd.f32 %v5341, %v5279
    %v5343 = vadd.f32 %v5342, %v5280
    %v5344 = vadd.f32 %v5343, %v5281
    %v5345 = vadd.f32 %v5344, %v5282
    %v5346 = vadd.f32 %v5345, %v5283
    %v5347 = vadd.f32 %v5346, %v5284
    %v5348 = vadd.f32 %v5347, %v5285
    %v5349 = vadd.f32 %v5348, %v5286
    %v5350 = vadd.f32 %v5349, %v5287
    %v5351 = vadd.f32 %v5350, %v5288
    %v5352 = vadd.f32 %v5351, %v5289
    %v5353 = vrot.slane %v5352, 4
    %v5354 = vadd.f32 %v5352, %v5353
    %v5355 = vrot.slane %v5354, 2
    %v5356 = vadd.f32 %v5354, %v5355
    %v5357 = vrot.slane %v5356, 1
    %v5358 = vadd.f32 %v5356, %v5357
    %v5359 = vmul.f32 %v5226, %v5226
    %v5360 = vmul.f32 %v5227, %v5227
    %v5361 = vmul.f32 %v5228, %v5228
    %v5362 = vmul.f32 %v5229, %v5229
    %v5363 = vmul.f32 %v5230, %v5230
    %v5364 = vmul.f32 %v5231, %v5231
    %v5365 = vmul.f32 %v5232, %v5232
    %v5366 = vmul.f32 %v5233, %v5233
    %v5367 = vmul.f32 %v5234, %v5234
    %v5368 = vmul.f32 %v5235, %v5235
    %v5369 = vmul.f32 %v5236, %v5236
    %v5370 = vmul.f32 %v5237, %v5237
    %v5371 = vmul.f32 %v5238, %v5238
    %v5372 = vmul.f32 %v5239, %v5239
    %v5373 = vmul.f32 %v5240, %v5240
    %v5374 = vmul.f32 %v5241, %v5241
    %v5375 = vmul.f32 %v5242, %v5242
    %v5376 = vmul.f32 %v5243, %v5243
    %v5377 = vmul.f32 %v5244, %v5244
    %v5378 = vmul.f32 %v5245, %v5245
    %v5379 = vmul.f32 %v5246, %v5246
    %v5380 = vmul.f32 %v5247, %v5247
    %v5381 = vmul.f32 %v5248, %v5248
    %v5382 = vmul.f32 %v5249, %v5249
    %v5383 = vmul.f32 %v5250, %v5250
    %v5384 = vmul.f32 %v5251, %v5251
    %v5385 = vmul.f32 %v5252, %v5252
    %v5386 = vmul.f32 %v5253, %v5253
    %v5387 = vmul.f32 %v5254, %v5254
    %v5388 = vmul.f32 %v5255, %v5255
    %v5389 = vmul.f32 %v5256, %v5256
    %v5390 = vmul.f32 %v5257, %v5257
    %v5391 = vmul.f32 %v5258, %v5258
    %v5392 = vmul.f32 %v5259, %v5259
    %v5393 = vmul.f32 %v5260, %v5260
    %v5394 = vmul.f32 %v5261, %v5261
    %v5395 = vmul.f32 %v5262, %v5262
    %v5396 = vmul.f32 %v5263, %v5263
    %v5397 = vmul.f32 %v5264, %v5264
    %v5398 = vmul.f32 %v5265, %v5265
    %v5399 = vmul.f32 %v5266, %v5266
    %v5400 = vmul.f32 %v5267, %v5267
    %v5401 = vmul.f32 %v5268, %v5268
    %v5402 = vmul.f32 %v5269, %v5269
    %v5403 = vmul.f32 %v5270, %v5270
    %v5404 = vmul.f32 %v5271, %v5271
    %v5405 = vmul.f32 %v5272, %v5272
    %v5406 = vmul.f32 %v5273, %v5273
    %v5407 = vmul.f32 %v5274, %v5274
    %v5408 = vmul.f32 %v5275, %v5275
    %v5409 = vmul.f32 %v5276, %v5276
    %v5410 = vmul.f32 %v5277, %v5277
    %v5411 = vmul.f32 %v5278, %v5278
    %v5412 = vmul.f32 %v5279, %v5279
    %v5413 = vmul.f32 %v5280, %v5280
    %v5414 = vmul.f32 %v5281, %v5281
    %v5415 = vmul.f32 %v5282, %v5282
    %v5416 = vmul.f32 %v5283, %v5283
    %v5417 = vmul.f32 %v5284, %v5284
    %v5418 = vmul.f32 %v5285, %v5285
    %v5419 = vmul.f32 %v5286, %v5286
    %v5420 = vmul.f32 %v5287, %v5287
    %v5421 = vmul.f32 %v5288, %v5288
    %v5422 = vmul.f32 %v5289, %v5289
    %v5423 = vadd.f32 %v5359, %v5360
    %v5424 = vadd.f32 %v5423, %v5361
    %v5425 = vadd.f32 %v5424, %v5362
    %v5426 = vadd.f32 %v5425, %v5363
    %v5427 = vadd.f32 %v5426, %v5364
    %v5428 = vadd.f32 %v5427, %v5365
    %v5429 = vadd.f32 %v5428, %v5366
    %v5430 = vadd.f32 %v5429, %v5367
    %v5431 = vadd.f32 %v5430, %v5368
    %v5432 = vadd.f32 %v5431, %v5369
    %v5433 = vadd.f32 %v5432, %v5370
    %v5434 = vadd.f32 %v5433, %v5371
    %v5435 = vadd.f32 %v5434, %v5372
    %v5436 = vadd.f32 %v5435, %v5373
    %v5437 = vadd.f32 %v5436, %v5374
    %v5438 = vadd.f32 %v5437, %v5375
    %v5439 = vadd.f32 %v5438, %v5376
    %v5440 = vadd.f32 %v5439, %v5377
    %v5441 = vadd.f32 %v5440, %v5378
    %v5442 = vadd.f32 %v5441, %v5379
    %v5443 = vadd.f32 %v5442, %v5380
    %v5444 = vadd.f32 %v5443, %v5381
    %v5445 = vadd.f32 %v5444, %v5382
    %v5446 = vadd.f32 %v5445, %v5383
    %v5447 = vadd.f32 %v5446, %v5384
    %v5448 = vadd.f32 %v5447, %v5385
    %v5449 = vadd.f32 %v5448, %v5386
    %v5450 = vadd.f32 %v5449, %v5387
    %v5451 = vadd.f32 %v5450, %v5388
    %v5452 = vadd.f32 %v5451, %v5389
    %v5453 = vadd.f32 %v5452, %v5390
    %v5454 = vadd.f32 %v5453, %v5391
    %v5455 = vadd.f32 %v5454, %v5392
    %v5456 = vadd.f32 %v5455, %v5393
    %v5457 = vadd.f32 %v5456, %v5394
    %v5458 = vadd.f32 %v5457, %v5395
    %v5459 = vadd.f32 %v5458, %v5396
    %v5460 = vadd.f32 %v5459, %v5397
    %v5461 = vadd.f32 %v5460, %v5398
    %v5462 = vadd.f32 %v5461, %v5399
    %v5463 = vadd.f32 %v5462, %v5400
    %v5464 = vadd.f32 %v5463, %v5401
    %v5465 = vadd.f32 %v5464, %v5402
    %v5466 = vadd.f32 %v5465, %v5403
    %v5467 = vadd.f32 %v5466, %v5404
    %v5468 = vadd.f32 %v5467, %v5405
    %v5469 = vadd.f32 %v5468, %v5406
    %v5470 = vadd.f32 %v5469, %v5407
    %v5471 = vadd.f32 %v5470, %v5408
    %v5472 = vadd.f32 %v5471, %v5409
    %v5473 = vadd.f32 %v5472, %v5410
    %v5474 = vadd.f32 %v5473, %v5411
    %v5475 = vadd.f32 %v5474, %v5412
    %v5476 = vadd.f32 %v5475, %v5413
    %v5477 = vadd.f32 %v5476, %v5414
    %v5478 = vadd.f32 %v5477, %v5415
    %v5479 = vadd.f32 %v5478, %v5416
    %v5480 = vadd.f32 %v5479, %v5417
    %v5481 = vadd.f32 %v5480, %v5418
    %v5482 = vadd.f32 %v5481, %v5419
    %v5483 = vadd.f32 %v5482, %v5420
    %v5484 = vadd.f32 %v5483, %v5421
    %v5485 = vadd.f32 %v5484, %v5422
    %v5486 = vrot.slane %v5485, 4
    %v5487 = vadd.f32 %v5485, %v5486
    %v5488 = vrot.slane %v5487, 2
    %v5489 = vadd.f32 %v5487, %v5488
    %v5490 = vrot.slane %v5489, 1
    %v5491 = vadd.f32 %v5489, %v5490
    %v5492 = vmul.f32 %v5358, 0.001953125
    %v5493 = vmul.f32 %v5491, 0.001953125
    %v5494 = vmul.f32 %v5492, %v5492
    %v5495 = vsub.f32 %v5493, %v5494
    %v5496 = vld [vmem:[%s7] sm:$0x1]
    %v5497 = vadd.f32 %v5495, 1e-05
    %v5498 = vrsqrt.pop %v5497
    %v5499 = vmul.f32 %v5496, %v5498
    %v5500 = vld [vmem:[%s8] sm:$0x1]
    %v5501 = vmul.f32 %v5492, %v5499
    %v5502 = vsub.f32 %v5500, %v5501
    %v5504 = vlaneseq
    %v5505 = vshrl.u32 %v5504, 7
    %v5506 = vsub.s32 0, %v5505
    %v5507 = vrot.slane %v5499, %v5506
    %v5509 = vmul.f32 %v5226, %v5507
    %v5510 = vmul.f32 %v5227, %v5507
    %v5511 = vmul.f32 %v5228, %v5507
    %v5512 = vmul.f32 %v5229, %v5507
    %v5513 = vmul.f32 %v5230, %v5507
    %v5514 = vmul.f32 %v5231, %v5507
    %v5515 = vmul.f32 %v5232, %v5507
    %v5516 = vmul.f32 %v5233, %v5507
    %v5517 = vmul.f32 %v5234, %v5507
    %v5518 = vmul.f32 %v5235, %v5507
    %v5519 = vmul.f32 %v5236, %v5507
    %v5520 = vmul.f32 %v5237, %v5507
    %v5521 = vmul.f32 %v5238, %v5507
    %v5522 = vmul.f32 %v5239, %v5507
    %v5523 = vmul.f32 %v5240, %v5507
    %v5524 = vmul.f32 %v5241, %v5507
    %v5525 = vmul.f32 %v5242, %v5507
    %v5526 = vmul.f32 %v5243, %v5507
    %v5527 = vmul.f32 %v5244, %v5507
    %v5528 = vmul.f32 %v5245, %v5507
    %v5529 = vmul.f32 %v5246, %v5507
    %v5530 = vmul.f32 %v5247, %v5507
    %v5531 = vmul.f32 %v5248, %v5507
    %v5532 = vmul.f32 %v5249, %v5507
    %v5533 = vmul.f32 %v5250, %v5507
    %v5534 = vmul.f32 %v5251, %v5507
    %v5535 = vmul.f32 %v5252, %v5507
    %v5536 = vmul.f32 %v5253, %v5507
    %v5537 = vmul.f32 %v5254, %v5507
    %v5538 = vmul.f32 %v5255, %v5507
    %v5539 = vmul.f32 %v5256, %v5507
    %v5540 = vmul.f32 %v5257, %v5507
    %v5541 = vmul.f32 %v5258, %v5507
    %v5542 = vmul.f32 %v5259, %v5507
    %v5543 = vmul.f32 %v5260, %v5507
    %v5544 = vmul.f32 %v5261, %v5507
    %v5545 = vmul.f32 %v5262, %v5507
    %v5546 = vmul.f32 %v5263, %v5507
    %v5547 = vmul.f32 %v5264, %v5507
    %v5548 = vmul.f32 %v5265, %v5507
    %v5549 = vmul.f32 %v5266, %v5507
    %v5550 = vmul.f32 %v5267, %v5507
    %v5551 = vmul.f32 %v5268, %v5507
    %v5552 = vmul.f32 %v5269, %v5507
    %v5553 = vmul.f32 %v5270, %v5507
    %v5554 = vmul.f32 %v5271, %v5507
    %v5555 = vmul.f32 %v5272, %v5507
    %v5556 = vmul.f32 %v5273, %v5507
    %v5557 = vmul.f32 %v5274, %v5507
    %v5558 = vmul.f32 %v5275, %v5507
    %v5559 = vmul.f32 %v5276, %v5507
    %v5560 = vmul.f32 %v5277, %v5507
    %v5561 = vmul.f32 %v5278, %v5507
    %v5562 = vmul.f32 %v5279, %v5507
    %v5563 = vmul.f32 %v5280, %v5507
    %v5564 = vmul.f32 %v5281, %v5507
    %v5565 = vmul.f32 %v5282, %v5507
    %v5566 = vmul.f32 %v5283, %v5507
    %v5567 = vmul.f32 %v5284, %v5507
    %v5568 = vmul.f32 %v5285, %v5507
    %v5569 = vmul.f32 %v5286, %v5507
    %v5570 = vmul.f32 %v5287, %v5507
    %v5571 = vmul.f32 %v5288, %v5507
    %v5572 = vmul.f32 %v5289, %v5507
    %v5574 = vlaneseq
    %v5575 = vshrl.u32 %v5574, 7
    %v5576 = vsub.s32 0, %v5575
    %v5577 = vrot.slane %v5502, %v5576
    %v5579 = vadd.f32 %v5509, %v5577
    %v5580 = vadd.f32 %v5510, %v5577
    %v5581 = vadd.f32 %v5511, %v5577
    %v5582 = vadd.f32 %v5512, %v5577
    %v5583 = vadd.f32 %v5513, %v5577
    %v5584 = vadd.f32 %v5514, %v5577
    %v5585 = vadd.f32 %v5515, %v5577
    %v5586 = vadd.f32 %v5516, %v5577
    %v5587 = vadd.f32 %v5517, %v5577
    %v5588 = vadd.f32 %v5518, %v5577
    %v5589 = vadd.f32 %v5519, %v5577
    %v5590 = vadd.f32 %v5520, %v5577
    %v5591 = vadd.f32 %v5521, %v5577
    %v5592 = vadd.f32 %v5522, %v5577
    %v5593 = vadd.f32 %v5523, %v5577
    %v5594 = vadd.f32 %v5524, %v5577
    %v5595 = vadd.f32 %v5525, %v5577
    %v5596 = vadd.f32 %v5526, %v5577
    %v5597 = vadd.f32 %v5527, %v5577
    %v5598 = vadd.f32 %v5528, %v5577
    %v5599 = vadd.f32 %v5529, %v5577
    %v5600 = vadd.f32 %v5530, %v5577
    %v5601 = vadd.f32 %v5531, %v5577
    %v5602 = vadd.f32 %v5532, %v5577
    %v5603 = vadd.f32 %v5533, %v5577
    %v5604 = vadd.f32 %v5534, %v5577
    %v5605 = vadd.f32 %v5535, %v5577
    %v5606 = vadd.f32 %v5536, %v5577
    %v5607 = vadd.f32 %v5537, %v5577
    %v5608 = vadd.f32 %v5538, %v5577
    %v5609 = vadd.f32 %v5539, %v5577
    %v5610 = vadd.f32 %v5540, %v5577
    %v5611 = vadd.f32 %v5541, %v5577
    %v5612 = vadd.f32 %v5542, %v5577
    %v5613 = vadd.f32 %v5543, %v5577
    %v5614 = vadd.f32 %v5544, %v5577
    %v5615 = vadd.f32 %v5545, %v5577
    %v5616 = vadd.f32 %v5546, %v5577
    %v5617 = vadd.f32 %v5547, %v5577
    %v5618 = vadd.f32 %v5548, %v5577
    %v5619 = vadd.f32 %v5549, %v5577
    %v5620 = vadd.f32 %v5550, %v5577
    %v5621 = vadd.f32 %v5551, %v5577
    %v5622 = vadd.f32 %v5552, %v5577
    %v5623 = vadd.f32 %v5553, %v5577
    %v5624 = vadd.f32 %v5554, %v5577
    %v5625 = vadd.f32 %v5555, %v5577
    %v5626 = vadd.f32 %v5556, %v5577
    %v5627 = vadd.f32 %v5557, %v5577
    %v5628 = vadd.f32 %v5558, %v5577
    %v5629 = vadd.f32 %v5559, %v5577
    %v5630 = vadd.f32 %v5560, %v5577
    %v5631 = vadd.f32 %v5561, %v5577
    %v5632 = vadd.f32 %v5562, %v5577
    %v5633 = vadd.f32 %v5563, %v5577
    %v5634 = vadd.f32 %v5564, %v5577
    %v5635 = vadd.f32 %v5565, %v5577
    %v5636 = vadd.f32 %v5566, %v5577
    %v5637 = vadd.f32 %v5567, %v5577
    %v5638 = vadd.f32 %v5568, %v5577
    %v5639 = vadd.f32 %v5569, %v5577
    %v5640 = vadd.f32 %v5570, %v5577
    %v5641 = vadd.f32 %v5571, %v5577
    %v5642 = vadd.f32 %v5572, %v5577
    %v5643 = vadd.f32 %v5162, %v5579
    %v5644 = vadd.f32 %v5163, %v5580
    %v5645 = vadd.f32 %v5164, %v5581
    %v5646 = vadd.f32 %v5165, %v5582
    %v5647 = vadd.f32 %v5166, %v5583
    %v5648 = vadd.f32 %v5167, %v5584
    %v5649 = vadd.f32 %v5168, %v5585
    %v5650 = vadd.f32 %v5169, %v5586
    %v5651 = vadd.f32 %v5170, %v5587
    %v5652 = vadd.f32 %v5171, %v5588
    %v5653 = vadd.f32 %v5172, %v5589
    %v5654 = vadd.f32 %v5173, %v5590
    %v5655 = vadd.f32 %v5174, %v5591
    %v5656 = vadd.f32 %v5175, %v5592
    %v5657 = vadd.f32 %v5176, %v5593
    %v5658 = vadd.f32 %v5177, %v5594
    %v5659 = vadd.f32 %v5178, %v5595
    %v5660 = vadd.f32 %v5179, %v5596
    %v5661 = vadd.f32 %v5180, %v5597
    %v5662 = vadd.f32 %v5181, %v5598
    %v5663 = vadd.f32 %v5182, %v5599
    %v5664 = vadd.f32 %v5183, %v5600
    %v5665 = vadd.f32 %v5184, %v5601
    %v5666 = vadd.f32 %v5185, %v5602
    %v5667 = vadd.f32 %v5186, %v5603
    %v5668 = vadd.f32 %v5187, %v5604
    %v5669 = vadd.f32 %v5188, %v5605
    %v5670 = vadd.f32 %v5189, %v5606
    %v5671 = vadd.f32 %v5190, %v5607
    %v5672 = vadd.f32 %v5191, %v5608
    %v5673 = vadd.f32 %v5192, %v5609
    %v5674 = vadd.f32 %v5193, %v5610
    %v5675 = vadd.f32 %v5194, %v5611
    %v5676 = vadd.f32 %v5195, %v5612
    %v5677 = vadd.f32 %v5196, %v5613
    %v5678 = vadd.f32 %v5197, %v5614
    %v5679 = vadd.f32 %v5198, %v5615
    %v5680 = vadd.f32 %v5199, %v5616
    %v5681 = vadd.f32 %v5200, %v5617
    %v5682 = vadd.f32 %v5201, %v5618
    %v5683 = vadd.f32 %v5202, %v5619
    %v5684 = vadd.f32 %v5203, %v5620
    %v5685 = vadd.f32 %v5204, %v5621
    %v5686 = vadd.f32 %v5205, %v5622
    %v5687 = vadd.f32 %v5206, %v5623
    %v5688 = vadd.f32 %v5207, %v5624
    %v5689 = vadd.f32 %v5208, %v5625
    %v5690 = vadd.f32 %v5209, %v5626
    %v5691 = vadd.f32 %v5210, %v5627
    %v5692 = vadd.f32 %v5211, %v5628
    %v5693 = vadd.f32 %v5212, %v5629
    %v5694 = vadd.f32 %v5213, %v5630
    %v5695 = vadd.f32 %v5214, %v5631
    %v5696 = vadd.f32 %v5215, %v5632
    %v5697 = vadd.f32 %v5216, %v5633
    %v5698 = vadd.f32 %v5217, %v5634
    %v5699 = vadd.f32 %v5218, %v5635
    %v5700 = vadd.f32 %v5219, %v5636
    %v5701 = vadd.f32 %v5220, %v5637
    %v5702 = vadd.f32 %v5221, %v5638
    %v5703 = vadd.f32 %v5222, %v5639
    %v5704 = vadd.f32 %v5223, %v5640
    %v5705 = vadd.f32 %v5224, %v5641
    %v5706 = vadd.f32 %v5225, %v5642
    %v5707 = vmax.f32 %v5643, 0.0
    %v5708 = vmax.f32 %v5644, 0.0
    %v5709 = vmax.f32 %v5645, 0.0
    %v5710 = vmax.f32 %v5646, 0.0
    %v5711 = vmax.f32 %v5647, 0.0
    %v5712 = vmax.f32 %v5648, 0.0
    %v5713 = vmax.f32 %v5649, 0.0
    %v5714 = vmax.f32 %v5650, 0.0
    %v5715 = vmax.f32 %v5651, 0.0
    %v5716 = vmax.f32 %v5652, 0.0
    %v5717 = vmax.f32 %v5653, 0.0
    %v5718 = vmax.f32 %v5654, 0.0
    %v5719 = vmax.f32 %v5655, 0.0
    %v5720 = vmax.f32 %v5656, 0.0
    %v5721 = vmax.f32 %v5657, 0.0
    %v5722 = vmax.f32 %v5658, 0.0
    %v5723 = vmax.f32 %v5659, 0.0
    %v5724 = vmax.f32 %v5660, 0.0
    %v5725 = vmax.f32 %v5661, 0.0
    %v5726 = vmax.f32 %v5662, 0.0
    %v5727 = vmax.f32 %v5663, 0.0
    %v5728 = vmax.f32 %v5664, 0.0
    %v5729 = vmax.f32 %v5665, 0.0
    %v5730 = vmax.f32 %v5666, 0.0
    %v5731 = vmax.f32 %v5667, 0.0
    %v5732 = vmax.f32 %v5668, 0.0
    %v5733 = vmax.f32 %v5669, 0.0
    %v5734 = vmax.f32 %v5670, 0.0
    %v5735 = vmax.f32 %v5671, 0.0
    %v5736 = vmax.f32 %v5672, 0.0
    %v5737 = vmax.f32 %v5673, 0.0
    %v5738 = vmax.f32 %v5674, 0.0
    %v5739 = vmax.f32 %v5675, 0.0
    %v5740 = vmax.f32 %v5676, 0.0
    %v5741 = vmax.f32 %v5677, 0.0
    %v5742 = vmax.f32 %v5678, 0.0
    %v5743 = vmax.f32 %v5679, 0.0
    %v5744 = vmax.f32 %v5680, 0.0
    %v5745 = vmax.f32 %v5681, 0.0
    %v5746 = vmax.f32 %v5682, 0.0
    %v5747 = vmax.f32 %v5683, 0.0
    %v5748 = vmax.f32 %v5684, 0.0
    %v5749 = vmax.f32 %v5685, 0.0
    %v5750 = vmax.f32 %v5686, 0.0
    %v5751 = vmax.f32 %v5687, 0.0
    %v5752 = vmax.f32 %v5688, 0.0
    %v5753 = vmax.f32 %v5689, 0.0
    %v5754 = vmax.f32 %v5690, 0.0
    %v5755 = vmax.f32 %v5691, 0.0
    %v5756 = vmax.f32 %v5692, 0.0
    %v5757 = vmax.f32 %v5693, 0.0
    %v5758 = vmax.f32 %v5694, 0.0
    %v5759 = vmax.f32 %v5695, 0.0
    %v5760 = vmax.f32 %v5696, 0.0
    %v5761 = vmax.f32 %v5697, 0.0
    %v5762 = vmax.f32 %v5698, 0.0
    %v5763 = vmax.f32 %v5699, 0.0
    %v5764 = vmax.f32 %v5700, 0.0
    %v5765 = vmax.f32 %v5701, 0.0
    %v5766 = vmax.f32 %v5702, 0.0
    %v5767 = vmax.f32 %v5703, 0.0
    %v5768 = vmax.f32 %v5704, 0.0
    %v5769 = vmax.f32 %v5705, 0.0
    %v5770 = vmax.f32 %v5706, 0.0
    %5771 = vst [vmem:[#allocation11] sm:$0xff] %v5707
    %5772 = vst [vmem:[#allocation11 + $0x8] sm:$0xff] %v5708
    %5773 = vst [vmem:[#allocation11 + $0x10] sm:$0xff] %v5709
    %5774 = vst [vmem:[#allocation11 + $0x18] sm:$0xff] %v5710
    %5775 = vst [vmem:[#allocation11 + $0x20] sm:$0xff] %v5711
    %5776 = vst [vmem:[#allocation11 + $0x28] sm:$0xff] %v5712
    %5777 = vst [vmem:[#allocation11 + $0x30] sm:$0xff] %v5713
    %5778 = vst [vmem:[#allocation11 + $0x38] sm:$0xff] %v5714
    %5779 = vst [vmem:[#allocation11 + $0x40] sm:$0xff] %v5715
    %5780 = vst [vmem:[#allocation11 + $0x48] sm:$0xff] %v5716
    %5781 = vst [vmem:[#allocation11 + $0x50] sm:$0xff] %v5717
    %5782 = vst [vmem:[#allocation11 + $0x58] sm:$0xff] %v5718
    %5783 = vst [vmem:[#allocation11 + $0x60] sm:$0xff] %v5719
    %5784 = vst [vmem:[#allocation11 + $0x68] sm:$0xff] %v5720
    %5785 = vst [vmem:[#allocation11 + $0x70] sm:$0xff] %v5721
    %5786 = vst [vmem:[#allocation11 + $0x78] sm:$0xff] %v5722
    %5787 = vst [vmem:[#allocation11 + $0x80] sm:$0xff] %v5723
    %5788 = vst [vmem:[#allocation11 + $0x88] sm:$0xff] %v5724
    %5789 = vst [vmem:[#allocation11 + $0x90] sm:$0xff] %v5725
    %5790 = vst [vmem:[#allocation11 + $0x98] sm:$0xff] %v5726
    %5791 = vst [vmem:[#allocation11 + $0xa0] sm:$0xff] %v5727
    %5792 = vst [vmem:[#allocation11 + $0xa8] sm:$0xff] %v5728
    %5793 = vst [vmem:[#allocation11 + $0xb0] sm:$0xff] %v5729
    %5794 = vst [vmem:[#allocation11 + $0xb8] sm:$0xff] %v5730
    %5795 = vst [vmem:[#allocation11 + $0xc0] sm:$0xff] %v5731
    %5796 = vst [vmem:[#allocation11 + $0xc8] sm:$0xff] %v5732
    %5797 = vst [vmem:[#allocation11 + $0xd0] sm:$0xff] %v5733
    %5798 = vst [vmem:[#allocation11 + $0xd8] sm:$0xff] %v5734
    %5799 = vst [vmem:[#allocation11 + $0xe0] sm:$0xff] %v5735
    %5800 = vst [vmem:[#allocation11 + $0xe8] sm:$0xff] %v5736
    %5801 = vst [vmem:[#allocation11 + $0xf0] sm:$0xff] %v5737
    %5802 = vst [vmem:[#allocation11 + $0xf8] sm:$0xff] %v5738
    %5803 = vst [vmem:[#allocation11 + $0x100] sm:$0xff] %v5739
    %5804 = vst [vmem:[#allocation11 + $0x108] sm:$0xff] %v5740
    %5805 = vst [vmem:[#allocation11 + $0x110] sm:$0xff] %v5741
    %5806 = vst [vmem:[#allocation11 + $0x118] sm:$0xff] %v5742
    %5807 = vst [vmem:[#allocation11 + $0x120] sm:$0xff] %v5743
    %5808 = vst [vmem:[#allocation11 + $0x128] sm:$0xff] %v5744
    %5809 = vst [vmem:[#allocation11 + $0x130] sm:$0xff] %v5745
    %5810 = vst [vmem:[#allocation11 + $0x138] sm:$0xff] %v5746
    %5811 = vst [vmem:[#allocation11 + $0x140] sm:$0xff] %v5747
    %5812 = vst [vmem:[#allocation11 + $0x148] sm:$0xff] %v5748
    %5813 = vst [vmem:[#allocation11 + $0x150] sm:$0xff] %v5749
    %5814 = vst [vmem:[#allocation11 + $0x158] sm:$0xff] %v5750
    %5815 = vst [vmem:[#allocation11 + $0x160] sm:$0xff] %v5751
    %5816 = vst [vmem:[#allocation11 + $0x168] sm:$0xff] %v5752
    %5817 = vst [vmem:[#allocation11 + $0x170] sm:$0xff] %v5753
    %5818 = vst [vmem:[#allocation11 + $0x178] sm:$0xff] %v5754
    %5819 = vst [vmem:[#allocation11 + $0x180] sm:$0xff] %v5755
    %5820 = vst [vmem:[#allocation11 + $0x188] sm:$0xff] %v5756
    %5821 = vst [vmem:[#allocation11 + $0x190] sm:$0xff] %v5757
    %5822 = vst [vmem:[#allocation11 + $0x198] sm:$0xff] %v5758
    %5823 = vst [vmem:[#allocation11 + $0x1a0] sm:$0xff] %v5759
    %5824 = vst [vmem:[#allocation11 + $0x1a8] sm:$0xff] %v5760
    %5825 = vst [vmem:[#allocation11 + $0x1b0] sm:$0xff] %v5761
    %5826 = vst [vmem:[#allocation11 + $0x1b8] sm:$0xff] %v5762
    %5827 = vst [vmem:[#allocation11 + $0x1c0] sm:$0xff] %v5763
    %5828 = vst [vmem:[#allocation11 + $0x1c8] sm:$0xff] %v5764
    %5829 = vst [vmem:[#allocation11 + $0x1d0] sm:$0xff] %v5765
    %5830 = vst [vmem:[#allocation11 + $0x1d8] sm:$0xff] %v5766
    %5831 = vst [vmem:[#allocation11 + $0x1e0] sm:$0xff] %v5767
    %5832 = vst [vmem:[#allocation11 + $0x1e8] sm:$0xff] %v5768
    %5833 = vst [vmem:[#allocation11 + $0x1f0] sm:$0xff] %v5769
    %5834 = vst [vmem:[#allocation11 + $0x1f8] sm:$0xff] %v5770
    // Predicated region
    $region50: #{tpu_custom_call.1} parent=1 // pred_check
      _
    $region51: #{tpu_custom_call.1} parent=1 // pred_check_branch
      %5836 = sbr.rel (0) target = $region53
    $region52: #{tpu_custom_call.1} parent=1 // pred_region
      %s5838 = ssub.s32 8192, 8192
      %5839 = vsyncadd [#allocation7], %s5838
      %s5840 = sshll.u32 [#allocation11], 4
      %s5841 = int_to_ptr.vmem [resolvable:$true] %s5840
      %5846 = dma.vmem_to_hbm [thread:$0]  %s5841, 8192, %s9, [#allocation7], 128, 128, 8
    $region53: #{tpu_custom_call.1} parent=1 // pred_fallthru
      _
    // Predicated region
    $region54: #{tpu_custom_call.1} parent=1 // pred_check
      _
    $region55: #{tpu_custom_call.1} parent=1 // pred_check_branch
      %5848 = sbr.rel (0) target = $region57
    $region56: #{tpu_custom_call.1} parent=1 // pred_region
      %5849 = dma.done [#allocation7], 8192
    $region57: #{tpu_custom_call.1} parent=1 // pred_fallthru
      _
    %5850 = vsyncpa [#allocation6], 1
    %5851 = vsyncpa [#allocation9], 1
    %5852 = vsyncpa [#allocation7], 1

</llo_original>
